<compile_context>
chip_gen: v6e
topology: v6e:2x2x1
jax: 0.10.0
libtpu: 0.0.40
codegen_flags: <defaults>
</compile_context>

<pallas_src>
import math

import jax
import jax.numpy as jnp
import numpy as np
from jax import lax
from jax.experimental import pallas as pl
from jax.experimental.pallas import tpu as pltpu

EPS = 1e-6
NEG_INF = -1e18


def make_encoder_kernel(num_heads, batch_tile, seq_len):
    Bt, L = batch_tile, seq_len
    NH = num_heads

    def _layer_norm(x, gamma, beta):
        # Matches the module's LayerNorm: unbiased std (ddof=1), eps added to std.
        mean = jnp.mean(x, axis=-1, keepdims=True)
        d = x - mean
        var = jnp.sum(d * d, axis=-1, keepdims=True) * (1.0 / (x.shape[-1] - 1))
        inv = pl.reciprocal(jnp.sqrt(var) + EPS)   # exact: LN error compounds per layer
        return gamma * (d * inv) + beta

    def kernel(x_ref, mask_ref, timing_ref, wemb_ref,
               g_mha_ref, b_mha_ref, wq_ref, wk_ref, wv_ref, wo_ref,
               g_ffn_ref, b_ffn_ref, w1_ref, b1_ref, w2_ref, b2_ref,
               g_f_ref, b_f_ref, out_ref, x_acc):
        l = pl.program_id(1)
        n_layers = pl.num_programs(1)
        rows = Bt * L
        H = wemb_ref.shape[1]
        KD = wq_ref.shape[-1]
        VD = wv_ref.shape[-1]
        dk = KD // NH
        dv = VD // NH
        bf = jnp.bfloat16
        f32 = jnp.float32

        # -------- first layer step: embedding projection (no bias) + timing --------
        @pl.when(l == 0)
        def _():
            x_in = x_ref[...].reshape(rows, x_ref.shape[-1])
            xe = jnp.dot(x_in.astype(bf), wemb_ref[...], preferred_element_type=f32)
            # broadcast-add the timing signal (no Bt-deep concatenation)
            x_acc[...] = (xe.reshape(Bt, L, H) + timing_ref[...]).reshape(rows, H)

        x = x_acc[...]                                                 # [Bt*L, H] f32

        # additive attention bias from the padding mask (1.0 == masked key position)
        bias = mask_ref[...] * jnp.float32(NEG_INF)                    # [Bt, 1, L]

        # ---------------------- multi-head self-attention sub-layer ----------------
        xn = _layer_norm(x, g_mha_ref[0], b_mha_ref[0])
        xnb = xn.astype(bf)
        # 1/sqrt(dk) is folded into wq at init.
        q = jnp.dot(xnb, wq_ref[0], preferred_element_type=f32)        # [rows, KD]
        k = jnp.dot(xnb, wk_ref[0], preferred_element_type=f32)
        v = jnp.dot(xnb, wv_ref[0], preferred_element_type=f32)
        q3 = q.reshape(Bt, L, KD)
        k3 = k.reshape(Bt, L, KD)
        v3 = v.reshape(Bt, L, VD)

        attn = jnp.zeros((rows, H), f32)
        for h in range(NH):                                            # static, small
            qh = q3[:, :, h * dk:(h + 1) * dk].astype(bf)
            kh = k3[:, :, h * dk:(h + 1) * dk].astype(bf)
            vh = v3[:, :, h * dv:(h + 1) * dv].astype(bf)
            lg = jnp.einsum('bqd,bkd->bqk', qh, kh,
                            preferred_element_type=f32)                # [Bt, L, L]
            lg = lg + bias
            lg = lg - jnp.max(lg, axis=-1, keepdims=True)
            p = jnp.exp(lg)
            p = p * pl.reciprocal(jnp.sum(p, axis=-1, keepdims=True), approx=True)
            ctx = jnp.einsum('bqk,bkd->bqd', p.astype(bf), vh,
                             preferred_element_type=f32)               # [Bt, L, dv]
            # per-head output projection, accumulated (no lane-axis concat)
            attn = attn + jnp.dot(ctx.reshape(rows, dv).astype(bf), wo_ref[0, h],
                                  preferred_element_type=f32)
        x = x + attn

        # ------ position-wise FFN: conv(k=3,'both') -> relu -> conv(k=3,'both') ----
        pos = lax.broadcasted_iota(jnp.int32, (rows, 1), 0) % L
        not_first = pos != 0
        not_last = pos != (L - 1)

        def conv3(inp, w_ref, b):
            # out[t] = b + x[t-1] @ W0 + x[t] @ W1 + x[t+1] @ W2   (zero padded per seq)
            # shifts via pltpu.roll (f32, XLU); wrapped / cross-sequence rows masked out.
            prev = jnp.where(not_first, pltpu.roll(inp, shift=1, axis=0), 0.0)
            nxt = jnp.where(not_last, pltpu.roll(inp, shift=rows - 1, axis=0), 0.0)
            out = jnp.dot(prev.astype(bf), w_ref[0, 0], preferred_element_type=f32)
            out = out + jnp.dot(inp.astype(bf), w_ref[0, 1], preferred_element_type=f32)
            out = out + jnp.dot(nxt.astype(bf), w_ref[0, 2], preferred_element_type=f32)
            return out + b

        xn = _layer_norm(x, g_ffn_ref[0], b_ffn_ref[0])
        h1 = jnp.maximum(conv3(xn, w1_ref, b1_ref[0]), 0.0)            # [Bt*L, FS]
        y = conv3(h1, w2_ref, b2_ref[0])                               # [Bt*L, H]
        x = x + y

        x_acc[...] = x

        # ------------------------------- final LayerNorm ---------------------------
        @pl.when(l == n_layers - 1)
        def _():
            out_ref[...] = _layer_norm(x, g_f_ref[...],
                                       b_f_ref[...]).reshape(Bt, L, H)

    return kernel


def _pick_batch_tile(B, L, target_rows=128, max_rows=2048):
    """Largest-enough batch tile: rows = Bt*L >= target_rows if possible, nb >= 2."""
    divisors = [d for d in range(1, B + 1) if B % d == 0]
    candidates = [d for d in divisors if d * L <= max_rows]
    if not candidates:
        return 1
    pref = [d for d in candidates if d * L >= target_rows and B // d >= 2]
    if pref:
        return min(pref)
    pref = [d for d in candidates if d * L >= target_rows]
    if pref:
        return min(pref)
    return max(candidates)


def _default_vmem_limit():
    # ~3/4 of the chip's VMEM (96 MiB on v5e/v6e, 48 MiB on v7x), with a safe fallback.
    cap = 64 * 1024 * 1024
    try:
        info = pltpu.get_tpu_info()
        cap = int(getattr(info, "vmem_capacity_bytes", cap))
    except Exception:
        pass
    return int(cap * 3 // 4)


def encoder_forward(inputs, mask, params, num_layers, num_heads, *,
                    batch_tile=None, vmem_limit_bytes=None):
    B, L, E = inputs.shape
    H = params["wemb"].shape[1]
    Bt = batch_tile if batch_tile is not None else _pick_batch_tile(B, L)
    assert B % Bt == 0, "batch must be divisible by the batch tile"
    nb = B // Bt
    if vmem_limit_bytes is None:
        vmem_limit_bytes = _default_vmem_limit()

    names = ("timing", "wemb", "g_mha", "b_mha", "wq", "wk", "wv", "wo",
             "g_ffn", "b_ffn", "w1", "b1", "w2", "b2", "g_f", "b_f")
    ordered = [params[n] for n in names]
    shared = {"timing", "wemb", "g_f", "b_f"}   # no per-layer leading axis

    def shared_spec(shape):
        n = len(shape)
        return pl.BlockSpec(shape, lambda b, l, _n=n: (0,) * _n)

    def per_layer_spec(shape):
        n = len(shape)
        return pl.BlockSpec((1,) + tuple(shape[1:]),
                            lambda b, l, _n=n: (l,) + (0,) * (_n - 1))

    in_specs = [pl.BlockSpec((Bt, L, E), lambda b, l: (b, 0, 0)),
                pl.BlockSpec((Bt, 1, L), lambda b, l: (b, 0, 0))]
    for name, p in zip(names, ordered):
        in_specs.append(shared_spec(p.shape) if name in shared
                        else per_layer_spec(p.shape))

    return pl.pallas_call(
        make_encoder_kernel(num_heads, Bt, L),
        out_shape=jax.ShapeDtypeStruct((B, L, H), jnp.float32),
        grid=(nb, num_layers),
        in_specs=in_specs,
        out_specs=pl.BlockSpec((Bt, L, H), lambda b, l: (b, 0, 0)),
        scratch_shapes=[pltpu.VMEM((Bt * L, H), jnp.float32)],
        compiler_params=pltpu.CompilerParams(
            dimension_semantics=("parallel", "arbitrary"),
            vmem_limit_bytes=vmem_limit_bytes),
    )(inputs, mask, *ordered)


def gen_timing_signal(length, channels, min_timescale=1.0, max_timescale=1.0e4):
    position = np.arange(length)
    num_timescales = channels // 2
    log_timescale_increment = math.log(float(max_timescale) / float(min_timescale)) / max(
        float(num_timescales) - 1, 1.0)
    inv_timescales = min_timescale * np.exp(
        np.arange(num_timescales).astype(np.float64) * -log_timescale_increment)
    scaled_time = position[:, None] * inv_timescales[None, :]
    signal = np.concatenate([np.sin(scaled_time), np.cos(scaled_time)], axis=1)
    signal = np.pad(signal, [[0, 0], [0, channels % 2]], "constant")
    return jnp.asarray(signal, dtype=jnp.float32)  # [L, H]


def init_params(key, E, H, NL, NH, KD, VD, FS, L):
    ks = jax.random.split(key, 9)

    def nrm(k, shape, scale=0.05):
        return scale * jax.random.normal(k, shape, jnp.float32)

    dk, dv = KD // NH, VD // NH
    q_scale = float(dk) ** -0.5

    # PyTorch-shaped parameters (Linear: [out, in]; Conv1d: [out, in, k]).
    w_emb = nrm(ks[0], (H, E))
    wq = nrm(ks[1], (NL, KD, H))
    wk = nrm(ks[2], (NL, KD, H))
    wv = nrm(ks[3], (NL, VD, H))
    wo = nrm(ks[4], (NL, H, VD))
    w1 = nrm(ks[5], (NL, FS, H, 3))
    w2 = nrm(ks[6], (NL, H, FS, 3))
    b1 = nrm(ks[7], (NL, FS))
    b2 = nrm(ks[8], (NL, H))

    bf = jnp.bfloat16
    wq_t = jnp.transpose(wq, (0, 2, 1)) * q_scale                      # scale folded
    wo_t = jnp.transpose(wo, (0, 2, 1)).reshape(NL, NH, dv, H)         # per-head out proj
    return dict(
        timing=gen_timing_signal(L, H),                                # [L, H] f32
        wemb=jnp.transpose(w_emb).astype(bf),                          # [E, H]
        g_mha=jnp.ones((NL, 1, H), jnp.float32),
        b_mha=jnp.zeros((NL, 1, H), jnp.float32),
        wq=wq_t.astype(bf),                                            # [NL, H, KD]
        wk=jnp.transpose(wk, (0, 2, 1)).astype(bf),                    # [NL, H, KD]
        wv=jnp.transpose(wv, (0, 2, 1)).astype(bf),                    # [NL, H, VD]
        wo=wo_t.astype(bf),                                            # [NL, NH, dv, H]
        g_ffn=jnp.ones((NL, 1, H), jnp.float32),
        b_ffn=jnp.zeros((NL, 1, H), jnp.float32),
        w1=jnp.transpose(w1, (0, 3, 2, 1)).astype(bf),                 # [NL, 3, H, FS]
        b1=b1.reshape(NL, 1, FS),
        w2=jnp.transpose(w2, (0, 3, 2, 1)).astype(bf),                 # [NL, 3, FS, H]
        b2=b2.reshape(NL, 1, H),
        g_f=jnp.ones((1, H), jnp.float32),
        b_f=jnp.zeros((1, H), jnp.float32),
    )


def reference_forward(inputs, mask, params, num_layers, num_heads,
                      matmul_dtype=jnp.float32):
    """Pure-JAX reference mirroring the PyTorch module forward (dropout p=0)."""
    B, L, _ = inputs.shape
    KD = params["wq"].shape[-1]
    NL_, NH, dv, H = params["wo"].shape
    VD = NH * dv
    dk = KD // num_heads
    dt = matmul_dtype

    def mm(a, b):
        return jnp.matmul(a.astype(dt), b.astype(dt),
                          preferred_element_type=jnp.float32)

    def ln(z, g, bta):
        mean = jnp.mean(z, axis=-1, keepdims=True)
        d = z - mean
        var = jnp.sum(d * d, axis=-1, keepdims=True) / (z.shape[-1] - 1)
        return g * d / (jnp.sqrt(var) + EPS) + bta

    def shift(z, delta):            # out[:, t] = z[:, t + delta], zero padded
        zero = jnp.zeros_like(z[:, :1])
        if delta == -1:
            return jnp.concatenate([zero, z[:, :-1]], axis=1)
        return jnp.concatenate([z[:, 1:], zero], axis=1)

    x = mm(inputs, params["wemb"]) + params["timing"]                   # [B, L, H]
    m = mask > 0.5                                                      # [B, 1, L]
    for l in range(num_layers):
        xn = ln(x, params["g_mha"][l], params["b_mha"][l])
        q = mm(xn, params["wq"][l])      # query scale pre-folded into wq
        k = mm(xn, params["wk"][l])
        v = mm(xn, params["wv"][l])
        heads = []
        for h in range(num_heads):
            qh = q[..., h * dk:(h + 1) * dk]
            kh = k[..., h * dk:(h + 1) * dk]
            vh = v[..., h * dv:(h + 1) * dv]
            lg = jnp.einsum('bqd,bkd->bqk', qh.astype(dt), kh.astype(dt),
                            preferred_element_type=jnp.float32)
            lg = jnp.where(m, NEG_INF, lg)
            p = jax.nn.softmax(lg, axis=-1)
            heads.append(jnp.einsum('bqk,bkd->bqd', p.astype(dt), vh.astype(dt),
                                    preferred_element_type=jnp.float32))
        ctx = jnp.concatenate(heads, axis=-1)                           # [B, L, VD]
        x = x + mm(ctx, params["wo"][l].reshape(VD, H))

        xn = ln(x, params["g_ffn"][l], params["b_ffn"][l])
        h1 = (params["b1"][l]
              + mm(shift(xn, -1), params["w1"][l, 0])
              + mm(xn, params["w1"][l, 1])
              + mm(shift(xn, 1), params["w1"][l, 2]))
        h1 = jnp.maximum(h1, 0.0)
        y = (params["b2"][l]
             + mm(shift(h1, -1), params["w2"][l, 0])
             + mm(h1, params["w2"][l, 1])
             + mm(shift(h1, 1), params["w2"][l, 2]))
        x = x + y
    return ln(x, params["g_f"], params["b_f"])


if __name__ == "__main__":
    # Small, module-consistent hyperparameters.  B*L chosen so the default batch tile
    # gives rows = Bt*L = 128 with nb = 2 batch blocks (megacore-friendly).
    B, L, E, H = 32, 8, 32, 32
    NL, NH, KD, VD, FS = 2, 2, 32, 32, 64

    key = jax.random.PRNGKey(0)
    k_in, k_par = jax.random.split(key)
    inputs = jax.random.normal(k_in, (B, L, E), jnp.float32)
    # pad mask: 1.0 == masked (the bool mask handed to masked_fill in PyTorch).
    mask = jnp.zeros((B, 1, L), jnp.float32)
    mask = mask.at[1, 0, L - 2:].set(1.0).at[3, 0, L - 3:].set(1.0)
    mask = mask.at[7, 0, L - 1:].set(1.0)

    params = init_params(k_par, E, H, NL, NH, KD, VD, FS, L)

    out = encoder_forward(inputs, mask, params, NL, NH)
    out = jax.block_until_ready(out)

    assert out.shape == (B, L, H)
    assert bool(jnp.all(jnp.isfinite(out)))

    # Validate against a pure-JAX reference of the module forward using the same bf16
    # matmul operands (softmax/LayerNorm/residual math stays f32 in the kernel; the
    # softmax uses an approximate EUP reciprocal, hence the tolerance).
    ref = reference_forward(inputs, mask, params, NL, NH, matmul_dtype=jnp.bfloat16)
    np.testing.assert_allclose(np.asarray(out), np.asarray(ref), rtol=3e-2, atol=3e-2)

    # TODO(synk): input/layer/attention/relu dropouts have p=0.0 (inference) and are
    # identities; the universal/ACT branch of the module is not implemented.
    print("KERNEL_OK")
</pallas_src>

<mosaic_0001>
module attributes {stable_mosaic.version = 11 : i64} {
  func.func @kernel(%arg0: i32, %arg1: i32, %arg2: memref<16x8x32xf32, #tpu.memory_space<vmem>>, %arg3: memref<16x1x8xf32, #tpu.memory_space<vmem>>, %arg4: memref<8x32xf32, #tpu.memory_space<vmem>>, %arg5: memref<32x32xbf16, #tpu.memory_space<vmem>>, %arg6: memref<1x1x32xf32, #tpu.memory_space<vmem>>, %arg7: memref<1x1x32xf32, #tpu.memory_space<vmem>>, %arg8: memref<1x32x32xbf16, #tpu.memory_space<vmem>>, %arg9: memref<1x32x32xbf16, #tpu.memory_space<vmem>>, %arg10: memref<1x32x32xbf16, #tpu.memory_space<vmem>>, %arg11: memref<1x2x16x32xbf16, #tpu.memory_space<vmem>>, %arg12: memref<1x1x32xf32, #tpu.memory_space<vmem>>, %arg13: memref<1x1x32xf32, #tpu.memory_space<vmem>>, %arg14: memref<1x3x32x64xbf16, #tpu.memory_space<vmem>>, %arg15: memref<1x1x64xf32, #tpu.memory_space<vmem>>, %arg16: memref<1x3x64x32xbf16, #tpu.memory_space<vmem>>, %arg17: memref<1x1x32xf32, #tpu.memory_space<vmem>>, %arg18: memref<1x32xf32, #tpu.memory_space<vmem>>, %arg19: memref<1x32xf32, #tpu.memory_space<vmem>>, %arg20: memref<16x8x32xf32, #tpu.memory_space<vmem>>, %arg21: memref<128x32xf32, #tpu.memory_space<vmem>>) attributes {dimension_semantics = [#tpu.dimension_semantics<parallel>, #tpu.dimension_semantics<arbitrary>], iteration_bounds = array<i64: 2, 2>, scalar_prefetch = 0 : i64, scratch_operands = 1 : i64, tpu.core_type = #tpu.core_type<tc>, window_params = [{transform_indices = @transform_0, window_bounds = array<i64: 16, 8, 32>}, {transform_indices = @transform_1, window_bounds = array<i64: 16, 1, 8>}, {pipeline_mode = #tpu.pipeline_mode<synchronous>, transform_indices = @transform_2, window_bounds = array<i64: 8, 32>}, {pipeline_mode = #tpu.pipeline_mode<synchronous>, transform_indices = @transform_3, window_bounds = array<i64: 32, 32>}, {transform_indices = @transform_4, window_bounds = array<i64: 1, 1, 32>}, {transform_indices = @transform_5, window_bounds = array<i64: 1, 1, 32>}, {transform_indices = @transform_6, window_bounds = array<i64: 1, 32, 32>}, {transform_indices = @transform_7, window_bounds = array<i64: 1, 32, 32>}, {transform_indices = @transform_8, window_bounds = array<i64: 1, 32, 32>}, {transform_indices = @transform_9, window_bounds = array<i64: 1, 2, 16, 32>}, {transform_indices = @transform_10, window_bounds = array<i64: 1, 1, 32>}, {transform_indices = @transform_11, window_bounds = array<i64: 1, 1, 32>}, {transform_indices = @transform_12, window_bounds = array<i64: 1, 3, 32, 64>}, {transform_indices = @transform_13, window_bounds = array<i64: 1, 1, 64>}, {transform_indices = @transform_14, window_bounds = array<i64: 1, 3, 64, 32>}, {transform_indices = @transform_15, window_bounds = array<i64: 1, 1, 32>}, {pipeline_mode = #tpu.pipeline_mode<synchronous>, transform_indices = @transform_16, window_bounds = array<i64: 1, 32>}, {pipeline_mode = #tpu.pipeline_mode<synchronous>, transform_indices = @transform_17, window_bounds = array<i64: 1, 32>}, {transform_indices = @transform_18, window_bounds = array<i64: 16, 8, 32>}]} {
    %c0_i32 = arith.constant 0 : i32
    %0 = arith.cmpi eq, %arg1, %c0_i32 : i32
    %1 = arith.extui %0 : i1 to i32
    %c0_i32_0 = arith.constant 0 : i32
    %2 = arith.cmpi ne, %1, %c0_i32_0 : i32
    scf.if %2 {
      %c0_109 = arith.constant 0 : index
      %c0_110 = arith.constant 0 : index
      %c0_111 = arith.constant 0 : index
      %210 = vector.load %arg2[%c0_109, %c0_110, %c0_111] : memref<16x8x32xf32, #tpu.memory_space<vmem>>, vector<16x8x32xf32>
      %211 = vector.shape_cast %210 : vector<16x8x32xf32> to vector<128x32xf32>
      %212 = arith.truncf %211 : vector<128x32xf32> to vector<128x32xbf16>
      %c0_112 = arith.constant 0 : index
      %c0_113 = arith.constant 0 : index
      %213 = vector.load %arg5[%c0_112, %c0_113] : memref<32x32xbf16, #tpu.memory_space<vmem>>, vector<32x32xbf16>
      %cst_114 = arith.constant dense<0.000000e+00> : vector<128x32xf32>
      %214 = tpu.matmul %212, %213, %cst_114 {dimension_numbers = #tpu.dot_dimension_numbers<[1], [0], [0], [1], [0, 0, 1, 1], [], []>} : vector<128x32xbf16>, vector<32x32xbf16>, vector<128x32xf32> -> vector<128x32xf32>
      %215 = vector.shape_cast %214 : vector<128x32xf32> to vector<16x8x32xf32>
      %c0_115 = arith.constant 0 : index
      %c0_116 = arith.constant 0 : index
      %216 = vector.load %arg4[%c0_115, %c0_116] : memref<8x32xf32, #tpu.memory_space<vmem>>, vector<8x32xf32>
      %217 = vector.shape_cast %216 : vector<8x32xf32> to vector<1x8x32xf32>
      %218 = vector.broadcast %217 : vector<1x8x32xf32> to vector<16x8x32xf32>
      %219 = arith.addf %215, %218 : vector<16x8x32xf32>
      %220 = vector.shape_cast %219 : vector<16x8x32xf32> to vector<128x32xf32>
      %c0_117 = arith.constant 0 : index
      %c0_118 = arith.constant 0 : index
      %221 = vector.load %arg21[%c0_117, %c0_118] : memref<128x32xf32, #tpu.memory_space<vmem>>, vector<128x32xf32>
      tpu.vector_store %arg21[%c0_117, %c0_118], %220 {strides = array<i32>} : memref<128x32xf32, #tpu.memory_space<vmem>>, vector<128x32xf32>,
    } else {
    }
    %c0 = arith.constant 0 : index
    %c0_1 = arith.constant 0 : index
    %3 = vector.load %arg21[%c0, %c0_1] : memref<128x32xf32, #tpu.memory_space<vmem>>, vector<128x32xf32>
    %c0_2 = arith.constant 0 : index
    %c0_3 = arith.constant 0 : index
    %c0_4 = arith.constant 0 : index
    %4 = vector.load %arg3[%c0_2, %c0_3, %c0_4] : memref<16x1x8xf32, #tpu.memory_space<vmem>>, vector<16x1x8xf32>
    %cst = arith.constant -9.99999984E+17 : f32
    %5 = vector.broadcast %cst : f32 to vector<16x1x8xf32>
    %6 = arith.mulf %4, %5 : vector<16x1x8xf32>
    %c0_5 = arith.constant 0 : index
    %c0_6 = arith.constant 0 : index
    %c0_7 = arith.constant 0 : index
    %7 = vector.load %arg6[%c0_5, %c0_6, %c0_7] : memref<1x1x32xf32, #tpu.memory_space<vmem>>, vector<1x1x32xf32>
    %8 = vector.shape_cast %7 : vector<1x1x32xf32> to vector<1x32xf32>
    %c0_8 = arith.constant 0 : index
    %c0_9 = arith.constant 0 : index
    %c0_10 = arith.constant 0 : index
    %9 = vector.load %arg7[%c0_8, %c0_9, %c0_10] : memref<1x1x32xf32, #tpu.memory_space<vmem>>, vector<1x1x32xf32>
    %10 = vector.shape_cast %9 : vector<1x1x32xf32> to vector<1x32xf32>
    %cst_11 = arith.constant dense<0.000000e+00> : vector<128xf32>
    %11 = vector.multi_reduction <add>, %3, %cst_11 [1] : vector<128x32xf32> to vector<128xf32>
    %12 = vector.shape_cast %11 : vector<128xf32> to vector<128x1xf32>
    %cst_12 = arith.constant 3.200000e+01 : f32
    %13 = vector.broadcast %cst_12 : f32 to vector<128x1xf32>
    %14 = arith.divf %12, %13 : vector<128x1xf32>
    %15 = vector.broadcast %14 : vector<128x1xf32> to vector<128x32xf32>
    %16 = arith.subf %3, %15 : vector<128x32xf32>
    %17 = arith.mulf %16, %16 : vector<128x32xf32>
    %cst_13 = arith.constant dense<0.000000e+00> : vector<128xf32>
    %18 = vector.multi_reduction <add>, %17, %cst_13 [1] : vector<128x32xf32> to vector<128xf32>
    %19 = vector.shape_cast %18 : vector<128xf32> to vector<128x1xf32>
    %cst_14 = arith.constant 0.0322580636 : f32
    %20 = vector.broadcast %cst_14 : f32 to vector<128x1xf32>
    %21 = arith.mulf %19, %20 : vector<128x1xf32>
    %22 = math.sqrt %21 : vector<128x1xf32>
    %cst_15 = arith.constant 9.99999997E-7 : f32
    %23 = vector.broadcast %cst_15 : f32 to vector<128x1xf32>
    %24 = arith.addf %22, %23 : vector<128x1xf32>
    %25 = tpu.reciprocal %24 : vector<128x1xf32> -> vector<128x1xf32>
    %26 = vector.broadcast %25 : vector<128x1xf32> to vector<128x32xf32>
    %27 = arith.mulf %16, %26 : vector<128x32xf32>
    %28 = vector.broadcast %8 : vector<1x32xf32> to vector<128x32xf32>
    %29 = arith.mulf %28, %27 : vector<128x32xf32>
    %30 = vector.broadcast %10 : vector<1x32xf32> to vector<128x32xf32>
    %31 = arith.addf %29, %30 : vector<128x32xf32>
    %32 = arith.truncf %31 : vector<128x32xf32> to vector<128x32xbf16>
    %c0_16 = arith.constant 0 : index
    %c0_17 = arith.constant 0 : index
    %c0_18 = arith.constant 0 : index
    %33 = vector.load %arg8[%c0_16, %c0_17, %c0_18] : memref<1x32x32xbf16, #tpu.memory_space<vmem>>, vector<1x32x32xbf16>
    %34 = vector.shape_cast %33 : vector<1x32x32xbf16> to vector<32x32xbf16>
    %cst_19 = arith.constant dense<0.000000e+00> : vector<128x32xf32>
    %35 = tpu.matmul %32, %34, %cst_19 {dimension_numbers = #tpu.dot_dimension_numbers<[1], [0], [0], [1], [0, 0, 1, 1], [], []>} : vector<128x32xbf16>, vector<32x32xbf16>, vector<128x32xf32> -> vector<128x32xf32>
    %c0_20 = arith.constant 0 : index
    %c0_21 = arith.constant 0 : index
    %c0_22 = arith.constant 0 : index
    %36 = vector.load %arg9[%c0_20, %c0_21, %c0_22] : memref<1x32x32xbf16, #tpu.memory_space<vmem>>, vector<1x32x32xbf16>
    %37 = vector.shape_cast %36 : vector<1x32x32xbf16> to vector<32x32xbf16>
    %cst_23 = arith.constant dense<0.000000e+00> : vector<128x32xf32>
    %38 = tpu.matmul %32, %37, %cst_23 {dimension_numbers = #tpu.dot_dimension_numbers<[1], [0], [0], [1], [0, 0, 1, 1], [], []>} : vector<128x32xbf16>, vector<32x32xbf16>, vector<128x32xf32> -> vector<128x32xf32>
    %c0_24 = arith.constant 0 : index
    %c0_25 = arith.constant 0 : index
    %c0_26 = arith.constant 0 : index
    %39 = vector.load %arg10[%c0_24, %c0_25, %c0_26] : memref<1x32x32xbf16, #tpu.memory_space<vmem>>, vector<1x32x32xbf16>
    %40 = vector.shape_cast %39 : vector<1x32x32xbf16> to vector<32x32xbf16>
    %cst_27 = arith.constant dense<0.000000e+00> : vector<128x32xf32>
    %41 = tpu.matmul %32, %40, %cst_27 {dimension_numbers = #tpu.dot_dimension_numbers<[1], [0], [0], [1], [0, 0, 1, 1], [], []>} : vector<128x32xbf16>, vector<32x32xbf16>, vector<128x32xf32> -> vector<128x32xf32>
    %42 = vector.shape_cast %35 : vector<128x32xf32> to vector<16x8x32xf32>
    %43 = vector.shape_cast %38 : vector<128x32xf32> to vector<16x8x32xf32>
    %44 = vector.shape_cast %41 : vector<128x32xf32> to vector<16x8x32xf32>
    %cst_28 = arith.constant 0.000000e+00 : f32
    %45 = vector.broadcast %cst_28 : f32 to vector<128x32xf32>
    %46 = vector.extract_strided_slice %42 {offsets = [0, 0, 0], sizes = [16, 8, 16], strides = [1, 1, 1]} : vector<16x8x32xf32> to vector<16x8x16xf32>
    %47 = arith.truncf %46 : vector<16x8x16xf32> to vector<16x8x16xbf16>
    %48 = vector.extract_strided_slice %43 {offsets = [0, 0, 0], sizes = [16, 8, 16], strides = [1, 1, 1]} : vector<16x8x32xf32> to vector<16x8x16xf32>
    %49 = arith.truncf %48 : vector<16x8x16xf32> to vector<16x8x16xbf16>
    %50 = vector.extract_strided_slice %44 {offsets = [0, 0, 0], sizes = [16, 8, 16], strides = [1, 1, 1]} : vector<16x8x32xf32> to vector<16x8x16xf32>
    %51 = arith.truncf %50 : vector<16x8x16xf32> to vector<16x8x16xbf16>
    "tpu.trace_start"() <{level = 10 : i32, message = "bqd,bkd->bqk"}> : () -> ()
    %cst_29 = arith.constant dense<0.000000e+00> : vector<16x8x8xf32>
    %52 = tpu.matmul %47, %49, %cst_29 {dimension_numbers = #tpu.dot_dimension_numbers<[2], [2], [1], [1], [0, 0, 0, 1, 1, 1], [0], [0]>} : vector<16x8x16xbf16>, vector<16x8x16xbf16>, vector<16x8x8xf32> -> vector<16x8x8xf32>
    "tpu.trace_stop"() : () -> ()
    %53 = vector.broadcast %6 : vector<16x1x8xf32> to vector<16x8x8xf32>
    %54 = arith.addf %52, %53 : vector<16x8x8xf32>
    %cst_30 = arith.constant dense<0xFF800000> : vector<16x8xf32>
    %55 = vector.multi_reduction <maximumf>, %54, %cst_30 [2] : vector<16x8x8xf32> to vector<16x8xf32>
    %56 = vector.shape_cast %55 : vector<16x8xf32> to vector<16x8x1xf32>
    %57 = vector.broadcast %56 : vector<16x8x1xf32> to vector<16x8x8xf32>
    %58 = arith.subf %54, %57 : vector<16x8x8xf32>
    %59 = math.exp %58 : vector<16x8x8xf32>
    %cst_31 = arith.constant dense<0.000000e+00> : vector<16x8xf32>
    %60 = vector.multi_reduction <add>, %59, %cst_31 [2] : vector<16x8x8xf32> to vector<16x8xf32>
    %61 = vector.shape_cast %60 : vector<16x8xf32> to vector<16x8x1xf32>
    %62 = tpu.reciprocal %61 {approx = true} : vector<16x8x1xf32> -> vector<16x8x1xf32>
    %63 = vector.broadcast %62 : vector<16x8x1xf32> to vector<16x8x8xf32>
    %64 = arith.mulf %59, %63 : vector<16x8x8xf32>
    %65 = arith.truncf %64 : vector<16x8x8xf32> to vector<16x8x8xbf16>
    "tpu.trace_start"() <{level = 10 : i32, message = "bqk,bkd->bqd"}> : () -> ()
    %cst_32 = arith.constant dense<0.000000e+00> : vector<16x8x16xf32>
    %66 = tpu.matmul %65, %51, %cst_32 {dimension_numbers = #tpu.dot_dimension_numbers<[2], [1], [1], [2], [0, 0, 0, 1, 1, 2], [0], [0]>} : vector<16x8x8xbf16>, vector<16x8x16xbf16>, vector<16x8x16xf32> -> vector<16x8x16xf32>
    "tpu.trace_stop"() : () -> ()
    %67 = vector.shape_cast %66 : vector<16x8x16xf32> to vector<128x16xf32>
    %68 = arith.truncf %67 : vector<128x16xf32> to vector<128x16xbf16>
    %c0_33 = arith.constant 0 : index
    %c0_34 = arith.constant 0 : index
    %c0_35 = arith.constant 0 : index
    %c0_36 = arith.constant 0 : index
    %69 = vector.load %arg11[%c0_33, %c0_34, %c0_35, %c0_36] : memref<1x2x16x32xbf16, #tpu.memory_space<vmem>>, vector<1x1x16x32xbf16>
    %70 = vector.shape_cast %69 : vector<1x1x16x32xbf16> to vector<16x32xbf16>
    %cst_37 = arith.constant dense<0.000000e+00> : vector<128x32xf32>
    %71 = tpu.matmul %68, %70, %cst_37 {dimension_numbers = #tpu.dot_dimension_numbers<[1], [0], [0], [1], [0, 0, 1, 1], [], []>} : vector<128x16xbf16>, vector<16x32xbf16>, vector<128x32xf32> -> vector<128x32xf32>
    %72 = arith.addf %45, %71 : vector<128x32xf32>
    %73 = vector.extract_strided_slice %42 {offsets = [0, 0, 16], sizes = [16, 8, 16], strides = [1, 1, 1]} : vector<16x8x32xf32> to vector<16x8x16xf32>
    %74 = arith.truncf %73 : vector<16x8x16xf32> to vector<16x8x16xbf16>
    %75 = vector.extract_strided_slice %43 {offsets = [0, 0, 16], sizes = [16, 8, 16], strides = [1, 1, 1]} : vector<16x8x32xf32> to vector<16x8x16xf32>
    %76 = arith.truncf %75 : vector<16x8x16xf32> to vector<16x8x16xbf16>
    %77 = vector.extract_strided_slice %44 {offsets = [0, 0, 16], sizes = [16, 8, 16], strides = [1, 1, 1]} : vector<16x8x32xf32> to vector<16x8x16xf32>
    %78 = arith.truncf %77 : vector<16x8x16xf32> to vector<16x8x16xbf16>
    "tpu.trace_start"() <{level = 10 : i32, message = "bqd,bkd->bqk"}> : () -> ()
    %cst_38 = arith.constant dense<0.000000e+00> : vector<16x8x8xf32>
    %79 = tpu.matmul %74, %76, %cst_38 {dimension_numbers = #tpu.dot_dimension_numbers<[2], [2], [1], [1], [0, 0, 0, 1, 1, 1], [0], [0]>} : vector<16x8x16xbf16>, vector<16x8x16xbf16>, vector<16x8x8xf32> -> vector<16x8x8xf32>
    "tpu.trace_stop"() : () -> ()
    %80 = vector.broadcast %6 : vector<16x1x8xf32> to vector<16x8x8xf32>
    %81 = arith.addf %79, %80 : vector<16x8x8xf32>
    %cst_39 = arith.constant dense<0xFF800000> : vector<16x8xf32>
    %82 = vector.multi_reduction <maximumf>, %81, %cst_39 [2] : vector<16x8x8xf32> to vector<16x8xf32>
    %83 = vector.shape_cast %82 : vector<16x8xf32> to vector<16x8x1xf32>
    %84 = vector.broadcast %83 : vector<16x8x1xf32> to vector<16x8x8xf32>
    %85 = arith.subf %81, %84 : vector<16x8x8xf32>
    %86 = math.exp %85 : vector<16x8x8xf32>
    %cst_40 = arith.constant dense<0.000000e+00> : vector<16x8xf32>
    %87 = vector.multi_reduction <add>, %86, %cst_40 [2] : vector<16x8x8xf32> to vector<16x8xf32>
    %88 = vector.shape_cast %87 : vector<16x8xf32> to vector<16x8x1xf32>
    %89 = tpu.reciprocal %88 {approx = true} : vector<16x8x1xf32> -> vector<16x8x1xf32>
    %90 = vector.broadcast %89 : vector<16x8x1xf32> to vector<16x8x8xf32>
    %91 = arith.mulf %86, %90 : vector<16x8x8xf32>
    %92 = arith.truncf %91 : vector<16x8x8xf32> to vector<16x8x8xbf16>
    "tpu.trace_start"() <{level = 10 : i32, message = "bqk,bkd->bqd"}> : () -> ()
    %cst_41 = arith.constant dense<0.000000e+00> : vector<16x8x16xf32>
    %93 = tpu.matmul %92, %78, %cst_41 {dimension_numbers = #tpu.dot_dimension_numbers<[2], [1], [1], [2], [0, 0, 0, 1, 1, 2], [0], [0]>} : vector<16x8x8xbf16>, vector<16x8x16xbf16>, vector<16x8x16xf32> -> vector<16x8x16xf32>
    "tpu.trace_stop"() : () -> ()
    %94 = vector.shape_cast %93 : vector<16x8x16xf32> to vector<128x16xf32>
    %95 = arith.truncf %94 : vector<128x16xf32> to vector<128x16xbf16>
    %c0_42 = arith.constant 0 : index
    %c1 = arith.constant 1 : index
    %c0_43 = arith.constant 0 : index
    %c0_44 = arith.constant 0 : index
    %96 = vector.load %arg11[%c0_42, %c1, %c0_43, %c0_44] : memref<1x2x16x32xbf16, #tpu.memory_space<vmem>>, vector<1x1x16x32xbf16>
    %97 = vector.shape_cast %96 : vector<1x1x16x32xbf16> to vector<16x32xbf16>
    %cst_45 = arith.constant dense<0.000000e+00> : vector<128x32xf32>
    %98 = tpu.matmul %95, %97, %cst_45 {dimension_numbers = #tpu.dot_dimension_numbers<[1], [0], [0], [1], [0, 0, 1, 1], [], []>} : vector<128x16xbf16>, vector<16x32xbf16>, vector<128x32xf32> -> vector<128x32xf32>
    %99 = arith.addf %72, %98 : vector<128x32xf32>
    %100 = arith.addf %3, %99 : vector<128x32xf32>
    %101 = tpu.iota {dimensions = array<i32: 0>} : vector<128x1xi32>
    %c8_i32 = arith.constant 8 : i32
    %c0_i32_46 = arith.constant 0 : i32
    %102 = arith.cmpi eq, %c8_i32, %c0_i32_46 : i32
    %c1_i32 = arith.constant 1 : i32
    %103 = arith.select %102, %c1_i32, %c8_i32 : i32
    %104 = vector.broadcast %103 : i32 to vector<128x1xi32>
    %105 = arith.remsi %101, %104 : vector<128x1xi32>
    %c0_i32_47 = arith.constant 0 : i32
    %106 = vector.broadcast %c0_i32_47 : i32 to vector<128x1xi32>
    %107 = arith.cmpi ne, %105, %106 : vector<128x1xi32>
    %c0_i32_48 = arith.constant 0 : i32
    %108 = vector.broadcast %c0_i32_48 : i32 to vector<128x1xi32>
    %109 = arith.cmpi slt, %105, %108 : vector<128x1xi32>
    %c0_i32_49 = arith.constant 0 : i32
    %110 = arith.cmpi slt, %103, %c0_i32_49 : i32
    %111 = vector.broadcast %110 : i1 to vector<128x1xi1>
    %112 = vector.broadcast %111 : vector<128x1xi1> to vector<128x1xi1>
    %113 = arith.xori %109, %112 : vector<128x1xi1>
    %114 = arith.andi %113, %107 : vector<128x1xi1>
    %115 = vector.broadcast %103 : i32 to vector<128x1xi32>
    %116 = arith.addi %105, %115 : vector<128x1xi32>
    %117 = arith.select %114, %116, %105 : vector<128x1xi1>, vector<128x1xi32>
    %c0_i32_50 = arith.constant 0 : i32
    %118 = vector.broadcast %c0_i32_50 : i32 to vector<128x1xi32>
    %119 = arith.cmpi ne, %117, %118 : vector<128x1xi32>
    %c7_i32 = arith.constant 7 : i32
    %120 = vector.broadcast %c7_i32 : i32 to vector<128x1xi32>
    %121 = arith.cmpi ne, %117, %120 : vector<128x1xi32>
    %c0_51 = arith.constant 0 : index
    %c0_52 = arith.constant 0 : index
    %c0_53 = arith.constant 0 : index
    %122 = vector.load %arg12[%c0_51, %c0_52, %c0_53] : memref<1x1x32xf32, #tpu.memory_space<vmem>>, vector<1x1x32xf32>
    %123 = vector.shape_cast %122 : vector<1x1x32xf32> to vector<1x32xf32>
    %c0_54 = arith.constant 0 : index
    %c0_55 = arith.constant 0 : index
    %c0_56 = arith.constant 0 : index
    %124 = vector.load %arg13[%c0_54, %c0_55, %c0_56] : memref<1x1x32xf32, #tpu.memory_space<vmem>>, vector<1x1x32xf32>
    %125 = vector.shape_cast %124 : vector<1x1x32xf32> to vector<1x32xf32>
    %cst_57 = arith.constant dense<0.000000e+00> : vector<128xf32>
    %126 = vector.multi_reduction <add>, %100, %cst_57 [1] : vector<128x32xf32> to vector<128xf32>
    %127 = vector.shape_cast %126 : vector<128xf32> to vector<128x1xf32>
    %cst_58 = arith.constant 3.200000e+01 : f32
    %128 = vector.broadcast %cst_58 : f32 to vector<128x1xf32>
    %129 = arith.divf %127, %128 : vector<128x1xf32>
    %130 = vector.broadcast %129 : vector<128x1xf32> to vector<128x32xf32>
    %131 = arith.subf %100, %130 : vector<128x32xf32>
    %132 = arith.mulf %131, %131 : vector<128x32xf32>
    %cst_59 = arith.constant dense<0.000000e+00> : vector<128xf32>
    %133 = vector.multi_reduction <add>, %132, %cst_59 [1] : vector<128x32xf32> to vector<128xf32>
    %134 = vector.shape_cast %133 : vector<128xf32> to vector<128x1xf32>
    %cst_60 = arith.constant 0.0322580636 : f32
    %135 = vector.broadcast %cst_60 : f32 to vector<128x1xf32>
    %136 = arith.mulf %134, %135 : vector<128x1xf32>
    %137 = math.sqrt %136 : vector<128x1xf32>
    %cst_61 = arith.constant 9.99999997E-7 : f32
    %138 = vector.broadcast %cst_61 : f32 to vector<128x1xf32>
    %139 = arith.addf %137, %138 : vector<128x1xf32>
    %140 = tpu.reciprocal %139 : vector<128x1xf32> -> vector<128x1xf32>
    %141 = vector.broadcast %140 : vector<128x1xf32> to vector<128x32xf32>
    %142 = arith.mulf %131, %141 : vector<128x32xf32>
    %143 = vector.broadcast %123 : vector<1x32xf32> to vector<128x32xf32>
    %144 = arith.mulf %143, %142 : vector<128x32xf32>
    %145 = vector.broadcast %125 : vector<1x32xf32> to vector<128x32xf32>
    %146 = arith.addf %144, %145 : vector<128x32xf32>
    %c0_62 = arith.constant 0 : index
    %c0_63 = arith.constant 0 : index
    %c0_64 = arith.constant 0 : index
    %147 = vector.load %arg15[%c0_62, %c0_63, %c0_64] : memref<1x1x64xf32, #tpu.memory_space<vmem>>, vector<1x1x64xf32>
    %148 = vector.shape_cast %147 : vector<1x1x64xf32> to vector<1x64xf32>
    %c1_i32_65 = arith.constant 1 : i32
    %149 = tpu.dynamic_rotate %146 by %c1_i32_65 dim 0 : vector<128x32xf32>, i32 -> vector<128x32xf32>
    %cst_66 = arith.constant 0.000000e+00 : f32
    %150 = vector.shape_cast %119 : vector<128x1xi1> to vector<128x1xi1>
    %151 = vector.broadcast %150 : vector<128x1xi1> to vector<128x32xi1>
    %152 = vector.broadcast %cst_66 : f32 to vector<128x32xf32>
    %153 = arith.select %151, %149, %152 : vector<128x32xi1>, vector<128x32xf32>
    %c127_i32 = arith.constant 127 : i32
    %154 = tpu.dynamic_rotate %146 by %c127_i32 dim 0 : vector<128x32xf32>, i32 -> vector<128x32xf32>
    %cst_67 = arith.constant 0.000000e+00 : f32
    %155 = vector.shape_cast %121 : vector<128x1xi1> to vector<128x1xi1>
    %156 = vector.broadcast %155 : vector<128x1xi1> to vector<128x32xi1>
    %157 = vector.broadcast %cst_67 : f32 to vector<128x32xf32>
    %158 = arith.select %156, %154, %157 : vector<128x32xi1>, vector<128x32xf32>
    %159 = arith.truncf %153 : vector<128x32xf32> to vector<128x32xbf16>
    %c0_68 = arith.constant 0 : index
    %c0_69 = arith.constant 0 : index
    %c0_70 = arith.constant 0 : index
    %c0_71 = arith.constant 0 : index
    %160 = vector.load %arg14[%c0_68, %c0_69, %c0_70, %c0_71] : memref<1x3x32x64xbf16, #tpu.memory_space<vmem>>, vector<1x1x32x64xbf16>
    %161 = vector.shape_cast %160 : vector<1x1x32x64xbf16> to vector<32x64xbf16>
    %cst_72 = arith.constant dense<0.000000e+00> : vector<128x64xf32>
    %162 = tpu.matmul %159, %161, %cst_72 {dimension_numbers = #tpu.dot_dimension_numbers<[1], [0], [0], [1], [0, 0, 1, 1], [], []>} : vector<128x32xbf16>, vector<32x64xbf16>, vector<128x64xf32> -> vector<128x64xf32>
    %163 = arith.truncf %146 : vector<128x32xf32> to vector<128x32xbf16>
    %c0_73 = arith.constant 0 : index
    %c1_74 = arith.constant 1 : index
    %c0_75 = arith.constant 0 : index
    %c0_76 = arith.constant 0 : index
    %164 = vector.load %arg14[%c0_73, %c1_74, %c0_75, %c0_76] : memref<1x3x32x64xbf16, #tpu.memory_space<vmem>>, vector<1x1x32x64xbf16>
    %165 = vector.shape_cast %164 : vector<1x1x32x64xbf16> to vector<32x64xbf16>
    %cst_77 = arith.constant dense<0.000000e+00> : vector<128x64xf32>
    %166 = tpu.matmul %163, %165, %cst_77 {dimension_numbers = #tpu.dot_dimension_numbers<[1], [0], [0], [1], [0, 0, 1, 1], [], []>} : vector<128x32xbf16>, vector<32x64xbf16>, vector<128x64xf32> -> vector<128x64xf32>
    %167 = arith.addf %162, %166 : vector<128x64xf32>
    %168 = arith.truncf %158 : vector<128x32xf32> to vector<128x32xbf16>
    %c0_78 = arith.constant 0 : index
    %c2 = arith.constant 2 : index
    %c0_79 = arith.constant 0 : index
    %c0_80 = arith.constant 0 : index
    %169 = vector.load %arg14[%c0_78, %c2, %c0_79, %c0_80] : memref<1x3x32x64xbf16, #tpu.memory_space<vmem>>, vector<1x1x32x64xbf16>
    %170 = vector.shape_cast %169 : vector<1x1x32x64xbf16> to vector<32x64xbf16>
    %cst_81 = arith.constant dense<0.000000e+00> : vector<128x64xf32>
    %171 = tpu.matmul %168, %170, %cst_81 {dimension_numbers = #tpu.dot_dimension_numbers<[1], [0], [0], [1], [0, 0, 1, 1], [], []>} : vector<128x32xbf16>, vector<32x64xbf16>, vector<128x64xf32> -> vector<128x64xf32>
    %172 = arith.addf %167, %171 : vector<128x64xf32>
    %173 = vector.broadcast %148 : vector<1x64xf32> to vector<128x64xf32>
    %174 = arith.addf %172, %173 : vector<128x64xf32>
    %cst_82 = arith.constant 0.000000e+00 : f32
    %175 = vector.broadcast %cst_82 : f32 to vector<128x64xf32>
    %176 = arith.maximumf %174, %175 : vector<128x64xf32>
    %c0_83 = arith.constant 0 : index
    %c0_84 = arith.constant 0 : index
    %c0_85 = arith.constant 0 : index
    %177 = vector.load %arg17[%c0_83, %c0_84, %c0_85] : memref<1x1x32xf32, #tpu.memory_space<vmem>>, vector<1x1x32xf32>
    %178 = vector.shape_cast %177 : vector<1x1x32xf32> to vector<1x32xf32>
    %c1_i32_86 = arith.constant 1 : i32
    %179 = tpu.dynamic_rotate %176 by %c1_i32_86 dim 0 : vector<128x64xf32>, i32 -> vector<128x64xf32>
    %cst_87 = arith.constant 0.000000e+00 : f32
    %180 = vector.shape_cast %119 : vector<128x1xi1> to vector<128x1xi1>
    %181 = vector.broadcast %180 : vector<128x1xi1> to vector<128x64xi1>
    %182 = vector.broadcast %cst_87 : f32 to vector<128x64xf32>
    %183 = arith.select %181, %179, %182 : vector<128x64xi1>, vector<128x64xf32>
    %c127_i32_88 = arith.constant 127 : i32
    %184 = tpu.dynamic_rotate %176 by %c127_i32_88 dim 0 : vector<128x64xf32>, i32 -> vector<128x64xf32>
    %cst_89 = arith.constant 0.000000e+00 : f32
    %185 = vector.shape_cast %121 : vector<128x1xi1> to vector<128x1xi1>
    %186 = vector.broadcast %185 : vector<128x1xi1> to vector<128x64xi1>
    %187 = vector.broadcast %cst_89 : f32 to vector<128x64xf32>
    %188 = arith.select %186, %184, %187 : vector<128x64xi1>, vector<128x64xf32>
    %189 = arith.truncf %183 : vector<128x64xf32> to vector<128x64xbf16>
    %c0_90 = arith.constant 0 : index
    %c0_91 = arith.constant 0 : index
    %c0_92 = arith.constant 0 : index
    %c0_93 = arith.constant 0 : index
    %190 = vector.load %arg16[%c0_90, %c0_91, %c0_92, %c0_93] : memref<1x3x64x32xbf16, #tpu.memory_space<vmem>>, vector<1x1x64x32xbf16>
    %191 = vector.shape_cast %190 : vector<1x1x64x32xbf16> to vector<64x32xbf16>
    %cst_94 = arith.constant dense<0.000000e+00> : vector<128x32xf32>
    %192 = tpu.matmul %189, %191, %cst_94 {dimension_numbers = #tpu.dot_dimension_numbers<[1], [0], [0], [1], [0, 0, 1, 1], [], []>} : vector<128x64xbf16>, vector<64x32xbf16>, vector<128x32xf32> -> vector<128x32xf32>
    %193 = arith.truncf %176 : vector<128x64xf32> to vector<128x64xbf16>
    %c0_95 = arith.constant 0 : index
    %c1_96 = arith.constant 1 : index
    %c0_97 = arith.constant 0 : index
    %c0_98 = arith.constant 0 : index
    %194 = vector.load %arg16[%c0_95, %c1_96, %c0_97, %c0_98] : memref<1x3x64x32xbf16, #tpu.memory_space<vmem>>, vector<1x1x64x32xbf16>
    %195 = vector.shape_cast %194 : vector<1x1x64x32xbf16> to vector<64x32xbf16>
    %cst_99 = arith.constant dense<0.000000e+00> : vector<128x32xf32>
    %196 = tpu.matmul %193, %195, %cst_99 {dimension_numbers = #tpu.dot_dimension_numbers<[1], [0], [0], [1], [0, 0, 1, 1], [], []>} : vector<128x64xbf16>, vector<64x32xbf16>, vector<128x32xf32> -> vector<128x32xf32>
    %197 = arith.addf %192, %196 : vector<128x32xf32>
    %198 = arith.truncf %188 : vector<128x64xf32> to vector<128x64xbf16>
    %c0_100 = arith.constant 0 : index
    %c2_101 = arith.constant 2 : index
    %c0_102 = arith.constant 0 : index
    %c0_103 = arith.constant 0 : index
    %199 = vector.load %arg16[%c0_100, %c2_101, %c0_102, %c0_103] : memref<1x3x64x32xbf16, #tpu.memory_space<vmem>>, vector<1x1x64x32xbf16>
    %200 = vector.shape_cast %199 : vector<1x1x64x32xbf16> to vector<64x32xbf16>
    %cst_104 = arith.constant dense<0.000000e+00> : vector<128x32xf32>
    %201 = tpu.matmul %198, %200, %cst_104 {dimension_numbers = #tpu.dot_dimension_numbers<[1], [0], [0], [1], [0, 0, 1, 1], [], []>} : vector<128x64xbf16>, vector<64x32xbf16>, vector<128x32xf32> -> vector<128x32xf32>
    %202 = arith.addf %197, %201 : vector<128x32xf32>
    %203 = vector.broadcast %178 : vector<1x32xf32> to vector<128x32xf32>
    %204 = arith.addf %202, %203 : vector<128x32xf32>
    %205 = arith.addf %100, %204 : vector<128x32xf32>
    %c0_105 = arith.constant 0 : index
    %c0_106 = arith.constant 0 : index
    %206 = vector.load %arg21[%c0_105, %c0_106] : memref<128x32xf32, #tpu.memory_space<vmem>>, vector<128x32xf32>
    tpu.vector_store %arg21[%c0_105, %c0_106], %205 {strides = array<i32>} : memref<128x32xf32, #tpu.memory_space<vmem>>, vector<128x32xf32>,
    %c1_i32_107 = arith.constant 1 : i32
    %207 = arith.cmpi eq, %arg1, %c1_i32_107 : i32
    %208 = arith.extui %207 : i1 to i32
    %c0_i32_108 = arith.constant 0 : i32
    %209 = arith.cmpi ne, %208, %c0_i32_108 : i32
    scf.if %209 {
      %c0_109 = arith.constant 0 : index
      %c0_110 = arith.constant 0 : index
      %210 = vector.load %arg18[%c0_109, %c0_110] : memref<1x32xf32, #tpu.memory_space<vmem>>, vector<1x32xf32>
      %c0_111 = arith.constant 0 : index
      %c0_112 = arith.constant 0 : index
      %211 = vector.load %arg19[%c0_111, %c0_112] : memref<1x32xf32, #tpu.memory_space<vmem>>, vector<1x32xf32>
      %cst_113 = arith.constant dense<0.000000e+00> : vector<128xf32>
      %212 = vector.multi_reduction <add>, %205, %cst_113 [1] : vector<128x32xf32> to vector<128xf32>
      %213 = vector.shape_cast %212 : vector<128xf32> to vector<128x1xf32>
      %cst_114 = arith.constant 3.200000e+01 : f32
      %214 = vector.broadcast %cst_114 : f32 to vector<128x1xf32>
      %215 = arith.divf %213, %214 : vector<128x1xf32>
      %216 = vector.broadcast %215 : vector<128x1xf32> to vector<128x32xf32>
      %217 = arith.subf %205, %216 : vector<128x32xf32>
      %218 = arith.mulf %217, %217 : vector<128x32xf32>
      %cst_115 = arith.constant dense<0.000000e+00> : vector<128xf32>
      %219 = vector.multi_reduction <add>, %218, %cst_115 [1] : vector<128x32xf32> to vector<128xf32>
      %220 = vector.shape_cast %219 : vector<128xf32> to vector<128x1xf32>
      %cst_116 = arith.constant 0.0322580636 : f32
      %221 = vector.broadcast %cst_116 : f32 to vector<128x1xf32>
      %222 = arith.mulf %220, %221 : vector<128x1xf32>
      %223 = math.sqrt %222 : vector<128x1xf32>
      %cst_117 = arith.constant 9.99999997E-7 : f32
      %224 = vector.broadcast %cst_117 : f32 to vector<128x1xf32>
      %225 = arith.addf %223, %224 : vector<128x1xf32>
      %226 = tpu.reciprocal %225 : vector<128x1xf32> -> vector<128x1xf32>
      %227 = vector.broadcast %226 : vector<128x1xf32> to vector<128x32xf32>
      %228 = arith.mulf %217, %227 : vector<128x32xf32>
      %229 = vector.broadcast %210 : vector<1x32xf32> to vector<128x32xf32>
      %230 = arith.mulf %229, %228 : vector<128x32xf32>
      %231 = vector.broadcast %211 : vector<1x32xf32> to vector<128x32xf32>
      %232 = arith.addf %230, %231 : vector<128x32xf32>
      %233 = vector.shape_cast %232 : vector<128x32xf32> to vector<16x8x32xf32>
      %c0_118 = arith.constant 0 : index
      %c0_119 = arith.constant 0 : index
      %c0_120 = arith.constant 0 : index
      %234 = vector.load %arg20[%c0_118, %c0_119, %c0_120] : memref<16x8x32xf32, #tpu.memory_space<vmem>>, vector<16x8x32xf32>
      tpu.vector_store %arg20[%c0_118, %c0_119, %c0_120], %233 {strides = array<i32>} : memref<16x8x32xf32, #tpu.memory_space<vmem>>, vector<16x8x32xf32>,
    } else {
    }
    return
  }
  func.func @transform_0(%arg0: i32, %arg1: i32) -> (i32, i32, i32) {
    %c0_i32 = arith.constant 0 : i32
    %c0_i32_0 = arith.constant 0 : i32
    %c0_i32_1 = arith.constant 0 : i32
    return %arg0, %c0_i32, %c0_i32_0 : i32, i32, i32
  }
  func.func @transform_1(%arg0: i32, %arg1: i32) -> (i32, i32, i32) {
    %c0_i32 = arith.constant 0 : i32
    %c0_i32_0 = arith.constant 0 : i32
    %c0_i32_1 = arith.constant 0 : i32
    return %arg0, %c0_i32, %c0_i32_0 : i32, i32, i32
  }
  func.func @transform_2(%arg0: i32, %arg1: i32) -> (i32, i32) {
    %c0_i32 = arith.constant 0 : i32
    %c0_i32_0 = arith.constant 0 : i32
    %c0_i32_1 = arith.constant 0 : i32
    return %c0_i32, %c0_i32_0 : i32, i32
  }
  func.func @transform_3(%arg0: i32, %arg1: i32) -> (i32, i32) {
    %c0_i32 = arith.constant 0 : i32
    %c0_i32_0 = arith.constant 0 : i32
    %c0_i32_1 = arith.constant 0 : i32
    return %c0_i32, %c0_i32_0 : i32, i32
  }
  func.func @transform_4(%arg0: i32, %arg1: i32) -> (i32, i32, i32) {
    %c0_i32 = arith.constant 0 : i32
    %c0_i32_0 = arith.constant 0 : i32
    %c0_i32_1 = arith.constant 0 : i32
    return %arg1, %c0_i32, %c0_i32_0 : i32, i32, i32
  }
  func.func @transform_5(%arg0: i32, %arg1: i32) -> (i32, i32, i32) {
    %c0_i32 = arith.constant 0 : i32
    %c0_i32_0 = arith.constant 0 : i32
    %c0_i32_1 = arith.constant 0 : i32
    return %arg1, %c0_i32, %c0_i32_0 : i32, i32, i32
  }
  func.func @transform_6(%arg0: i32, %arg1: i32) -> (i32, i32, i32) {
    %c0_i32 = arith.constant 0 : i32
    %c0_i32_0 = arith.constant 0 : i32
    %c0_i32_1 = arith.constant 0 : i32
    return %arg1, %c0_i32, %c0_i32_0 : i32, i32, i32
  }
  func.func @transform_7(%arg0: i32, %arg1: i32) -> (i32, i32, i32) {
    %c0_i32 = arith.constant 0 : i32
    %c0_i32_0 = arith.constant 0 : i32
    %c0_i32_1 = arith.constant 0 : i32
    return %arg1, %c0_i32, %c0_i32_0 : i32, i32, i32
  }
  func.func @transform_8(%arg0: i32, %arg1: i32) -> (i32, i32, i32) {
    %c0_i32 = arith.constant 0 : i32
    %c0_i32_0 = arith.constant 0 : i32
    %c0_i32_1 = arith.constant 0 : i32
    return %arg1, %c0_i32, %c0_i32_0 : i32, i32, i32
  }
  func.func @transform_9(%arg0: i32, %arg1: i32) -> (i32, i32, i32, i32) {
    %c0_i32 = arith.constant 0 : i32
    %c0_i32_0 = arith.constant 0 : i32
    %c0_i32_1 = arith.constant 0 : i32
    %c0_i32_2 = arith.constant 0 : i32
    return %arg1, %c0_i32, %c0_i32_0, %c0_i32_1 : i32, i32, i32, i32
  }
  func.func @transform_10(%arg0: i32, %arg1: i32) -> (i32, i32, i32) {
    %c0_i32 = arith.constant 0 : i32
    %c0_i32_0 = arith.constant 0 : i32
    %c0_i32_1 = arith.constant 0 : i32
    return %arg1, %c0_i32, %c0_i32_0 : i32, i32, i32
  }
  func.func @transform_11(%arg0: i32, %arg1: i32) -> (i32, i32, i32) {
    %c0_i32 = arith.constant 0 : i32
    %c0_i32_0 = arith.constant 0 : i32
    %c0_i32_1 = arith.constant 0 : i32
    return %arg1, %c0_i32, %c0_i32_0 : i32, i32, i32
  }
  func.func @transform_12(%arg0: i32, %arg1: i32) -> (i32, i32, i32, i32) {
    %c0_i32 = arith.constant 0 : i32
    %c0_i32_0 = arith.constant 0 : i32
    %c0_i32_1 = arith.constant 0 : i32
    %c0_i32_2 = arith.constant 0 : i32
    return %arg1, %c0_i32, %c0_i32_0, %c0_i32_1 : i32, i32, i32, i32
  }
  func.func @transform_13(%arg0: i32, %arg1: i32) -> (i32, i32, i32) {
    %c0_i32 = arith.constant 0 : i32
    %c0_i32_0 = arith.constant 0 : i32
    %c0_i32_1 = arith.constant 0 : i32
    return %arg1, %c0_i32, %c0_i32_0 : i32, i32, i32
  }
  func.func @transform_14(%arg0: i32, %arg1: i32) -> (i32, i32, i32, i32) {
    %c0_i32 = arith.constant 0 : i32
    %c0_i32_0 = arith.constant 0 : i32
    %c0_i32_1 = arith.constant 0 : i32
    %c0_i32_2 = arith.constant 0 : i32
    return %arg1, %c0_i32, %c0_i32_0, %c0_i32_1 : i32, i32, i32, i32
  }
  func.func @transform_15(%arg0: i32, %arg1: i32) -> (i32, i32, i32) {
    %c0_i32 = arith.constant 0 : i32
    %c0_i32_0 = arith.constant 0 : i32
    %c0_i32_1 = arith.constant 0 : i32
    return %arg1, %c0_i32, %c0_i32_0 : i32, i32, i32
  }
  func.func @transform_16(%arg0: i32, %arg1: i32) -> (i32, i32) {
    %c0_i32 = arith.constant 0 : i32
    %c0_i32_0 = arith.constant 0 : i32
    %c0_i32_1 = arith.constant 0 : i32
    return %c0_i32, %c0_i32_0 : i32, i32
  }
  func.func @transform_17(%arg0: i32, %arg1: i32) -> (i32, i32) {
    %c0_i32 = arith.constant 0 : i32
    %c0_i32_0 = arith.constant 0 : i32
    %c0_i32_1 = arith.constant 0 : i32
    return %c0_i32, %c0_i32_0 : i32, i32
  }
  func.func @transform_18(%arg0: i32, %arg1: i32) -> (i32, i32, i32) {
    %c0_i32 = arith.constant 0 : i32
    %c0_i32_0 = arith.constant 0 : i32
    %c0_i32_1 = arith.constant 0 : i32
    return %arg0, %c0_i32, %c0_i32_0 : i32, i32, i32
  }
}

</mosaic_0001>

<llo_original>
// kernel: tpu_custom_call.1
$region0: #{tpu_custom_call.1}
  #allocation0 [shape = 'u32[]', space=smem, size = 0x4, offset = 0x4, fixed_abs, tag = 'smem constant byte address 0x4 - core index']
  #allocation1 [shape = 'u32[144,128]{1,0:T(1,128)}', space=vmem, size = 0x12000, scoped, tag = 'internal scratch']
  #allocation2 [shape = 'f32[128,32]{1,0:T(8,128)}', space=vmem, size = 0x10000, scoped, tag = 'scratch operand']
  %s0 = inlined_call_operand.vmem [shape: f32[32,8,32], index: 0, kind: input, shape index: {}]
  %s1 = inlined_call_operand.vmem [shape: f32[32,1,8], index: 1, kind: input, shape index: {}]
  %s2 = inlined_call_operand.vmem [shape: f32[8,32], index: 2, kind: input, shape index: {}]
  %s3 = inlined_call_operand.hbm [shape: bf16[32,32], index: 3, kind: input, shape index: {}]
  %s4 = inlined_call_operand.vmem [shape: f32[2,1,32], index: 4, kind: input, shape index: {}]
  %s5 = inlined_call_operand.vmem [shape: f32[2,1,32], index: 5, kind: input, shape index: {}]
  %s6 = inlined_call_operand.vmem [shape: bf16[2,32,32], index: 6, kind: input, shape index: {}]
  %s7 = inlined_call_operand.vmem [shape: bf16[2,32,32], index: 7, kind: input, shape index: {}]
  %s8 = inlined_call_operand.hbm [shape: bf16[2,32,32], index: 8, kind: input, shape index: {}]
  %s9 = inlined_call_operand.hbm [shape: bf16[2,2,16,32], index: 9, kind: input, shape index: {}]
  %s10 = inlined_call_operand.vmem [shape: f32[2,1,32], index: 10, kind: input, shape index: {}]
  %s11 = inlined_call_operand.vmem [shape: f32[2,1,32], index: 11, kind: input, shape index: {}]
  %s12 = inlined_call_operand.hbm [shape: bf16[2,3,32,64], index: 12, kind: input, shape index: {}]
  %s13 = inlined_call_operand.vmem [shape: f32[2,1,64], index: 13, kind: input, shape index: {}]
  %s14 = inlined_call_operand.vmem [shape: bf16[2,3,64,32], index: 14, kind: input, shape index: {}]
  %s15 = inlined_call_operand.vmem [shape: f32[2,1,32], index: 15, kind: input, shape index: {}]
  %s16 = inlined_call_operand.vmem [shape: f32[1,32], index: 16, kind: input, shape index: {}]
  %s17 = inlined_call_operand.vmem [shape: f32[1,32], index: 17, kind: input, shape index: {}]
  %s18 = inlined_call_operand.hbm [shape: f32[32,8,32], index: 18, kind: output, shape index: {}]
  %s19 = sld [smem:[#allocation0]]
  $region129: #{tpu_custom_call.1} parent=0
    _
  %s21 = ssub.s32 1, %s19
  %s22 = scalar_select 0, %s21, %s19
  $region1: #{tpu_custom_call.1} parent=0
    #allocation3 [shape = 'u8[8192]{0}', space=vmem, size = 0x2000, scoped, tag = 'input window, operand 3, single buffered']
    #allocation4 [shape = 's32[2]{0}', space=sflag, size = 0x8, scoped, tag = 'scoped memory for tpu_custom_call.1']
    #allocation5 [shape = 's32[2]{0}', space=sflag, size = 0x8, scoped, tag = 'scoped memory for tpu_custom_call.1']
    #allocation6 [shape = 'u8[16384]{0}', space=vmem, size = 0x4000, scoped, tag = 'input window, operand 8']
    #allocation7 [shape = 's32[2]{0}', space=sflag, size = 0x8, scoped, tag = 'scoped memory for tpu_custom_call.1']
    #allocation8 [shape = 'u8[16384]{0}', space=vmem, size = 0x4000, scoped, tag = 'input window, operand 9']
    #allocation9 [shape = 'u8[49152]{0}', space=vmem, size = 0xc000, scoped, tag = 'input window, operand 12']
    #allocation10 [shape = 's32[2]{0}', space=sflag, size = 0x8, scoped, tag = 'scoped memory for tpu_custom_call.1']
    #allocation11 [shape = 'u8[131072]{0}', space=vmem, size = 0x20000, scoped, tag = 'output window, operand 0']
    %23 = vsyncpa [#allocation4], 0
    %24 = vsyncpa [#allocation7], 0
    %s25 = scalar_lea.sflag [#allocation7], 1
    %26 = vsyncpa %s25, 0
    %27 = vsyncpa [#allocation10], 0
    %s28 = scalar_lea.sflag [#allocation10], 1
    %29 = vsyncpa %s28, 0
    %30 = vsyncpa [#allocation5], 0
    %s31 = scalar_lea.sflag [#allocation5], 1
    %32 = vsyncpa %s31, 0
    loop: start=0, step=1, limit=6
    $region2: #{tpu_custom_call.1} parent=1 // loop_pre_header
      _
    $region3: #{tpu_custom_call.1} parent=1 // loop_header
      %s34 = sphi 0, %s38
      %p35 = scmp.ge.s32.totalorder %s34, 6
      %s41 = sphi 0, %s53
      %s42 = sphi 0, %s49
      %s43 = sphi 0, %s41
      %s44 = sphi 0, %s42
      %s45 = sphi 0, %s43
      %s46 = sphi 0, %s44
      %s56 = sphi 0, %s58
      %s59 = sphi 0, %s56
      %s60 = sphi 0, %s59
      %s76 = sphi 0, %s60
      %s82 = sphi 0, %s84
      %s85 = sphi 0, %s82
      %s86 = sphi 0, %s85
      %s102 = sphi 0, %s86
      %s106 = sphi 0, %s106
      %s108 = sphi 0, %s106
      %s109 = sphi 0, %s108
      %s123 = sphi 0, %s109
      %s127 = sphi 0, %s127
      %s129 = sphi 0, %s127
      %s130 = sphi 0, %s129
      %s144 = sphi 0, %s130
      %s150 = sphi 0, %s152
      %s153 = sphi 0, %s150
      %s154 = sphi 0, %s153
      %s170 = sphi 0, %s154
      %s176 = sphi 0, %s178
      %s179 = sphi 0, %s176
      %s180 = sphi 0, %s179
      %s196 = sphi 0, %s180
      %s202 = sphi 0, %s204
      %s205 = sphi 0, %s202
      %s206 = sphi 0, %s205
      %s222 = sphi 0, %s206
      %s228 = sphi 0, %s230
      %s231 = sphi 0, %s228
      %s232 = sphi 0, %s231
      %s248 = sphi 0, %s232
      %s254 = sphi 0, %s256
      %s257 = sphi 0, %s254
      %s258 = sphi 0, %s257
      %s274 = sphi 0, %s258
      %s280 = sphi 0, %s282
      %s283 = sphi 0, %s280
      %s284 = sphi 0, %s283
      %s300 = sphi 0, %s284
      %s306 = sphi 0, %s308
      %s309 = sphi 0, %s306
      %s310 = sphi 0, %s309
      %s326 = sphi 0, %s310
      %s332 = sphi 0, %s334
      %s335 = sphi 0, %s332
      %s336 = sphi 0, %s335
      %s352 = sphi 0, %s336
      %s358 = sphi 0, %s360
      %s361 = sphi 0, %s358
      %s362 = sphi 0, %s361
      %s378 = sphi 0, %s362
      %s384 = sphi 0, %s386
      %s387 = sphi 0, %s384
      %s388 = sphi 0, %s387
      %s404 = sphi 0, %s388
      %s410 = sphi 0, %s412
      %s413 = sphi 0, %s410
      %s414 = sphi 0, %s413
      %s430 = sphi 0, %s414
      %s436 = sphi 0, %s438
      %s439 = sphi 0, %s436
      %s440 = sphi 0, %s439
      %s456 = sphi 0, %s440
      %s460 = sphi 0, %s460
      %s462 = sphi 0, %s460
      %s463 = sphi 0, %s462
      %s477 = sphi 0, %s463
      %s481 = sphi 0, %s481
      %s483 = sphi 0, %s481
      %s484 = sphi 0, %s483
      %s498 = sphi 0, %s484
      %s504 = sphi 0, %s506
      %s507 = sphi 0, %s504
      %s508 = sphi 0, %s507
      %s524 = sphi 0, %s508
    $region4: #{tpu_custom_call.1} parent=1 // loop_header_branch
      %37 = sbr.rel (%p35) target = $region8
    $region5: #{tpu_custom_call.1} parent=1 // loop_body
      %s39 = ssub.s32 %s34, 1
      %s40 = ssub.s32 %s34, 2
      %s47 = sadd.s32 1, %s42
      %p48 = scmp.ge.s32.totalorder %s47, 2
      %s49 = scalar_select %p48, 0, %s47
      %s50 = sadd.s32 1, %s41
      %s51 = scalar_select %p48, %s50, %s41
      %p52 = scmp.ge.s32.totalorder %s51, 2
      %s53 = scalar_select %p52, 0, %s51
      %s54 = ssub.s32 %s41, %s53
      %p55 = scmp.eq.s32.totalorder %s54, 0
      %s57 = sadd.s32 %s56, 1
      %s58 = scalar_select %p55, %s56, %s57
      %p61 = pneg %p55
      %p62 = scmp.eq.s32.totalorder %s34, 3
      %p63 = por %p61, %p62
      %p64 = scmp.ne.s32.totalorder %s56, %s59
      %p65 = scmp.eq.s32.totalorder %s34, 0
      %p66 = por %p64, %p65
      %p67 = scmp.ne.s32.totalorder %s56, %s59
      %p68 = scmp.eq.s32.totalorder %s39, 3
      %p69 = por %p67, %p68
      %p70 = scmp.ne.s32.totalorder %s59, %s60
      %p71 = scmp.eq.s32.totalorder %s39, 0
      %p72 = por %p70, %p71
      %p73 = scmp.ne.s32.totalorder %s59, %s60
      %p74 = scmp.eq.s32.totalorder %s40, 3
      %p75 = por %p73, %p74
      %p77 = scmp.ne.s32.totalorder %s60, %s76
      %p78 = scmp.eq.s32.totalorder %s40, 0
      %p79 = por %p77, %p78
      %s80 = ssub.s32 %s41, %s53
      %p81 = scmp.eq.s32.totalorder %s80, 0
      %s83 = sadd.s32 %s82, 1
      %s84 = scalar_select %p81, %s82, %s83
      %p87 = pneg %p81
      %p88 = scmp.eq.s32.totalorder %s34, 3
      %p89 = por %p87, %p88
      %p90 = scmp.ne.s32.totalorder %s82, %s85
      %p91 = scmp.eq.s32.totalorder %s34, 0
      %p92 = por %p90, %p91
      %p93 = scmp.ne.s32.totalorder %s82, %s85
      %p94 = scmp.eq.s32.totalorder %s39, 3
      %p95 = por %p93, %p94
      %p96 = scmp.ne.s32.totalorder %s85, %s86
      %p97 = scmp.eq.s32.totalorder %s39, 0
      %p98 = por %p96, %p97
      %p99 = scmp.ne.s32.totalorder %s85, %s86
      %p100 = scmp.eq.s32.totalorder %s40, 3
      %p101 = por %p99, %p100
      %p103 = scmp.ne.s32.totalorder %s86, %s102
      %p104 = scmp.eq.s32.totalorder %s40, 0
      %p105 = por %p103, %p104
      %s107 = sadd.s32 %s106, 1
      %p110 = scmp.eq.s32.totalorder %s34, 3
      %p111 = scmp.ne.s32.totalorder %s106, %s108
      %p112 = scmp.eq.s32.totalorder %s34, 0
      %p113 = por %p111, %p112
      %p114 = scmp.ne.s32.totalorder %s106, %s108
      %p115 = scmp.eq.s32.totalorder %s39, 3
      %p116 = por %p114, %p115
      %p117 = scmp.ne.s32.totalorder %s108, %s109
      %p118 = scmp.eq.s32.totalorder %s39, 0
      %p119 = por %p117, %p118
      %p120 = scmp.ne.s32.totalorder %s108, %s109
      %p121 = scmp.eq.s32.totalorder %s40, 3
      %p122 = por %p120, %p121
      %p124 = scmp.ne.s32.totalorder %s109, %s123
      %p125 = scmp.eq.s32.totalorder %s40, 0
      %p126 = por %p124, %p125
      %s128 = sadd.s32 %s127, 1
      %p131 = scmp.eq.s32.totalorder %s34, 3
      %p132 = scmp.ne.s32.totalorder %s127, %s129
      %p133 = scmp.eq.s32.totalorder %s34, 0
      %p134 = por %p132, %p133
      %p135 = scmp.ne.s32.totalorder %s127, %s129
      %p136 = scmp.eq.s32.totalorder %s39, 3
      %p137 = por %p135, %p136
      %p138 = scmp.ne.s32.totalorder %s129, %s130
      %p139 = scmp.eq.s32.totalorder %s39, 0
      %p140 = por %p138, %p139
      %p141 = scmp.ne.s32.totalorder %s129, %s130
      %p142 = scmp.eq.s32.totalorder %s40, 3
      %p143 = por %p141, %p142
      %p145 = scmp.ne.s32.totalorder %s130, %s144
      %p146 = scmp.eq.s32.totalorder %s40, 0
      %p147 = por %p145, %p146
      %s148 = ssub.s32 %s42, %s49
      %p149 = scmp.eq.s32.totalorder %s148, 0
      %s151 = sadd.s32 %s150, 1
      %s152 = scalar_select %p149, %s150, %s151
      %p155 = pneg %p149
      %p156 = scmp.eq.s32.totalorder %s34, 3
      %p157 = por %p155, %p156
      %p158 = scmp.ne.s32.totalorder %s150, %s153
      %p159 = scmp.eq.s32.totalorder %s34, 0
      %p160 = por %p158, %p159
      %p161 = scmp.ne.s32.totalorder %s150, %s153
      %p162 = scmp.eq.s32.totalorder %s39, 3
      %p163 = por %p161, %p162
      %p164 = scmp.ne.s32.totalorder %s153, %s154
      %p165 = scmp.eq.s32.totalorder %s39, 0
      %p166 = por %p164, %p165
      %p167 = scmp.ne.s32.totalorder %s153, %s154
      %p168 = scmp.eq.s32.totalorder %s40, 3
      %p169 = por %p167, %p168
      %p171 = scmp.ne.s32.totalorder %s154, %s170
      %p172 = scmp.eq.s32.totalorder %s40, 0
      %p173 = por %p171, %p172
      %s174 = ssub.s32 %s42, %s49
      %p175 = scmp.eq.s32.totalorder %s174, 0
      %s177 = sadd.s32 %s176, 1
      %s178 = scalar_select %p175, %s176, %s177
      %p181 = pneg %p175
      %p182 = scmp.eq.s32.totalorder %s34, 3
      %p183 = por %p181, %p182
      %p184 = scmp.ne.s32.totalorder %s176, %s179
      %p185 = scmp.eq.s32.totalorder %s34, 0
      %p186 = por %p184, %p185
      %p187 = scmp.ne.s32.totalorder %s176, %s179
      %p188 = scmp.eq.s32.totalorder %s39, 3
      %p189 = por %p187, %p188
      %p190 = scmp.ne.s32.totalorder %s179, %s180
      %p191 = scmp.eq.s32.totalorder %s39, 0
      %p192 = por %p190, %p191
      %p193 = scmp.ne.s32.totalorder %s179, %s180
      %p194 = scmp.eq.s32.totalorder %s40, 3
      %p195 = por %p193, %p194
      %p197 = scmp.ne.s32.totalorder %s180, %s196
      %p198 = scmp.eq.s32.totalorder %s40, 0
      %p199 = por %p197, %p198
      %s200 = ssub.s32 %s42, %s49
      %p201 = scmp.eq.s32.totalorder %s200, 0
      %s203 = sadd.s32 %s202, 1
      %s204 = scalar_select %p201, %s202, %s203
      %p207 = pneg %p201
      %p208 = scmp.eq.s32.totalorder %s34, 3
      %p209 = por %p207, %p208
      %p210 = scmp.ne.s32.totalorder %s202, %s205
      %p211 = scmp.eq.s32.totalorder %s34, 0
      %p212 = por %p210, %p211
      %p213 = scmp.ne.s32.totalorder %s202, %s205
      %p214 = scmp.eq.s32.totalorder %s39, 3
      %p215 = por %p213, %p214
      %p216 = scmp.ne.s32.totalorder %s205, %s206
      %p217 = scmp.eq.s32.totalorder %s39, 0
      %p218 = por %p216, %p217
      %p219 = scmp.ne.s32.totalorder %s205, %s206
      %p220 = scmp.eq.s32.totalorder %s40, 3
      %p221 = por %p219, %p220
      %p223 = scmp.ne.s32.totalorder %s206, %s222
      %p224 = scmp.eq.s32.totalorder %s40, 0
      %p225 = por %p223, %p224
      %s226 = ssub.s32 %s42, %s49
      %p227 = scmp.eq.s32.totalorder %s226, 0
      %s229 = sadd.s32 %s228, 1
      %s230 = scalar_select %p227, %s228, %s229
      %p233 = pneg %p227
      %p234 = scmp.eq.s32.totalorder %s34, 3
      %p235 = por %p233, %p234
      %p236 = scmp.ne.s32.totalorder %s228, %s231
      %p237 = scmp.eq.s32.totalorder %s34, 0
      %p238 = por %p236, %p237
      %p239 = scmp.ne.s32.totalorder %s228, %s231
      %p240 = scmp.eq.s32.totalorder %s39, 3
      %p241 = por %p239, %p240
      %p242 = scmp.ne.s32.totalorder %s231, %s232
      %p243 = scmp.eq.s32.totalorder %s39, 0
      %p244 = por %p242, %p243
      %p245 = scmp.ne.s32.totalorder %s231, %s232
      %p246 = scmp.eq.s32.totalorder %s40, 3
      %p247 = por %p245, %p246
      %p249 = scmp.ne.s32.totalorder %s232, %s248
      %p250 = scmp.eq.s32.totalorder %s40, 0
      %p251 = por %p249, %p250
      %s252 = ssub.s32 %s42, %s49
      %p253 = scmp.eq.s32.totalorder %s252, 0
      %s255 = sadd.s32 %s254, 1
      %s256 = scalar_select %p253, %s254, %s255
      %p259 = pneg %p253
      %p260 = scmp.eq.s32.totalorder %s34, 3
      %p261 = por %p259, %p260
      %p262 = scmp.ne.s32.totalorder %s254, %s257
      %p263 = scmp.eq.s32.totalorder %s34, 0
      %p264 = por %p262, %p263
      %p265 = scmp.ne.s32.totalorder %s254, %s257
      %p266 = scmp.eq.s32.totalorder %s39, 3
      %p267 = por %p265, %p266
      %p268 = scmp.ne.s32.totalorder %s257, %s258
      %p269 = scmp.eq.s32.totalorder %s39, 0
      %p270 = por %p268, %p269
      %p271 = scmp.ne.s32.totalorder %s257, %s258
      %p272 = scmp.eq.s32.totalorder %s40, 3
      %p273 = por %p271, %p272
      %p275 = scmp.ne.s32.totalorder %s258, %s274
      %p276 = scmp.eq.s32.totalorder %s40, 0
      %p277 = por %p275, %p276
      %s278 = ssub.s32 %s42, %s49
      %p279 = scmp.eq.s32.totalorder %s278, 0
      %s281 = sadd.s32 %s280, 1
      %s282 = scalar_select %p279, %s280, %s281
      %p285 = pneg %p279
      %p286 = scmp.eq.s32.totalorder %s34, 3
      %p287 = por %p285, %p286
      %p288 = scmp.ne.s32.totalorder %s280, %s283
      %p289 = scmp.eq.s32.totalorder %s34, 0
      %p290 = por %p288, %p289
      %p291 = scmp.ne.s32.totalorder %s280, %s283
      %p292 = scmp.eq.s32.totalorder %s39, 3
      %p293 = por %p291, %p292
      %p294 = scmp.ne.s32.totalorder %s283, %s284
      %p295 = scmp.eq.s32.totalorder %s39, 0
      %p296 = por %p294, %p295
      %p297 = scmp.ne.s32.totalorder %s283, %s284
      %p298 = scmp.eq.s32.totalorder %s40, 3
      %p299 = por %p297, %p298
      %p301 = scmp.ne.s32.totalorder %s284, %s300
      %p302 = scmp.eq.s32.totalorder %s40, 0
      %p303 = por %p301, %p302
      %s304 = ssub.s32 %s42, %s49
      %p305 = scmp.eq.s32.totalorder %s304, 0
      %s307 = sadd.s32 %s306, 1
      %s308 = scalar_select %p305, %s306, %s307
      %p311 = pneg %p305
      %p312 = scmp.eq.s32.totalorder %s34, 3
      %p313 = por %p311, %p312
      %p314 = scmp.ne.s32.totalorder %s306, %s309
      %p315 = scmp.eq.s32.totalorder %s34, 0
      %p316 = por %p314, %p315
      %p317 = scmp.ne.s32.totalorder %s306, %s309
      %p318 = scmp.eq.s32.totalorder %s39, 3
      %p319 = por %p317, %p318
      %p320 = scmp.ne.s32.totalorder %s309, %s310
      %p321 = scmp.eq.s32.totalorder %s39, 0
      %p322 = por %p320, %p321
      %p323 = scmp.ne.s32.totalorder %s309, %s310
      %p324 = scmp.eq.s32.totalorder %s40, 3
      %p325 = por %p323, %p324
      %p327 = scmp.ne.s32.totalorder %s310, %s326
      %p328 = scmp.eq.s32.totalorder %s40, 0
      %p329 = por %p327, %p328
      %s330 = ssub.s32 %s42, %s49
      %p331 = scmp.eq.s32.totalorder %s330, 0
      %s333 = sadd.s32 %s332, 1
      %s334 = scalar_select %p331, %s332, %s333
      %p337 = pneg %p331
      %p338 = scmp.eq.s32.totalorder %s34, 3
      %p339 = por %p337, %p338
      %p340 = scmp.ne.s32.totalorder %s332, %s335
      %p341 = scmp.eq.s32.totalorder %s34, 0
      %p342 = por %p340, %p341
      %p343 = scmp.ne.s32.totalorder %s332, %s335
      %p344 = scmp.eq.s32.totalorder %s39, 3
      %p345 = por %p343, %p344
      %p346 = scmp.ne.s32.totalorder %s335, %s336
      %p347 = scmp.eq.s32.totalorder %s39, 0
      %p348 = por %p346, %p347
      %p349 = scmp.ne.s32.totalorder %s335, %s336
      %p350 = scmp.eq.s32.totalorder %s40, 3
      %p351 = por %p349, %p350
      %p353 = scmp.ne.s32.totalorder %s336, %s352
      %p354 = scmp.eq.s32.totalorder %s40, 0
      %p355 = por %p353, %p354
      %s356 = ssub.s32 %s42, %s49
      %p357 = scmp.eq.s32.totalorder %s356, 0
      %s359 = sadd.s32 %s358, 1
      %s360 = scalar_select %p357, %s358, %s359
      %p363 = pneg %p357
      %p364 = scmp.eq.s32.totalorder %s34, 3
      %p365 = por %p363, %p364
      %p366 = scmp.ne.s32.totalorder %s358, %s361
      %p367 = scmp.eq.s32.totalorder %s34, 0
      %p368 = por %p366, %p367
      %p369 = scmp.ne.s32.totalorder %s358, %s361
      %p370 = scmp.eq.s32.totalorder %s39, 3
      %p371 = por %p369, %p370
      %p372 = scmp.ne.s32.totalorder %s361, %s362
      %p373 = scmp.eq.s32.totalorder %s39, 0
      %p374 = por %p372, %p373
      %p375 = scmp.ne.s32.totalorder %s361, %s362
      %p376 = scmp.eq.s32.totalorder %s40, 3
      %p377 = por %p375, %p376
      %p379 = scmp.ne.s32.totalorder %s362, %s378
      %p380 = scmp.eq.s32.totalorder %s40, 0
      %p381 = por %p379, %p380
      %s382 = ssub.s32 %s42, %s49
      %p383 = scmp.eq.s32.totalorder %s382, 0
      %s385 = sadd.s32 %s384, 1
      %s386 = scalar_select %p383, %s384, %s385
      %p389 = pneg %p383
      %p390 = scmp.eq.s32.totalorder %s34, 3
      %p391 = por %p389, %p390
      %p392 = scmp.ne.s32.totalorder %s384, %s387
      %p393 = scmp.eq.s32.totalorder %s34, 0
      %p394 = por %p392, %p393
      %p395 = scmp.ne.s32.totalorder %s384, %s387
      %p396 = scmp.eq.s32.totalorder %s39, 3
      %p397 = por %p395, %p396
      %p398 = scmp.ne.s32.totalorder %s387, %s388
      %p399 = scmp.eq.s32.totalorder %s39, 0
      %p400 = por %p398, %p399
      %p401 = scmp.ne.s32.totalorder %s387, %s388
      %p402 = scmp.eq.s32.totalorder %s40, 3
      %p403 = por %p401, %p402
      %p405 = scmp.ne.s32.totalorder %s388, %s404
      %p406 = scmp.eq.s32.totalorder %s40, 0
      %p407 = por %p405, %p406
      %s408 = ssub.s32 %s42, %s49
      %p409 = scmp.eq.s32.totalorder %s408, 0
      %s411 = sadd.s32 %s410, 1
      %s412 = scalar_select %p409, %s410, %s411
      %p415 = pneg %p409
      %p416 = scmp.eq.s32.totalorder %s34, 3
      %p417 = por %p415, %p416
      %p418 = scmp.ne.s32.totalorder %s410, %s413
      %p419 = scmp.eq.s32.totalorder %s34, 0
      %p420 = por %p418, %p419
      %p421 = scmp.ne.s32.totalorder %s410, %s413
      %p422 = scmp.eq.s32.totalorder %s39, 3
      %p423 = por %p421, %p422
      %p424 = scmp.ne.s32.totalorder %s413, %s414
      %p425 = scmp.eq.s32.totalorder %s39, 0
      %p426 = por %p424, %p425
      %p427 = scmp.ne.s32.totalorder %s413, %s414
      %p428 = scmp.eq.s32.totalorder %s40, 3
      %p429 = por %p427, %p428
      %p431 = scmp.ne.s32.totalorder %s414, %s430
      %p432 = scmp.eq.s32.totalorder %s40, 0
      %p433 = por %p431, %p432
      %s434 = ssub.s32 %s42, %s49
      %p435 = scmp.eq.s32.totalorder %s434, 0
      %s437 = sadd.s32 %s436, 1
      %s438 = scalar_select %p435, %s436, %s437
      %p441 = pneg %p435
      %p442 = scmp.eq.s32.totalorder %s34, 3
      %p443 = por %p441, %p442
      %p444 = scmp.ne.s32.totalorder %s436, %s439
      %p445 = scmp.eq.s32.totalorder %s34, 0
      %p446 = por %p444, %p445
      %p447 = scmp.ne.s32.totalorder %s436, %s439
      %p448 = scmp.eq.s32.totalorder %s39, 3
      %p449 = por %p447, %p448
      %p450 = scmp.ne.s32.totalorder %s439, %s440
      %p451 = scmp.eq.s32.totalorder %s39, 0
      %p452 = por %p450, %p451
      %p453 = scmp.ne.s32.totalorder %s439, %s440
      %p454 = scmp.eq.s32.totalorder %s40, 3
      %p455 = por %p453, %p454
      %p457 = scmp.ne.s32.totalorder %s440, %s456
      %p458 = scmp.eq.s32.totalorder %s40, 0
      %p459 = por %p457, %p458
      %s461 = sadd.s32 %s460, 1
      %p464 = scmp.eq.s32.totalorder %s34, 3
      %p465 = scmp.ne.s32.totalorder %s460, %s462
      %p466 = scmp.eq.s32.totalorder %s34, 0
      %p467 = por %p465, %p466
      %p468 = scmp.ne.s32.totalorder %s460, %s462
      %p469 = scmp.eq.s32.totalorder %s39, 3
      %p470 = por %p468, %p469
      %p471 = scmp.ne.s32.totalorder %s462, %s463
      %p472 = scmp.eq.s32.totalorder %s39, 0
      %p473 = por %p471, %p472
      %p474 = scmp.ne.s32.totalorder %s462, %s463
      %p475 = scmp.eq.s32.totalorder %s40, 3
      %p476 = por %p474, %p475
      %p478 = scmp.ne.s32.totalorder %s463, %s477
      %p479 = scmp.eq.s32.totalorder %s40, 0
      %p480 = por %p478, %p479
      %s482 = sadd.s32 %s481, 1
      %p485 = scmp.eq.s32.totalorder %s34, 3
      %p486 = scmp.ne.s32.totalorder %s481, %s483
      %p487 = scmp.eq.s32.totalorder %s34, 0
      %p488 = por %p486, %p487
      %p489 = scmp.ne.s32.totalorder %s481, %s483
      %p490 = scmp.eq.s32.totalorder %s39, 3
      %p491 = por %p489, %p490
      %p492 = scmp.ne.s32.totalorder %s483, %s484
      %p493 = scmp.eq.s32.totalorder %s39, 0
      %p494 = por %p492, %p493
      %p495 = scmp.ne.s32.totalorder %s483, %s484
      %p496 = scmp.eq.s32.totalorder %s40, 3
      %p497 = por %p495, %p496
      %p499 = scmp.ne.s32.totalorder %s484, %s498
      %p500 = scmp.eq.s32.totalorder %s40, 0
      %p501 = por %p499, %p500
      %s502 = ssub.s32 %s41, %s53
      %p503 = scmp.eq.s32.totalorder %s502, 0
      %s505 = sadd.s32 %s504, 1
      %s506 = scalar_select %p503, %s504, %s505
      %p509 = pneg %p503
      %p510 = scmp.eq.s32.totalorder %s34, 3
      %p511 = por %p509, %p510
      %p512 = scmp.ne.s32.totalorder %s504, %s507
      %p513 = scmp.eq.s32.totalorder %s34, 0
      %p514 = por %p512, %p513
      %p515 = scmp.ne.s32.totalorder %s504, %s507
      %p516 = scmp.eq.s32.totalorder %s39, 3
      %p517 = por %p515, %p516
      %p518 = scmp.ne.s32.totalorder %s507, %s508
      %p519 = scmp.eq.s32.totalorder %s39, 0
      %p520 = por %p518, %p519
      %p521 = scmp.ne.s32.totalorder %s507, %s508
      %p522 = scmp.eq.s32.totalorder %s40, 3
      %p523 = por %p521, %p522
      %p525 = scmp.ne.s32.totalorder %s508, %s524
      %p526 = scmp.eq.s32.totalorder %s40, 0
      %p527 = por %p525, %p526
      %p528 = scmp.le.s32.totalorder 1, %s34
      %p529 = scmp.lt.s32.totalorder %s34, 5
      %p530 = pnand %p528, %p529
      %p531 = pneg %p530
      // Predicated region
      $region9: #{tpu_custom_call.1} parent=5 // pred_check
        _
      $region10: #{tpu_custom_call.1} parent=5 // pred_check_branch
        %533 = sbr.rel (%p530) target = $region12
      $region11: #{tpu_custom_call.1} parent=5 // pred_region
        %s534 = ssub.s32 %s34, 1
        // Predicated region
        $region13: #{tpu_custom_call.1} parent=11 // pred_check
          %p535 = pneg %p119
        $region14: #{tpu_custom_call.1} parent=11 // pred_check_branch
          %537 = sbr.rel (%p535) target = $region16
        $region15: #{tpu_custom_call.1} parent=11 // pred_region
          _
        $region16: #{tpu_custom_call.1} parent=11 // pred_fallthru
          _
        // Predicated region
        $region17: #{tpu_custom_call.1} parent=11 // pred_check
          %p538 = pneg %p140
        $region18: #{tpu_custom_call.1} parent=11 // pred_check_branch
          %540 = sbr.rel (%p538) target = $region20
        $region19: #{tpu_custom_call.1} parent=11 // pred_region
          %s542 = ssub.s32 256, 256
          %543 = vsyncadd [#allocation4], %s542
          %s544 = sshll.u32 [#allocation3], 4
          %s545 = int_to_ptr.vmem [resolvable:$true] %s544
          %550 = dma.hbm_to_vmem [thread:$0]  %s3, 256, %s545, [#allocation4], 64, 64, 4
        $region20: #{tpu_custom_call.1} parent=11 // pred_fallthru
          _
        // Predicated region
        $region21: #{tpu_custom_call.1} parent=11 // pred_check
          %p551 = pneg %p473
        $region22: #{tpu_custom_call.1} parent=11 // pred_check_branch
          %553 = sbr.rel (%p551) target = $region24
        $region23: #{tpu_custom_call.1} parent=11 // pred_region
          _
        $region24: #{tpu_custom_call.1} parent=11 // pred_fallthru
          _
        // Predicated region
        $region25: #{tpu_custom_call.1} parent=11 // pred_check
          %p554 = pneg %p494
        $region26: #{tpu_custom_call.1} parent=11 // pred_check_branch
          %556 = sbr.rel (%p554) target = $region28
        $region27: #{tpu_custom_call.1} parent=11 // pred_region
          _
        $region28: #{tpu_custom_call.1} parent=11 // pred_fallthru
          _
      $region12: #{tpu_custom_call.1} parent=5 // pred_fallthru
        _
      %p557 = scmp.lt.s32.totalorder %s34, 4
      // Predicated region
      $region29: #{tpu_custom_call.1} parent=5 // pred_check
        %p558 = pneg %p557
      $region30: #{tpu_custom_call.1} parent=5 // pred_check_branch
        %560 = sbr.rel (%p558) target = $region32
      $region31: #{tpu_custom_call.1} parent=5 // pred_region
        // Predicated region
        $region33: #{tpu_custom_call.1} parent=31 // pred_check
          %p561 = pneg %p66
        $region34: #{tpu_custom_call.1} parent=31 // pred_check_branch
          %563 = sbr.rel (%p561) target = $region36
        $region35: #{tpu_custom_call.1} parent=31 // pred_region
          %s564 = smul.u32 16, %s41
          %p565 = scmp.lt.s32.totalorder %s564, 31
          %s566 = scalar_select %p565, %s564, 31
          %s567 = smul.addr %s566, 8
          %s568 = scalar_lea.vmem %s0, %s567
          %s569 = smul.u32 16, %s41
        $region36: #{tpu_custom_call.1} parent=31 // pred_fallthru
          _
        // Predicated region
        $region37: #{tpu_custom_call.1} parent=31 // pred_check
          %p570 = pneg %p92
        $region38: #{tpu_custom_call.1} parent=31 // pred_check_branch
          %572 = sbr.rel (%p570) target = $region40
        $region39: #{tpu_custom_call.1} parent=31 // pred_region
          %s573 = smul.u32 16, %s41
          %p574 = scmp.lt.s32.totalorder %s573, 31
          %s575 = scalar_select %p574, %s573, 31
          %s576 = scalar_lea.vmem %s1, %s575
          %s577 = smul.u32 16, %s41
        $region40: #{tpu_custom_call.1} parent=31 // pred_fallthru
          _
        // Predicated region
        $region41: #{tpu_custom_call.1} parent=31 // pred_check
          %p578 = pneg %p160
        $region42: #{tpu_custom_call.1} parent=31 // pred_check_branch
          %580 = sbr.rel (%p578) target = $region44
        $region43: #{tpu_custom_call.1} parent=31 // pred_region
          %p581 = scmp.lt.s32.totalorder %s42, 1
          %s582 = scalar_select %p581, %s42, 1
          %s583 = scalar_lea.vmem %s4, %s582
        $region44: #{tpu_custom_call.1} parent=31 // pred_fallthru
          _
        // Predicated region
        $region45: #{tpu_custom_call.1} parent=31 // pred_check
          %p584 = pneg %p186
        $region46: #{tpu_custom_call.1} parent=31 // pred_check_branch
          %586 = sbr.rel (%p584) target = $region48
        $region47: #{tpu_custom_call.1} parent=31 // pred_region
          %p587 = scmp.lt.s32.totalorder %s42, 1
          %s588 = scalar_select %p587, %s42, 1
          %s589 = scalar_lea.vmem %s5, %s588
        $region48: #{tpu_custom_call.1} parent=31 // pred_fallthru
          _
        // Predicated region
        $region49: #{tpu_custom_call.1} parent=31 // pred_check
          %p590 = pneg %p212
        $region50: #{tpu_custom_call.1} parent=31 // pred_check_branch
          %592 = sbr.rel (%p590) target = $region52
        $region51: #{tpu_custom_call.1} parent=31 // pred_region
          %p593 = scmp.lt.s32.totalorder %s42, 1
          %s594 = scalar_select %p593, %s42, 1
          %s595 = smul.addr %s594, 4
          %s596 = smul.addr %s595, 4
          %s597 = scalar_lea.vmem %s6, %s596
        $region52: #{tpu_custom_call.1} parent=31 // pred_fallthru
          _
        // Predicated region
        $region53: #{tpu_custom_call.1} parent=31 // pred_check
          %p598 = pneg %p238
        $region54: #{tpu_custom_call.1} parent=31 // pred_check_branch
          %600 = sbr.rel (%p598) target = $region56
        $region55: #{tpu_custom_call.1} parent=31 // pred_region
          %p601 = scmp.lt.s32.totalorder %s42, 1
          %s602 = scalar_select %p601, %s42, 1
          %s603 = smul.addr %s602, 4
          %s604 = smul.addr %s603, 4
          %s605 = scalar_lea.vmem %s7, %s604
        $region56: #{tpu_custom_call.1} parent=31 // pred_fallthru
          _
        // Predicated region
        $region57: #{tpu_custom_call.1} parent=31 // pred_check
          %p606 = pneg %p264
        $region58: #{tpu_custom_call.1} parent=31 // pred_check_branch
          %608 = sbr.rel (%p606) target = $region60
        $region59: #{tpu_custom_call.1} parent=31 // pred_region
          %s609 = sand.u32 %s34, 1
          %s610 = scalar_lea.sflag [#allocation7], %s609
          %s611 = sand.u32 %s254, 1
          %s612 = smul.addr %s611, 16
          %s613 = scalar_lea.vmem [#allocation6], %s612
          %s615 = ssub.s32 256, 256
          %616 = vsyncadd %s610, %s615
          %s617 = smul.addr %s42, 4
          %s618 = smul.addr %s617, 64
          %s619 = scalar_lea.hbm %s8, %s618
          %s620 = sshll.u32 %s613, 4
          %s621 = int_to_ptr.vmem [resolvable:$true] %s620
          %626 = dma.hbm_to_vmem [thread:$0]  %s619, 256, %s621, %s610, 64, 64, 4
        $region60: #{tpu_custom_call.1} parent=31 // pred_fallthru
          _
        // Predicated region
        $region61: #{tpu_custom_call.1} parent=31 // pred_check
          %p627 = pneg %p290
        $region62: #{tpu_custom_call.1} parent=31 // pred_check_branch
          %629 = sbr.rel (%p627) target = $region64
        $region63: #{tpu_custom_call.1} parent=31 // pred_region
          %s630 = sand.u32 %s34, 1
          %s631 = scalar_lea.sflag [#allocation7], %s630
          %s632 = sand.u32 %s280, 1
          %s633 = smul.addr %s632, 16
          %s634 = scalar_lea.vmem [#allocation8], %s633
          %s636 = ssub.s32 256, 256
          %637 = vsyncadd %s631, %s636
          %s638 = smul.addr %s42, 4
          %s639 = smul.addr %s638, 64
          %s640 = scalar_lea.hbm %s9, %s639
          %s641 = sshll.u32 %s634, 4
          %s642 = int_to_ptr.vmem [resolvable:$true] %s641
          %647 = dma.hbm_to_vmem [thread:$0]  %s640, 256, %s642, %s631, 64, 64, 4
        $region64: #{tpu_custom_call.1} parent=31 // pred_fallthru
          _
        // Predicated region
        $region65: #{tpu_custom_call.1} parent=31 // pred_check
          %p648 = pneg %p316
        $region66: #{tpu_custom_call.1} parent=31 // pred_check_branch
          %650 = sbr.rel (%p648) target = $region68
        $region67: #{tpu_custom_call.1} parent=31 // pred_region
          %p651 = scmp.lt.s32.totalorder %s42, 1
          %s652 = scalar_select %p651, %s42, 1
          %s653 = scalar_lea.vmem %s10, %s652
        $region68: #{tpu_custom_call.1} parent=31 // pred_fallthru
          _
        // Predicated region
        $region69: #{tpu_custom_call.1} parent=31 // pred_check
          %p654 = pneg %p342
        $region70: #{tpu_custom_call.1} parent=31 // pred_check_branch
          %656 = sbr.rel (%p654) target = $region72
        $region71: #{tpu_custom_call.1} parent=31 // pred_region
          %p657 = scmp.lt.s32.totalorder %s42, 1
          %s658 = scalar_select %p657, %s42, 1
          %s659 = scalar_lea.vmem %s11, %s658
        $region72: #{tpu_custom_call.1} parent=31 // pred_fallthru
          _
        // Predicated region
        $region73: #{tpu_custom_call.1} parent=31 // pred_check
          %p660 = pneg %p368
        $region74: #{tpu_custom_call.1} parent=31 // pred_check_branch
          %662 = sbr.rel (%p660) target = $region76
        $region75: #{tpu_custom_call.1} parent=31 // pred_region
          %s663 = sand.u32 %s358, 1
          %s664 = scalar_lea.sflag [#allocation10], %s663
          %s665 = sand.u32 %s358, 1
          %s666 = smul.addr %s665, 48
          %s667 = scalar_lea.vmem [#allocation9], %s666
          %s669 = ssub.s32 768, 768
          %670 = vsyncadd %s664, %s669
          %s671 = smul.addr %s42, 12
          %s672 = smul.addr %s671, 64
          %s673 = scalar_lea.hbm %s12, %s672
          %s674 = sshll.u32 %s667, 4
          %s675 = int_to_ptr.vmem [resolvable:$true] %s674
          %680 = dma.hbm_to_vmem [thread:$0]  %s673, 768, %s675, %s664, 64, 64, 4
        $region76: #{tpu_custom_call.1} parent=31 // pred_fallthru
          _
        // Predicated region
        $region77: #{tpu_custom_call.1} parent=31 // pred_check
          %p681 = pneg %p394
        $region78: #{tpu_custom_call.1} parent=31 // pred_check_branch
          %683 = sbr.rel (%p681) target = $region80
        $region79: #{tpu_custom_call.1} parent=31 // pred_region
          %p684 = scmp.lt.s32.totalorder %s42, 1
          %s685 = scalar_select %p684, %s42, 1
          %s686 = scalar_lea.vmem %s13, %s685
        $region80: #{tpu_custom_call.1} parent=31 // pred_fallthru
          _
        // Predicated region
        $region81: #{tpu_custom_call.1} parent=31 // pred_check
          %p687 = pneg %p420
        $region82: #{tpu_custom_call.1} parent=31 // pred_check_branch
          %689 = sbr.rel (%p687) target = $region84
        $region83: #{tpu_custom_call.1} parent=31 // pred_region
          %p690 = scmp.lt.s32.totalorder %s42, 1
          %s691 = scalar_select %p690, %s42, 1
          %s692 = smul.addr %s691, 24
          %s693 = smul.addr %s692, 4
          %s694 = scalar_lea.vmem %s14, %s693
        $region84: #{tpu_custom_call.1} parent=31 // pred_fallthru
          _
        // Predicated region
        $region85: #{tpu_custom_call.1} parent=31 // pred_check
          %p695 = pneg %p446
        $region86: #{tpu_custom_call.1} parent=31 // pred_check_branch
          %697 = sbr.rel (%p695) target = $region88
        $region87: #{tpu_custom_call.1} parent=31 // pred_region
          %p698 = scmp.lt.s32.totalorder %s42, 1
          %s699 = scalar_select %p698, %s42, 1
          %s700 = scalar_lea.vmem %s15, %s699
        $region88: #{tpu_custom_call.1} parent=31 // pred_fallthru
          _
      $region32: #{tpu_custom_call.1} parent=5 // pred_fallthru
        _
      %p701 = scmp.le.s32.totalorder 1, %s34
      %p702 = scmp.lt.s32.totalorder %s34, 5
      %p703 = pnand %p701, %p702
      %p704 = pneg %p703
      // Predicated region
      $region89: #{tpu_custom_call.1} parent=5 // pred_check
        _
      $region90: #{tpu_custom_call.1} parent=5 // pred_check_branch
        %706 = sbr.rel (%p703) target = $region92
      $region91: #{tpu_custom_call.1} parent=5 // pred_region
        %s707 = ssub.s32 %s34, 1
        // Predicated region
        $region93: #{tpu_custom_call.1} parent=91 // pred_check
          %p708 = pneg %p140
        $region94: #{tpu_custom_call.1} parent=91 // pred_check_branch
          %710 = sbr.rel (%p708) target = $region96
        $region95: #{tpu_custom_call.1} parent=91 // pred_region
          %711 = dma.done [#allocation4], 256
        $region96: #{tpu_custom_call.1} parent=91 // pred_fallthru
          _
        %s712 = sand.u32 %s39, 1
        %s713 = scalar_lea.sflag [#allocation7], %s712
        %s714 = sand.u32 %s257, 1
        %s715 = smul.addr %s714, 16
        %s716 = scalar_lea.vmem [#allocation6], %s715
        // Predicated region
        $region97: #{tpu_custom_call.1} parent=91 // pred_check
          %p717 = pneg %p270
        $region98: #{tpu_custom_call.1} parent=91 // pred_check_branch
          %719 = sbr.rel (%p717) target = $region100
        $region99: #{tpu_custom_call.1} parent=91 // pred_region
          %720 = dma.done %s713, 256
        $region100: #{tpu_custom_call.1} parent=91 // pred_fallthru
          _
        %s721 = sand.u32 %s39, 1
        %s722 = scalar_lea.sflag [#allocation7], %s721
        %s723 = sand.u32 %s283, 1
        %s724 = smul.addr %s723, 16
        %s725 = scalar_lea.vmem [#allocation8], %s724
        // Predicated region
        $region101: #{tpu_custom_call.1} parent=91 // pred_check
          %p726 = pneg %p296
        $region102: #{tpu_custom_call.1} parent=91 // pred_check_branch
          %728 = sbr.rel (%p726) target = $region104
        $region103: #{tpu_custom_call.1} parent=91 // pred_region
          %729 = dma.done %s722, 256
        $region104: #{tpu_custom_call.1} parent=91 // pred_fallthru
          _
        %s730 = sand.u32 %s361, 1
        %s731 = scalar_lea.sflag [#allocation10], %s730
        %s732 = sand.u32 %s361, 1
        %s733 = smul.addr %s732, 48
        %s734 = scalar_lea.vmem [#allocation9], %s733
        // Predicated region
        $region105: #{tpu_custom_call.1} parent=91 // pred_check
          %p735 = pneg %p374
        $region106: #{tpu_custom_call.1} parent=91 // pred_check_branch
          %737 = sbr.rel (%p735) target = $region108
        $region107: #{tpu_custom_call.1} parent=91 // pred_region
          %738 = dma.done %s731, 768
        $region108: #{tpu_custom_call.1} parent=91 // pred_fallthru
          _
        %s739 = smul.u32 16, %s43
        %p740 = scmp.lt.s32.totalorder %s739, 31
        %s741 = scalar_select %p740, %s739, 31
        %s742 = smul.addr %s741, 8
        %s743 = scalar_lea.vmem %s0, %s742
        %p744 = pneg %p72
        %p745 = pneg %p69
        %s746 = smul.u32 16, %s43
        %p747 = scmp.lt.s32.totalorder %s746, 31
        %s748 = scalar_select %p747, %s746, 31
        %s749 = scalar_lea.vmem %s1, %s748
        %p750 = pneg %p98
        %p751 = pneg %p95
        %p752 = pneg %p119
        %p753 = pneg %p116
        %p754 = pneg %p140
        %p755 = pneg %p137
        %p756 = scmp.lt.s32.totalorder %s44, 1
        %s757 = scalar_select %p756, %s44, 1
        %s758 = scalar_lea.vmem %s4, %s757
        %p759 = pneg %p166
        %p760 = pneg %p163
        %p761 = scmp.lt.s32.totalorder %s44, 1
        %s762 = scalar_select %p761, %s44, 1
        %s763 = scalar_lea.vmem %s5, %s762
        %p764 = pneg %p192
        %p765 = pneg %p189
        %p766 = scmp.lt.s32.totalorder %s44, 1
        %s767 = scalar_select %p766, %s44, 1
        %s768 = smul.addr %s767, 4
        %s769 = smul.addr %s768, 4
        %s770 = scalar_lea.vmem %s6, %s769
        %p771 = pneg %p218
        %p772 = pneg %p215
        %p773 = scmp.lt.s32.totalorder %s44, 1
        %s774 = scalar_select %p773, %s44, 1
        %s775 = smul.addr %s774, 4
        %s776 = smul.addr %s775, 4
        %s777 = scalar_lea.vmem %s7, %s776
        %p778 = pneg %p244
        %p779 = pneg %p241
        %s780 = sand.u32 %s39, 1
        %s781 = scalar_lea.sflag [#allocation7], %s780
        %s782 = sand.u32 %s257, 1
        %s783 = smul.addr %s782, 16
        %s784 = scalar_lea.vmem [#allocation6], %s783
        %p785 = pneg %p270
        %p786 = pneg %p267
        %s787 = sand.u32 %s39, 1
        %s788 = scalar_lea.sflag [#allocation7], %s787
        %s789 = sand.u32 %s283, 1
        %s790 = smul.addr %s789, 16
        %s791 = scalar_lea.vmem [#allocation8], %s790
        %p792 = pneg %p296
        %p793 = pneg %p293
        %p794 = scmp.lt.s32.totalorder %s44, 1
        %s795 = scalar_select %p794, %s44, 1
        %s796 = scalar_lea.vmem %s10, %s795
        %p797 = pneg %p322
        %p798 = pneg %p319
        %p799 = scmp.lt.s32.totalorder %s44, 1
        %s800 = scalar_select %p799, %s44, 1
        %s801 = scalar_lea.vmem %s11, %s800
        %p802 = pneg %p348
        %p803 = pneg %p345
        %s804 = sand.u32 %s361, 1
        %s805 = scalar_lea.sflag [#allocation10], %s804
        %s806 = sand.u32 %s361, 1
        %s807 = smul.addr %s806, 48
        %s808 = scalar_lea.vmem [#allocation9], %s807
        %p809 = pneg %p374
        %p810 = pneg %p371
        %p811 = scmp.lt.s32.totalorder %s44, 1
        %s812 = scalar_select %p811, %s44, 1
        %s813 = scalar_lea.vmem %s13, %s812
        %p814 = pneg %p400
        %p815 = pneg %p397
        %p816 = scmp.lt.s32.totalorder %s44, 1
        %s817 = scalar_select %p816, %s44, 1
        %s818 = smul.addr %s817, 24
        %s819 = smul.addr %s818, 4
        %s820 = scalar_lea.vmem %s14, %s819
        %p821 = pneg %p426
        %p822 = pneg %p423
        %p823 = scmp.lt.s32.totalorder %s44, 1
        %s824 = scalar_select %p823, %s44, 1
        %s825 = scalar_lea.vmem %s15, %s824
        %p826 = pneg %p452
        %p827 = pneg %p449
        %p828 = pneg %p473
        %p829 = pneg %p470
        %p830 = pneg %p494
        %p831 = pneg %p491
        %p832 = pneg %p520
        %p833 = pneg %p517
        %s834 = sand.u32 %s507, 1
        %s835 = scalar_lea.sflag [#allocation5], %s834
        %s836 = sand.u32 %s507, 1
        %s837 = smul.addr %s836, 128
        %s838 = scalar_lea.vmem [#allocation11], %s837
        %s839 = smul.u32 16, %s43
        %p840 = scmp.lt.s32.totalorder %s839, 31
        %s841 = scalar_select %p840, %s839, 31
        %s842 = smul.addr %s841, 8
        %s843 = scalar_lea.vmem %s0, %s842
        %s844 = smul.u32 16, %s43
        %s845 = smul.u32 16, %s43
        %p846 = scmp.lt.s32.totalorder %s845, 31
        %s847 = scalar_select %p846, %s845, 31
        %s848 = scalar_lea.vmem %s1, %s847
        %s849 = smul.u32 16, %s43
        %p850 = scmp.lt.s32.totalorder %s44, 1
        %s851 = scalar_select %p850, %s44, 1
        %s852 = scalar_lea.vmem %s4, %s851
        %p853 = scmp.lt.s32.totalorder %s44, 1
        %s854 = scalar_select %p853, %s44, 1
        %s855 = scalar_lea.vmem %s5, %s854
        %p856 = scmp.lt.s32.totalorder %s44, 1
        %s857 = scalar_select %p856, %s44, 1
        %s858 = smul.addr %s857, 4
        %s859 = smul.addr %s858, 4
        %s860 = scalar_lea.vmem %s6, %s859
        %p861 = scmp.lt.s32.totalorder %s44, 1
        %s862 = scalar_select %p861, %s44, 1
        %s863 = smul.addr %s862, 4
        %s864 = smul.addr %s863, 4
        %s865 = scalar_lea.vmem %s7, %s864
        %p866 = scmp.lt.s32.totalorder %s44, 1
        %s867 = scalar_select %p866, %s44, 1
        %s868 = scalar_lea.vmem %s10, %s867
        %p869 = scmp.lt.s32.totalorder %s44, 1
        %s870 = scalar_select %p869, %s44, 1
        %s871 = scalar_lea.vmem %s11, %s870
        %p872 = scmp.lt.s32.totalorder %s44, 1
        %s873 = scalar_select %p872, %s44, 1
        %s874 = scalar_lea.vmem %s13, %s873
        %p875 = scmp.lt.s32.totalorder %s44, 1
        %s876 = scalar_select %p875, %s44, 1
        %s877 = smul.addr %s876, 24
        %s878 = smul.addr %s877, 4
        %s879 = scalar_lea.vmem %s14, %s878
        %p880 = scmp.lt.s32.totalorder %s44, 1
        %s881 = scalar_select %p880, %s44, 1
        %s882 = scalar_lea.vmem %s15, %s881
        %s883 = smul.u32 16, %s43
        %p885 = scmp.eq.s32.totalorder %s44, 0
        // Predicated region
        $region109: #{tpu_custom_call.1} parent=91 // pred_check
          %p886 = pneg %p885
        $region110: #{tpu_custom_call.1} parent=91 // pred_check_branch
          %888 = sbr.rel (%p886) target = $region112
        $region111: #{tpu_custom_call.1} parent=91 // pred_region
          %v889 = vld [vmem:[%s843] sm:$0xff]
          %v890 = vld [vmem:[%s843 + $0x8] sm:$0xff]
          %v891 = vld [vmem:[%s843 + $0x10] sm:$0xff]
          %v892 = vld [vmem:[%s843 + $0x18] sm:$0xff]
          %v893 = vld [vmem:[%s843 + $0x20] sm:$0xff]
          %v894 = vld [vmem:[%s843 + $0x28] sm:$0xff]
          %v895 = vld [vmem:[%s843 + $0x30] sm:$0xff]
          %v896 = vld [vmem:[%s843 + $0x38] sm:$0xff]
          %v897 = vld [vmem:[%s843 + $0x40] sm:$0xff]
          %v898 = vld [vmem:[%s843 + $0x48] sm:$0xff]
          %v899 = vld [vmem:[%s843 + $0x50] sm:$0xff]
          %v900 = vld [vmem:[%s843 + $0x58] sm:$0xff]
          %v901 = vld [vmem:[%s843 + $0x60] sm:$0xff]
          %v902 = vld [vmem:[%s843 + $0x68] sm:$0xff]
          %v903 = vld [vmem:[%s843 + $0x70] sm:$0xff]
          %v904 = vld [vmem:[%s843 + $0x78] sm:$0xff]
          %v905 = vpack.c.bf16 %v890, %v889
          %v906 = vpack.c.bf16 %v892, %v891
          %v907 = vpack.c.bf16 %v894, %v893
          %v908 = vpack.c.bf16 %v896, %v895
          %v909 = vpack.c.bf16 %v898, %v897
          %v910 = vpack.c.bf16 %v900, %v899
          %v911 = vpack.c.bf16 %v902, %v901
          %v912 = vpack.c.bf16 %v904, %v903
          %v913 = vld [vmem:[#allocation3] sm:$0xf]
          %v914 = vld [vmem:[#allocation3 + $0x4] sm:$0xf]
          %v915 = vld [vmem:[#allocation3 + $0x8] sm:$0xf]
          %v916 = vld [vmem:[#allocation3 + $0xc] sm:$0xf]
          %v921 = vunpack.c.l.b16 %v913
          %v922 = vunpack.c.l.b16 %v914
          %v923 = vunpack.c.l.b16 %v915
          %v924 = vunpack.c.l.b16 %v916
          %v925 = vpack.c.b16 %v922, %v921
          %v926 = vpack.c.b16 %v924, %v923
          %vm929 = vcmask 261120
          %v931 = vsel %vm929, %v905, 0
          %v934 = vsel %vm929, %v906, 0
          %v937 = vsel %vm929, %v907, 0
          %v940 = vsel %vm929, %v908, 0
          %v943 = vsel %vm929, %v909, 0
          %v946 = vsel %vm929, %v910, 0
          %v949 = vsel %vm929, %v911, 0
          %v952 = vsel %vm929, %v912, 0
          %954 = vmatprep.subr.bf16.mxu0 0
          %955 = vmatpush1.bf16.msra.mxu0 0
          %956 = vmatprep.subr.bf16.mxu0 0
          %957 = vmatpush1.bf16.msra.mxu0 0
          %958 = vmatprep.subr.bf16.mxu0 0
          %959 = vmatpush1.bf16.msra.mxu0 0
          %960 = vmatprep.subr.bf16.mxu0 0
          %961 = vmatpush1.bf16.msra.mxu0 0
          %962 = vmatprep.subr.bf16.mxu0 0
          %963 = vmatpush1.bf16.msra.mxu0 0
          %964 = vmatprep.subr.bf16.mxu0 0
          %965 = vmatpush1.bf16.msra.mxu0 0
          %966 = vmatprep.subr.bf16.mxu0 0
          %967 = vmatpush1.bf16.msra.mxu0 %v926
          %968 = vmatprep.subr.bf16.mxu0 0
          %969 = vmatpush1.bf16.msra.mxu0 %v925
          %970 = vmatprep.subr.bf16.mxu0 0
          %971 = vmatpush2.bf16.msra.mxu0 0
          %972 = vmatprep.subr.bf16.mxu0 0
          %973 = vmatpush2.bf16.msra.mxu0 0
          %974 = vmatprep.subr.bf16.mxu0 0
          %975 = vmatpush2.bf16.msra.mxu0 0
          %976 = vmatprep.subr.bf16.mxu0 0
          %977 = vmatpush2.bf16.msra.mxu0 0
          %978 = vmatprep.subr.bf16.mxu0 0
          %979 = vmatpush2.bf16.msra.mxu0 0
          %980 = vmatprep.subr.bf16.mxu0 0
          %981 = vmatpush2.bf16.msra.mxu0 0
          %982 = vmatprep.subr.bf16.mxu0 0
          %983 = vmatpush2.bf16.msra.mxu0 0
          %984 = vmatprep.subr.bf16.mxu0 0
          %985 = vmatpush2.bf16.msra.mxu0 0
          %986 = vmatprep.mubr.bf16.mxu0 0
          %987 = vmatmul.mubr.bf16.gmra.mxu0 %v931
          %v988 = vpop.f32.mrf.mxu0
          %v989 = vadd.f32 0.0, %v988
          %v990 = vpop.f32.mrf.mxu0
          %v991 = vpop.f32.mrf.mxu0
          %v992 = vadd.f32 0.0, %v991
          %v993 = vpop.f32.mrf.mxu0
          %994 = vmatprep.mubr.bf16.mxu0 0
          %995 = vmatmul.mubr.bf16.gmra.mxu0 %v934
          %v996 = vpop.f32.mrf.mxu0
          %v997 = vadd.f32 0.0, %v996
          %v998 = vpop.f32.mrf.mxu0
          %v999 = vpop.f32.mrf.mxu0
          %v1000 = vadd.f32 0.0, %v999
          %v1001 = vpop.f32.mrf.mxu0
          %1002 = vmatprep.mubr.bf16.mxu0 0
          %1003 = vmatmul.mubr.bf16.gmra.mxu0 %v937
          %v1004 = vpop.f32.mrf.mxu0
          %v1005 = vadd.f32 0.0, %v1004
          %v1006 = vpop.f32.mrf.mxu0
          %v1007 = vpop.f32.mrf.mxu0
          %v1008 = vadd.f32 0.0, %v1007
          %v1009 = vpop.f32.mrf.mxu0
          %1010 = vmatprep.mubr.bf16.mxu0 0
          %1011 = vmatmul.mubr.bf16.gmra.mxu0 %v940
          %v1012 = vpop.f32.mrf.mxu0
          %v1013 = vadd.f32 0.0, %v1012
          %v1014 = vpop.f32.mrf.mxu0
          %v1015 = vpop.f32.mrf.mxu0
          %v1016 = vadd.f32 0.0, %v1015
          %v1017 = vpop.f32.mrf.mxu0
          %1018 = vmatprep.mubr.bf16.mxu0 0
          %1019 = vmatmul.mubr.bf16.gmra.mxu0 %v943
          %v1020 = vpop.f32.mrf.mxu0
          %v1021 = vadd.f32 0.0, %v1020
          %v1022 = vpop.f32.mrf.mxu0
          %v1023 = vpop.f32.mrf.mxu0
          %v1024 = vadd.f32 0.0, %v1023
          %v1025 = vpop.f32.mrf.mxu0
          %1026 = vmatprep.mubr.bf16.mxu0 0
          %1027 = vmatmul.mubr.bf16.gmra.mxu0 %v946
          %v1028 = vpop.f32.mrf.mxu0
          %v1029 = vadd.f32 0.0, %v1028
          %v1030 = vpop.f32.mrf.mxu0
          %v1031 = vpop.f32.mrf.mxu0
          %v1032 = vadd.f32 0.0, %v1031
          %v1033 = vpop.f32.mrf.mxu0
          %1034 = vmatprep.mubr.bf16.mxu0 0
          %1035 = vmatmul.mubr.bf16.gmra.mxu0 %v949
          %v1036 = vpop.f32.mrf.mxu0
          %v1037 = vadd.f32 0.0, %v1036
          %v1038 = vpop.f32.mrf.mxu0
          %v1039 = vpop.f32.mrf.mxu0
          %v1040 = vadd.f32 0.0, %v1039
          %v1041 = vpop.f32.mrf.mxu0
          %1042 = vmatprep.mubr.bf16.mxu0 0
          %1043 = vmatmul.mubr.bf16.gmra.mxu0 %v952
          %v1044 = vpop.f32.mrf.mxu0
          %v1045 = vadd.f32 0.0, %v1044
          %v1046 = vpop.f32.mrf.mxu0
          %v1047 = vpop.f32.mrf.mxu0
          %v1048 = vadd.f32 0.0, %v1047
          %v1049 = vpop.f32.mrf.mxu0
          %1050 = vdwg.mxu0
          %v1051 = vld [vmem:[%s2] sm:$0xff]
          %v1052 = vadd.f32 %v989, %v1051
          %v1053 = vadd.f32 %v992, %v1051
          %v1054 = vadd.f32 %v997, %v1051
          %v1055 = vadd.f32 %v1000, %v1051
          %v1056 = vadd.f32 %v1005, %v1051
          %v1057 = vadd.f32 %v1008, %v1051
          %v1058 = vadd.f32 %v1013, %v1051
          %v1059 = vadd.f32 %v1016, %v1051
          %v1060 = vadd.f32 %v1021, %v1051
          %v1061 = vadd.f32 %v1024, %v1051
          %v1062 = vadd.f32 %v1029, %v1051
          %v1063 = vadd.f32 %v1032, %v1051
          %v1064 = vadd.f32 %v1037, %v1051
          %v1065 = vadd.f32 %v1040, %v1051
          %v1066 = vadd.f32 %v1045, %v1051
          %v1067 = vadd.f32 %v1048, %v1051
          %1068 = vst.msk [vmem:[#allocation2] sm:$0xff] %vm929, %v1052
          %1069 = vst.msk [vmem:[#allocation2 + $0x8] sm:$0xff] %vm929, %v1053
          %1070 = vst.msk [vmem:[#allocation2 + $0x10] sm:$0xff] %vm929, %v1054
          %1071 = vst.msk [vmem:[#allocation2 + $0x18] sm:$0xff] %vm929, %v1055
          %1072 = vst.msk [vmem:[#allocation2 + $0x20] sm:$0xff] %vm929, %v1056
          %1073 = vst.msk [vmem:[#allocation2 + $0x28] sm:$0xff] %vm929, %v1057
          %1074 = vst.msk [vmem:[#allocation2 + $0x30] sm:$0xff] %vm929, %v1058
          %1075 = vst.msk [vmem:[#allocation2 + $0x38] sm:$0xff] %vm929, %v1059
          %1076 = vst.msk [vmem:[#allocation2 + $0x40] sm:$0xff] %vm929, %v1060
          %1077 = vst.msk [vmem:[#allocation2 + $0x48] sm:$0xff] %vm929, %v1061
          %1078 = vst.msk [vmem:[#allocation2 + $0x50] sm:$0xff] %vm929, %v1062
          %1079 = vst.msk [vmem:[#allocation2 + $0x58] sm:$0xff] %vm929, %v1063
          %1080 = vst.msk [vmem:[#allocation2 + $0x60] sm:$0xff] %vm929, %v1064
          %1081 = vst.msk [vmem:[#allocation2 + $0x68] sm:$0xff] %vm929, %v1065
          %1082 = vst.msk [vmem:[#allocation2 + $0x70] sm:$0xff] %vm929, %v1066
          %1083 = vst.msk [vmem:[#allocation2 + $0x78] sm:$0xff] %vm929, %v1067
        $region112: #{tpu_custom_call.1} parent=91 // pred_fallthru
          _
        %v1084 = vld [vmem:[#allocation2] sm:$0xff]
        %v1085 = vld [vmem:[#allocation2 + $0x8] sm:$0xff]
        %v1086 = vld [vmem:[#allocation2 + $0x10] sm:$0xff]
        %v1087 = vld [vmem:[#allocation2 + $0x18] sm:$0xff]
        %v1088 = vld [vmem:[#allocation2 + $0x20] sm:$0xff]
        %v1089 = vld [vmem:[#allocation2 + $0x28] sm:$0xff]
        %v1090 = vld [vmem:[#allocation2 + $0x30] sm:$0xff]
        %v1091 = vld [vmem:[#allocation2 + $0x38] sm:$0xff]
        %v1092 = vld [vmem:[#allocation2 + $0x40] sm:$0xff]
        %v1093 = vld [vmem:[#allocation2 + $0x48] sm:$0xff]
        %v1094 = vld [vmem:[#allocation2 + $0x50] sm:$0xff]
        %v1095 = vld [vmem:[#allocation2 + $0x58] sm:$0xff]
        %v1096 = vld [vmem:[#allocation2 + $0x60] sm:$0xff]
        %v1097 = vld [vmem:[#allocation2 + $0x68] sm:$0xff]
        %v1098 = vld [vmem:[#allocation2 + $0x70] sm:$0xff]
        %v1099 = vld [vmem:[#allocation2 + $0x78] sm:$0xff]
        %v1100 = vld [vmem:[%s848] sm:$0x1]
        %v1101 = vld [vmem:[%s848 + $0x1] sm:$0x1]
        %v1102 = vld [vmem:[%s848 + $0x2] sm:$0x1]
        %v1103 = vld [vmem:[%s848 + $0x3] sm:$0x1]
        %v1104 = vld [vmem:[%s848 + $0x4] sm:$0x1]
        %v1105 = vld [vmem:[%s848 + $0x5] sm:$0x1]
        %v1106 = vld [vmem:[%s848 + $0x6] sm:$0x1]
        %v1107 = vld [vmem:[%s848 + $0x7] sm:$0x1]
        %v1108 = vld [vmem:[%s848 + $0x8] sm:$0x1]
        %v1109 = vld [vmem:[%s848 + $0x9] sm:$0x1]
        %v1110 = vld [vmem:[%s848 + $0xa] sm:$0x1]
        %v1111 = vld [vmem:[%s848 + $0xb] sm:$0x1]
        %v1112 = vld [vmem:[%s848 + $0xc] sm:$0x1]
        %v1113 = vld [vmem:[%s848 + $0xd] sm:$0x1]
        %v1114 = vld [vmem:[%s848 + $0xe] sm:$0x1]
        %v1115 = vld [vmem:[%s848 + $0xf] sm:$0x1]
        %v1116 = vmul.f32 %v1100, -1e+18
        %v1117 = vmul.f32 %v1101, -1e+18
        %v1118 = vmul.f32 %v1102, -1e+18
        %v1119 = vmul.f32 %v1103, -1e+18
        %v1120 = vmul.f32 %v1104, -1e+18
        %v1121 = vmul.f32 %v1105, -1e+18
        %v1122 = vmul.f32 %v1106, -1e+18
        %v1123 = vmul.f32 %v1107, -1e+18
        %v1124 = vmul.f32 %v1108, -1e+18
        %v1125 = vmul.f32 %v1109, -1e+18
        %v1126 = vmul.f32 %v1110, -1e+18
        %v1127 = vmul.f32 %v1111, -1e+18
        %v1128 = vmul.f32 %v1112, -1e+18
        %v1129 = vmul.f32 %v1113, -1e+18
        %v1130 = vmul.f32 %v1114, -1e+18
        %v1131 = vmul.f32 %v1115, -1e+18
        %v1132 = vld [vmem:[%s852] sm:$0x1]
        %v1133 = vld [vmem:[%s855] sm:$0x1]
        %vm1134 = vcmask 261120
        %v1135 = vsel %vm1134, %v1084, 0.0
        %1136 = vadd.xlane.f32.xlu0 %v1135
        %v1137 = vpop.xlane.xlu0 %1136
        %v1138 = vsel %vm1134, %v1085, 0.0
        %1139 = vadd.xlane.f32.xlu0 %v1138
        %v1140 = vpop.xlane.xlu0 %1139
        %v1141 = vsel %vm1134, %v1086, 0.0
        %1142 = vadd.xlane.f32.xlu0 %v1141
        %v1143 = vpop.xlane.xlu0 %1142
        %v1144 = vsel %vm1134, %v1087, 0.0
        %1145 = vadd.xlane.f32.xlu0 %v1144
        %v1146 = vpop.xlane.xlu0 %1145
        %v1147 = vsel %vm1134, %v1088, 0.0
        %1148 = vadd.xlane.f32.xlu0 %v1147
        %v1149 = vpop.xlane.xlu0 %1148
        %v1150 = vsel %vm1134, %v1089, 0.0
        %1151 = vadd.xlane.f32.xlu0 %v1150
        %v1152 = vpop.xlane.xlu0 %1151
        %v1153 = vsel %vm1134, %v1090, 0.0
        %1154 = vadd.xlane.f32.xlu0 %v1153
        %v1155 = vpop.xlane.xlu0 %1154
        %v1156 = vsel %vm1134, %v1091, 0.0
        %1157 = vadd.xlane.f32.xlu0 %v1156
        %v1158 = vpop.xlane.xlu0 %1157
        %v1159 = vsel %vm1134, %v1092, 0.0
        %1160 = vadd.xlane.f32.xlu0 %v1159
        %v1161 = vpop.xlane.xlu0 %1160
        %v1162 = vsel %vm1134, %v1093, 0.0
        %1163 = vadd.xlane.f32.xlu0 %v1162
        %v1164 = vpop.xlane.xlu0 %1163
        %v1165 = vsel %vm1134, %v1094, 0.0
        %1166 = vadd.xlane.f32.xlu0 %v1165
        %v1167 = vpop.xlane.xlu0 %1166
        %v1168 = vsel %vm1134, %v1095, 0.0
        %1169 = vadd.xlane.f32.xlu0 %v1168
        %v1170 = vpop.xlane.xlu0 %1169
        %v1171 = vsel %vm1134, %v1096, 0.0
        %1172 = vadd.xlane.f32.xlu0 %v1171
        %v1173 = vpop.xlane.xlu0 %1172
        %v1174 = vsel %vm1134, %v1097, 0.0
        %1175 = vadd.xlane.f32.xlu0 %v1174
        %v1176 = vpop.xlane.xlu0 %1175
        %v1177 = vsel %vm1134, %v1098, 0.0
        %1178 = vadd.xlane.f32.xlu0 %v1177
        %v1179 = vpop.xlane.xlu0 %1178
        %v1180 = vsel %vm1134, %v1099, 0.0
        %1181 = vadd.xlane.f32.xlu0 %v1180
        %v1182 = vpop.xlane.xlu0 %1181
        %v1183 = vrcp.pop 32.0
        %v1184 = vmul.f32 %v1137, %v1183
        %v1185 = vmul.f32 %v1140, %v1183
        %v1186 = vmul.f32 %v1143, %v1183
        %v1187 = vmul.f32 %v1146, %v1183
        %v1188 = vmul.f32 %v1149, %v1183
        %v1189 = vmul.f32 %v1152, %v1183
        %v1190 = vmul.f32 %v1155, %v1183
        %v1191 = vmul.f32 %v1158, %v1183
        %v1192 = vmul.f32 %v1161, %v1183
        %v1193 = vmul.f32 %v1164, %v1183
        %v1194 = vmul.f32 %v1167, %v1183
        %v1195 = vmul.f32 %v1170, %v1183
        %v1196 = vmul.f32 %v1173, %v1183
        %v1197 = vmul.f32 %v1176, %v1183
        %v1198 = vmul.f32 %v1179, %v1183
        %v1199 = vmul.f32 %v1182, %v1183
        %v1200 = vsub.f32 %v1084, %v1184
        %v1201 = vsub.f32 %v1085, %v1185
        %v1202 = vsub.f32 %v1086, %v1186
        %v1203 = vsub.f32 %v1087, %v1187
        %v1204 = vsub.f32 %v1088, %v1188
        %v1205 = vsub.f32 %v1089, %v1189
        %v1206 = vsub.f32 %v1090, %v1190
        %v1207 = vsub.f32 %v1091, %v1191
        %v1208 = vsub.f32 %v1092, %v1192
        %v1209 = vsub.f32 %v1093, %v1193
        %v1210 = vsub.f32 %v1094, %v1194
        %v1211 = vsub.f32 %v1095, %v1195
        %v1212 = vsub.f32 %v1096, %v1196
        %v1213 = vsub.f32 %v1097, %v1197
        %v1214 = vsub.f32 %v1098, %v1198
        %v1215 = vsub.f32 %v1099, %v1199
        %v1216 = vmul.f32 %v1200, %v1200
        %v1217 = vmul.f32 %v1201, %v1201
        %v1218 = vmul.f32 %v1202, %v1202
        %v1219 = vmul.f32 %v1203, %v1203
        %v1220 = vmul.f32 %v1204, %v1204
        %v1221 = vmul.f32 %v1205, %v1205
        %v1222 = vmul.f32 %v1206, %v1206
        %v1223 = vmul.f32 %v1207, %v1207
        %v1224 = vmul.f32 %v1208, %v1208
        %v1225 = vmul.f32 %v1209, %v1209
        %v1226 = vmul.f32 %v1210, %v1210
        %v1227 = vmul.f32 %v1211, %v1211
        %v1228 = vmul.f32 %v1212, %v1212
        %v1229 = vmul.f32 %v1213, %v1213
        %v1230 = vmul.f32 %v1214, %v1214
        %v1231 = vmul.f32 %v1215, %v1215
        %v1232 = vsel %vm1134, %v1216, 0.0
        %1233 = vadd.xlane.f32.xlu0 %v1232
        %v1234 = vpop.xlane.xlu0 %1233
        %v1235 = vsel %vm1134, %v1217, 0.0
        %1236 = vadd.xlane.f32.xlu0 %v1235
        %v1237 = vpop.xlane.xlu0 %1236
        %v1238 = vsel %vm1134, %v1218, 0.0
        %1239 = vadd.xlane.f32.xlu0 %v1238
        %v1240 = vpop.xlane.xlu0 %1239
        %v1241 = vsel %vm1134, %v1219, 0.0
        %1242 = vadd.xlane.f32.xlu0 %v1241
        %v1243 = vpop.xlane.xlu0 %1242
        %v1244 = vsel %vm1134, %v1220, 0.0
        %1245 = vadd.xlane.f32.xlu0 %v1244
        %v1246 = vpop.xlane.xlu0 %1245
        %v1247 = vsel %vm1134, %v1221, 0.0
        %1248 = vadd.xlane.f32.xlu0 %v1247
        %v1249 = vpop.xlane.xlu0 %1248
        %v1250 = vsel %vm1134, %v1222, 0.0
        %1251 = vadd.xlane.f32.xlu0 %v1250
        %v1252 = vpop.xlane.xlu0 %1251
        %v1253 = vsel %vm1134, %v1223, 0.0
        %1254 = vadd.xlane.f32.xlu0 %v1253
        %v1255 = vpop.xlane.xlu0 %1254
        %v1256 = vsel %vm1134, %v1224, 0.0
        %1257 = vadd.xlane.f32.xlu0 %v1256
        %v1258 = vpop.xlane.xlu0 %1257
        %v1259 = vsel %vm1134, %v1225, 0.0
        %1260 = vadd.xlane.f32.xlu0 %v1259
        %v1261 = vpop.xlane.xlu0 %1260
        %v1262 = vsel %vm1134, %v1226, 0.0
        %1263 = vadd.xlane.f32.xlu0 %v1262
        %v1264 = vpop.xlane.xlu0 %1263
        %v1265 = vsel %vm1134, %v1227, 0.0
        %1266 = vadd.xlane.f32.xlu0 %v1265
        %v1267 = vpop.xlane.xlu0 %1266
        %v1268 = vsel %vm1134, %v1228, 0.0
        %1269 = vadd.xlane.f32.xlu0 %v1268
        %v1270 = vpop.xlane.xlu0 %1269
        %v1271 = vsel %vm1134, %v1229, 0.0
        %1272 = vadd.xlane.f32.xlu0 %v1271
        %v1273 = vpop.xlane.xlu0 %1272
        %v1274 = vsel %vm1134, %v1230, 0.0
        %1275 = vadd.xlane.f32.xlu0 %v1274
        %v1276 = vpop.xlane.xlu0 %1275
        %v1277 = vsel %vm1134, %v1231, 0.0
        %1278 = vadd.xlane.f32.xlu0 %v1277
        %v1279 = vpop.xlane.xlu0 %1278
        %v1280 = vmul.f32 %v1234, 0.032258064
        %v1281 = vmul.f32 %v1237, 0.032258064
        %v1282 = vmul.f32 %v1240, 0.032258064
        %v1283 = vmul.f32 %v1243, 0.032258064
        %v1284 = vmul.f32 %v1246, 0.032258064
        %v1285 = vmul.f32 %v1249, 0.032258064
        %v1286 = vmul.f32 %v1252, 0.032258064
        %v1287 = vmul.f32 %v1255, 0.032258064
        %v1288 = vmul.f32 %v1258, 0.032258064
        %v1289 = vmul.f32 %v1261, 0.032258064
        %v1290 = vmul.f32 %v1264, 0.032258064
        %v1291 = vmul.f32 %v1267, 0.032258064
        %v1292 = vmul.f32 %v1270, 0.032258064
        %v1293 = vmul.f32 %v1273, 0.032258064
        %v1294 = vmul.f32 %v1276, 0.032258064
        %v1295 = vmul.f32 %v1279, 0.032258064
        %v1296 = vrsqrt.pop %v1280
        %v1297 = vmul.f32 %v1280, %v1296
        %vm1298 = vcmp.eq.f32.partialorder %v1280, inf
        %v1299 = vsel %vm1298, %v1280, %v1297
        %vm1300 = vcmp.eq.f32.partialorder %v1280, 0.0
        %v1301 = vand.u32 %v1280, 2147483648
        %v1302 = vsel %vm1300, %v1301, %v1299
        %v1303 = vrsqrt.pop %v1281
        %v1304 = vmul.f32 %v1281, %v1303
        %vm1305 = vcmp.eq.f32.partialorder %v1281, inf
        %v1306 = vsel %vm1305, %v1281, %v1304
        %vm1307 = vcmp.eq.f32.partialorder %v1281, 0.0
        %v1308 = vand.u32 %v1281, 2147483648
        %v1309 = vsel %vm1307, %v1308, %v1306
        %v1310 = vrsqrt.pop %v1282
        %v1311 = vmul.f32 %v1282, %v1310
        %vm1312 = vcmp.eq.f32.partialorder %v1282, inf
        %v1313 = vsel %vm1312, %v1282, %v1311
        %vm1314 = vcmp.eq.f32.partialorder %v1282, 0.0
        %v1315 = vand.u32 %v1282, 2147483648
        %v1316 = vsel %vm1314, %v1315, %v1313
        %v1317 = vrsqrt.pop %v1283
        %v1318 = vmul.f32 %v1283, %v1317
        %vm1319 = vcmp.eq.f32.partialorder %v1283, inf
        %v1320 = vsel %vm1319, %v1283, %v1318
        %vm1321 = vcmp.eq.f32.partialorder %v1283, 0.0
        %v1322 = vand.u32 %v1283, 2147483648
        %v1323 = vsel %vm1321, %v1322, %v1320
        %v1324 = vrsqrt.pop %v1284
        %v1325 = vmul.f32 %v1284, %v1324
        %vm1326 = vcmp.eq.f32.partialorder %v1284, inf
        %v1327 = vsel %vm1326, %v1284, %v1325
        %vm1328 = vcmp.eq.f32.partialorder %v1284, 0.0
        %v1329 = vand.u32 %v1284, 2147483648
        %v1330 = vsel %vm1328, %v1329, %v1327
        %v1331 = vrsqrt.pop %v1285
        %v1332 = vmul.f32 %v1285, %v1331
        %vm1333 = vcmp.eq.f32.partialorder %v1285, inf
        %v1334 = vsel %vm1333, %v1285, %v1332
        %vm1335 = vcmp.eq.f32.partialorder %v1285, 0.0
        %v1336 = vand.u32 %v1285, 2147483648
        %v1337 = vsel %vm1335, %v1336, %v1334
        %v1338 = vrsqrt.pop %v1286
        %v1339 = vmul.f32 %v1286, %v1338
        %vm1340 = vcmp.eq.f32.partialorder %v1286, inf
        %v1341 = vsel %vm1340, %v1286, %v1339
        %vm1342 = vcmp.eq.f32.partialorder %v1286, 0.0
        %v1343 = vand.u32 %v1286, 2147483648
        %v1344 = vsel %vm1342, %v1343, %v1341
        %v1345 = vrsqrt.pop %v1287
        %v1346 = vmul.f32 %v1287, %v1345
        %vm1347 = vcmp.eq.f32.partialorder %v1287, inf
        %v1348 = vsel %vm1347, %v1287, %v1346
        %vm1349 = vcmp.eq.f32.partialorder %v1287, 0.0
        %v1350 = vand.u32 %v1287, 2147483648
        %v1351 = vsel %vm1349, %v1350, %v1348
        %v1352 = vrsqrt.pop %v1288
        %v1353 = vmul.f32 %v1288, %v1352
        %vm1354 = vcmp.eq.f32.partialorder %v1288, inf
        %v1355 = vsel %vm1354, %v1288, %v1353
        %vm1356 = vcmp.eq.f32.partialorder %v1288, 0.0
        %v1357 = vand.u32 %v1288, 2147483648
        %v1358 = vsel %vm1356, %v1357, %v1355
        %v1359 = vrsqrt.pop %v1289
        %v1360 = vmul.f32 %v1289, %v1359
        %vm1361 = vcmp.eq.f32.partialorder %v1289, inf
        %v1362 = vsel %vm1361, %v1289, %v1360
        %vm1363 = vcmp.eq.f32.partialorder %v1289, 0.0
        %v1364 = vand.u32 %v1289, 2147483648
        %v1365 = vsel %vm1363, %v1364, %v1362
        %v1366 = vrsqrt.pop %v1290
        %v1367 = vmul.f32 %v1290, %v1366
        %vm1368 = vcmp.eq.f32.partialorder %v1290, inf
        %v1369 = vsel %vm1368, %v1290, %v1367
        %vm1370 = vcmp.eq.f32.partialorder %v1290, 0.0
        %v1371 = vand.u32 %v1290, 2147483648
        %v1372 = vsel %vm1370, %v1371, %v1369
        %v1373 = vrsqrt.pop %v1291
        %v1374 = vmul.f32 %v1291, %v1373
        %vm1375 = vcmp.eq.f32.partialorder %v1291, inf
        %v1376 = vsel %vm1375, %v1291, %v1374
        %vm1377 = vcmp.eq.f32.partialorder %v1291, 0.0
        %v1378 = vand.u32 %v1291, 2147483648
        %v1379 = vsel %vm1377, %v1378, %v1376
        %v1380 = vrsqrt.pop %v1292
        %v1381 = vmul.f32 %v1292, %v1380
        %vm1382 = vcmp.eq.f32.partialorder %v1292, inf
        %v1383 = vsel %vm1382, %v1292, %v1381
        %vm1384 = vcmp.eq.f32.partialorder %v1292, 0.0
        %v1385 = vand.u32 %v1292, 2147483648
        %v1386 = vsel %vm1384, %v1385, %v1383
        %v1387 = vrsqrt.pop %v1293
        %v1388 = vmul.f32 %v1293, %v1387
        %vm1389 = vcmp.eq.f32.partialorder %v1293, inf
        %v1390 = vsel %vm1389, %v1293, %v1388
        %vm1391 = vcmp.eq.f32.partialorder %v1293, 0.0
        %v1392 = vand.u32 %v1293, 2147483648
        %v1393 = vsel %vm1391, %v1392, %v1390
        %v1394 = vrsqrt.pop %v1294
        %v1395 = vmul.f32 %v1294, %v1394
        %vm1396 = vcmp.eq.f32.partialorder %v1294, inf
        %v1397 = vsel %vm1396, %v1294, %v1395
        %vm1398 = vcmp.eq.f32.partialorder %v1294, 0.0
        %v1399 = vand.u32 %v1294, 2147483648
        %v1400 = vsel %vm1398, %v1399, %v1397
        %v1401 = vrsqrt.pop %v1295
        %v1402 = vmul.f32 %v1295, %v1401
        %vm1403 = vcmp.eq.f32.partialorder %v1295, inf
        %v1404 = vsel %vm1403, %v1295, %v1402
        %vm1405 = vcmp.eq.f32.partialorder %v1295, 0.0
        %v1406 = vand.u32 %v1295, 2147483648
        %v1407 = vsel %vm1405, %v1406, %v1404
        %v1408 = vadd.f32 %v1302, 1e-06
        %v1409 = vadd.f32 %v1309, 1e-06
        %v1410 = vadd.f32 %v1316, 1e-06
        %v1411 = vadd.f32 %v1323, 1e-06
        %v1412 = vadd.f32 %v1330, 1e-06
        %v1413 = vadd.f32 %v1337, 1e-06
        %v1414 = vadd.f32 %v1344, 1e-06
        %v1415 = vadd.f32 %v1351, 1e-06
        %v1416 = vadd.f32 %v1358, 1e-06
        %v1417 = vadd.f32 %v1365, 1e-06
        %v1418 = vadd.f32 %v1372, 1e-06
        %v1419 = vadd.f32 %v1379, 1e-06
        %v1420 = vadd.f32 %v1386, 1e-06
        %v1421 = vadd.f32 %v1393, 1e-06
        %v1422 = vadd.f32 %v1400, 1e-06
        %v1423 = vadd.f32 %v1407, 1e-06
        %v1424 = vrcp.pop %v1408
        %v1425 = vrcp.pop %v1409
        %v1426 = vrcp.pop %v1410
        %v1427 = vrcp.pop %v1411
        %v1428 = vrcp.pop %v1412
        %v1429 = vrcp.pop %v1413
        %v1430 = vrcp.pop %v1414
        %v1431 = vrcp.pop %v1415
        %v1432 = vrcp.pop %v1416
        %v1433 = vrcp.pop %v1417
        %v1434 = vrcp.pop %v1418
        %v1435 = vrcp.pop %v1419
        %v1436 = vrcp.pop %v1420
        %v1437 = vrcp.pop %v1421
        %v1438 = vrcp.pop %v1422
        %v1439 = vrcp.pop %v1423
        %v1440 = vmul.f32 %v1200, %v1424
        %v1441 = vmul.f32 %v1201, %v1425
        %v1442 = vmul.f32 %v1202, %v1426
        %v1443 = vmul.f32 %v1203, %v1427
        %v1444 = vmul.f32 %v1204, %v1428
        %v1445 = vmul.f32 %v1205, %v1429
        %v1446 = vmul.f32 %v1206, %v1430
        %v1447 = vmul.f32 %v1207, %v1431
        %v1448 = vmul.f32 %v1208, %v1432
        %v1449 = vmul.f32 %v1209, %v1433
        %v1450 = vmul.f32 %v1210, %v1434
        %v1451 = vmul.f32 %v1211, %v1435
        %v1452 = vmul.f32 %v1212, %v1436
        %v1453 = vmul.f32 %v1213, %v1437
        %v1454 = vmul.f32 %v1214, %v1438
        %v1455 = vmul.f32 %v1215, %v1439
        %v1457 = vlaneseq
        %v1458 = vshrl.u32 %v1457, 7
        %v1459 = vsub.s32 0, %v1458
        %v1460 = vrot.slane %v1132, %v1459
        %v1462 = vmul.f32 %v1460, %v1440
        %v1463 = vmul.f32 %v1460, %v1441
        %v1464 = vmul.f32 %v1460, %v1442
        %v1465 = vmul.f32 %v1460, %v1443
        %v1466 = vmul.f32 %v1460, %v1444
        %v1467 = vmul.f32 %v1460, %v1445
        %v1468 = vmul.f32 %v1460, %v1446
        %v1469 = vmul.f32 %v1460, %v1447
        %v1470 = vmul.f32 %v1460, %v1448
        %v1471 = vmul.f32 %v1460, %v1449
        %v1472 = vmul.f32 %v1460, %v1450
        %v1473 = vmul.f32 %v1460, %v1451
        %v1474 = vmul.f32 %v1460, %v1452
        %v1475 = vmul.f32 %v1460, %v1453
        %v1476 = vmul.f32 %v1460, %v1454
        %v1477 = vmul.f32 %v1460, %v1455
        %v1479 = vlaneseq
        %v1480 = vshrl.u32 %v1479, 7
        %v1481 = vsub.s32 0, %v1480
        %v1482 = vrot.slane %v1133, %v1481
        %v1484 = vadd.f32 %v1462, %v1482
        %v1485 = vadd.f32 %v1463, %v1482
        %v1486 = vadd.f32 %v1464, %v1482
        %v1487 = vadd.f32 %v1465, %v1482
        %v1488 = vadd.f32 %v1466, %v1482
        %v1489 = vadd.f32 %v1467, %v1482
        %v1490 = vadd.f32 %v1468, %v1482
        %v1491 = vadd.f32 %v1469, %v1482
        %v1492 = vadd.f32 %v1470, %v1482
        %v1493 = vadd.f32 %v1471, %v1482
        %v1494 = vadd.f32 %v1472, %v1482
        %v1495 = vadd.f32 %v1473, %v1482
        %v1496 = vadd.f32 %v1474, %v1482
        %v1497 = vadd.f32 %v1475, %v1482
        %v1498 = vadd.f32 %v1476, %v1482
        %v1499 = vadd.f32 %v1477, %v1482
        %v1500 = vpack.c.bf16 %v1485, %v1484
        %v1501 = vpack.c.bf16 %v1487, %v1486
        %v1502 = vpack.c.bf16 %v1489, %v1488
        %v1503 = vpack.c.bf16 %v1491, %v1490
        %v1504 = vpack.c.bf16 %v1493, %v1492
        %v1505 = vpack.c.bf16 %v1495, %v1494
        %v1506 = vpack.c.bf16 %v1497, %v1496
        %v1507 = vpack.c.bf16 %v1499, %v1498
        %v1508 = vld [vmem:[%s860] sm:$0xf]
        %v1509 = vld [vmem:[%s860 + $0x4] sm:$0xf]
        %v1510 = vld [vmem:[%s860 + $0x8] sm:$0xf]
        %v1511 = vld [vmem:[%s860 + $0xc] sm:$0xf]
        %v1516 = vunpack.c.l.b16 %v1508
        %v1517 = vunpack.c.l.b16 %v1509
        %v1518 = vunpack.c.l.b16 %v1510
        %v1519 = vunpack.c.l.b16 %v1511
        %v1520 = vpack.c.b16 %v1517, %v1516
        %v1521 = vpack.c.b16 %v1519, %v1518
        %v1525 = vsel %vm1134, %v1500, 0
        %v1528 = vsel %vm1134, %v1501, 0
        %v1531 = vsel %vm1134, %v1502, 0
        %v1534 = vsel %vm1134, %v1503, 0
        %v1537 = vsel %vm1134, %v1504, 0
        %v1540 = vsel %vm1134, %v1505, 0
        %v1543 = vsel %vm1134, %v1506, 0
        %v1546 = vsel %vm1134, %v1507, 0
        %1548 = vmatprep.subr.bf16.mxu0 0
        %1549 = vmatpush1.bf16.msra.mxu0 0
        %1550 = vmatprep.subr.bf16.mxu0 0
        %1551 = vmatpush1.bf16.msra.mxu0 0
        %1552 = vmatprep.subr.bf16.mxu0 0
        %1553 = vmatpush1.bf16.msra.mxu0 0
        %1554 = vmatprep.subr.bf16.mxu0 0
        %1555 = vmatpush1.bf16.msra.mxu0 0
        %1556 = vmatprep.subr.bf16.mxu0 0
        %1557 = vmatpush1.bf16.msra.mxu0 0
        %1558 = vmatprep.subr.bf16.mxu0 0
        %1559 = vmatpush1.bf16.msra.mxu0 0
        %1560 = vmatprep.subr.bf16.mxu0 0
        %1561 = vmatpush1.bf16.msra.mxu0 %v1521
        %1562 = vmatprep.subr.bf16.mxu0 0
        %1563 = vmatpush1.bf16.msra.mxu0 %v1520
        %1564 = vmatprep.subr.bf16.mxu0 0
        %1565 = vmatpush2.bf16.msra.mxu0 0
        %1566 = vmatprep.subr.bf16.mxu0 0
        %1567 = vmatpush2.bf16.msra.mxu0 0
        %1568 = vmatprep.subr.bf16.mxu0 0
        %1569 = vmatpush2.bf16.msra.mxu0 0
        %1570 = vmatprep.subr.bf16.mxu0 0
        %1571 = vmatpush2.bf16.msra.mxu0 0
        %1572 = vmatprep.subr.bf16.mxu0 0
        %1573 = vmatpush2.bf16.msra.mxu0 0
        %1574 = vmatprep.subr.bf16.mxu0 0
        %1575 = vmatpush2.bf16.msra.mxu0 0
        %1576 = vmatprep.subr.bf16.mxu0 0
        %1577 = vmatpush2.bf16.msra.mxu0 0
        %1578 = vmatprep.subr.bf16.mxu0 0
        %1579 = vmatpush2.bf16.msra.mxu0 0
        %1580 = vmatprep.mubr.bf16.mxu0 0
        %1581 = vmatmul.mubr.bf16.gmra.mxu0 %v1525
        %v1582 = vpop.f32.mrf.mxu0
        %v1583 = vadd.f32 0.0, %v1582
        %v1584 = vpop.f32.mrf.mxu0
        %v1585 = vpop.f32.mrf.mxu0
        %v1586 = vadd.f32 0.0, %v1585
        %v1587 = vpop.f32.mrf.mxu0
        %1588 = vmatprep.mubr.bf16.mxu0 0
        %1589 = vmatmul.mubr.bf16.gmra.mxu0 %v1528
        %v1590 = vpop.f32.mrf.mxu0
        %v1591 = vadd.f32 0.0, %v1590
        %v1592 = vpop.f32.mrf.mxu0
        %v1593 = vpop.f32.mrf.mxu0
        %v1594 = vadd.f32 0.0, %v1593
        %v1595 = vpop.f32.mrf.mxu0
        %1596 = vmatprep.mubr.bf16.mxu0 0
        %1597 = vmatmul.mubr.bf16.gmra.mxu0 %v1531
        %v1598 = vpop.f32.mrf.mxu0
        %v1599 = vadd.f32 0.0, %v1598
        %v1600 = vpop.f32.mrf.mxu0
        %v1601 = vpop.f32.mrf.mxu0
        %v1602 = vadd.f32 0.0, %v1601
        %v1603 = vpop.f32.mrf.mxu0
        %1604 = vmatprep.mubr.bf16.mxu0 0
        %1605 = vmatmul.mubr.bf16.gmra.mxu0 %v1534
        %v1606 = vpop.f32.mrf.mxu0
        %v1607 = vadd.f32 0.0, %v1606
        %v1608 = vpop.f32.mrf.mxu0
        %v1609 = vpop.f32.mrf.mxu0
        %v1610 = vadd.f32 0.0, %v1609
        %v1611 = vpop.f32.mrf.mxu0
        %1612 = vmatprep.mubr.bf16.mxu0 0
        %1613 = vmatmul.mubr.bf16.gmra.mxu0 %v1537
        %v1614 = vpop.f32.mrf.mxu0
        %v1615 = vadd.f32 0.0, %v1614
        %v1616 = vpop.f32.mrf.mxu0
        %v1617 = vpop.f32.mrf.mxu0
        %v1618 = vadd.f32 0.0, %v1617
        %v1619 = vpop.f32.mrf.mxu0
        %1620 = vmatprep.mubr.bf16.mxu0 0
        %1621 = vmatmul.mubr.bf16.gmra.mxu0 %v1540
        %v1622 = vpop.f32.mrf.mxu0
        %v1623 = vadd.f32 0.0, %v1622
        %v1624 = vpop.f32.mrf.mxu0
        %v1625 = vpop.f32.mrf.mxu0
        %v1626 = vadd.f32 0.0, %v1625
        %v1627 = vpop.f32.mrf.mxu0
        %1628 = vmatprep.mubr.bf16.mxu0 0
        %1629 = vmatmul.mubr.bf16.gmra.mxu0 %v1543
        %v1630 = vpop.f32.mrf.mxu0
        %v1631 = vadd.f32 0.0, %v1630
        %v1632 = vpop.f32.mrf.mxu0
        %v1633 = vpop.f32.mrf.mxu0
        %v1634 = vadd.f32 0.0, %v1633
        %v1635 = vpop.f32.mrf.mxu0
        %1636 = vmatprep.mubr.bf16.mxu0 0
        %1637 = vmatmul.mubr.bf16.gmra.mxu0 %v1546
        %v1638 = vpop.f32.mrf.mxu0
        %v1639 = vadd.f32 0.0, %v1638
        %v1640 = vpop.f32.mrf.mxu0
        %v1641 = vpop.f32.mrf.mxu0
        %v1642 = vadd.f32 0.0, %v1641
        %v1643 = vpop.f32.mrf.mxu0
        %1644 = vdwg.mxu0
        %v1645 = vld [vmem:[%s865] sm:$0xf]
        %v1646 = vld [vmem:[%s865 + $0x4] sm:$0xf]
        %v1647 = vld [vmem:[%s865 + $0x8] sm:$0xf]
        %v1648 = vld [vmem:[%s865 + $0xc] sm:$0xf]
        %v1653 = vunpack.c.l.b16 %v1645
        %v1654 = vunpack.c.l.b16 %v1646
        %v1655 = vunpack.c.l.b16 %v1647
        %v1656 = vunpack.c.l.b16 %v1648
        %v1657 = vpack.c.b16 %v1654, %v1653
        %v1658 = vpack.c.b16 %v1656, %v1655
        %1661 = vmatprep.subr.bf16.mxu0 0
        %1662 = vmatpush1.bf16.msra.mxu0 0
        %1663 = vmatprep.subr.bf16.mxu0 0
        %1664 = vmatpush1.bf16.msra.mxu0 0
        %1665 = vmatprep.subr.bf16.mxu0 0
        %1666 = vmatpush1.bf16.msra.mxu0 0
        %1667 = vmatprep.subr.bf16.mxu0 0
        %1668 = vmatpush1.bf16.msra.mxu0 0
        %1669 = vmatprep.subr.bf16.mxu0 0
        %1670 = vmatpush1.bf16.msra.mxu0 0
        %1671 = vmatprep.subr.bf16.mxu0 0
        %1672 = vmatpush1.bf16.msra.mxu0 0
        %1673 = vmatprep.subr.bf16.mxu0 0
        %1674 = vmatpush1.bf16.msra.mxu0 %v1658
        %1675 = vmatprep.subr.bf16.mxu0 0
        %1676 = vmatpush1.bf16.msra.mxu0 %v1657
        %1677 = vmatprep.subr.bf16.mxu0 0
        %1678 = vmatpush2.bf16.msra.mxu0 0
        %1679 = vmatprep.subr.bf16.mxu0 0
        %1680 = vmatpush2.bf16.msra.mxu0 0
        %1681 = vmatprep.subr.bf16.mxu0 0
        %1682 = vmatpush2.bf16.msra.mxu0 0
        %1683 = vmatprep.subr.bf16.mxu0 0
        %1684 = vmatpush2.bf16.msra.mxu0 0
        %1685 = vmatprep.subr.bf16.mxu0 0
        %1686 = vmatpush2.bf16.msra.mxu0 0
        %1687 = vmatprep.subr.bf16.mxu0 0
        %1688 = vmatpush2.bf16.msra.mxu0 0
        %1689 = vmatprep.subr.bf16.mxu0 0
        %1690 = vmatpush2.bf16.msra.mxu0 0
        %1691 = vmatprep.subr.bf16.mxu0 0
        %1692 = vmatpush2.bf16.msra.mxu0 0
        %1693 = vmatprep.mubr.bf16.mxu0 0
        %1694 = vmatmul.mubr.bf16.gmra.mxu0 %v1525
        %v1695 = vpop.f32.mrf.mxu0
        %v1696 = vadd.f32 0.0, %v1695
        %v1697 = vpop.f32.mrf.mxu0
        %v1698 = vpop.f32.mrf.mxu0
        %v1699 = vadd.f32 0.0, %v1698
        %v1700 = vpop.f32.mrf.mxu0
        %1701 = vmatprep.mubr.bf16.mxu0 0
        %1702 = vmatmul.mubr.bf16.gmra.mxu0 %v1528
        %v1703 = vpop.f32.mrf.mxu0
        %v1704 = vadd.f32 0.0, %v1703
        %v1705 = vpop.f32.mrf.mxu0
        %v1706 = vpop.f32.mrf.mxu0
        %v1707 = vadd.f32 0.0, %v1706
        %v1708 = vpop.f32.mrf.mxu0
        %1709 = vmatprep.mubr.bf16.mxu0 0
        %1710 = vmatmul.mubr.bf16.gmra.mxu0 %v1531
        %v1711 = vpop.f32.mrf.mxu0
        %v1712 = vadd.f32 0.0, %v1711
        %v1713 = vpop.f32.mrf.mxu0
        %v1714 = vpop.f32.mrf.mxu0
        %v1715 = vadd.f32 0.0, %v1714
        %v1716 = vpop.f32.mrf.mxu0
        %1717 = vmatprep.mubr.bf16.mxu0 0
        %1718 = vmatmul.mubr.bf16.gmra.mxu0 %v1534
        %v1719 = vpop.f32.mrf.mxu0
        %v1720 = vadd.f32 0.0, %v1719
        %v1721 = vpop.f32.mrf.mxu0
        %v1722 = vpop.f32.mrf.mxu0
        %v1723 = vadd.f32 0.0, %v1722
        %v1724 = vpop.f32.mrf.mxu0
        %1725 = vmatprep.mubr.bf16.mxu0 0
        %1726 = vmatmul.mubr.bf16.gmra.mxu0 %v1537
        %v1727 = vpop.f32.mrf.mxu0
        %v1728 = vadd.f32 0.0, %v1727
        %v1729 = vpop.f32.mrf.mxu0
        %v1730 = vpop.f32.mrf.mxu0
        %v1731 = vadd.f32 0.0, %v1730
        %v1732 = vpop.f32.mrf.mxu0
        %1733 = vmatprep.mubr.bf16.mxu0 0
        %1734 = vmatmul.mubr.bf16.gmra.mxu0 %v1540
        %v1735 = vpop.f32.mrf.mxu0
        %v1736 = vadd.f32 0.0, %v1735
        %v1737 = vpop.f32.mrf.mxu0
        %v1738 = vpop.f32.mrf.mxu0
        %v1739 = vadd.f32 0.0, %v1738
        %v1740 = vpop.f32.mrf.mxu0
        %1741 = vmatprep.mubr.bf16.mxu0 0
        %1742 = vmatmul.mubr.bf16.gmra.mxu0 %v1543
        %v1743 = vpop.f32.mrf.mxu0
        %v1744 = vadd.f32 0.0, %v1743
        %v1745 = vpop.f32.mrf.mxu0
        %v1746 = vpop.f32.mrf.mxu0
        %v1747 = vadd.f32 0.0, %v1746
        %v1748 = vpop.f32.mrf.mxu0
        %1749 = vmatprep.mubr.bf16.mxu0 0
        %1750 = vmatmul.mubr.bf16.gmra.mxu0 %v1546
        %v1751 = vpop.f32.mrf.mxu0
        %v1752 = vadd.f32 0.0, %v1751
        %v1753 = vpop.f32.mrf.mxu0
        %v1754 = vpop.f32.mrf.mxu0
        %v1755 = vadd.f32 0.0, %v1754
        %v1756 = vpop.f32.mrf.mxu0
        %1757 = vdwg.mxu0
        %v1758 = vld [vmem:[%s716] sm:$0xf]
        %v1759 = vld [vmem:[%s716 + $0x4] sm:$0xf]
        %v1760 = vld [vmem:[%s716 + $0x8] sm:$0xf]
        %v1761 = vld [vmem:[%s716 + $0xc] sm:$0xf]
        %v1766 = vunpack.c.l.b16 %v1758
        %v1767 = vunpack.c.l.b16 %v1759
        %v1768 = vunpack.c.l.b16 %v1760
        %v1769 = vunpack.c.l.b16 %v1761
        %v1770 = vpack.c.b16 %v1767, %v1766
        %v1771 = vpack.c.b16 %v1769, %v1768
        %1774 = vmatprep.subr.bf16.mxu0 0
        %1775 = vmatpush1.bf16.msra.mxu0 0
        %1776 = vmatprep.subr.bf16.mxu0 0
        %1777 = vmatpush1.bf16.msra.mxu0 0
        %1778 = vmatprep.subr.bf16.mxu0 0
        %1779 = vmatpush1.bf16.msra.mxu0 0
        %1780 = vmatprep.subr.bf16.mxu0 0
        %1781 = vmatpush1.bf16.msra.mxu0 0
        %1782 = vmatprep.subr.bf16.mxu0 0
        %1783 = vmatpush1.bf16.msra.mxu0 0
        %1784 = vmatprep.subr.bf16.mxu0 0
        %1785 = vmatpush1.bf16.msra.mxu0 0
        %1786 = vmatprep.subr.bf16.mxu0 0
        %1787 = vmatpush1.bf16.msra.mxu0 %v1771
        %1788 = vmatprep.subr.bf16.mxu0 0
        %1789 = vmatpush1.bf16.msra.mxu0 %v1770
        %1790 = vmatprep.subr.bf16.mxu0 0
        %1791 = vmatpush2.bf16.msra.mxu0 0
        %1792 = vmatprep.subr.bf16.mxu0 0
        %1793 = vmatpush2.bf16.msra.mxu0 0
        %1794 = vmatprep.subr.bf16.mxu0 0
        %1795 = vmatpush2.bf16.msra.mxu0 0
        %1796 = vmatprep.subr.bf16.mxu0 0
        %1797 = vmatpush2.bf16.msra.mxu0 0
        %1798 = vmatprep.subr.bf16.mxu0 0
        %1799 = vmatpush2.bf16.msra.mxu0 0
        %1800 = vmatprep.subr.bf16.mxu0 0
        %1801 = vmatpush2.bf16.msra.mxu0 0
        %1802 = vmatprep.subr.bf16.mxu0 0
        %1803 = vmatpush2.bf16.msra.mxu0 0
        %1804 = vmatprep.subr.bf16.mxu0 0
        %1805 = vmatpush2.bf16.msra.mxu0 0
        %1806 = vmatprep.mubr.bf16.mxu0 0
        %1807 = vmatmul.mubr.bf16.gmra.mxu0 %v1525
        %v1808 = vpop.f32.mrf.mxu0
        %v1809 = vadd.f32 0.0, %v1808
        %v1810 = vpop.f32.mrf.mxu0
        %v1811 = vpop.f32.mrf.mxu0
        %v1812 = vadd.f32 0.0, %v1811
        %v1813 = vpop.f32.mrf.mxu0
        %1814 = vmatprep.mubr.bf16.mxu0 0
        %1815 = vmatmul.mubr.bf16.gmra.mxu0 %v1528
        %v1816 = vpop.f32.mrf.mxu0
        %v1817 = vadd.f32 0.0, %v1816
        %v1818 = vpop.f32.mrf.mxu0
        %v1819 = vpop.f32.mrf.mxu0
        %v1820 = vadd.f32 0.0, %v1819
        %v1821 = vpop.f32.mrf.mxu0
        %1822 = vmatprep.mubr.bf16.mxu0 0
        %1823 = vmatmul.mubr.bf16.gmra.mxu0 %v1531
        %v1824 = vpop.f32.mrf.mxu0
        %v1825 = vadd.f32 0.0, %v1824
        %v1826 = vpop.f32.mrf.mxu0
        %v1827 = vpop.f32.mrf.mxu0
        %v1828 = vadd.f32 0.0, %v1827
        %v1829 = vpop.f32.mrf.mxu0
        %1830 = vmatprep.mubr.bf16.mxu0 0
        %1831 = vmatmul.mubr.bf16.gmra.mxu0 %v1534
        %v1832 = vpop.f32.mrf.mxu0
        %v1833 = vadd.f32 0.0, %v1832
        %v1834 = vpop.f32.mrf.mxu0
        %v1835 = vpop.f32.mrf.mxu0
        %v1836 = vadd.f32 0.0, %v1835
        %v1837 = vpop.f32.mrf.mxu0
        %1838 = vmatprep.mubr.bf16.mxu0 0
        %1839 = vmatmul.mubr.bf16.gmra.mxu0 %v1537
        %v1840 = vpop.f32.mrf.mxu0
        %v1841 = vadd.f32 0.0, %v1840
        %v1842 = vpop.f32.mrf.mxu0
        %v1843 = vpop.f32.mrf.mxu0
        %v1844 = vadd.f32 0.0, %v1843
        %v1845 = vpop.f32.mrf.mxu0
        %1846 = vmatprep.mubr.bf16.mxu0 0
        %1847 = vmatmul.mubr.bf16.gmra.mxu0 %v1540
        %v1848 = vpop.f32.mrf.mxu0
        %v1849 = vadd.f32 0.0, %v1848
        %v1850 = vpop.f32.mrf.mxu0
        %v1851 = vpop.f32.mrf.mxu0
        %v1852 = vadd.f32 0.0, %v1851
        %v1853 = vpop.f32.mrf.mxu0
        %1854 = vmatprep.mubr.bf16.mxu0 0
        %1855 = vmatmul.mubr.bf16.gmra.mxu0 %v1543
        %v1856 = vpop.f32.mrf.mxu0
        %v1857 = vadd.f32 0.0, %v1856
        %v1858 = vpop.f32.mrf.mxu0
        %v1859 = vpop.f32.mrf.mxu0
        %v1860 = vadd.f32 0.0, %v1859
        %v1861 = vpop.f32.mrf.mxu0
        %1862 = vmatprep.mubr.bf16.mxu0 0
        %1863 = vmatmul.mubr.bf16.gmra.mxu0 %v1546
        %v1864 = vpop.f32.mrf.mxu0
        %v1865 = vadd.f32 0.0, %v1864
        %v1866 = vpop.f32.mrf.mxu0
        %v1867 = vpop.f32.mrf.mxu0
        %v1868 = vadd.f32 0.0, %v1867
        %v1869 = vpop.f32.mrf.mxu0
        %1870 = vdwg.mxu0
        %v1871 = vpack.c.bf16 %v1583, %v1583
        %v1872 = vpack.c.bf16 %v1586, %v1586
        %v1873 = vpack.c.bf16 %v1591, %v1591
        %v1874 = vpack.c.bf16 %v1594, %v1594
        %v1875 = vpack.c.bf16 %v1599, %v1599
        %v1876 = vpack.c.bf16 %v1602, %v1602
        %v1877 = vpack.c.bf16 %v1607, %v1607
        %v1878 = vpack.c.bf16 %v1610, %v1610
        %v1879 = vpack.c.bf16 %v1615, %v1615
        %v1880 = vpack.c.bf16 %v1618, %v1618
        %v1881 = vpack.c.bf16 %v1623, %v1623
        %v1882 = vpack.c.bf16 %v1626, %v1626
        %v1883 = vpack.c.bf16 %v1631, %v1631
        %v1884 = vpack.c.bf16 %v1634, %v1634
        %v1885 = vpack.c.bf16 %v1639, %v1639
        %v1886 = vpack.c.bf16 %v1642, %v1642
        %v1887 = vpack.c.bf16 %v1696, %v1696
        %v1888 = vpack.c.bf16 %v1699, %v1699
        %v1889 = vpack.c.bf16 %v1704, %v1704
        %v1890 = vpack.c.bf16 %v1707, %v1707
        %v1891 = vpack.c.bf16 %v1712, %v1712
        %v1892 = vpack.c.bf16 %v1715, %v1715
        %v1893 = vpack.c.bf16 %v1720, %v1720
        %v1894 = vpack.c.bf16 %v1723, %v1723
        %v1895 = vpack.c.bf16 %v1728, %v1728
        %v1896 = vpack.c.bf16 %v1731, %v1731
        %v1897 = vpack.c.bf16 %v1736, %v1736
        %v1898 = vpack.c.bf16 %v1739, %v1739
        %v1899 = vpack.c.bf16 %v1744, %v1744
        %v1900 = vpack.c.bf16 %v1747, %v1747
        %v1901 = vpack.c.bf16 %v1752, %v1752
        %v1902 = vpack.c.bf16 %v1755, %v1755
        %v1903 = vpack.c.bf16 %v1809, %v1809
        %v1904 = vpack.c.bf16 %v1812, %v1812
        %v1905 = vpack.c.bf16 %v1817, %v1817
        %v1906 = vpack.c.bf16 %v1820, %v1820
        %v1907 = vpack.c.bf16 %v1825, %v1825
        %v1908 = vpack.c.bf16 %v1828, %v1828
        %v1909 = vpack.c.bf16 %v1833, %v1833
        %v1910 = vpack.c.bf16 %v1836, %v1836
        %v1911 = vpack.c.bf16 %v1841, %v1841
        %v1912 = vpack.c.bf16 %v1844, %v1844
        %v1913 = vpack.c.bf16 %v1849, %v1849
        %v1914 = vpack.c.bf16 %v1852, %v1852
        %v1915 = vpack.c.bf16 %v1857, %v1857
        %v1916 = vpack.c.bf16 %v1860, %v1860
        %v1917 = vpack.c.bf16 %v1865, %v1865
        %v1918 = vpack.c.bf16 %v1868, %v1868
        %v1935 = vlaneseq
        %v1936 = vshrl.u32 %v1935, 7
        %v1937 = vsub.s32 0, %v1936
        %v1938 = vrot.slane %v1116, %v1937
        %v1939 = vlaneseq
        %v1940 = vshrl.u32 %v1939, 7
        %v1941 = vsub.s32 0, %v1940
        %v1942 = vrot.slane %v1117, %v1941
        %v1943 = vlaneseq
        %v1944 = vshrl.u32 %v1943, 7
        %v1945 = vsub.s32 0, %v1944
        %v1946 = vrot.slane %v1118, %v1945
        %v1947 = vlaneseq
        %v1948 = vshrl.u32 %v1947, 7
        %v1949 = vsub.s32 0, %v1948
        %v1950 = vrot.slane %v1119, %v1949
        %v1951 = vlaneseq
        %v1952 = vshrl.u32 %v1951, 7
        %v1953 = vsub.s32 0, %v1952
        %v1954 = vrot.slane %v1120, %v1953
        %v1955 = vlaneseq
        %v1956 = vshrl.u32 %v1955, 7
        %v1957 = vsub.s32 0, %v1956
        %v1958 = vrot.slane %v1121, %v1957
        %v1959 = vlaneseq
        %v1960 = vshrl.u32 %v1959, 7
        %v1961 = vsub.s32 0, %v1960
        %v1962 = vrot.slane %v1122, %v1961
        %v1963 = vlaneseq
        %v1964 = vshrl.u32 %v1963, 7
        %v1965 = vsub.s32 0, %v1964
        %v1966 = vrot.slane %v1123, %v1965
        %v1967 = vlaneseq
        %v1968 = vshrl.u32 %v1967, 7
        %v1969 = vsub.s32 0, %v1968
        %v1970 = vrot.slane %v1124, %v1969
        %v1971 = vlaneseq
        %v1972 = vshrl.u32 %v1971, 7
        %v1973 = vsub.s32 0, %v1972
        %v1974 = vrot.slane %v1125, %v1973
        %v1975 = vlaneseq
        %v1976 = vshrl.u32 %v1975, 7
        %v1977 = vsub.s32 0, %v1976
        %v1978 = vrot.slane %v1126, %v1977
        %v1979 = vlaneseq
        %v1980 = vshrl.u32 %v1979, 7
        %v1981 = vsub.s32 0, %v1980
        %v1982 = vrot.slane %v1127, %v1981
        %v1983 = vlaneseq
        %v1984 = vshrl.u32 %v1983, 7
        %v1985 = vsub.s32 0, %v1984
        %v1986 = vrot.slane %v1128, %v1985
        %v1987 = vlaneseq
        %v1988 = vshrl.u32 %v1987, 7
        %v1989 = vsub.s32 0, %v1988
        %v1990 = vrot.slane %v1129, %v1989
        %v1991 = vlaneseq
        %v1992 = vshrl.u32 %v1991, 7
        %v1993 = vsub.s32 0, %v1992
        %v1994 = vrot.slane %v1130, %v1993
        %v1995 = vlaneseq
        %v1996 = vshrl.u32 %v1995, 7
        %v1997 = vsub.s32 0, %v1996
        %v1998 = vrot.slane %v1131, %v1997
        %vm2015 = vcmask 130048
        %v2017 = vsel %vm2015, %v1871, 0
        %v2020 = vsel %vm2015, %v1887, 0
        %2022 = vmatprep.subr.bf16.mxu0 0
        %2023 = vmatpush1.bf16.xpose.msra.mxu0 0
        %2024 = vmatprep.subr.bf16.mxu0 0
        %2025 = vmatpush1.bf16.xpose.msra.mxu0 0
        %2026 = vmatprep.subr.bf16.mxu0 0
        %2027 = vmatpush1.bf16.xpose.msra.mxu0 0
        %2028 = vmatprep.subr.bf16.mxu0 0
        %2029 = vmatpush1.bf16.xpose.msra.mxu0 0
        %2030 = vmatprep.subr.bf16.mxu0 0
        %2031 = vmatpush1.bf16.xpose.msra.mxu0 0
        %2032 = vmatprep.subr.bf16.mxu0 0
        %2033 = vmatpush1.bf16.xpose.msra.mxu0 0
        %2034 = vmatprep.subr.bf16.mxu0 0
        %2035 = vmatpush1.bf16.xpose.msra.mxu0 0
        %2036 = vmatprep.subr.bf16.mxu0 0
        %2037 = vmatpush1.bf16.xpose.msra.mxu0 %v2020
        %2038 = vmatprep.subr.bf16.mxu0 0
        %2039 = vmatpush2.bf16.xpose.msra.mxu0 0
        %2040 = vmatprep.subr.bf16.mxu0 0
        %2041 = vmatpush2.bf16.xpose.msra.mxu0 0
        %2042 = vmatprep.subr.bf16.mxu0 0
        %2043 = vmatpush2.bf16.xpose.msra.mxu0 0
        %2044 = vmatprep.subr.bf16.mxu0 0
        %2045 = vmatpush2.bf16.xpose.msra.mxu0 0
        %2046 = vmatprep.subr.bf16.mxu0 0
        %2047 = vmatpush2.bf16.xpose.msra.mxu0 0
        %2048 = vmatprep.subr.bf16.mxu0 0
        %2049 = vmatpush2.bf16.xpose.msra.mxu0 0
        %2050 = vmatprep.subr.bf16.mxu0 0
        %2051 = vmatpush2.bf16.xpose.msra.mxu0 0
        %2052 = vmatprep.subr.bf16.mxu0 0
        %2053 = vmatpush2.bf16.xpose.msra.mxu0 0
        %2054 = vmatprep.mubr.bf16.mxu0 0
        %2055 = vmatmul.mubr.bf16.gmra.mxu0 %v2017
        %v2056 = vpop.f32.mrf.mxu0
        %v2057 = vadd.f32 %v1938, %v2056
        %v2058 = vpop.f32.mrf.mxu0
        %v2059 = vpop.f32.mrf.mxu0
        %v2060 = vpop.f32.mrf.mxu0
        %2061 = vdwg.mxu0
        %v2063 = vsel %vm2015, %v1872, 0
        %v2066 = vsel %vm2015, %v1888, 0
        %2068 = vmatprep.subr.bf16.mxu0 0
        %2069 = vmatpush1.bf16.xpose.msra.mxu0 0
        %2070 = vmatprep.subr.bf16.mxu0 0
        %2071 = vmatpush1.bf16.xpose.msra.mxu0 0
        %2072 = vmatprep.subr.bf16.mxu0 0
        %2073 = vmatpush1.bf16.xpose.msra.mxu0 0
        %2074 = vmatprep.subr.bf16.mxu0 0
        %2075 = vmatpush1.bf16.xpose.msra.mxu0 0
        %2076 = vmatprep.subr.bf16.mxu0 0
        %2077 = vmatpush1.bf16.xpose.msra.mxu0 0
        %2078 = vmatprep.subr.bf16.mxu0 0
        %2079 = vmatpush1.bf16.xpose.msra.mxu0 0
        %2080 = vmatprep.subr.bf16.mxu0 0
        %2081 = vmatpush1.bf16.xpose.msra.mxu0 0
        %2082 = vmatprep.subr.bf16.mxu0 0
        %2083 = vmatpush1.bf16.xpose.msra.mxu0 %v2066
        %2084 = vmatprep.subr.bf16.mxu0 0
        %2085 = vmatpush2.bf16.xpose.msra.mxu0 0
        %2086 = vmatprep.subr.bf16.mxu0 0
        %2087 = vmatpush2.bf16.xpose.msra.mxu0 0
        %2088 = vmatprep.subr.bf16.mxu0 0
        %2089 = vmatpush2.bf16.xpose.msra.mxu0 0
        %2090 = vmatprep.subr.bf16.mxu0 0
        %2091 = vmatpush2.bf16.xpose.msra.mxu0 0
        %2092 = vmatprep.subr.bf16.mxu0 0
        %2093 = vmatpush2.bf16.xpose.msra.mxu0 0
        %2094 = vmatprep.subr.bf16.mxu0 0
        %2095 = vmatpush2.bf16.xpose.msra.mxu0 0
        %2096 = vmatprep.subr.bf16.mxu0 0
        %2097 = vmatpush2.bf16.xpose.msra.mxu0 0
        %2098 = vmatprep.subr.bf16.mxu0 0
        %2099 = vmatpush2.bf16.xpose.msra.mxu0 0
        %2100 = vmatprep.mubr.bf16.mxu0 0
        %2101 = vmatmul.mubr.bf16.gmra.mxu0 %v2063
        %v2102 = vpop.f32.mrf.mxu0
        %v2103 = vadd.f32 %v1942, %v2102
        %v2104 = vpop.f32.mrf.mxu0
        %v2105 = vpop.f32.mrf.mxu0
        %v2106 = vpop.f32.mrf.mxu0
        %2107 = vdwg.mxu0
        %v2109 = vsel %vm2015, %v1873, 0
        %v2112 = vsel %vm2015, %v1889, 0
        %2114 = vmatprep.subr.bf16.mxu0 0
        %2115 = vmatpush1.bf16.xpose.msra.mxu0 0
        %2116 = vmatprep.subr.bf16.mxu0 0
        %2117 = vmatpush1.bf16.xpose.msra.mxu0 0
        %2118 = vmatprep.subr.bf16.mxu0 0
        %2119 = vmatpush1.bf16.xpose.msra.mxu0 0
        %2120 = vmatprep.subr.bf16.mxu0 0
        %2121 = vmatpush1.bf16.xpose.msra.mxu0 0
        %2122 = vmatprep.subr.bf16.mxu0 0
        %2123 = vmatpush1.bf16.xpose.msra.mxu0 0
        %2124 = vmatprep.subr.bf16.mxu0 0
        %2125 = vmatpush1.bf16.xpose.msra.mxu0 0
        %2126 = vmatprep.subr.bf16.mxu0 0
        %2127 = vmatpush1.bf16.xpose.msra.mxu0 0
        %2128 = vmatprep.subr.bf16.mxu0 0
        %2129 = vmatpush1.bf16.xpose.msra.mxu0 %v2112
        %2130 = vmatprep.subr.bf16.mxu0 0
        %2131 = vmatpush2.bf16.xpose.msra.mxu0 0
        %2132 = vmatprep.subr.bf16.mxu0 0
        %2133 = vmatpush2.bf16.xpose.msra.mxu0 0
        %2134 = vmatprep.subr.bf16.mxu0 0
        %2135 = vmatpush2.bf16.xpose.msra.mxu0 0
        %2136 = vmatprep.subr.bf16.mxu0 0
        %2137 = vmatpush2.bf16.xpose.msra.mxu0 0
        %2138 = vmatprep.subr.bf16.mxu0 0
        %2139 = vmatpush2.bf16.xpose.msra.mxu0 0
        %2140 = vmatprep.subr.bf16.mxu0 0
        %2141 = vmatpush2.bf16.xpose.msra.mxu0 0
        %2142 = vmatprep.subr.bf16.mxu0 0
        %2143 = vmatpush2.bf16.xpose.msra.mxu0 0
        %2144 = vmatprep.subr.bf16.mxu0 0
        %2145 = vmatpush2.bf16.xpose.msra.mxu0 0
        %2146 = vmatprep.mubr.bf16.mxu0 0
        %2147 = vmatmul.mubr.bf16.gmra.mxu0 %v2109
        %v2148 = vpop.f32.mrf.mxu0
        %v2149 = vadd.f32 %v1946, %v2148
        %v2150 = vpop.f32.mrf.mxu0
        %v2151 = vpop.f32.mrf.mxu0
        %v2152 = vpop.f32.mrf.mxu0
        %2153 = vdwg.mxu0
        %v2155 = vsel %vm2015, %v1874, 0
        %v2158 = vsel %vm2015, %v1890, 0
        %2160 = vmatprep.subr.bf16.mxu0 0
        %2161 = vmatpush1.bf16.xpose.msra.mxu0 0
        %2162 = vmatprep.subr.bf16.mxu0 0
        %2163 = vmatpush1.bf16.xpose.msra.mxu0 0
        %2164 = vmatprep.subr.bf16.mxu0 0
        %2165 = vmatpush1.bf16.xpose.msra.mxu0 0
        %2166 = vmatprep.subr.bf16.mxu0 0
        %2167 = vmatpush1.bf16.xpose.msra.mxu0 0
        %2168 = vmatprep.subr.bf16.mxu0 0
        %2169 = vmatpush1.bf16.xpose.msra.mxu0 0
        %2170 = vmatprep.subr.bf16.mxu0 0
        %2171 = vmatpush1.bf16.xpose.msra.mxu0 0
        %2172 = vmatprep.subr.bf16.mxu0 0
        %2173 = vmatpush1.bf16.xpose.msra.mxu0 0
        %2174 = vmatprep.subr.bf16.mxu0 0
        %2175 = vmatpush1.bf16.xpose.msra.mxu0 %v2158
        %2176 = vmatprep.subr.bf16.mxu0 0
        %2177 = vmatpush2.bf16.xpose.msra.mxu0 0
        %2178 = vmatprep.subr.bf16.mxu0 0
        %2179 = vmatpush2.bf16.xpose.msra.mxu0 0
        %2180 = vmatprep.subr.bf16.mxu0 0
        %2181 = vmatpush2.bf16.xpose.msra.mxu0 0
        %2182 = vmatprep.subr.bf16.mxu0 0
        %2183 = vmatpush2.bf16.xpose.msra.mxu0 0
        %2184 = vmatprep.subr.bf16.mxu0 0
        %2185 = vmatpush2.bf16.xpose.msra.mxu0 0
        %2186 = vmatprep.subr.bf16.mxu0 0
        %2187 = vmatpush2.bf16.xpose.msra.mxu0 0
        %2188 = vmatprep.subr.bf16.mxu0 0
        %2189 = vmatpush2.bf16.xpose.msra.mxu0 0
        %2190 = vmatprep.subr.bf16.mxu0 0
        %2191 = vmatpush2.bf16.xpose.msra.mxu0 0
        %2192 = vmatprep.mubr.bf16.mxu0 0
        %2193 = vmatmul.mubr.bf16.gmra.mxu0 %v2155
        %v2194 = vpop.f32.mrf.mxu0
        %v2195 = vadd.f32 %v1950, %v2194
        %v2196 = vpop.f32.mrf.mxu0
        %v2197 = vpop.f32.mrf.mxu0
        %v2198 = vpop.f32.mrf.mxu0
        %2199 = vdwg.mxu0
        %v2201 = vsel %vm2015, %v1875, 0
        %v2204 = vsel %vm2015, %v1891, 0
        %2206 = vmatprep.subr.bf16.mxu0 0
        %2207 = vmatpush1.bf16.xpose.msra.mxu0 0
        %2208 = vmatprep.subr.bf16.mxu0 0
        %2209 = vmatpush1.bf16.xpose.msra.mxu0 0
        %2210 = vmatprep.subr.bf16.mxu0 0
        %2211 = vmatpush1.bf16.xpose.msra.mxu0 0
        %2212 = vmatprep.subr.bf16.mxu0 0
        %2213 = vmatpush1.bf16.xpose.msra.mxu0 0
        %2214 = vmatprep.subr.bf16.mxu0 0
        %2215 = vmatpush1.bf16.xpose.msra.mxu0 0
        %2216 = vmatprep.subr.bf16.mxu0 0
        %2217 = vmatpush1.bf16.xpose.msra.mxu0 0
        %2218 = vmatprep.subr.bf16.mxu0 0
        %2219 = vmatpush1.bf16.xpose.msra.mxu0 0
        %2220 = vmatprep.subr.bf16.mxu0 0
        %2221 = vmatpush1.bf16.xpose.msra.mxu0 %v2204
        %2222 = vmatprep.subr.bf16.mxu0 0
        %2223 = vmatpush2.bf16.xpose.msra.mxu0 0
        %2224 = vmatprep.subr.bf16.mxu0 0
        %2225 = vmatpush2.bf16.xpose.msra.mxu0 0
        %2226 = vmatprep.subr.bf16.mxu0 0
        %2227 = vmatpush2.bf16.xpose.msra.mxu0 0
        %2228 = vmatprep.subr.bf16.mxu0 0
        %2229 = vmatpush2.bf16.xpose.msra.mxu0 0
        %2230 = vmatprep.subr.bf16.mxu0 0
        %2231 = vmatpush2.bf16.xpose.msra.mxu0 0
        %2232 = vmatprep.subr.bf16.mxu0 0
        %2233 = vmatpush2.bf16.xpose.msra.mxu0 0
        %2234 = vmatprep.subr.bf16.mxu0 0
        %2235 = vmatpush2.bf16.xpose.msra.mxu0 0
        %2236 = vmatprep.subr.bf16.mxu0 0
        %2237 = vmatpush2.bf16.xpose.msra.mxu0 0
        %2238 = vmatprep.mubr.bf16.mxu0 0
        %2239 = vmatmul.mubr.bf16.gmra.mxu0 %v2201
        %v2240 = vpop.f32.mrf.mxu0
        %v2241 = vadd.f32 %v1954, %v2240
        %v2242 = vpop.f32.mrf.mxu0
        %v2243 = vpop.f32.mrf.mxu0
        %v2244 = vpop.f32.mrf.mxu0
        %2245 = vdwg.mxu0
        %v2247 = vsel %vm2015, %v1876, 0
        %v2250 = vsel %vm2015, %v1892, 0
        %2252 = vmatprep.subr.bf16.mxu0 0
        %2253 = vmatpush1.bf16.xpose.msra.mxu0 0
        %2254 = vmatprep.subr.bf16.mxu0 0
        %2255 = vmatpush1.bf16.xpose.msra.mxu0 0
        %2256 = vmatprep.subr.bf16.mxu0 0
        %2257 = vmatpush1.bf16.xpose.msra.mxu0 0
        %2258 = vmatprep.subr.bf16.mxu0 0
        %2259 = vmatpush1.bf16.xpose.msra.mxu0 0
        %2260 = vmatprep.subr.bf16.mxu0 0
        %2261 = vmatpush1.bf16.xpose.msra.mxu0 0
        %2262 = vmatprep.subr.bf16.mxu0 0
        %2263 = vmatpush1.bf16.xpose.msra.mxu0 0
        %2264 = vmatprep.subr.bf16.mxu0 0
        %2265 = vmatpush1.bf16.xpose.msra.mxu0 0
        %2266 = vmatprep.subr.bf16.mxu0 0
        %2267 = vmatpush1.bf16.xpose.msra.mxu0 %v2250
        %2268 = vmatprep.subr.bf16.mxu0 0
        %2269 = vmatpush2.bf16.xpose.msra.mxu0 0
        %2270 = vmatprep.subr.bf16.mxu0 0
        %2271 = vmatpush2.bf16.xpose.msra.mxu0 0
        %2272 = vmatprep.subr.bf16.mxu0 0
        %2273 = vmatpush2.bf16.xpose.msra.mxu0 0
        %2274 = vmatprep.subr.bf16.mxu0 0
        %2275 = vmatpush2.bf16.xpose.msra.mxu0 0
        %2276 = vmatprep.subr.bf16.mxu0 0
        %2277 = vmatpush2.bf16.xpose.msra.mxu0 0
        %2278 = vmatprep.subr.bf16.mxu0 0
        %2279 = vmatpush2.bf16.xpose.msra.mxu0 0
        %2280 = vmatprep.subr.bf16.mxu0 0
        %2281 = vmatpush2.bf16.xpose.msra.mxu0 0
        %2282 = vmatprep.subr.bf16.mxu0 0
        %2283 = vmatpush2.bf16.xpose.msra.mxu0 0
        %2284 = vmatprep.mubr.bf16.mxu0 0
        %2285 = vmatmul.mubr.bf16.gmra.mxu0 %v2247
        %v2286 = vpop.f32.mrf.mxu0
        %v2287 = vadd.f32 %v1958, %v2286
        %v2288 = vpop.f32.mrf.mxu0
        %v2289 = vpop.f32.mrf.mxu0
        %v2290 = vpop.f32.mrf.mxu0
        %2291 = vdwg.mxu0
        %v2293 = vsel %vm2015, %v1877, 0
        %v2296 = vsel %vm2015, %v1893, 0
        %2298 = vmatprep.subr.bf16.mxu0 0
        %2299 = vmatpush1.bf16.xpose.msra.mxu0 0
        %2300 = vmatprep.subr.bf16.mxu0 0
        %2301 = vmatpush1.bf16.xpose.msra.mxu0 0
        %2302 = vmatprep.subr.bf16.mxu0 0
        %2303 = vmatpush1.bf16.xpose.msra.mxu0 0
        %2304 = vmatprep.subr.bf16.mxu0 0
        %2305 = vmatpush1.bf16.xpose.msra.mxu0 0
        %2306 = vmatprep.subr.bf16.mxu0 0
        %2307 = vmatpush1.bf16.xpose.msra.mxu0 0
        %2308 = vmatprep.subr.bf16.mxu0 0
        %2309 = vmatpush1.bf16.xpose.msra.mxu0 0
        %2310 = vmatprep.subr.bf16.mxu0 0
        %2311 = vmatpush1.bf16.xpose.msra.mxu0 0
        %2312 = vmatprep.subr.bf16.mxu0 0
        %2313 = vmatpush1.bf16.xpose.msra.mxu0 %v2296
        %2314 = vmatprep.subr.bf16.mxu0 0
        %2315 = vmatpush2.bf16.xpose.msra.mxu0 0
        %2316 = vmatprep.subr.bf16.mxu0 0
        %2317 = vmatpush2.bf16.xpose.msra.mxu0 0
        %2318 = vmatprep.subr.bf16.mxu0 0
        %2319 = vmatpush2.bf16.xpose.msra.mxu0 0
        %2320 = vmatprep.subr.bf16.mxu0 0
        %2321 = vmatpush2.bf16.xpose.msra.mxu0 0
        %2322 = vmatprep.subr.bf16.mxu0 0
        %2323 = vmatpush2.bf16.xpose.msra.mxu0 0
        %2324 = vmatprep.subr.bf16.mxu0 0
        %2325 = vmatpush2.bf16.xpose.msra.mxu0 0
        %2326 = vmatprep.subr.bf16.mxu0 0
        %2327 = vmatpush2.bf16.xpose.msra.mxu0 0
        %2328 = vmatprep.subr.bf16.mxu0 0
        %2329 = vmatpush2.bf16.xpose.msra.mxu0 0
        %2330 = vmatprep.mubr.bf16.mxu0 0
        %2331 = vmatmul.mubr.bf16.gmra.mxu0 %v2293
        %v2332 = vpop.f32.mrf.mxu0
        %v2333 = vadd.f32 %v1962, %v2332
        %v2334 = vpop.f32.mrf.mxu0
        %v2335 = vpop.f32.mrf.mxu0
        %v2336 = vpop.f32.mrf.mxu0
        %2337 = vdwg.mxu0
        %v2339 = vsel %vm2015, %v1878, 0
        %v2342 = vsel %vm2015, %v1894, 0
        %2344 = vmatprep.subr.bf16.mxu0 0
        %2345 = vmatpush1.bf16.xpose.msra.mxu0 0
        %2346 = vmatprep.subr.bf16.mxu0 0
        %2347 = vmatpush1.bf16.xpose.msra.mxu0 0
        %2348 = vmatprep.subr.bf16.mxu0 0
        %2349 = vmatpush1.bf16.xpose.msra.mxu0 0
        %2350 = vmatprep.subr.bf16.mxu0 0
        %2351 = vmatpush1.bf16.xpose.msra.mxu0 0
        %2352 = vmatprep.subr.bf16.mxu0 0
        %2353 = vmatpush1.bf16.xpose.msra.mxu0 0
        %2354 = vmatprep.subr.bf16.mxu0 0
        %2355 = vmatpush1.bf16.xpose.msra.mxu0 0
        %2356 = vmatprep.subr.bf16.mxu0 0
        %2357 = vmatpush1.bf16.xpose.msra.mxu0 0
        %2358 = vmatprep.subr.bf16.mxu0 0
        %2359 = vmatpush1.bf16.xpose.msra.mxu0 %v2342
        %2360 = vmatprep.subr.bf16.mxu0 0
        %2361 = vmatpush2.bf16.xpose.msra.mxu0 0
        %2362 = vmatprep.subr.bf16.mxu0 0
        %2363 = vmatpush2.bf16.xpose.msra.mxu0 0
        %2364 = vmatprep.subr.bf16.mxu0 0
        %2365 = vmatpush2.bf16.xpose.msra.mxu0 0
        %2366 = vmatprep.subr.bf16.mxu0 0
        %2367 = vmatpush2.bf16.xpose.msra.mxu0 0
        %2368 = vmatprep.subr.bf16.mxu0 0
        %2369 = vmatpush2.bf16.xpose.msra.mxu0 0
        %2370 = vmatprep.subr.bf16.mxu0 0
        %2371 = vmatpush2.bf16.xpose.msra.mxu0 0
        %2372 = vmatprep.subr.bf16.mxu0 0
        %2373 = vmatpush2.bf16.xpose.msra.mxu0 0
        %2374 = vmatprep.subr.bf16.mxu0 0
        %2375 = vmatpush2.bf16.xpose.msra.mxu0 0
        %2376 = vmatprep.mubr.bf16.mxu0 0
        %2377 = vmatmul.mubr.bf16.gmra.mxu0 %v2339
        %v2378 = vpop.f32.mrf.mxu0
        %v2379 = vadd.f32 %v1966, %v2378
        %v2380 = vpop.f32.mrf.mxu0
        %v2381 = vpop.f32.mrf.mxu0
        %v2382 = vpop.f32.mrf.mxu0
        %2383 = vdwg.mxu0
        %v2385 = vsel %vm2015, %v1879, 0
        %v2388 = vsel %vm2015, %v1895, 0
        %2390 = vmatprep.subr.bf16.mxu0 0
        %2391 = vmatpush1.bf16.xpose.msra.mxu0 0
        %2392 = vmatprep.subr.bf16.mxu0 0
        %2393 = vmatpush1.bf16.xpose.msra.mxu0 0
        %2394 = vmatprep.subr.bf16.mxu0 0
        %2395 = vmatpush1.bf16.xpose.msra.mxu0 0
        %2396 = vmatprep.subr.bf16.mxu0 0
        %2397 = vmatpush1.bf16.xpose.msra.mxu0 0
        %2398 = vmatprep.subr.bf16.mxu0 0
        %2399 = vmatpush1.bf16.xpose.msra.mxu0 0
        %2400 = vmatprep.subr.bf16.mxu0 0
        %2401 = vmatpush1.bf16.xpose.msra.mxu0 0
        %2402 = vmatprep.subr.bf16.mxu0 0
        %2403 = vmatpush1.bf16.xpose.msra.mxu0 0
        %2404 = vmatprep.subr.bf16.mxu0 0
        %2405 = vmatpush1.bf16.xpose.msra.mxu0 %v2388
        %2406 = vmatprep.subr.bf16.mxu0 0
        %2407 = vmatpush2.bf16.xpose.msra.mxu0 0
        %2408 = vmatprep.subr.bf16.mxu0 0
        %2409 = vmatpush2.bf16.xpose.msra.mxu0 0
        %2410 = vmatprep.subr.bf16.mxu0 0
        %2411 = vmatpush2.bf16.xpose.msra.mxu0 0
        %2412 = vmatprep.subr.bf16.mxu0 0
        %2413 = vmatpush2.bf16.xpose.msra.mxu0 0
        %2414 = vmatprep.subr.bf16.mxu0 0
        %2415 = vmatpush2.bf16.xpose.msra.mxu0 0
        %2416 = vmatprep.subr.bf16.mxu0 0
        %2417 = vmatpush2.bf16.xpose.msra.mxu0 0
        %2418 = vmatprep.subr.bf16.mxu0 0
        %2419 = vmatpush2.bf16.xpose.msra.mxu0 0
        %2420 = vmatprep.subr.bf16.mxu0 0
        %2421 = vmatpush2.bf16.xpose.msra.mxu0 0
        %2422 = vmatprep.mubr.bf16.mxu0 0
        %2423 = vmatmul.mubr.bf16.gmra.mxu0 %v2385
        %v2424 = vpop.f32.mrf.mxu0
        %v2425 = vadd.f32 %v1970, %v2424
        %v2426 = vpop.f32.mrf.mxu0
        %v2427 = vpop.f32.mrf.mxu0
        %v2428 = vpop.f32.mrf.mxu0
        %2429 = vdwg.mxu0
        %v2431 = vsel %vm2015, %v1880, 0
        %v2434 = vsel %vm2015, %v1896, 0
        %2436 = vmatprep.subr.bf16.mxu0 0
        %2437 = vmatpush1.bf16.xpose.msra.mxu0 0
        %2438 = vmatprep.subr.bf16.mxu0 0
        %2439 = vmatpush1.bf16.xpose.msra.mxu0 0
        %2440 = vmatprep.subr.bf16.mxu0 0
        %2441 = vmatpush1.bf16.xpose.msra.mxu0 0
        %2442 = vmatprep.subr.bf16.mxu0 0
        %2443 = vmatpush1.bf16.xpose.msra.mxu0 0
        %2444 = vmatprep.subr.bf16.mxu0 0
        %2445 = vmatpush1.bf16.xpose.msra.mxu0 0
        %2446 = vmatprep.subr.bf16.mxu0 0
        %2447 = vmatpush1.bf16.xpose.msra.mxu0 0
        %2448 = vmatprep.subr.bf16.mxu0 0
        %2449 = vmatpush1.bf16.xpose.msra.mxu0 0
        %2450 = vmatprep.subr.bf16.mxu0 0
        %2451 = vmatpush1.bf16.xpose.msra.mxu0 %v2434
        %2452 = vmatprep.subr.bf16.mxu0 0
        %2453 = vmatpush2.bf16.xpose.msra.mxu0 0
        %2454 = vmatprep.subr.bf16.mxu0 0
        %2455 = vmatpush2.bf16.xpose.msra.mxu0 0
        %2456 = vmatprep.subr.bf16.mxu0 0
        %2457 = vmatpush2.bf16.xpose.msra.mxu0 0
        %2458 = vmatprep.subr.bf16.mxu0 0
        %2459 = vmatpush2.bf16.xpose.msra.mxu0 0
        %2460 = vmatprep.subr.bf16.mxu0 0
        %2461 = vmatpush2.bf16.xpose.msra.mxu0 0
        %2462 = vmatprep.subr.bf16.mxu0 0
        %2463 = vmatpush2.bf16.xpose.msra.mxu0 0
        %2464 = vmatprep.subr.bf16.mxu0 0
        %2465 = vmatpush2.bf16.xpose.msra.mxu0 0
        %2466 = vmatprep.subr.bf16.mxu0 0
        %2467 = vmatpush2.bf16.xpose.msra.mxu0 0
        %2468 = vmatprep.mubr.bf16.mxu0 0
        %2469 = vmatmul.mubr.bf16.gmra.mxu0 %v2431
        %v2470 = vpop.f32.mrf.mxu0
        %v2471 = vadd.f32 %v1974, %v2470
        %v2472 = vpop.f32.mrf.mxu0
        %v2473 = vpop.f32.mrf.mxu0
        %v2474 = vpop.f32.mrf.mxu0
        %2475 = vdwg.mxu0
        %v2477 = vsel %vm2015, %v1881, 0
        %v2480 = vsel %vm2015, %v1897, 0
        %2482 = vmatprep.subr.bf16.mxu0 0
        %2483 = vmatpush1.bf16.xpose.msra.mxu0 0
        %2484 = vmatprep.subr.bf16.mxu0 0
        %2485 = vmatpush1.bf16.xpose.msra.mxu0 0
        %2486 = vmatprep.subr.bf16.mxu0 0
        %2487 = vmatpush1.bf16.xpose.msra.mxu0 0
        %2488 = vmatprep.subr.bf16.mxu0 0
        %2489 = vmatpush1.bf16.xpose.msra.mxu0 0
        %2490 = vmatprep.subr.bf16.mxu0 0
        %2491 = vmatpush1.bf16.xpose.msra.mxu0 0
        %2492 = vmatprep.subr.bf16.mxu0 0
        %2493 = vmatpush1.bf16.xpose.msra.mxu0 0
        %2494 = vmatprep.subr.bf16.mxu0 0
        %2495 = vmatpush1.bf16.xpose.msra.mxu0 0
        %2496 = vmatprep.subr.bf16.mxu0 0
        %2497 = vmatpush1.bf16.xpose.msra.mxu0 %v2480
        %2498 = vmatprep.subr.bf16.mxu0 0
        %2499 = vmatpush2.bf16.xpose.msra.mxu0 0
        %2500 = vmatprep.subr.bf16.mxu0 0
        %2501 = vmatpush2.bf16.xpose.msra.mxu0 0
        %2502 = vmatprep.subr.bf16.mxu0 0
        %2503 = vmatpush2.bf16.xpose.msra.mxu0 0
        %2504 = vmatprep.subr.bf16.mxu0 0
        %2505 = vmatpush2.bf16.xpose.msra.mxu0 0
        %2506 = vmatprep.subr.bf16.mxu0 0
        %2507 = vmatpush2.bf16.xpose.msra.mxu0 0
        %2508 = vmatprep.subr.bf16.mxu0 0
        %2509 = vmatpush2.bf16.xpose.msra.mxu0 0
        %2510 = vmatprep.subr.bf16.mxu0 0
        %2511 = vmatpush2.bf16.xpose.msra.mxu0 0
        %2512 = vmatprep.subr.bf16.mxu0 0
        %2513 = vmatpush2.bf16.xpose.msra.mxu0 0
        %2514 = vmatprep.mubr.bf16.mxu0 0
        %2515 = vmatmul.mubr.bf16.gmra.mxu0 %v2477
        %v2516 = vpop.f32.mrf.mxu0
        %v2517 = vadd.f32 %v1978, %v2516
        %v2518 = vpop.f32.mrf.mxu0
        %v2519 = vpop.f32.mrf.mxu0
        %v2520 = vpop.f32.mrf.mxu0
        %2521 = vdwg.mxu0
        %v2523 = vsel %vm2015, %v1882, 0
        %v2526 = vsel %vm2015, %v1898, 0
        %2528 = vmatprep.subr.bf16.mxu0 0
        %2529 = vmatpush1.bf16.xpose.msra.mxu0 0
        %2530 = vmatprep.subr.bf16.mxu0 0
        %2531 = vmatpush1.bf16.xpose.msra.mxu0 0
        %2532 = vmatprep.subr.bf16.mxu0 0
        %2533 = vmatpush1.bf16.xpose.msra.mxu0 0
        %2534 = vmatprep.subr.bf16.mxu0 0
        %2535 = vmatpush1.bf16.xpose.msra.mxu0 0
        %2536 = vmatprep.subr.bf16.mxu0 0
        %2537 = vmatpush1.bf16.xpose.msra.mxu0 0
        %2538 = vmatprep.subr.bf16.mxu0 0
        %2539 = vmatpush1.bf16.xpose.msra.mxu0 0
        %2540 = vmatprep.subr.bf16.mxu0 0
        %2541 = vmatpush1.bf16.xpose.msra.mxu0 0
        %2542 = vmatprep.subr.bf16.mxu0 0
        %2543 = vmatpush1.bf16.xpose.msra.mxu0 %v2526
        %2544 = vmatprep.subr.bf16.mxu0 0
        %2545 = vmatpush2.bf16.xpose.msra.mxu0 0
        %2546 = vmatprep.subr.bf16.mxu0 0
        %2547 = vmatpush2.bf16.xpose.msra.mxu0 0
        %2548 = vmatprep.subr.bf16.mxu0 0
        %2549 = vmatpush2.bf16.xpose.msra.mxu0 0
        %2550 = vmatprep.subr.bf16.mxu0 0
        %2551 = vmatpush2.bf16.xpose.msra.mxu0 0
        %2552 = vmatprep.subr.bf16.mxu0 0
        %2553 = vmatpush2.bf16.xpose.msra.mxu0 0
        %2554 = vmatprep.subr.bf16.mxu0 0
        %2555 = vmatpush2.bf16.xpose.msra.mxu0 0
        %2556 = vmatprep.subr.bf16.mxu0 0
        %2557 = vmatpush2.bf16.xpose.msra.mxu0 0
        %2558 = vmatprep.subr.bf16.mxu0 0
        %2559 = vmatpush2.bf16.xpose.msra.mxu0 0
        %2560 = vmatprep.mubr.bf16.mxu0 0
        %2561 = vmatmul.mubr.bf16.gmra.mxu0 %v2523
        %v2562 = vpop.f32.mrf.mxu0
        %v2563 = vadd.f32 %v1982, %v2562
        %v2564 = vpop.f32.mrf.mxu0
        %v2565 = vpop.f32.mrf.mxu0
        %v2566 = vpop.f32.mrf.mxu0
        %2567 = vdwg.mxu0
        %v2569 = vsel %vm2015, %v1883, 0
        %v2572 = vsel %vm2015, %v1899, 0
        %2574 = vmatprep.subr.bf16.mxu0 0
        %2575 = vmatpush1.bf16.xpose.msra.mxu0 0
        %2576 = vmatprep.subr.bf16.mxu0 0
        %2577 = vmatpush1.bf16.xpose.msra.mxu0 0
        %2578 = vmatprep.subr.bf16.mxu0 0
        %2579 = vmatpush1.bf16.xpose.msra.mxu0 0
        %2580 = vmatprep.subr.bf16.mxu0 0
        %2581 = vmatpush1.bf16.xpose.msra.mxu0 0
        %2582 = vmatprep.subr.bf16.mxu0 0
        %2583 = vmatpush1.bf16.xpose.msra.mxu0 0
        %2584 = vmatprep.subr.bf16.mxu0 0
        %2585 = vmatpush1.bf16.xpose.msra.mxu0 0
        %2586 = vmatprep.subr.bf16.mxu0 0
        %2587 = vmatpush1.bf16.xpose.msra.mxu0 0
        %2588 = vmatprep.subr.bf16.mxu0 0
        %2589 = vmatpush1.bf16.xpose.msra.mxu0 %v2572
        %2590 = vmatprep.subr.bf16.mxu0 0
        %2591 = vmatpush2.bf16.xpose.msra.mxu0 0
        %2592 = vmatprep.subr.bf16.mxu0 0
        %2593 = vmatpush2.bf16.xpose.msra.mxu0 0
        %2594 = vmatprep.subr.bf16.mxu0 0
        %2595 = vmatpush2.bf16.xpose.msra.mxu0 0
        %2596 = vmatprep.subr.bf16.mxu0 0
        %2597 = vmatpush2.bf16.xpose.msra.mxu0 0
        %2598 = vmatprep.subr.bf16.mxu0 0
        %2599 = vmatpush2.bf16.xpose.msra.mxu0 0
        %2600 = vmatprep.subr.bf16.mxu0 0
        %2601 = vmatpush2.bf16.xpose.msra.mxu0 0
        %2602 = vmatprep.subr.bf16.mxu0 0
        %2603 = vmatpush2.bf16.xpose.msra.mxu0 0
        %2604 = vmatprep.subr.bf16.mxu0 0
        %2605 = vmatpush2.bf16.xpose.msra.mxu0 0
        %2606 = vmatprep.mubr.bf16.mxu0 0
        %2607 = vmatmul.mubr.bf16.gmra.mxu0 %v2569
        %v2608 = vpop.f32.mrf.mxu0
        %v2609 = vadd.f32 %v1986, %v2608
        %v2610 = vpop.f32.mrf.mxu0
        %v2611 = vpop.f32.mrf.mxu0
        %v2612 = vpop.f32.mrf.mxu0
        %2613 = vdwg.mxu0
        %v2615 = vsel %vm2015, %v1884, 0
        %v2618 = vsel %vm2015, %v1900, 0
        %2620 = vmatprep.subr.bf16.mxu0 0
        %2621 = vmatpush1.bf16.xpose.msra.mxu0 0
        %2622 = vmatprep.subr.bf16.mxu0 0
        %2623 = vmatpush1.bf16.xpose.msra.mxu0 0
        %2624 = vmatprep.subr.bf16.mxu0 0
        %2625 = vmatpush1.bf16.xpose.msra.mxu0 0
        %2626 = vmatprep.subr.bf16.mxu0 0
        %2627 = vmatpush1.bf16.xpose.msra.mxu0 0
        %2628 = vmatprep.subr.bf16.mxu0 0
        %2629 = vmatpush1.bf16.xpose.msra.mxu0 0
        %2630 = vmatprep.subr.bf16.mxu0 0
        %2631 = vmatpush1.bf16.xpose.msra.mxu0 0
        %2632 = vmatprep.subr.bf16.mxu0 0
        %2633 = vmatpush1.bf16.xpose.msra.mxu0 0
        %2634 = vmatprep.subr.bf16.mxu0 0
        %2635 = vmatpush1.bf16.xpose.msra.mxu0 %v2618
        %2636 = vmatprep.subr.bf16.mxu0 0
        %2637 = vmatpush2.bf16.xpose.msra.mxu0 0
        %2638 = vmatprep.subr.bf16.mxu0 0
        %2639 = vmatpush2.bf16.xpose.msra.mxu0 0
        %2640 = vmatprep.subr.bf16.mxu0 0
        %2641 = vmatpush2.bf16.xpose.msra.mxu0 0
        %2642 = vmatprep.subr.bf16.mxu0 0
        %2643 = vmatpush2.bf16.xpose.msra.mxu0 0
        %2644 = vmatprep.subr.bf16.mxu0 0
        %2645 = vmatpush2.bf16.xpose.msra.mxu0 0
        %2646 = vmatprep.subr.bf16.mxu0 0
        %2647 = vmatpush2.bf16.xpose.msra.mxu0 0
        %2648 = vmatprep.subr.bf16.mxu0 0
        %2649 = vmatpush2.bf16.xpose.msra.mxu0 0
        %2650 = vmatprep.subr.bf16.mxu0 0
        %2651 = vmatpush2.bf16.xpose.msra.mxu0 0
        %2652 = vmatprep.mubr.bf16.mxu0 0
        %2653 = vmatmul.mubr.bf16.gmra.mxu0 %v2615
        %v2654 = vpop.f32.mrf.mxu0
        %v2655 = vadd.f32 %v1990, %v2654
        %v2656 = vpop.f32.mrf.mxu0
        %v2657 = vpop.f32.mrf.mxu0
        %v2658 = vpop.f32.mrf.mxu0
        %2659 = vdwg.mxu0
        %v2661 = vsel %vm2015, %v1885, 0
        %v2664 = vsel %vm2015, %v1901, 0
        %2666 = vmatprep.subr.bf16.mxu0 0
        %2667 = vmatpush1.bf16.xpose.msra.mxu0 0
        %2668 = vmatprep.subr.bf16.mxu0 0
        %2669 = vmatpush1.bf16.xpose.msra.mxu0 0
        %2670 = vmatprep.subr.bf16.mxu0 0
        %2671 = vmatpush1.bf16.xpose.msra.mxu0 0
        %2672 = vmatprep.subr.bf16.mxu0 0
        %2673 = vmatpush1.bf16.xpose.msra.mxu0 0
        %2674 = vmatprep.subr.bf16.mxu0 0
        %2675 = vmatpush1.bf16.xpose.msra.mxu0 0
        %2676 = vmatprep.subr.bf16.mxu0 0
        %2677 = vmatpush1.bf16.xpose.msra.mxu0 0
        %2678 = vmatprep.subr.bf16.mxu0 0
        %2679 = vmatpush1.bf16.xpose.msra.mxu0 0
        %2680 = vmatprep.subr.bf16.mxu0 0
        %2681 = vmatpush1.bf16.xpose.msra.mxu0 %v2664
        %2682 = vmatprep.subr.bf16.mxu0 0
        %2683 = vmatpush2.bf16.xpose.msra.mxu0 0
        %2684 = vmatprep.subr.bf16.mxu0 0
        %2685 = vmatpush2.bf16.xpose.msra.mxu0 0
        %2686 = vmatprep.subr.bf16.mxu0 0
        %2687 = vmatpush2.bf16.xpose.msra.mxu0 0
        %2688 = vmatprep.subr.bf16.mxu0 0
        %2689 = vmatpush2.bf16.xpose.msra.mxu0 0
        %2690 = vmatprep.subr.bf16.mxu0 0
        %2691 = vmatpush2.bf16.xpose.msra.mxu0 0
        %2692 = vmatprep.subr.bf16.mxu0 0
        %2693 = vmatpush2.bf16.xpose.msra.mxu0 0
        %2694 = vmatprep.subr.bf16.mxu0 0
        %2695 = vmatpush2.bf16.xpose.msra.mxu0 0
        %2696 = vmatprep.subr.bf16.mxu0 0
        %2697 = vmatpush2.bf16.xpose.msra.mxu0 0
        %2698 = vmatprep.mubr.bf16.mxu0 0
        %2699 = vmatmul.mubr.bf16.gmra.mxu0 %v2661
        %v2700 = vpop.f32.mrf.mxu0
        %v2701 = vadd.f32 %v1994, %v2700
        %v2702 = vpop.f32.mrf.mxu0
        %v2703 = vpop.f32.mrf.mxu0
        %v2704 = vpop.f32.mrf.mxu0
        %2705 = vdwg.mxu0
        %v2707 = vsel %vm2015, %v1886, 0
        %v2710 = vsel %vm2015, %v1902, 0
        %2712 = vmatprep.subr.bf16.mxu0 0
        %2713 = vmatpush1.bf16.xpose.msra.mxu0 0
        %2714 = vmatprep.subr.bf16.mxu0 0
        %2715 = vmatpush1.bf16.xpose.msra.mxu0 0
        %2716 = vmatprep.subr.bf16.mxu0 0
        %2717 = vmatpush1.bf16.xpose.msra.mxu0 0
        %2718 = vmatprep.subr.bf16.mxu0 0
        %2719 = vmatpush1.bf16.xpose.msra.mxu0 0
        %2720 = vmatprep.subr.bf16.mxu0 0
        %2721 = vmatpush1.bf16.xpose.msra.mxu0 0
        %2722 = vmatprep.subr.bf16.mxu0 0
        %2723 = vmatpush1.bf16.xpose.msra.mxu0 0
        %2724 = vmatprep.subr.bf16.mxu0 0
        %2725 = vmatpush1.bf16.xpose.msra.mxu0 0
        %2726 = vmatprep.subr.bf16.mxu0 0
        %2727 = vmatpush1.bf16.xpose.msra.mxu0 %v2710
        %2728 = vmatprep.subr.bf16.mxu0 0
        %2729 = vmatpush2.bf16.xpose.msra.mxu0 0
        %2730 = vmatprep.subr.bf16.mxu0 0
        %2731 = vmatpush2.bf16.xpose.msra.mxu0 0
        %2732 = vmatprep.subr.bf16.mxu0 0
        %2733 = vmatpush2.bf16.xpose.msra.mxu0 0
        %2734 = vmatprep.subr.bf16.mxu0 0
        %2735 = vmatpush2.bf16.xpose.msra.mxu0 0
        %2736 = vmatprep.subr.bf16.mxu0 0
        %2737 = vmatpush2.bf16.xpose.msra.mxu0 0
        %2738 = vmatprep.subr.bf16.mxu0 0
        %2739 = vmatpush2.bf16.xpose.msra.mxu0 0
        %2740 = vmatprep.subr.bf16.mxu0 0
        %2741 = vmatpush2.bf16.xpose.msra.mxu0 0
        %2742 = vmatprep.subr.bf16.mxu0 0
        %2743 = vmatpush2.bf16.xpose.msra.mxu0 0
        %2744 = vmatprep.mubr.bf16.mxu0 0
        %2745 = vmatmul.mubr.bf16.gmra.mxu0 %v2707
        %v2746 = vpop.f32.mrf.mxu0
        %v2747 = vadd.f32 %v1998, %v2746
        %v2748 = vpop.f32.mrf.mxu0
        %v2749 = vpop.f32.mrf.mxu0
        %v2750 = vpop.f32.mrf.mxu0
        %2751 = vdwg.mxu0
        %vm2752 = vcmask 64512
        %v2753 = vsel %vm2752, %v2057, -inf
        %2754 = vmax.xlane.f32.xlu0 %v2753
        %v2755 = vpop.xlane.xlu0 %2754
        %v2756 = vsel %vm2752, %v2103, -inf
        %2757 = vmax.xlane.f32.xlu0 %v2756
        %v2758 = vpop.xlane.xlu0 %2757
        %v2759 = vsel %vm2752, %v2149, -inf
        %2760 = vmax.xlane.f32.xlu0 %v2759
        %v2761 = vpop.xlane.xlu0 %2760
        %v2762 = vsel %vm2752, %v2195, -inf
        %2763 = vmax.xlane.f32.xlu0 %v2762
        %v2764 = vpop.xlane.xlu0 %2763
        %v2765 = vsel %vm2752, %v2241, -inf
        %2766 = vmax.xlane.f32.xlu0 %v2765
        %v2767 = vpop.xlane.xlu0 %2766
        %v2768 = vsel %vm2752, %v2287, -inf
        %2769 = vmax.xlane.f32.xlu0 %v2768
        %v2770 = vpop.xlane.xlu0 %2769
        %v2771 = vsel %vm2752, %v2333, -inf
        %2772 = vmax.xlane.f32.xlu0 %v2771
        %v2773 = vpop.xlane.xlu0 %2772
        %v2774 = vsel %vm2752, %v2379, -inf
        %2775 = vmax.xlane.f32.xlu0 %v2774
        %v2776 = vpop.xlane.xlu0 %2775
        %v2777 = vsel %vm2752, %v2425, -inf
        %2778 = vmax.xlane.f32.xlu0 %v2777
        %v2779 = vpop.xlane.xlu0 %2778
        %v2780 = vsel %vm2752, %v2471, -inf
        %2781 = vmax.xlane.f32.xlu0 %v2780
        %v2782 = vpop.xlane.xlu0 %2781
        %v2783 = vsel %vm2752, %v2517, -inf
        %2784 = vmax.xlane.f32.xlu0 %v2783
        %v2785 = vpop.xlane.xlu0 %2784
        %v2786 = vsel %vm2752, %v2563, -inf
        %2787 = vmax.xlane.f32.xlu0 %v2786
        %v2788 = vpop.xlane.xlu0 %2787
        %v2789 = vsel %vm2752, %v2609, -inf
        %2790 = vmax.xlane.f32.xlu0 %v2789
        %v2791 = vpop.xlane.xlu0 %2790
        %v2792 = vsel %vm2752, %v2655, -inf
        %2793 = vmax.xlane.f32.xlu0 %v2792
        %v2794 = vpop.xlane.xlu0 %2793
        %v2795 = vsel %vm2752, %v2701, -inf
        %2796 = vmax.xlane.f32.xlu0 %v2795
        %v2797 = vpop.xlane.xlu0 %2796
        %v2798 = vsel %vm2752, %v2747, -inf
        %2799 = vmax.xlane.f32.xlu0 %v2798
        %v2800 = vpop.xlane.xlu0 %2799
        %v2801 = vsub.f32 %v2057, %v2755
        %v2802 = vsub.f32 %v2103, %v2758
        %v2803 = vsub.f32 %v2149, %v2761
        %v2804 = vsub.f32 %v2195, %v2764
        %v2805 = vsub.f32 %v2241, %v2767
        %v2806 = vsub.f32 %v2287, %v2770
        %v2807 = vsub.f32 %v2333, %v2773
        %v2808 = vsub.f32 %v2379, %v2776
        %v2809 = vsub.f32 %v2425, %v2779
        %v2810 = vsub.f32 %v2471, %v2782
        %v2811 = vsub.f32 %v2517, %v2785
        %v2812 = vsub.f32 %v2563, %v2788
        %v2813 = vsub.f32 %v2609, %v2791
        %v2814 = vsub.f32 %v2655, %v2794
        %v2815 = vsub.f32 %v2701, %v2797
        %v2816 = vsub.f32 %v2747, %v2800
        %v2817 = vmul.f32 %v2801, 1.442695
        %v2818 = vpow.pop %v2817
        %v2819 = vmul.f32 %v2802, 1.442695
        %v2820 = vpow.pop %v2819
        %v2821 = vmul.f32 %v2803, 1.442695
        %v2822 = vpow.pop %v2821
        %v2823 = vmul.f32 %v2804, 1.442695
        %v2824 = vpow.pop %v2823
        %v2825 = vmul.f32 %v2805, 1.442695
        %v2826 = vpow.pop %v2825
        %v2827 = vmul.f32 %v2806, 1.442695
        %v2828 = vpow.pop %v2827
        %v2829 = vmul.f32 %v2807, 1.442695
        %v2830 = vpow.pop %v2829
        %v2831 = vmul.f32 %v2808, 1.442695
        %v2832 = vpow.pop %v2831
        %v2833 = vmul.f32 %v2809, 1.442695
        %v2834 = vpow.pop %v2833
        %v2835 = vmul.f32 %v2810, 1.442695
        %v2836 = vpow.pop %v2835
        %v2837 = vmul.f32 %v2811, 1.442695
        %v2838 = vpow.pop %v2837
        %v2839 = vmul.f32 %v2812, 1.442695
        %v2840 = vpow.pop %v2839
        %v2841 = vmul.f32 %v2813, 1.442695
        %v2842 = vpow.pop %v2841
        %v2843 = vmul.f32 %v2814, 1.442695
        %v2844 = vpow.pop %v2843
        %v2845 = vmul.f32 %v2815, 1.442695
        %v2846 = vpow.pop %v2845
        %v2847 = vmul.f32 %v2816, 1.442695
        %v2848 = vpow.pop %v2847
        %v2849 = vsel %vm2752, %v2818, 0.0
        %2850 = vadd.xlane.f32.xlu0 %v2849
        %v2851 = vpop.xlane.xlu0 %2850
        %v2852 = vsel %vm2752, %v2820, 0.0
        %2853 = vadd.xlane.f32.xlu0 %v2852
        %v2854 = vpop.xlane.xlu0 %2853
        %v2855 = vsel %vm2752, %v2822, 0.0
        %2856 = vadd.xlane.f32.xlu0 %v2855
        %v2857 = vpop.xlane.xlu0 %2856
        %v2858 = vsel %vm2752, %v2824, 0.0
        %2859 = vadd.xlane.f32.xlu0 %v2858
        %v2860 = vpop.xlane.xlu0 %2859
        %v2861 = vsel %vm2752, %v2826, 0.0
        %2862 = vadd.xlane.f32.xlu0 %v2861
        %v2863 = vpop.xlane.xlu0 %2862
        %v2864 = vsel %vm2752, %v2828, 0.0
        %2865 = vadd.xlane.f32.xlu0 %v2864
        %v2866 = vpop.xlane.xlu0 %2865
        %v2867 = vsel %vm2752, %v2830, 0.0
        %2868 = vadd.xlane.f32.xlu0 %v2867
        %v2869 = vpop.xlane.xlu0 %2868
        %v2870 = vsel %vm2752, %v2832, 0.0
        %2871 = vadd.xlane.f32.xlu0 %v2870
        %v2872 = vpop.xlane.xlu0 %2871
        %v2873 = vsel %vm2752, %v2834, 0.0
        %2874 = vadd.xlane.f32.xlu0 %v2873
        %v2875 = vpop.xlane.xlu0 %2874
        %v2876 = vsel %vm2752, %v2836, 0.0
        %2877 = vadd.xlane.f32.xlu0 %v2876
        %v2878 = vpop.xlane.xlu0 %2877
        %v2879 = vsel %vm2752, %v2838, 0.0
        %2880 = vadd.xlane.f32.xlu0 %v2879
        %v2881 = vpop.xlane.xlu0 %2880
        %v2882 = vsel %vm2752, %v2840, 0.0
        %2883 = vadd.xlane.f32.xlu0 %v2882
        %v2884 = vpop.xlane.xlu0 %2883
        %v2885 = vsel %vm2752, %v2842, 0.0
        %2886 = vadd.xlane.f32.xlu0 %v2885
        %v2887 = vpop.xlane.xlu0 %2886
        %v2888 = vsel %vm2752, %v2844, 0.0
        %2889 = vadd.xlane.f32.xlu0 %v2888
        %v2890 = vpop.xlane.xlu0 %2889
        %v2891 = vsel %vm2752, %v2846, 0.0
        %2892 = vadd.xlane.f32.xlu0 %v2891
        %v2893 = vpop.xlane.xlu0 %2892
        %v2894 = vsel %vm2752, %v2848, 0.0
        %2895 = vadd.xlane.f32.xlu0 %v2894
        %v2896 = vpop.xlane.xlu0 %2895
        %v2897 = vrcp.pop %v2851
        %v2898 = vrcp.pop %v2854
        %v2899 = vrcp.pop %v2857
        %v2900 = vrcp.pop %v2860
        %v2901 = vrcp.pop %v2863
        %v2902 = vrcp.pop %v2866
        %v2903 = vrcp.pop %v2869
        %v2904 = vrcp.pop %v2872
        %v2905 = vrcp.pop %v2875
        %v2906 = vrcp.pop %v2878
        %v2907 = vrcp.pop %v2881
        %v2908 = vrcp.pop %v2884
        %v2909 = vrcp.pop %v2887
        %v2910 = vrcp.pop %v2890
        %v2911 = vrcp.pop %v2893
        %v2912 = vrcp.pop %v2896
        %v2913 = vmul.f32 %v2818, %v2897
        %v2914 = vmul.f32 %v2820, %v2898
        %v2915 = vmul.f32 %v2822, %v2899
        %v2916 = vmul.f32 %v2824, %v2900
        %v2917 = vmul.f32 %v2826, %v2901
        %v2918 = vmul.f32 %v2828, %v2902
        %v2919 = vmul.f32 %v2830, %v2903
        %v2920 = vmul.f32 %v2832, %v2904
        %v2921 = vmul.f32 %v2834, %v2905
        %v2922 = vmul.f32 %v2836, %v2906
        %v2923 = vmul.f32 %v2838, %v2907
        %v2924 = vmul.f32 %v2840, %v2908
        %v2925 = vmul.f32 %v2842, %v2909
        %v2926 = vmul.f32 %v2844, %v2910
        %v2927 = vmul.f32 %v2846, %v2911
        %v2928 = vmul.f32 %v2848, %v2912
        %v2929 = vpack.c.bf16 %v2913, %v2913
        %v2930 = vpack.c.bf16 %v2914, %v2914
        %v2931 = vpack.c.bf16 %v2915, %v2915
        %v2932 = vpack.c.bf16 %v2916, %v2916
        %v2933 = vpack.c.bf16 %v2917, %v2917
        %v2934 = vpack.c.bf16 %v2918, %v2918
        %v2935 = vpack.c.bf16 %v2919, %v2919
        %v2936 = vpack.c.bf16 %v2920, %v2920
        %v2937 = vpack.c.bf16 %v2921, %v2921
        %v2938 = vpack.c.bf16 %v2922, %v2922
        %v2939 = vpack.c.bf16 %v2923, %v2923
        %v2940 = vpack.c.bf16 %v2924, %v2924
        %v2941 = vpack.c.bf16 %v2925, %v2925
        %v2942 = vpack.c.bf16 %v2926, %v2926
        %v2943 = vpack.c.bf16 %v2927, %v2927
        %v2944 = vpack.c.bf16 %v2928, %v2928
        %v2946 = vsel %vm2752, %v2929, 0
        %vm2948 = vcmask 1043456
        %v2950 = vsel %vm2948, %v1903, 0
        %2952 = vmatprep.subr.bf16.mxu0 0
        %2953 = vmatpush1.bf16.msra.mxu0 0
        %2954 = vmatprep.subr.bf16.mxu0 0
        %2955 = vmatpush1.bf16.msra.mxu0 0
        %2956 = vmatprep.subr.bf16.mxu0 0
        %2957 = vmatpush1.bf16.msra.mxu0 0
        %2958 = vmatprep.subr.bf16.mxu0 0
        %2959 = vmatpush1.bf16.msra.mxu0 0
        %2960 = vmatprep.subr.bf16.mxu0 0
        %2961 = vmatpush1.bf16.msra.mxu0 0
        %2962 = vmatprep.subr.bf16.mxu0 0
        %2963 = vmatpush1.bf16.msra.mxu0 0
        %2964 = vmatprep.subr.bf16.mxu0 0
        %2965 = vmatpush1.bf16.msra.mxu0 0
        %2966 = vmatprep.subr.bf16.mxu0 0
        %2967 = vmatpush1.bf16.msra.mxu0 %v2950
        %2968 = vmatprep.subr.bf16.mxu0 0
        %2969 = vmatpush2.bf16.msra.mxu0 0
        %2970 = vmatprep.subr.bf16.mxu0 0
        %2971 = vmatpush2.bf16.msra.mxu0 0
        %2972 = vmatprep.subr.bf16.mxu0 0
        %2973 = vmatpush2.bf16.msra.mxu0 0
        %2974 = vmatprep.subr.bf16.mxu0 0
        %2975 = vmatpush2.bf16.msra.mxu0 0
        %2976 = vmatprep.subr.bf16.mxu0 0
        %2977 = vmatpush2.bf16.msra.mxu0 0
        %2978 = vmatprep.subr.bf16.mxu0 0
        %2979 = vmatpush2.bf16.msra.mxu0 0
        %2980 = vmatprep.subr.bf16.mxu0 0
        %2981 = vmatpush2.bf16.msra.mxu0 0
        %2982 = vmatprep.subr.bf16.mxu0 0
        %2983 = vmatpush2.bf16.msra.mxu0 0
        %2984 = vmatprep.mubr.bf16.mxu0 0
        %2985 = vmatmul.mubr.bf16.gmra.mxu0 %v2946
        %v2986 = vpop.f32.mrf.mxu0
        %v2987 = vadd.f32 0.0, %v2986
        %v2988 = vpop.f32.mrf.mxu0
        %v2989 = vpop.f32.mrf.mxu0
        %v2990 = vpop.f32.mrf.mxu0
        %2991 = vdwg.mxu0
        %v2993 = vsel %vm2752, %v2930, 0
        %v2996 = vsel %vm2948, %v1904, 0
        %2998 = vmatprep.subr.bf16.mxu0 0
        %2999 = vmatpush1.bf16.msra.mxu0 0
        %3000 = vmatprep.subr.bf16.mxu0 0
        %3001 = vmatpush1.bf16.msra.mxu0 0
        %3002 = vmatprep.subr.bf16.mxu0 0
        %3003 = vmatpush1.bf16.msra.mxu0 0
        %3004 = vmatprep.subr.bf16.mxu0 0
        %3005 = vmatpush1.bf16.msra.mxu0 0
        %3006 = vmatprep.subr.bf16.mxu0 0
        %3007 = vmatpush1.bf16.msra.mxu0 0
        %3008 = vmatprep.subr.bf16.mxu0 0
        %3009 = vmatpush1.bf16.msra.mxu0 0
        %3010 = vmatprep.subr.bf16.mxu0 0
        %3011 = vmatpush1.bf16.msra.mxu0 0
        %3012 = vmatprep.subr.bf16.mxu0 0
        %3013 = vmatpush1.bf16.msra.mxu0 %v2996
        %3014 = vmatprep.subr.bf16.mxu0 0
        %3015 = vmatpush2.bf16.msra.mxu0 0
        %3016 = vmatprep.subr.bf16.mxu0 0
        %3017 = vmatpush2.bf16.msra.mxu0 0
        %3018 = vmatprep.subr.bf16.mxu0 0
        %3019 = vmatpush2.bf16.msra.mxu0 0
        %3020 = vmatprep.subr.bf16.mxu0 0
        %3021 = vmatpush2.bf16.msra.mxu0 0
        %3022 = vmatprep.subr.bf16.mxu0 0
        %3023 = vmatpush2.bf16.msra.mxu0 0
        %3024 = vmatprep.subr.bf16.mxu0 0
        %3025 = vmatpush2.bf16.msra.mxu0 0
        %3026 = vmatprep.subr.bf16.mxu0 0
        %3027 = vmatpush2.bf16.msra.mxu0 0
        %3028 = vmatprep.subr.bf16.mxu0 0
        %3029 = vmatpush2.bf16.msra.mxu0 0
        %3030 = vmatprep.mubr.bf16.mxu0 0
        %3031 = vmatmul.mubr.bf16.gmra.mxu0 %v2993
        %v3032 = vpop.f32.mrf.mxu0
        %v3033 = vadd.f32 0.0, %v3032
        %v3034 = vpop.f32.mrf.mxu0
        %v3035 = vpop.f32.mrf.mxu0
        %v3036 = vpop.f32.mrf.mxu0
        %3037 = vdwg.mxu0
        %v3039 = vsel %vm2752, %v2931, 0
        %v3042 = vsel %vm2948, %v1905, 0
        %3044 = vmatprep.subr.bf16.mxu0 0
        %3045 = vmatpush1.bf16.msra.mxu0 0
        %3046 = vmatprep.subr.bf16.mxu0 0
        %3047 = vmatpush1.bf16.msra.mxu0 0
        %3048 = vmatprep.subr.bf16.mxu0 0
        %3049 = vmatpush1.bf16.msra.mxu0 0
        %3050 = vmatprep.subr.bf16.mxu0 0
        %3051 = vmatpush1.bf16.msra.mxu0 0
        %3052 = vmatprep.subr.bf16.mxu0 0
        %3053 = vmatpush1.bf16.msra.mxu0 0
        %3054 = vmatprep.subr.bf16.mxu0 0
        %3055 = vmatpush1.bf16.msra.mxu0 0
        %3056 = vmatprep.subr.bf16.mxu0 0
        %3057 = vmatpush1.bf16.msra.mxu0 0
        %3058 = vmatprep.subr.bf16.mxu0 0
        %3059 = vmatpush1.bf16.msra.mxu0 %v3042
        %3060 = vmatprep.subr.bf16.mxu0 0
        %3061 = vmatpush2.bf16.msra.mxu0 0
        %3062 = vmatprep.subr.bf16.mxu0 0
        %3063 = vmatpush2.bf16.msra.mxu0 0
        %3064 = vmatprep.subr.bf16.mxu0 0
        %3065 = vmatpush2.bf16.msra.mxu0 0
        %3066 = vmatprep.subr.bf16.mxu0 0
        %3067 = vmatpush2.bf16.msra.mxu0 0
        %3068 = vmatprep.subr.bf16.mxu0 0
        %3069 = vmatpush2.bf16.msra.mxu0 0
        %3070 = vmatprep.subr.bf16.mxu0 0
        %3071 = vmatpush2.bf16.msra.mxu0 0
        %3072 = vmatprep.subr.bf16.mxu0 0
        %3073 = vmatpush2.bf16.msra.mxu0 0
        %3074 = vmatprep.subr.bf16.mxu0 0
        %3075 = vmatpush2.bf16.msra.mxu0 0
        %3076 = vmatprep.mubr.bf16.mxu0 0
        %3077 = vmatmul.mubr.bf16.gmra.mxu0 %v3039
        %v3078 = vpop.f32.mrf.mxu0
        %v3079 = vadd.f32 0.0, %v3078
        %v3080 = vpop.f32.mrf.mxu0
        %v3081 = vpop.f32.mrf.mxu0
        %v3082 = vpop.f32.mrf.mxu0
        %3083 = vdwg.mxu0
        %v3085 = vsel %vm2752, %v2932, 0
        %v3088 = vsel %vm2948, %v1906, 0
        %3090 = vmatprep.subr.bf16.mxu0 0
        %3091 = vmatpush1.bf16.msra.mxu0 0
        %3092 = vmatprep.subr.bf16.mxu0 0
        %3093 = vmatpush1.bf16.msra.mxu0 0
        %3094 = vmatprep.subr.bf16.mxu0 0
        %3095 = vmatpush1.bf16.msra.mxu0 0
        %3096 = vmatprep.subr.bf16.mxu0 0
        %3097 = vmatpush1.bf16.msra.mxu0 0
        %3098 = vmatprep.subr.bf16.mxu0 0
        %3099 = vmatpush1.bf16.msra.mxu0 0
        %3100 = vmatprep.subr.bf16.mxu0 0
        %3101 = vmatpush1.bf16.msra.mxu0 0
        %3102 = vmatprep.subr.bf16.mxu0 0
        %3103 = vmatpush1.bf16.msra.mxu0 0
        %3104 = vmatprep.subr.bf16.mxu0 0
        %3105 = vmatpush1.bf16.msra.mxu0 %v3088
        %3106 = vmatprep.subr.bf16.mxu0 0
        %3107 = vmatpush2.bf16.msra.mxu0 0
        %3108 = vmatprep.subr.bf16.mxu0 0
        %3109 = vmatpush2.bf16.msra.mxu0 0
        %3110 = vmatprep.subr.bf16.mxu0 0
        %3111 = vmatpush2.bf16.msra.mxu0 0
        %3112 = vmatprep.subr.bf16.mxu0 0
        %3113 = vmatpush2.bf16.msra.mxu0 0
        %3114 = vmatprep.subr.bf16.mxu0 0
        %3115 = vmatpush2.bf16.msra.mxu0 0
        %3116 = vmatprep.subr.bf16.mxu0 0
        %3117 = vmatpush2.bf16.msra.mxu0 0
        %3118 = vmatprep.subr.bf16.mxu0 0
        %3119 = vmatpush2.bf16.msra.mxu0 0
        %3120 = vmatprep.subr.bf16.mxu0 0
        %3121 = vmatpush2.bf16.msra.mxu0 0
        %3122 = vmatprep.mubr.bf16.mxu0 0
        %3123 = vmatmul.mubr.bf16.gmra.mxu0 %v3085
        %v3124 = vpop.f32.mrf.mxu0
        %v3125 = vadd.f32 0.0, %v3124
        %v3126 = vpop.f32.mrf.mxu0
        %v3127 = vpop.f32.mrf.mxu0
        %v3128 = vpop.f32.mrf.mxu0
        %3129 = vdwg.mxu0
        %v3131 = vsel %vm2752, %v2933, 0
        %v3134 = vsel %vm2948, %v1907, 0
        %3136 = vmatprep.subr.bf16.mxu0 0
        %3137 = vmatpush1.bf16.msra.mxu0 0
        %3138 = vmatprep.subr.bf16.mxu0 0
        %3139 = vmatpush1.bf16.msra.mxu0 0
        %3140 = vmatprep.subr.bf16.mxu0 0
        %3141 = vmatpush1.bf16.msra.mxu0 0
        %3142 = vmatprep.subr.bf16.mxu0 0
        %3143 = vmatpush1.bf16.msra.mxu0 0
        %3144 = vmatprep.subr.bf16.mxu0 0
        %3145 = vmatpush1.bf16.msra.mxu0 0
        %3146 = vmatprep.subr.bf16.mxu0 0
        %3147 = vmatpush1.bf16.msra.mxu0 0
        %3148 = vmatprep.subr.bf16.mxu0 0
        %3149 = vmatpush1.bf16.msra.mxu0 0
        %3150 = vmatprep.subr.bf16.mxu0 0
        %3151 = vmatpush1.bf16.msra.mxu0 %v3134
        %3152 = vmatprep.subr.bf16.mxu0 0
        %3153 = vmatpush2.bf16.msra.mxu0 0
        %3154 = vmatprep.subr.bf16.mxu0 0
        %3155 = vmatpush2.bf16.msra.mxu0 0
        %3156 = vmatprep.subr.bf16.mxu0 0
        %3157 = vmatpush2.bf16.msra.mxu0 0
        %3158 = vmatprep.subr.bf16.mxu0 0
        %3159 = vmatpush2.bf16.msra.mxu0 0
        %3160 = vmatprep.subr.bf16.mxu0 0
        %3161 = vmatpush2.bf16.msra.mxu0 0
        %3162 = vmatprep.subr.bf16.mxu0 0
        %3163 = vmatpush2.bf16.msra.mxu0 0
        %3164 = vmatprep.subr.bf16.mxu0 0
        %3165 = vmatpush2.bf16.msra.mxu0 0
        %3166 = vmatprep.subr.bf16.mxu0 0
        %3167 = vmatpush2.bf16.msra.mxu0 0
        %3168 = vmatprep.mubr.bf16.mxu0 0
        %3169 = vmatmul.mubr.bf16.gmra.mxu0 %v3131
        %v3170 = vpop.f32.mrf.mxu0
        %v3171 = vadd.f32 0.0, %v3170
        %v3172 = vpop.f32.mrf.mxu0
        %v3173 = vpop.f32.mrf.mxu0
        %v3174 = vpop.f32.mrf.mxu0
        %3175 = vdwg.mxu0
        %v3177 = vsel %vm2752, %v2934, 0
        %v3180 = vsel %vm2948, %v1908, 0
        %3182 = vmatprep.subr.bf16.mxu0 0
        %3183 = vmatpush1.bf16.msra.mxu0 0
        %3184 = vmatprep.subr.bf16.mxu0 0
        %3185 = vmatpush1.bf16.msra.mxu0 0
        %3186 = vmatprep.subr.bf16.mxu0 0
        %3187 = vmatpush1.bf16.msra.mxu0 0
        %3188 = vmatprep.subr.bf16.mxu0 0
        %3189 = vmatpush1.bf16.msra.mxu0 0
        %3190 = vmatprep.subr.bf16.mxu0 0
        %3191 = vmatpush1.bf16.msra.mxu0 0
        %3192 = vmatprep.subr.bf16.mxu0 0
        %3193 = vmatpush1.bf16.msra.mxu0 0
        %3194 = vmatprep.subr.bf16.mxu0 0
        %3195 = vmatpush1.bf16.msra.mxu0 0
        %3196 = vmatprep.subr.bf16.mxu0 0
        %3197 = vmatpush1.bf16.msra.mxu0 %v3180
        %3198 = vmatprep.subr.bf16.mxu0 0
        %3199 = vmatpush2.bf16.msra.mxu0 0
        %3200 = vmatprep.subr.bf16.mxu0 0
        %3201 = vmatpush2.bf16.msra.mxu0 0
        %3202 = vmatprep.subr.bf16.mxu0 0
        %3203 = vmatpush2.bf16.msra.mxu0 0
        %3204 = vmatprep.subr.bf16.mxu0 0
        %3205 = vmatpush2.bf16.msra.mxu0 0
        %3206 = vmatprep.subr.bf16.mxu0 0
        %3207 = vmatpush2.bf16.msra.mxu0 0
        %3208 = vmatprep.subr.bf16.mxu0 0
        %3209 = vmatpush2.bf16.msra.mxu0 0
        %3210 = vmatprep.subr.bf16.mxu0 0
        %3211 = vmatpush2.bf16.msra.mxu0 0
        %3212 = vmatprep.subr.bf16.mxu0 0
        %3213 = vmatpush2.bf16.msra.mxu0 0
        %3214 = vmatprep.mubr.bf16.mxu0 0
        %3215 = vmatmul.mubr.bf16.gmra.mxu0 %v3177
        %v3216 = vpop.f32.mrf.mxu0
        %v3217 = vadd.f32 0.0, %v3216
        %v3218 = vpop.f32.mrf.mxu0
        %v3219 = vpop.f32.mrf.mxu0
        %v3220 = vpop.f32.mrf.mxu0
        %3221 = vdwg.mxu0
        %v3223 = vsel %vm2752, %v2935, 0
        %v3226 = vsel %vm2948, %v1909, 0
        %3228 = vmatprep.subr.bf16.mxu0 0
        %3229 = vmatpush1.bf16.msra.mxu0 0
        %3230 = vmatprep.subr.bf16.mxu0 0
        %3231 = vmatpush1.bf16.msra.mxu0 0
        %3232 = vmatprep.subr.bf16.mxu0 0
        %3233 = vmatpush1.bf16.msra.mxu0 0
        %3234 = vmatprep.subr.bf16.mxu0 0
        %3235 = vmatpush1.bf16.msra.mxu0 0
        %3236 = vmatprep.subr.bf16.mxu0 0
        %3237 = vmatpush1.bf16.msra.mxu0 0
        %3238 = vmatprep.subr.bf16.mxu0 0
        %3239 = vmatpush1.bf16.msra.mxu0 0
        %3240 = vmatprep.subr.bf16.mxu0 0
        %3241 = vmatpush1.bf16.msra.mxu0 0
        %3242 = vmatprep.subr.bf16.mxu0 0
        %3243 = vmatpush1.bf16.msra.mxu0 %v3226
        %3244 = vmatprep.subr.bf16.mxu0 0
        %3245 = vmatpush2.bf16.msra.mxu0 0
        %3246 = vmatprep.subr.bf16.mxu0 0
        %3247 = vmatpush2.bf16.msra.mxu0 0
        %3248 = vmatprep.subr.bf16.mxu0 0
        %3249 = vmatpush2.bf16.msra.mxu0 0
        %3250 = vmatprep.subr.bf16.mxu0 0
        %3251 = vmatpush2.bf16.msra.mxu0 0
        %3252 = vmatprep.subr.bf16.mxu0 0
        %3253 = vmatpush2.bf16.msra.mxu0 0
        %3254 = vmatprep.subr.bf16.mxu0 0
        %3255 = vmatpush2.bf16.msra.mxu0 0
        %3256 = vmatprep.subr.bf16.mxu0 0
        %3257 = vmatpush2.bf16.msra.mxu0 0
        %3258 = vmatprep.subr.bf16.mxu0 0
        %3259 = vmatpush2.bf16.msra.mxu0 0
        %3260 = vmatprep.mubr.bf16.mxu0 0
        %3261 = vmatmul.mubr.bf16.gmra.mxu0 %v3223
        %v3262 = vpop.f32.mrf.mxu0
        %v3263 = vadd.f32 0.0, %v3262
        %v3264 = vpop.f32.mrf.mxu0
        %v3265 = vpop.f32.mrf.mxu0
        %v3266 = vpop.f32.mrf.mxu0
        %3267 = vdwg.mxu0
        %v3269 = vsel %vm2752, %v2936, 0
        %v3272 = vsel %vm2948, %v1910, 0
        %3274 = vmatprep.subr.bf16.mxu0 0
        %3275 = vmatpush1.bf16.msra.mxu0 0
        %3276 = vmatprep.subr.bf16.mxu0 0
        %3277 = vmatpush1.bf16.msra.mxu0 0
        %3278 = vmatprep.subr.bf16.mxu0 0
        %3279 = vmatpush1.bf16.msra.mxu0 0
        %3280 = vmatprep.subr.bf16.mxu0 0
        %3281 = vmatpush1.bf16.msra.mxu0 0
        %3282 = vmatprep.subr.bf16.mxu0 0
        %3283 = vmatpush1.bf16.msra.mxu0 0
        %3284 = vmatprep.subr.bf16.mxu0 0
        %3285 = vmatpush1.bf16.msra.mxu0 0
        %3286 = vmatprep.subr.bf16.mxu0 0
        %3287 = vmatpush1.bf16.msra.mxu0 0
        %3288 = vmatprep.subr.bf16.mxu0 0
        %3289 = vmatpush1.bf16.msra.mxu0 %v3272
        %3290 = vmatprep.subr.bf16.mxu0 0
        %3291 = vmatpush2.bf16.msra.mxu0 0
        %3292 = vmatprep.subr.bf16.mxu0 0
        %3293 = vmatpush2.bf16.msra.mxu0 0
        %3294 = vmatprep.subr.bf16.mxu0 0
        %3295 = vmatpush2.bf16.msra.mxu0 0
        %3296 = vmatprep.subr.bf16.mxu0 0
        %3297 = vmatpush2.bf16.msra.mxu0 0
        %3298 = vmatprep.subr.bf16.mxu0 0
        %3299 = vmatpush2.bf16.msra.mxu0 0
        %3300 = vmatprep.subr.bf16.mxu0 0
        %3301 = vmatpush2.bf16.msra.mxu0 0
        %3302 = vmatprep.subr.bf16.mxu0 0
        %3303 = vmatpush2.bf16.msra.mxu0 0
        %3304 = vmatprep.subr.bf16.mxu0 0
        %3305 = vmatpush2.bf16.msra.mxu0 0
        %3306 = vmatprep.mubr.bf16.mxu0 0
        %3307 = vmatmul.mubr.bf16.gmra.mxu0 %v3269
        %v3308 = vpop.f32.mrf.mxu0
        %v3309 = vadd.f32 0.0, %v3308
        %v3310 = vpop.f32.mrf.mxu0
        %v3311 = vpop.f32.mrf.mxu0
        %v3312 = vpop.f32.mrf.mxu0
        %3313 = vdwg.mxu0
        %v3315 = vsel %vm2752, %v2937, 0
        %v3318 = vsel %vm2948, %v1911, 0
        %3320 = vmatprep.subr.bf16.mxu0 0
        %3321 = vmatpush1.bf16.msra.mxu0 0
        %3322 = vmatprep.subr.bf16.mxu0 0
        %3323 = vmatpush1.bf16.msra.mxu0 0
        %3324 = vmatprep.subr.bf16.mxu0 0
        %3325 = vmatpush1.bf16.msra.mxu0 0
        %3326 = vmatprep.subr.bf16.mxu0 0
        %3327 = vmatpush1.bf16.msra.mxu0 0
        %3328 = vmatprep.subr.bf16.mxu0 0
        %3329 = vmatpush1.bf16.msra.mxu0 0
        %3330 = vmatprep.subr.bf16.mxu0 0
        %3331 = vmatpush1.bf16.msra.mxu0 0
        %3332 = vmatprep.subr.bf16.mxu0 0
        %3333 = vmatpush1.bf16.msra.mxu0 0
        %3334 = vmatprep.subr.bf16.mxu0 0
        %3335 = vmatpush1.bf16.msra.mxu0 %v3318
        %3336 = vmatprep.subr.bf16.mxu0 0
        %3337 = vmatpush2.bf16.msra.mxu0 0
        %3338 = vmatprep.subr.bf16.mxu0 0
        %3339 = vmatpush2.bf16.msra.mxu0 0
        %3340 = vmatprep.subr.bf16.mxu0 0
        %3341 = vmatpush2.bf16.msra.mxu0 0
        %3342 = vmatprep.subr.bf16.mxu0 0
        %3343 = vmatpush2.bf16.msra.mxu0 0
        %3344 = vmatprep.subr.bf16.mxu0 0
        %3345 = vmatpush2.bf16.msra.mxu0 0
        %3346 = vmatprep.subr.bf16.mxu0 0
        %3347 = vmatpush2.bf16.msra.mxu0 0
        %3348 = vmatprep.subr.bf16.mxu0 0
        %3349 = vmatpush2.bf16.msra.mxu0 0
        %3350 = vmatprep.subr.bf16.mxu0 0
        %3351 = vmatpush2.bf16.msra.mxu0 0
        %3352 = vmatprep.mubr.bf16.mxu0 0
        %3353 = vmatmul.mubr.bf16.gmra.mxu0 %v3315
        %v3354 = vpop.f32.mrf.mxu0
        %v3355 = vadd.f32 0.0, %v3354
        %v3356 = vpop.f32.mrf.mxu0
        %v3357 = vpop.f32.mrf.mxu0
        %v3358 = vpop.f32.mrf.mxu0
        %3359 = vdwg.mxu0
        %v3361 = vsel %vm2752, %v2938, 0
        %v3364 = vsel %vm2948, %v1912, 0
        %3366 = vmatprep.subr.bf16.mxu0 0
        %3367 = vmatpush1.bf16.msra.mxu0 0
        %3368 = vmatprep.subr.bf16.mxu0 0
        %3369 = vmatpush1.bf16.msra.mxu0 0
        %3370 = vmatprep.subr.bf16.mxu0 0
        %3371 = vmatpush1.bf16.msra.mxu0 0
        %3372 = vmatprep.subr.bf16.mxu0 0
        %3373 = vmatpush1.bf16.msra.mxu0 0
        %3374 = vmatprep.subr.bf16.mxu0 0
        %3375 = vmatpush1.bf16.msra.mxu0 0
        %3376 = vmatprep.subr.bf16.mxu0 0
        %3377 = vmatpush1.bf16.msra.mxu0 0
        %3378 = vmatprep.subr.bf16.mxu0 0
        %3379 = vmatpush1.bf16.msra.mxu0 0
        %3380 = vmatprep.subr.bf16.mxu0 0
        %3381 = vmatpush1.bf16.msra.mxu0 %v3364
        %3382 = vmatprep.subr.bf16.mxu0 0
        %3383 = vmatpush2.bf16.msra.mxu0 0
        %3384 = vmatprep.subr.bf16.mxu0 0
        %3385 = vmatpush2.bf16.msra.mxu0 0
        %3386 = vmatprep.subr.bf16.mxu0 0
        %3387 = vmatpush2.bf16.msra.mxu0 0
        %3388 = vmatprep.subr.bf16.mxu0 0
        %3389 = vmatpush2.bf16.msra.mxu0 0
        %3390 = vmatprep.subr.bf16.mxu0 0
        %3391 = vmatpush2.bf16.msra.mxu0 0
        %3392 = vmatprep.subr.bf16.mxu0 0
        %3393 = vmatpush2.bf16.msra.mxu0 0
        %3394 = vmatprep.subr.bf16.mxu0 0
        %3395 = vmatpush2.bf16.msra.mxu0 0
        %3396 = vmatprep.subr.bf16.mxu0 0
        %3397 = vmatpush2.bf16.msra.mxu0 0
        %3398 = vmatprep.mubr.bf16.mxu0 0
        %3399 = vmatmul.mubr.bf16.gmra.mxu0 %v3361
        %v3400 = vpop.f32.mrf.mxu0
        %v3401 = vadd.f32 0.0, %v3400
        %v3402 = vpop.f32.mrf.mxu0
        %v3403 = vpop.f32.mrf.mxu0
        %v3404 = vpop.f32.mrf.mxu0
        %3405 = vdwg.mxu0
        %v3407 = vsel %vm2752, %v2939, 0
        %v3410 = vsel %vm2948, %v1913, 0
        %3412 = vmatprep.subr.bf16.mxu0 0
        %3413 = vmatpush1.bf16.msra.mxu0 0
        %3414 = vmatprep.subr.bf16.mxu0 0
        %3415 = vmatpush1.bf16.msra.mxu0 0
        %3416 = vmatprep.subr.bf16.mxu0 0
        %3417 = vmatpush1.bf16.msra.mxu0 0
        %3418 = vmatprep.subr.bf16.mxu0 0
        %3419 = vmatpush1.bf16.msra.mxu0 0
        %3420 = vmatprep.subr.bf16.mxu0 0
        %3421 = vmatpush1.bf16.msra.mxu0 0
        %3422 = vmatprep.subr.bf16.mxu0 0
        %3423 = vmatpush1.bf16.msra.mxu0 0
        %3424 = vmatprep.subr.bf16.mxu0 0
        %3425 = vmatpush1.bf16.msra.mxu0 0
        %3426 = vmatprep.subr.bf16.mxu0 0
        %3427 = vmatpush1.bf16.msra.mxu0 %v3410
        %3428 = vmatprep.subr.bf16.mxu0 0
        %3429 = vmatpush2.bf16.msra.mxu0 0
        %3430 = vmatprep.subr.bf16.mxu0 0
        %3431 = vmatpush2.bf16.msra.mxu0 0
        %3432 = vmatprep.subr.bf16.mxu0 0
        %3433 = vmatpush2.bf16.msra.mxu0 0
        %3434 = vmatprep.subr.bf16.mxu0 0
        %3435 = vmatpush2.bf16.msra.mxu0 0
        %3436 = vmatprep.subr.bf16.mxu0 0
        %3437 = vmatpush2.bf16.msra.mxu0 0
        %3438 = vmatprep.subr.bf16.mxu0 0
        %3439 = vmatpush2.bf16.msra.mxu0 0
        %3440 = vmatprep.subr.bf16.mxu0 0
        %3441 = vmatpush2.bf16.msra.mxu0 0
        %3442 = vmatprep.subr.bf16.mxu0 0
        %3443 = vmatpush2.bf16.msra.mxu0 0
        %3444 = vmatprep.mubr.bf16.mxu0 0
        %3445 = vmatmul.mubr.bf16.gmra.mxu0 %v3407
        %v3446 = vpop.f32.mrf.mxu0
        %v3447 = vadd.f32 0.0, %v3446
        %v3448 = vpop.f32.mrf.mxu0
        %v3449 = vpop.f32.mrf.mxu0
        %v3450 = vpop.f32.mrf.mxu0
        %3451 = vdwg.mxu0
        %v3453 = vsel %vm2752, %v2940, 0
        %v3456 = vsel %vm2948, %v1914, 0
        %3458 = vmatprep.subr.bf16.mxu0 0
        %3459 = vmatpush1.bf16.msra.mxu0 0
        %3460 = vmatprep.subr.bf16.mxu0 0
        %3461 = vmatpush1.bf16.msra.mxu0 0
        %3462 = vmatprep.subr.bf16.mxu0 0
        %3463 = vmatpush1.bf16.msra.mxu0 0
        %3464 = vmatprep.subr.bf16.mxu0 0
        %3465 = vmatpush1.bf16.msra.mxu0 0
        %3466 = vmatprep.subr.bf16.mxu0 0
        %3467 = vmatpush1.bf16.msra.mxu0 0
        %3468 = vmatprep.subr.bf16.mxu0 0
        %3469 = vmatpush1.bf16.msra.mxu0 0
        %3470 = vmatprep.subr.bf16.mxu0 0
        %3471 = vmatpush1.bf16.msra.mxu0 0
        %3472 = vmatprep.subr.bf16.mxu0 0
        %3473 = vmatpush1.bf16.msra.mxu0 %v3456
        %3474 = vmatprep.subr.bf16.mxu0 0
        %3475 = vmatpush2.bf16.msra.mxu0 0
        %3476 = vmatprep.subr.bf16.mxu0 0
        %3477 = vmatpush2.bf16.msra.mxu0 0
        %3478 = vmatprep.subr.bf16.mxu0 0
        %3479 = vmatpush2.bf16.msra.mxu0 0
        %3480 = vmatprep.subr.bf16.mxu0 0
        %3481 = vmatpush2.bf16.msra.mxu0 0
        %3482 = vmatprep.subr.bf16.mxu0 0
        %3483 = vmatpush2.bf16.msra.mxu0 0
        %3484 = vmatprep.subr.bf16.mxu0 0
        %3485 = vmatpush2.bf16.msra.mxu0 0
        %3486 = vmatprep.subr.bf16.mxu0 0
        %3487 = vmatpush2.bf16.msra.mxu0 0
        %3488 = vmatprep.subr.bf16.mxu0 0
        %3489 = vmatpush2.bf16.msra.mxu0 0
        %3490 = vmatprep.mubr.bf16.mxu0 0
        %3491 = vmatmul.mubr.bf16.gmra.mxu0 %v3453
        %v3492 = vpop.f32.mrf.mxu0
        %v3493 = vadd.f32 0.0, %v3492
        %v3494 = vpop.f32.mrf.mxu0
        %v3495 = vpop.f32.mrf.mxu0
        %v3496 = vpop.f32.mrf.mxu0
        %3497 = vdwg.mxu0
        %v3499 = vsel %vm2752, %v2941, 0
        %v3502 = vsel %vm2948, %v1915, 0
        %3504 = vmatprep.subr.bf16.mxu0 0
        %3505 = vmatpush1.bf16.msra.mxu0 0
        %3506 = vmatprep.subr.bf16.mxu0 0
        %3507 = vmatpush1.bf16.msra.mxu0 0
        %3508 = vmatprep.subr.bf16.mxu0 0
        %3509 = vmatpush1.bf16.msra.mxu0 0
        %3510 = vmatprep.subr.bf16.mxu0 0
        %3511 = vmatpush1.bf16.msra.mxu0 0
        %3512 = vmatprep.subr.bf16.mxu0 0
        %3513 = vmatpush1.bf16.msra.mxu0 0
        %3514 = vmatprep.subr.bf16.mxu0 0
        %3515 = vmatpush1.bf16.msra.mxu0 0
        %3516 = vmatprep.subr.bf16.mxu0 0
        %3517 = vmatpush1.bf16.msra.mxu0 0
        %3518 = vmatprep.subr.bf16.mxu0 0
        %3519 = vmatpush1.bf16.msra.mxu0 %v3502
        %3520 = vmatprep.subr.bf16.mxu0 0
        %3521 = vmatpush2.bf16.msra.mxu0 0
        %3522 = vmatprep.subr.bf16.mxu0 0
        %3523 = vmatpush2.bf16.msra.mxu0 0
        %3524 = vmatprep.subr.bf16.mxu0 0
        %3525 = vmatpush2.bf16.msra.mxu0 0
        %3526 = vmatprep.subr.bf16.mxu0 0
        %3527 = vmatpush2.bf16.msra.mxu0 0
        %3528 = vmatprep.subr.bf16.mxu0 0
        %3529 = vmatpush2.bf16.msra.mxu0 0
        %3530 = vmatprep.subr.bf16.mxu0 0
        %3531 = vmatpush2.bf16.msra.mxu0 0
        %3532 = vmatprep.subr.bf16.mxu0 0
        %3533 = vmatpush2.bf16.msra.mxu0 0
        %3534 = vmatprep.subr.bf16.mxu0 0
        %3535 = vmatpush2.bf16.msra.mxu0 0
        %3536 = vmatprep.mubr.bf16.mxu0 0
        %3537 = vmatmul.mubr.bf16.gmra.mxu0 %v3499
        %v3538 = vpop.f32.mrf.mxu0
        %v3539 = vadd.f32 0.0, %v3538
        %v3540 = vpop.f32.mrf.mxu0
        %v3541 = vpop.f32.mrf.mxu0
        %v3542 = vpop.f32.mrf.mxu0
        %3543 = vdwg.mxu0
        %v3545 = vsel %vm2752, %v2942, 0
        %v3548 = vsel %vm2948, %v1916, 0
        %3550 = vmatprep.subr.bf16.mxu0 0
        %3551 = vmatpush1.bf16.msra.mxu0 0
        %3552 = vmatprep.subr.bf16.mxu0 0
        %3553 = vmatpush1.bf16.msra.mxu0 0
        %3554 = vmatprep.subr.bf16.mxu0 0
        %3555 = vmatpush1.bf16.msra.mxu0 0
        %3556 = vmatprep.subr.bf16.mxu0 0
        %3557 = vmatpush1.bf16.msra.mxu0 0
        %3558 = vmatprep.subr.bf16.mxu0 0
        %3559 = vmatpush1.bf16.msra.mxu0 0
        %3560 = vmatprep.subr.bf16.mxu0 0
        %3561 = vmatpush1.bf16.msra.mxu0 0
        %3562 = vmatprep.subr.bf16.mxu0 0
        %3563 = vmatpush1.bf16.msra.mxu0 0
        %3564 = vmatprep.subr.bf16.mxu0 0
        %3565 = vmatpush1.bf16.msra.mxu0 %v3548
        %3566 = vmatprep.subr.bf16.mxu0 0
        %3567 = vmatpush2.bf16.msra.mxu0 0
        %3568 = vmatprep.subr.bf16.mxu0 0
        %3569 = vmatpush2.bf16.msra.mxu0 0
        %3570 = vmatprep.subr.bf16.mxu0 0
        %3571 = vmatpush2.bf16.msra.mxu0 0
        %3572 = vmatprep.subr.bf16.mxu0 0
        %3573 = vmatpush2.bf16.msra.mxu0 0
        %3574 = vmatprep.subr.bf16.mxu0 0
        %3575 = vmatpush2.bf16.msra.mxu0 0
        %3576 = vmatprep.subr.bf16.mxu0 0
        %3577 = vmatpush2.bf16.msra.mxu0 0
        %3578 = vmatprep.subr.bf16.mxu0 0
        %3579 = vmatpush2.bf16.msra.mxu0 0
        %3580 = vmatprep.subr.bf16.mxu0 0
        %3581 = vmatpush2.bf16.msra.mxu0 0
        %3582 = vmatprep.mubr.bf16.mxu0 0
        %3583 = vmatmul.mubr.bf16.gmra.mxu0 %v3545
        %v3584 = vpop.f32.mrf.mxu0
        %v3585 = vadd.f32 0.0, %v3584
        %v3586 = vpop.f32.mrf.mxu0
        %v3587 = vpop.f32.mrf.mxu0
        %v3588 = vpop.f32.mrf.mxu0
        %3589 = vdwg.mxu0
        %v3591 = vsel %vm2752, %v2943, 0
        %v3594 = vsel %vm2948, %v1917, 0
        %3596 = vmatprep.subr.bf16.mxu0 0
        %3597 = vmatpush1.bf16.msra.mxu0 0
        %3598 = vmatprep.subr.bf16.mxu0 0
        %3599 = vmatpush1.bf16.msra.mxu0 0
        %3600 = vmatprep.subr.bf16.mxu0 0
        %3601 = vmatpush1.bf16.msra.mxu0 0
        %3602 = vmatprep.subr.bf16.mxu0 0
        %3603 = vmatpush1.bf16.msra.mxu0 0
        %3604 = vmatprep.subr.bf16.mxu0 0
        %3605 = vmatpush1.bf16.msra.mxu0 0
        %3606 = vmatprep.subr.bf16.mxu0 0
        %3607 = vmatpush1.bf16.msra.mxu0 0
        %3608 = vmatprep.subr.bf16.mxu0 0
        %3609 = vmatpush1.bf16.msra.mxu0 0
        %3610 = vmatprep.subr.bf16.mxu0 0
        %3611 = vmatpush1.bf16.msra.mxu0 %v3594
        %3612 = vmatprep.subr.bf16.mxu0 0
        %3613 = vmatpush2.bf16.msra.mxu0 0
        %3614 = vmatprep.subr.bf16.mxu0 0
        %3615 = vmatpush2.bf16.msra.mxu0 0
        %3616 = vmatprep.subr.bf16.mxu0 0
        %3617 = vmatpush2.bf16.msra.mxu0 0
        %3618 = vmatprep.subr.bf16.mxu0 0
        %3619 = vmatpush2.bf16.msra.mxu0 0
        %3620 = vmatprep.subr.bf16.mxu0 0
        %3621 = vmatpush2.bf16.msra.mxu0 0
        %3622 = vmatprep.subr.bf16.mxu0 0
        %3623 = vmatpush2.bf16.msra.mxu0 0
        %3624 = vmatprep.subr.bf16.mxu0 0
        %3625 = vmatpush2.bf16.msra.mxu0 0
        %3626 = vmatprep.subr.bf16.mxu0 0
        %3627 = vmatpush2.bf16.msra.mxu0 0
        %3628 = vmatprep.mubr.bf16.mxu0 0
        %3629 = vmatmul.mubr.bf16.gmra.mxu0 %v3591
        %v3630 = vpop.f32.mrf.mxu0
        %v3631 = vadd.f32 0.0, %v3630
        %v3632 = vpop.f32.mrf.mxu0
        %v3633 = vpop.f32.mrf.mxu0
        %v3634 = vpop.f32.mrf.mxu0
        %3635 = vdwg.mxu0
        %v3637 = vsel %vm2752, %v2944, 0
        %v3640 = vsel %vm2948, %v1918, 0
        %3642 = vmatprep.subr.bf16.mxu0 0
        %3643 = vmatpush1.bf16.msra.mxu0 0
        %3644 = vmatprep.subr.bf16.mxu0 0
        %3645 = vmatpush1.bf16.msra.mxu0 0
        %3646 = vmatprep.subr.bf16.mxu0 0
        %3647 = vmatpush1.bf16.msra.mxu0 0
        %3648 = vmatprep.subr.bf16.mxu0 0
        %3649 = vmatpush1.bf16.msra.mxu0 0
        %3650 = vmatprep.subr.bf16.mxu0 0
        %3651 = vmatpush1.bf16.msra.mxu0 0
        %3652 = vmatprep.subr.bf16.mxu0 0
        %3653 = vmatpush1.bf16.msra.mxu0 0
        %3654 = vmatprep.subr.bf16.mxu0 0
        %3655 = vmatpush1.bf16.msra.mxu0 0
        %3656 = vmatprep.subr.bf16.mxu0 0
        %3657 = vmatpush1.bf16.msra.mxu0 %v3640
        %3658 = vmatprep.subr.bf16.mxu0 0
        %3659 = vmatpush2.bf16.msra.mxu0 0
        %3660 = vmatprep.subr.bf16.mxu0 0
        %3661 = vmatpush2.bf16.msra.mxu0 0
        %3662 = vmatprep.subr.bf16.mxu0 0
        %3663 = vmatpush2.bf16.msra.mxu0 0
        %3664 = vmatprep.subr.bf16.mxu0 0
        %3665 = vmatpush2.bf16.msra.mxu0 0
        %3666 = vmatprep.subr.bf16.mxu0 0
        %3667 = vmatpush2.bf16.msra.mxu0 0
        %3668 = vmatprep.subr.bf16.mxu0 0
        %3669 = vmatpush2.bf16.msra.mxu0 0
        %3670 = vmatprep.subr.bf16.mxu0 0
        %3671 = vmatpush2.bf16.msra.mxu0 0
        %3672 = vmatprep.subr.bf16.mxu0 0
        %3673 = vmatpush2.bf16.msra.mxu0 0
        %3674 = vmatprep.mubr.bf16.mxu0 0
        %3675 = vmatmul.mubr.bf16.gmra.mxu0 %v3637
        %v3676 = vpop.f32.mrf.mxu0
        %v3677 = vadd.f32 0.0, %v3676
        %v3678 = vpop.f32.mrf.mxu0
        %v3679 = vpop.f32.mrf.mxu0
        %v3680 = vpop.f32.mrf.mxu0
        %3681 = vdwg.mxu0
        %v3682 = vpack.c.bf16 %v3033, %v2987
        %v3683 = vpack.c.bf16 %v3125, %v3079
        %v3684 = vpack.c.bf16 %v3217, %v3171
        %v3685 = vpack.c.bf16 %v3309, %v3263
        %v3686 = vpack.c.bf16 %v3401, %v3355
        %v3687 = vpack.c.bf16 %v3493, %v3447
        %v3688 = vpack.c.bf16 %v3585, %v3539
        %v3689 = vpack.c.bf16 %v3677, %v3631
        %v3690 = vld [vmem:[%s725] sm:$0xf]
        %v3691 = vld [vmem:[%s725 + $0x4] sm:$0xf]
        %3693 = vrot.lane.b32.xlu0 %v1871, 112
        %v3694 = vpop.permute.xlu0 %3693
        %3696 = vrot.lane.b32.xlu0 %v1887, 112
        %v3697 = vpop.permute.xlu0 %3696
        %v3699 = vsel %vm2015, %v3694, 0
        %v3702 = vsel %vm2015, %v3697, 0
        %3704 = vmatprep.subr.bf16.mxu0 0
        %3705 = vmatpush1.bf16.xpose.msra.mxu0 0
        %3706 = vmatprep.subr.bf16.mxu0 0
        %3707 = vmatpush1.bf16.xpose.msra.mxu0 0
        %3708 = vmatprep.subr.bf16.mxu0 0
        %3709 = vmatpush1.bf16.xpose.msra.mxu0 0
        %3710 = vmatprep.subr.bf16.mxu0 0
        %3711 = vmatpush1.bf16.xpose.msra.mxu0 0
        %3712 = vmatprep.subr.bf16.mxu0 0
        %3713 = vmatpush1.bf16.xpose.msra.mxu0 0
        %3714 = vmatprep.subr.bf16.mxu0 0
        %3715 = vmatpush1.bf16.xpose.msra.mxu0 0
        %3716 = vmatprep.subr.bf16.mxu0 0
        %3717 = vmatpush1.bf16.xpose.msra.mxu0 0
        %3718 = vmatprep.subr.bf16.mxu0 0
        %3719 = vmatpush1.bf16.xpose.msra.mxu0 %v3702
        %3720 = vmatprep.subr.bf16.mxu0 0
        %3721 = vmatpush2.bf16.xpose.msra.mxu0 0
        %3722 = vmatprep.subr.bf16.mxu0 0
        %3723 = vmatpush2.bf16.xpose.msra.mxu0 0
        %3724 = vmatprep.subr.bf16.mxu0 0
        %3725 = vmatpush2.bf16.xpose.msra.mxu0 0
        %3726 = vmatprep.subr.bf16.mxu0 0
        %3727 = vmatpush2.bf16.xpose.msra.mxu0 0
        %3728 = vmatprep.subr.bf16.mxu0 0
        %3729 = vmatpush2.bf16.xpose.msra.mxu0 0
        %3730 = vmatprep.subr.bf16.mxu0 0
        %3731 = vmatpush2.bf16.xpose.msra.mxu0 0
        %3732 = vmatprep.subr.bf16.mxu0 0
        %3733 = vmatpush2.bf16.xpose.msra.mxu0 0
        %3734 = vmatprep.subr.bf16.mxu0 0
        %3735 = vmatpush2.bf16.xpose.msra.mxu0 0
        %3736 = vmatprep.mubr.bf16.mxu0 0
        %3737 = vmatmul.mubr.bf16.gmra.mxu0 %v3699
        %v3738 = vpop.f32.mrf.mxu0
        %v3739 = vadd.f32 %v1938, %v3738
        %v3740 = vpop.f32.mrf.mxu0
        %v3741 = vpop.f32.mrf.mxu0
        %v3742 = vpop.f32.mrf.mxu0
        %3743 = vdwg.mxu0
        %3745 = vrot.lane.b32.xlu0 %v1872, 112
        %v3746 = vpop.permute.xlu0 %3745
        %3748 = vrot.lane.b32.xlu0 %v1888, 112
        %v3749 = vpop.permute.xlu0 %3748
        %v3751 = vsel %vm2015, %v3746, 0
        %v3754 = vsel %vm2015, %v3749, 0
        %3756 = vmatprep.subr.bf16.mxu0 0
        %3757 = vmatpush1.bf16.xpose.msra.mxu0 0
        %3758 = vmatprep.subr.bf16.mxu0 0
        %3759 = vmatpush1.bf16.xpose.msra.mxu0 0
        %3760 = vmatprep.subr.bf16.mxu0 0
        %3761 = vmatpush1.bf16.xpose.msra.mxu0 0
        %3762 = vmatprep.subr.bf16.mxu0 0
        %3763 = vmatpush1.bf16.xpose.msra.mxu0 0
        %3764 = vmatprep.subr.bf16.mxu0 0
        %3765 = vmatpush1.bf16.xpose.msra.mxu0 0
        %3766 = vmatprep.subr.bf16.mxu0 0
        %3767 = vmatpush1.bf16.xpose.msra.mxu0 0
        %3768 = vmatprep.subr.bf16.mxu0 0
        %3769 = vmatpush1.bf16.xpose.msra.mxu0 0
        %3770 = vmatprep.subr.bf16.mxu0 0
        %3771 = vmatpush1.bf16.xpose.msra.mxu0 %v3754
        %3772 = vmatprep.subr.bf16.mxu0 0
        %3773 = vmatpush2.bf16.xpose.msra.mxu0 0
        %3774 = vmatprep.subr.bf16.mxu0 0
        %3775 = vmatpush2.bf16.xpose.msra.mxu0 0
        %3776 = vmatprep.subr.bf16.mxu0 0
        %3777 = vmatpush2.bf16.xpose.msra.mxu0 0
        %3778 = vmatprep.subr.bf16.mxu0 0
        %3779 = vmatpush2.bf16.xpose.msra.mxu0 0
        %3780 = vmatprep.subr.bf16.mxu0 0
        %3781 = vmatpush2.bf16.xpose.msra.mxu0 0
        %3782 = vmatprep.subr.bf16.mxu0 0
        %3783 = vmatpush2.bf16.xpose.msra.mxu0 0
        %3784 = vmatprep.subr.bf16.mxu0 0
        %3785 = vmatpush2.bf16.xpose.msra.mxu0 0
        %3786 = vmatprep.subr.bf16.mxu0 0
        %3787 = vmatpush2.bf16.xpose.msra.mxu0 0
        %3788 = vmatprep.mubr.bf16.mxu0 0
        %3789 = vmatmul.mubr.bf16.gmra.mxu0 %v3751
        %v3790 = vpop.f32.mrf.mxu0
        %v3791 = vadd.f32 %v1942, %v3790
        %v3792 = vpop.f32.mrf.mxu0
        %v3793 = vpop.f32.mrf.mxu0
        %v3794 = vpop.f32.mrf.mxu0
        %3795 = vdwg.mxu0
        %3797 = vrot.lane.b32.xlu0 %v1873, 112
        %v3798 = vpop.permute.xlu0 %3797
        %3800 = vrot.lane.b32.xlu0 %v1889, 112
        %v3801 = vpop.permute.xlu0 %3800
        %v3803 = vsel %vm2015, %v3798, 0
        %v3806 = vsel %vm2015, %v3801, 0
        %3808 = vmatprep.subr.bf16.mxu0 0
        %3809 = vmatpush1.bf16.xpose.msra.mxu0 0
        %3810 = vmatprep.subr.bf16.mxu0 0
        %3811 = vmatpush1.bf16.xpose.msra.mxu0 0
        %3812 = vmatprep.subr.bf16.mxu0 0
        %3813 = vmatpush1.bf16.xpose.msra.mxu0 0
        %3814 = vmatprep.subr.bf16.mxu0 0
        %3815 = vmatpush1.bf16.xpose.msra.mxu0 0
        %3816 = vmatprep.subr.bf16.mxu0 0
        %3817 = vmatpush1.bf16.xpose.msra.mxu0 0
        %3818 = vmatprep.subr.bf16.mxu0 0
        %3819 = vmatpush1.bf16.xpose.msra.mxu0 0
        %3820 = vmatprep.subr.bf16.mxu0 0
        %3821 = vmatpush1.bf16.xpose.msra.mxu0 0
        %3822 = vmatprep.subr.bf16.mxu0 0
        %3823 = vmatpush1.bf16.xpose.msra.mxu0 %v3806
        %3824 = vmatprep.subr.bf16.mxu0 0
        %3825 = vmatpush2.bf16.xpose.msra.mxu0 0
        %3826 = vmatprep.subr.bf16.mxu0 0
        %3827 = vmatpush2.bf16.xpose.msra.mxu0 0
        %3828 = vmatprep.subr.bf16.mxu0 0
        %3829 = vmatpush2.bf16.xpose.msra.mxu0 0
        %3830 = vmatprep.subr.bf16.mxu0 0
        %3831 = vmatpush2.bf16.xpose.msra.mxu0 0
        %3832 = vmatprep.subr.bf16.mxu0 0
        %3833 = vmatpush2.bf16.xpose.msra.mxu0 0
        %3834 = vmatprep.subr.bf16.mxu0 0
        %3835 = vmatpush2.bf16.xpose.msra.mxu0 0
        %3836 = vmatprep.subr.bf16.mxu0 0
        %3837 = vmatpush2.bf16.xpose.msra.mxu0 0
        %3838 = vmatprep.subr.bf16.mxu0 0
        %3839 = vmatpush2.bf16.xpose.msra.mxu0 0
        %3840 = vmatprep.mubr.bf16.mxu0 0
        %3841 = vmatmul.mubr.bf16.gmra.mxu0 %v3803
        %v3842 = vpop.f32.mrf.mxu0
        %v3843 = vadd.f32 %v1946, %v3842
        %v3844 = vpop.f32.mrf.mxu0
        %v3845 = vpop.f32.mrf.mxu0
        %v3846 = vpop.f32.mrf.mxu0
        %3847 = vdwg.mxu0
        %3849 = vrot.lane.b32.xlu0 %v1874, 112
        %v3850 = vpop.permute.xlu0 %3849
        %3852 = vrot.lane.b32.xlu0 %v1890, 112
        %v3853 = vpop.permute.xlu0 %3852
        %v3855 = vsel %vm2015, %v3850, 0
        %v3858 = vsel %vm2015, %v3853, 0
        %3860 = vmatprep.subr.bf16.mxu0 0
        %3861 = vmatpush1.bf16.xpose.msra.mxu0 0
        %3862 = vmatprep.subr.bf16.mxu0 0
        %3863 = vmatpush1.bf16.xpose.msra.mxu0 0
        %3864 = vmatprep.subr.bf16.mxu0 0
        %3865 = vmatpush1.bf16.xpose.msra.mxu0 0
        %3866 = vmatprep.subr.bf16.mxu0 0
        %3867 = vmatpush1.bf16.xpose.msra.mxu0 0
        %3868 = vmatprep.subr.bf16.mxu0 0
        %3869 = vmatpush1.bf16.xpose.msra.mxu0 0
        %3870 = vmatprep.subr.bf16.mxu0 0
        %3871 = vmatpush1.bf16.xpose.msra.mxu0 0
        %3872 = vmatprep.subr.bf16.mxu0 0
        %3873 = vmatpush1.bf16.xpose.msra.mxu0 0
        %3874 = vmatprep.subr.bf16.mxu0 0
        %3875 = vmatpush1.bf16.xpose.msra.mxu0 %v3858
        %3876 = vmatprep.subr.bf16.mxu0 0
        %3877 = vmatpush2.bf16.xpose.msra.mxu0 0
        %3878 = vmatprep.subr.bf16.mxu0 0
        %3879 = vmatpush2.bf16.xpose.msra.mxu0 0
        %3880 = vmatprep.subr.bf16.mxu0 0
        %3881 = vmatpush2.bf16.xpose.msra.mxu0 0
        %3882 = vmatprep.subr.bf16.mxu0 0
        %3883 = vmatpush2.bf16.xpose.msra.mxu0 0
        %3884 = vmatprep.subr.bf16.mxu0 0
        %3885 = vmatpush2.bf16.xpose.msra.mxu0 0
        %3886 = vmatprep.subr.bf16.mxu0 0
        %3887 = vmatpush2.bf16.xpose.msra.mxu0 0
        %3888 = vmatprep.subr.bf16.mxu0 0
        %3889 = vmatpush2.bf16.xpose.msra.mxu0 0
        %3890 = vmatprep.subr.bf16.mxu0 0
        %3891 = vmatpush2.bf16.xpose.msra.mxu0 0
        %3892 = vmatprep.mubr.bf16.mxu0 0
        %3893 = vmatmul.mubr.bf16.gmra.mxu0 %v3855
        %v3894 = vpop.f32.mrf.mxu0
        %v3895 = vadd.f32 %v1950, %v3894
        %v3896 = vpop.f32.mrf.mxu0
        %v3897 = vpop.f32.mrf.mxu0
        %v3898 = vpop.f32.mrf.mxu0
        %3899 = vdwg.mxu0
        %3901 = vrot.lane.b32.xlu0 %v1875, 112
        %v3902 = vpop.permute.xlu0 %3901
        %3904 = vrot.lane.b32.xlu0 %v1891, 112
        %v3905 = vpop.permute.xlu0 %3904
        %v3907 = vsel %vm2015, %v3902, 0
        %v3910 = vsel %vm2015, %v3905, 0
        %3912 = vmatprep.subr.bf16.mxu0 0
        %3913 = vmatpush1.bf16.xpose.msra.mxu0 0
        %3914 = vmatprep.subr.bf16.mxu0 0
        %3915 = vmatpush1.bf16.xpose.msra.mxu0 0
        %3916 = vmatprep.subr.bf16.mxu0 0
        %3917 = vmatpush1.bf16.xpose.msra.mxu0 0
        %3918 = vmatprep.subr.bf16.mxu0 0
        %3919 = vmatpush1.bf16.xpose.msra.mxu0 0
        %3920 = vmatprep.subr.bf16.mxu0 0
        %3921 = vmatpush1.bf16.xpose.msra.mxu0 0
        %3922 = vmatprep.subr.bf16.mxu0 0
        %3923 = vmatpush1.bf16.xpose.msra.mxu0 0
        %3924 = vmatprep.subr.bf16.mxu0 0
        %3925 = vmatpush1.bf16.xpose.msra.mxu0 0
        %3926 = vmatprep.subr.bf16.mxu0 0
        %3927 = vmatpush1.bf16.xpose.msra.mxu0 %v3910
        %3928 = vmatprep.subr.bf16.mxu0 0
        %3929 = vmatpush2.bf16.xpose.msra.mxu0 0
        %3930 = vmatprep.subr.bf16.mxu0 0
        %3931 = vmatpush2.bf16.xpose.msra.mxu0 0
        %3932 = vmatprep.subr.bf16.mxu0 0
        %3933 = vmatpush2.bf16.xpose.msra.mxu0 0
        %3934 = vmatprep.subr.bf16.mxu0 0
        %3935 = vmatpush2.bf16.xpose.msra.mxu0 0
        %3936 = vmatprep.subr.bf16.mxu0 0
        %3937 = vmatpush2.bf16.xpose.msra.mxu0 0
        %3938 = vmatprep.subr.bf16.mxu0 0
        %3939 = vmatpush2.bf16.xpose.msra.mxu0 0
        %3940 = vmatprep.subr.bf16.mxu0 0
        %3941 = vmatpush2.bf16.xpose.msra.mxu0 0
        %3942 = vmatprep.subr.bf16.mxu0 0
        %3943 = vmatpush2.bf16.xpose.msra.mxu0 0
        %3944 = vmatprep.mubr.bf16.mxu0 0
        %3945 = vmatmul.mubr.bf16.gmra.mxu0 %v3907
        %v3946 = vpop.f32.mrf.mxu0
        %v3947 = vadd.f32 %v1954, %v3946
        %v3948 = vpop.f32.mrf.mxu0
        %v3949 = vpop.f32.mrf.mxu0
        %v3950 = vpop.f32.mrf.mxu0
        %3951 = vdwg.mxu0
        %3953 = vrot.lane.b32.xlu0 %v1876, 112
        %v3954 = vpop.permute.xlu0 %3953
        %3956 = vrot.lane.b32.xlu0 %v1892, 112
        %v3957 = vpop.permute.xlu0 %3956
        %v3959 = vsel %vm2015, %v3954, 0
        %v3962 = vsel %vm2015, %v3957, 0
        %3964 = vmatprep.subr.bf16.mxu0 0
        %3965 = vmatpush1.bf16.xpose.msra.mxu0 0
        %3966 = vmatprep.subr.bf16.mxu0 0
        %3967 = vmatpush1.bf16.xpose.msra.mxu0 0
        %3968 = vmatprep.subr.bf16.mxu0 0
        %3969 = vmatpush1.bf16.xpose.msra.mxu0 0
        %3970 = vmatprep.subr.bf16.mxu0 0
        %3971 = vmatpush1.bf16.xpose.msra.mxu0 0
        %3972 = vmatprep.subr.bf16.mxu0 0
        %3973 = vmatpush1.bf16.xpose.msra.mxu0 0
        %3974 = vmatprep.subr.bf16.mxu0 0
        %3975 = vmatpush1.bf16.xpose.msra.mxu0 0
        %3976 = vmatprep.subr.bf16.mxu0 0
        %3977 = vmatpush1.bf16.xpose.msra.mxu0 0
        %3978 = vmatprep.subr.bf16.mxu0 0
        %3979 = vmatpush1.bf16.xpose.msra.mxu0 %v3962
        %3980 = vmatprep.subr.bf16.mxu0 0
        %3981 = vmatpush2.bf16.xpose.msra.mxu0 0
        %3982 = vmatprep.subr.bf16.mxu0 0
        %3983 = vmatpush2.bf16.xpose.msra.mxu0 0
        %3984 = vmatprep.subr.bf16.mxu0 0
        %3985 = vmatpush2.bf16.xpose.msra.mxu0 0
        %3986 = vmatprep.subr.bf16.mxu0 0
        %3987 = vmatpush2.bf16.xpose.msra.mxu0 0
        %3988 = vmatprep.subr.bf16.mxu0 0
        %3989 = vmatpush2.bf16.xpose.msra.mxu0 0
        %3990 = vmatprep.subr.bf16.mxu0 0
        %3991 = vmatpush2.bf16.xpose.msra.mxu0 0
        %3992 = vmatprep.subr.bf16.mxu0 0
        %3993 = vmatpush2.bf16.xpose.msra.mxu0 0
        %3994 = vmatprep.subr.bf16.mxu0 0
        %3995 = vmatpush2.bf16.xpose.msra.mxu0 0
        %3996 = vmatprep.mubr.bf16.mxu0 0
        %3997 = vmatmul.mubr.bf16.gmra.mxu0 %v3959
        %v3998 = vpop.f32.mrf.mxu0
        %v3999 = vadd.f32 %v1958, %v3998
        %v4000 = vpop.f32.mrf.mxu0
        %v4001 = vpop.f32.mrf.mxu0
        %v4002 = vpop.f32.mrf.mxu0
        %4003 = vdwg.mxu0
        %4005 = vrot.lane.b32.xlu0 %v1877, 112
        %v4006 = vpop.permute.xlu0 %4005
        %4008 = vrot.lane.b32.xlu0 %v1893, 112
        %v4009 = vpop.permute.xlu0 %4008
        %v4011 = vsel %vm2015, %v4006, 0
        %v4014 = vsel %vm2015, %v4009, 0
        %4016 = vmatprep.subr.bf16.mxu0 0
        %4017 = vmatpush1.bf16.xpose.msra.mxu0 0
        %4018 = vmatprep.subr.bf16.mxu0 0
        %4019 = vmatpush1.bf16.xpose.msra.mxu0 0
        %4020 = vmatprep.subr.bf16.mxu0 0
        %4021 = vmatpush1.bf16.xpose.msra.mxu0 0
        %4022 = vmatprep.subr.bf16.mxu0 0
        %4023 = vmatpush1.bf16.xpose.msra.mxu0 0
        %4024 = vmatprep.subr.bf16.mxu0 0
        %4025 = vmatpush1.bf16.xpose.msra.mxu0 0
        %4026 = vmatprep.subr.bf16.mxu0 0
        %4027 = vmatpush1.bf16.xpose.msra.mxu0 0
        %4028 = vmatprep.subr.bf16.mxu0 0
        %4029 = vmatpush1.bf16.xpose.msra.mxu0 0
        %4030 = vmatprep.subr.bf16.mxu0 0
        %4031 = vmatpush1.bf16.xpose.msra.mxu0 %v4014
        %4032 = vmatprep.subr.bf16.mxu0 0
        %4033 = vmatpush2.bf16.xpose.msra.mxu0 0
        %4034 = vmatprep.subr.bf16.mxu0 0
        %4035 = vmatpush2.bf16.xpose.msra.mxu0 0
        %4036 = vmatprep.subr.bf16.mxu0 0
        %4037 = vmatpush2.bf16.xpose.msra.mxu0 0
        %4038 = vmatprep.subr.bf16.mxu0 0
        %4039 = vmatpush2.bf16.xpose.msra.mxu0 0
        %4040 = vmatprep.subr.bf16.mxu0 0
        %4041 = vmatpush2.bf16.xpose.msra.mxu0 0
        %4042 = vmatprep.subr.bf16.mxu0 0
        %4043 = vmatpush2.bf16.xpose.msra.mxu0 0
        %4044 = vmatprep.subr.bf16.mxu0 0
        %4045 = vmatpush2.bf16.xpose.msra.mxu0 0
        %4046 = vmatprep.subr.bf16.mxu0 0
        %4047 = vmatpush2.bf16.xpose.msra.mxu0 0
        %4048 = vmatprep.mubr.bf16.mxu0 0
        %4049 = vmatmul.mubr.bf16.gmra.mxu0 %v4011
        %v4050 = vpop.f32.mrf.mxu0
        %v4051 = vadd.f32 %v1962, %v4050
        %v4052 = vpop.f32.mrf.mxu0
        %v4053 = vpop.f32.mrf.mxu0
        %v4054 = vpop.f32.mrf.mxu0
        %4055 = vdwg.mxu0
        %4057 = vrot.lane.b32.xlu0 %v1878, 112
        %v4058 = vpop.permute.xlu0 %4057
        %4060 = vrot.lane.b32.xlu0 %v1894, 112
        %v4061 = vpop.permute.xlu0 %4060
        %v4063 = vsel %vm2015, %v4058, 0
        %v4066 = vsel %vm2015, %v4061, 0
        %4068 = vmatprep.subr.bf16.mxu0 0
        %4069 = vmatpush1.bf16.xpose.msra.mxu0 0
        %4070 = vmatprep.subr.bf16.mxu0 0
        %4071 = vmatpush1.bf16.xpose.msra.mxu0 0
        %4072 = vmatprep.subr.bf16.mxu0 0
        %4073 = vmatpush1.bf16.xpose.msra.mxu0 0
        %4074 = vmatprep.subr.bf16.mxu0 0
        %4075 = vmatpush1.bf16.xpose.msra.mxu0 0
        %4076 = vmatprep.subr.bf16.mxu0 0
        %4077 = vmatpush1.bf16.xpose.msra.mxu0 0
        %4078 = vmatprep.subr.bf16.mxu0 0
        %4079 = vmatpush1.bf16.xpose.msra.mxu0 0
        %4080 = vmatprep.subr.bf16.mxu0 0
        %4081 = vmatpush1.bf16.xpose.msra.mxu0 0
        %4082 = vmatprep.subr.bf16.mxu0 0
        %4083 = vmatpush1.bf16.xpose.msra.mxu0 %v4066
        %4084 = vmatprep.subr.bf16.mxu0 0
        %4085 = vmatpush2.bf16.xpose.msra.mxu0 0
        %4086 = vmatprep.subr.bf16.mxu0 0
        %4087 = vmatpush2.bf16.xpose.msra.mxu0 0
        %4088 = vmatprep.subr.bf16.mxu0 0
        %4089 = vmatpush2.bf16.xpose.msra.mxu0 0
        %4090 = vmatprep.subr.bf16.mxu0 0
        %4091 = vmatpush2.bf16.xpose.msra.mxu0 0
        %4092 = vmatprep.subr.bf16.mxu0 0
        %4093 = vmatpush2.bf16.xpose.msra.mxu0 0
        %4094 = vmatprep.subr.bf16.mxu0 0
        %4095 = vmatpush2.bf16.xpose.msra.mxu0 0
        %4096 = vmatprep.subr.bf16.mxu0 0
        %4097 = vmatpush2.bf16.xpose.msra.mxu0 0
        %4098 = vmatprep.subr.bf16.mxu0 0
        %4099 = vmatpush2.bf16.xpose.msra.mxu0 0
        %4100 = vmatprep.mubr.bf16.mxu0 0
        %4101 = vmatmul.mubr.bf16.gmra.mxu0 %v4063
        %v4102 = vpop.f32.mrf.mxu0
        %v4103 = vadd.f32 %v1966, %v4102
        %v4104 = vpop.f32.mrf.mxu0
        %v4105 = vpop.f32.mrf.mxu0
        %v4106 = vpop.f32.mrf.mxu0
        %4107 = vdwg.mxu0
        %4109 = vrot.lane.b32.xlu0 %v1879, 112
        %v4110 = vpop.permute.xlu0 %4109
        %4112 = vrot.lane.b32.xlu0 %v1895, 112
        %v4113 = vpop.permute.xlu0 %4112
        %v4115 = vsel %vm2015, %v4110, 0
        %v4118 = vsel %vm2015, %v4113, 0
        %4120 = vmatprep.subr.bf16.mxu0 0
        %4121 = vmatpush1.bf16.xpose.msra.mxu0 0
        %4122 = vmatprep.subr.bf16.mxu0 0
        %4123 = vmatpush1.bf16.xpose.msra.mxu0 0
        %4124 = vmatprep.subr.bf16.mxu0 0
        %4125 = vmatpush1.bf16.xpose.msra.mxu0 0
        %4126 = vmatprep.subr.bf16.mxu0 0
        %4127 = vmatpush1.bf16.xpose.msra.mxu0 0
        %4128 = vmatprep.subr.bf16.mxu0 0
        %4129 = vmatpush1.bf16.xpose.msra.mxu0 0
        %4130 = vmatprep.subr.bf16.mxu0 0
        %4131 = vmatpush1.bf16.xpose.msra.mxu0 0
        %4132 = vmatprep.subr.bf16.mxu0 0
        %4133 = vmatpush1.bf16.xpose.msra.mxu0 0
        %4134 = vmatprep.subr.bf16.mxu0 0
        %4135 = vmatpush1.bf16.xpose.msra.mxu0 %v4118
        %4136 = vmatprep.subr.bf16.mxu0 0
        %4137 = vmatpush2.bf16.xpose.msra.mxu0 0
        %4138 = vmatprep.subr.bf16.mxu0 0
        %4139 = vmatpush2.bf16.xpose.msra.mxu0 0
        %4140 = vmatprep.subr.bf16.mxu0 0
        %4141 = vmatpush2.bf16.xpose.msra.mxu0 0
        %4142 = vmatprep.subr.bf16.mxu0 0
        %4143 = vmatpush2.bf16.xpose.msra.mxu0 0
        %4144 = vmatprep.subr.bf16.mxu0 0
        %4145 = vmatpush2.bf16.xpose.msra.mxu0 0
        %4146 = vmatprep.subr.bf16.mxu0 0
        %4147 = vmatpush2.bf16.xpose.msra.mxu0 0
        %4148 = vmatprep.subr.bf16.mxu0 0
        %4149 = vmatpush2.bf16.xpose.msra.mxu0 0
        %4150 = vmatprep.subr.bf16.mxu0 0
        %4151 = vmatpush2.bf16.xpose.msra.mxu0 0
        %4152 = vmatprep.mubr.bf16.mxu0 0
        %4153 = vmatmul.mubr.bf16.gmra.mxu0 %v4115
        %v4154 = vpop.f32.mrf.mxu0
        %v4155 = vadd.f32 %v1970, %v4154
        %v4156 = vpop.f32.mrf.mxu0
        %v4157 = vpop.f32.mrf.mxu0
        %v4158 = vpop.f32.mrf.mxu0
        %4159 = vdwg.mxu0
        %4161 = vrot.lane.b32.xlu0 %v1880, 112
        %v4162 = vpop.permute.xlu0 %4161
        %4164 = vrot.lane.b32.xlu0 %v1896, 112
        %v4165 = vpop.permute.xlu0 %4164
        %v4167 = vsel %vm2015, %v4162, 0
        %v4170 = vsel %vm2015, %v4165, 0
        %4172 = vmatprep.subr.bf16.mxu0 0
        %4173 = vmatpush1.bf16.xpose.msra.mxu0 0
        %4174 = vmatprep.subr.bf16.mxu0 0
        %4175 = vmatpush1.bf16.xpose.msra.mxu0 0
        %4176 = vmatprep.subr.bf16.mxu0 0
        %4177 = vmatpush1.bf16.xpose.msra.mxu0 0
        %4178 = vmatprep.subr.bf16.mxu0 0
        %4179 = vmatpush1.bf16.xpose.msra.mxu0 0
        %4180 = vmatprep.subr.bf16.mxu0 0
        %4181 = vmatpush1.bf16.xpose.msra.mxu0 0
        %4182 = vmatprep.subr.bf16.mxu0 0
        %4183 = vmatpush1.bf16.xpose.msra.mxu0 0
        %4184 = vmatprep.subr.bf16.mxu0 0
        %4185 = vmatpush1.bf16.xpose.msra.mxu0 0
        %4186 = vmatprep.subr.bf16.mxu0 0
        %4187 = vmatpush1.bf16.xpose.msra.mxu0 %v4170
        %4188 = vmatprep.subr.bf16.mxu0 0
        %4189 = vmatpush2.bf16.xpose.msra.mxu0 0
        %4190 = vmatprep.subr.bf16.mxu0 0
        %4191 = vmatpush2.bf16.xpose.msra.mxu0 0
        %4192 = vmatprep.subr.bf16.mxu0 0
        %4193 = vmatpush2.bf16.xpose.msra.mxu0 0
        %4194 = vmatprep.subr.bf16.mxu0 0
        %4195 = vmatpush2.bf16.xpose.msra.mxu0 0
        %4196 = vmatprep.subr.bf16.mxu0 0
        %4197 = vmatpush2.bf16.xpose.msra.mxu0 0
        %4198 = vmatprep.subr.bf16.mxu0 0
        %4199 = vmatpush2.bf16.xpose.msra.mxu0 0
        %4200 = vmatprep.subr.bf16.mxu0 0
        %4201 = vmatpush2.bf16.xpose.msra.mxu0 0
        %4202 = vmatprep.subr.bf16.mxu0 0
        %4203 = vmatpush2.bf16.xpose.msra.mxu0 0
        %4204 = vmatprep.mubr.bf16.mxu0 0
        %4205 = vmatmul.mubr.bf16.gmra.mxu0 %v4167
        %v4206 = vpop.f32.mrf.mxu0
        %v4207 = vadd.f32 %v1974, %v4206
        %v4208 = vpop.f32.mrf.mxu0
        %v4209 = vpop.f32.mrf.mxu0
        %v4210 = vpop.f32.mrf.mxu0
        %4211 = vdwg.mxu0
        %4213 = vrot.lane.b32.xlu0 %v1881, 112
        %v4214 = vpop.permute.xlu0 %4213
        %4216 = vrot.lane.b32.xlu0 %v1897, 112
        %v4217 = vpop.permute.xlu0 %4216
        %v4219 = vsel %vm2015, %v4214, 0
        %v4222 = vsel %vm2015, %v4217, 0
        %4224 = vmatprep.subr.bf16.mxu0 0
        %4225 = vmatpush1.bf16.xpose.msra.mxu0 0
        %4226 = vmatprep.subr.bf16.mxu0 0
        %4227 = vmatpush1.bf16.xpose.msra.mxu0 0
        %4228 = vmatprep.subr.bf16.mxu0 0
        %4229 = vmatpush1.bf16.xpose.msra.mxu0 0
        %4230 = vmatprep.subr.bf16.mxu0 0
        %4231 = vmatpush1.bf16.xpose.msra.mxu0 0
        %4232 = vmatprep.subr.bf16.mxu0 0
        %4233 = vmatpush1.bf16.xpose.msra.mxu0 0
        %4234 = vmatprep.subr.bf16.mxu0 0
        %4235 = vmatpush1.bf16.xpose.msra.mxu0 0
        %4236 = vmatprep.subr.bf16.mxu0 0
        %4237 = vmatpush1.bf16.xpose.msra.mxu0 0
        %4238 = vmatprep.subr.bf16.mxu0 0
        %4239 = vmatpush1.bf16.xpose.msra.mxu0 %v4222
        %4240 = vmatprep.subr.bf16.mxu0 0
        %4241 = vmatpush2.bf16.xpose.msra.mxu0 0
        %4242 = vmatprep.subr.bf16.mxu0 0
        %4243 = vmatpush2.bf16.xpose.msra.mxu0 0
        %4244 = vmatprep.subr.bf16.mxu0 0
        %4245 = vmatpush2.bf16.xpose.msra.mxu0 0
        %4246 = vmatprep.subr.bf16.mxu0 0
        %4247 = vmatpush2.bf16.xpose.msra.mxu0 0
        %4248 = vmatprep.subr.bf16.mxu0 0
        %4249 = vmatpush2.bf16.xpose.msra.mxu0 0
        %4250 = vmatprep.subr.bf16.mxu0 0
        %4251 = vmatpush2.bf16.xpose.msra.mxu0 0
        %4252 = vmatprep.subr.bf16.mxu0 0
        %4253 = vmatpush2.bf16.xpose.msra.mxu0 0
        %4254 = vmatprep.subr.bf16.mxu0 0
        %4255 = vmatpush2.bf16.xpose.msra.mxu0 0
        %4256 = vmatprep.mubr.bf16.mxu0 0
        %4257 = vmatmul.mubr.bf16.gmra.mxu0 %v4219
        %v4258 = vpop.f32.mrf.mxu0
        %v4259 = vadd.f32 %v1978, %v4258
        %v4260 = vpop.f32.mrf.mxu0
        %v4261 = vpop.f32.mrf.mxu0
        %v4262 = vpop.f32.mrf.mxu0
        %4263 = vdwg.mxu0
        %4265 = vrot.lane.b32.xlu0 %v1882, 112
        %v4266 = vpop.permute.xlu0 %4265
        %4268 = vrot.lane.b32.xlu0 %v1898, 112
        %v4269 = vpop.permute.xlu0 %4268
        %v4271 = vsel %vm2015, %v4266, 0
        %v4274 = vsel %vm2015, %v4269, 0
        %4276 = vmatprep.subr.bf16.mxu0 0
        %4277 = vmatpush1.bf16.xpose.msra.mxu0 0
        %4278 = vmatprep.subr.bf16.mxu0 0
        %4279 = vmatpush1.bf16.xpose.msra.mxu0 0
        %4280 = vmatprep.subr.bf16.mxu0 0
        %4281 = vmatpush1.bf16.xpose.msra.mxu0 0
        %4282 = vmatprep.subr.bf16.mxu0 0
        %4283 = vmatpush1.bf16.xpose.msra.mxu0 0
        %4284 = vmatprep.subr.bf16.mxu0 0
        %4285 = vmatpush1.bf16.xpose.msra.mxu0 0
        %4286 = vmatprep.subr.bf16.mxu0 0
        %4287 = vmatpush1.bf16.xpose.msra.mxu0 0
        %4288 = vmatprep.subr.bf16.mxu0 0
        %4289 = vmatpush1.bf16.xpose.msra.mxu0 0
        %4290 = vmatprep.subr.bf16.mxu0 0
        %4291 = vmatpush1.bf16.xpose.msra.mxu0 %v4274
        %4292 = vmatprep.subr.bf16.mxu0 0
        %4293 = vmatpush2.bf16.xpose.msra.mxu0 0
        %4294 = vmatprep.subr.bf16.mxu0 0
        %4295 = vmatpush2.bf16.xpose.msra.mxu0 0
        %4296 = vmatprep.subr.bf16.mxu0 0
        %4297 = vmatpush2.bf16.xpose.msra.mxu0 0
        %4298 = vmatprep.subr.bf16.mxu0 0
        %4299 = vmatpush2.bf16.xpose.msra.mxu0 0
        %4300 = vmatprep.subr.bf16.mxu0 0
        %4301 = vmatpush2.bf16.xpose.msra.mxu0 0
        %4302 = vmatprep.subr.bf16.mxu0 0
        %4303 = vmatpush2.bf16.xpose.msra.mxu0 0
        %4304 = vmatprep.subr.bf16.mxu0 0
        %4305 = vmatpush2.bf16.xpose.msra.mxu0 0
        %4306 = vmatprep.subr.bf16.mxu0 0
        %4307 = vmatpush2.bf16.xpose.msra.mxu0 0
        %4308 = vmatprep.mubr.bf16.mxu0 0
        %4309 = vmatmul.mubr.bf16.gmra.mxu0 %v4271
        %v4310 = vpop.f32.mrf.mxu0
        %v4311 = vadd.f32 %v1982, %v4310
        %v4312 = vpop.f32.mrf.mxu0
        %v4313 = vpop.f32.mrf.mxu0
        %v4314 = vpop.f32.mrf.mxu0
        %4315 = vdwg.mxu0
        %4317 = vrot.lane.b32.xlu0 %v1883, 112
        %v4318 = vpop.permute.xlu0 %4317
        %4320 = vrot.lane.b32.xlu0 %v1899, 112
        %v4321 = vpop.permute.xlu0 %4320
        %v4323 = vsel %vm2015, %v4318, 0
        %v4326 = vsel %vm2015, %v4321, 0
        %4328 = vmatprep.subr.bf16.mxu0 0
        %4329 = vmatpush1.bf16.xpose.msra.mxu0 0
        %4330 = vmatprep.subr.bf16.mxu0 0
        %4331 = vmatpush1.bf16.xpose.msra.mxu0 0
        %4332 = vmatprep.subr.bf16.mxu0 0
        %4333 = vmatpush1.bf16.xpose.msra.mxu0 0
        %4334 = vmatprep.subr.bf16.mxu0 0
        %4335 = vmatpush1.bf16.xpose.msra.mxu0 0
        %4336 = vmatprep.subr.bf16.mxu0 0
        %4337 = vmatpush1.bf16.xpose.msra.mxu0 0
        %4338 = vmatprep.subr.bf16.mxu0 0
        %4339 = vmatpush1.bf16.xpose.msra.mxu0 0
        %4340 = vmatprep.subr.bf16.mxu0 0
        %4341 = vmatpush1.bf16.xpose.msra.mxu0 0
        %4342 = vmatprep.subr.bf16.mxu0 0
        %4343 = vmatpush1.bf16.xpose.msra.mxu0 %v4326
        %4344 = vmatprep.subr.bf16.mxu0 0
        %4345 = vmatpush2.bf16.xpose.msra.mxu0 0
        %4346 = vmatprep.subr.bf16.mxu0 0
        %4347 = vmatpush2.bf16.xpose.msra.mxu0 0
        %4348 = vmatprep.subr.bf16.mxu0 0
        %4349 = vmatpush2.bf16.xpose.msra.mxu0 0
        %4350 = vmatprep.subr.bf16.mxu0 0
        %4351 = vmatpush2.bf16.xpose.msra.mxu0 0
        %4352 = vmatprep.subr.bf16.mxu0 0
        %4353 = vmatpush2.bf16.xpose.msra.mxu0 0
        %4354 = vmatprep.subr.bf16.mxu0 0
        %4355 = vmatpush2.bf16.xpose.msra.mxu0 0
        %4356 = vmatprep.subr.bf16.mxu0 0
        %4357 = vmatpush2.bf16.xpose.msra.mxu0 0
        %4358 = vmatprep.subr.bf16.mxu0 0
        %4359 = vmatpush2.bf16.xpose.msra.mxu0 0
        %4360 = vmatprep.mubr.bf16.mxu0 0
        %4361 = vmatmul.mubr.bf16.gmra.mxu0 %v4323
        %v4362 = vpop.f32.mrf.mxu0
        %v4363 = vadd.f32 %v1986, %v4362
        %v4364 = vpop.f32.mrf.mxu0
        %v4365 = vpop.f32.mrf.mxu0
        %v4366 = vpop.f32.mrf.mxu0
        %4367 = vdwg.mxu0
        %4369 = vrot.lane.b32.xlu0 %v1884, 112
        %v4370 = vpop.permute.xlu0 %4369
        %4372 = vrot.lane.b32.xlu0 %v1900, 112
        %v4373 = vpop.permute.xlu0 %4372
        %v4375 = vsel %vm2015, %v4370, 0
        %v4378 = vsel %vm2015, %v4373, 0
        %4380 = vmatprep.subr.bf16.mxu0 0
        %4381 = vmatpush1.bf16.xpose.msra.mxu0 0
        %4382 = vmatprep.subr.bf16.mxu0 0
        %4383 = vmatpush1.bf16.xpose.msra.mxu0 0
        %4384 = vmatprep.subr.bf16.mxu0 0
        %4385 = vmatpush1.bf16.xpose.msra.mxu0 0
        %4386 = vmatprep.subr.bf16.mxu0 0
        %4387 = vmatpush1.bf16.xpose.msra.mxu0 0
        %4388 = vmatprep.subr.bf16.mxu0 0
        %4389 = vmatpush1.bf16.xpose.msra.mxu0 0
        %4390 = vmatprep.subr.bf16.mxu0 0
        %4391 = vmatpush1.bf16.xpose.msra.mxu0 0
        %4392 = vmatprep.subr.bf16.mxu0 0
        %4393 = vmatpush1.bf16.xpose.msra.mxu0 0
        %4394 = vmatprep.subr.bf16.mxu0 0
        %4395 = vmatpush1.bf16.xpose.msra.mxu0 %v4378
        %4396 = vmatprep.subr.bf16.mxu0 0
        %4397 = vmatpush2.bf16.xpose.msra.mxu0 0
        %4398 = vmatprep.subr.bf16.mxu0 0
        %4399 = vmatpush2.bf16.xpose.msra.mxu0 0
        %4400 = vmatprep.subr.bf16.mxu0 0
        %4401 = vmatpush2.bf16.xpose.msra.mxu0 0
        %4402 = vmatprep.subr.bf16.mxu0 0
        %4403 = vmatpush2.bf16.xpose.msra.mxu0 0
        %4404 = vmatprep.subr.bf16.mxu0 0
        %4405 = vmatpush2.bf16.xpose.msra.mxu0 0
        %4406 = vmatprep.subr.bf16.mxu0 0
        %4407 = vmatpush2.bf16.xpose.msra.mxu0 0
        %4408 = vmatprep.subr.bf16.mxu0 0
        %4409 = vmatpush2.bf16.xpose.msra.mxu0 0
        %4410 = vmatprep.subr.bf16.mxu0 0
        %4411 = vmatpush2.bf16.xpose.msra.mxu0 0
        %4412 = vmatprep.mubr.bf16.mxu0 0
        %4413 = vmatmul.mubr.bf16.gmra.mxu0 %v4375
        %v4414 = vpop.f32.mrf.mxu0
        %v4415 = vadd.f32 %v1990, %v4414
        %v4416 = vpop.f32.mrf.mxu0
        %v4417 = vpop.f32.mrf.mxu0
        %v4418 = vpop.f32.mrf.mxu0
        %4419 = vdwg.mxu0
        %4421 = vrot.lane.b32.xlu0 %v1885, 112
        %v4422 = vpop.permute.xlu0 %4421
        %4424 = vrot.lane.b32.xlu0 %v1901, 112
        %v4425 = vpop.permute.xlu0 %4424
        %v4427 = vsel %vm2015, %v4422, 0
        %v4430 = vsel %vm2015, %v4425, 0
        %4432 = vmatprep.subr.bf16.mxu0 0
        %4433 = vmatpush1.bf16.xpose.msra.mxu0 0
        %4434 = vmatprep.subr.bf16.mxu0 0
        %4435 = vmatpush1.bf16.xpose.msra.mxu0 0
        %4436 = vmatprep.subr.bf16.mxu0 0
        %4437 = vmatpush1.bf16.xpose.msra.mxu0 0
        %4438 = vmatprep.subr.bf16.mxu0 0
        %4439 = vmatpush1.bf16.xpose.msra.mxu0 0
        %4440 = vmatprep.subr.bf16.mxu0 0
        %4441 = vmatpush1.bf16.xpose.msra.mxu0 0
        %4442 = vmatprep.subr.bf16.mxu0 0
        %4443 = vmatpush1.bf16.xpose.msra.mxu0 0
        %4444 = vmatprep.subr.bf16.mxu0 0
        %4445 = vmatpush1.bf16.xpose.msra.mxu0 0
        %4446 = vmatprep.subr.bf16.mxu0 0
        %4447 = vmatpush1.bf16.xpose.msra.mxu0 %v4430
        %4448 = vmatprep.subr.bf16.mxu0 0
        %4449 = vmatpush2.bf16.xpose.msra.mxu0 0
        %4450 = vmatprep.subr.bf16.mxu0 0
        %4451 = vmatpush2.bf16.xpose.msra.mxu0 0
        %4452 = vmatprep.subr.bf16.mxu0 0
        %4453 = vmatpush2.bf16.xpose.msra.mxu0 0
        %4454 = vmatprep.subr.bf16.mxu0 0
        %4455 = vmatpush2.bf16.xpose.msra.mxu0 0
        %4456 = vmatprep.subr.bf16.mxu0 0
        %4457 = vmatpush2.bf16.xpose.msra.mxu0 0
        %4458 = vmatprep.subr.bf16.mxu0 0
        %4459 = vmatpush2.bf16.xpose.msra.mxu0 0
        %4460 = vmatprep.subr.bf16.mxu0 0
        %4461 = vmatpush2.bf16.xpose.msra.mxu0 0
        %4462 = vmatprep.subr.bf16.mxu0 0
        %4463 = vmatpush2.bf16.xpose.msra.mxu0 0
        %4464 = vmatprep.mubr.bf16.mxu0 0
        %4465 = vmatmul.mubr.bf16.gmra.mxu0 %v4427
        %v4466 = vpop.f32.mrf.mxu0
        %v4467 = vadd.f32 %v1994, %v4466
        %v4468 = vpop.f32.mrf.mxu0
        %v4469 = vpop.f32.mrf.mxu0
        %v4470 = vpop.f32.mrf.mxu0
        %4471 = vdwg.mxu0
        %4473 = vrot.lane.b32.xlu0 %v1886, 112
        %v4474 = vpop.permute.xlu0 %4473
        %4476 = vrot.lane.b32.xlu0 %v1902, 112
        %v4477 = vpop.permute.xlu0 %4476
        %v4479 = vsel %vm2015, %v4474, 0
        %v4482 = vsel %vm2015, %v4477, 0
        %4484 = vmatprep.subr.bf16.mxu0 0
        %4485 = vmatpush1.bf16.xpose.msra.mxu0 0
        %4486 = vmatprep.subr.bf16.mxu0 0
        %4487 = vmatpush1.bf16.xpose.msra.mxu0 0
        %4488 = vmatprep.subr.bf16.mxu0 0
        %4489 = vmatpush1.bf16.xpose.msra.mxu0 0
        %4490 = vmatprep.subr.bf16.mxu0 0
        %4491 = vmatpush1.bf16.xpose.msra.mxu0 0
        %4492 = vmatprep.subr.bf16.mxu0 0
        %4493 = vmatpush1.bf16.xpose.msra.mxu0 0
        %4494 = vmatprep.subr.bf16.mxu0 0
        %4495 = vmatpush1.bf16.xpose.msra.mxu0 0
        %4496 = vmatprep.subr.bf16.mxu0 0
        %4497 = vmatpush1.bf16.xpose.msra.mxu0 0
        %4498 = vmatprep.subr.bf16.mxu0 0
        %4499 = vmatpush1.bf16.xpose.msra.mxu0 %v4482
        %4500 = vmatprep.subr.bf16.mxu0 0
        %4501 = vmatpush2.bf16.xpose.msra.mxu0 0
        %4502 = vmatprep.subr.bf16.mxu0 0
        %4503 = vmatpush2.bf16.xpose.msra.mxu0 0
        %4504 = vmatprep.subr.bf16.mxu0 0
        %4505 = vmatpush2.bf16.xpose.msra.mxu0 0
        %4506 = vmatprep.subr.bf16.mxu0 0
        %4507 = vmatpush2.bf16.xpose.msra.mxu0 0
        %4508 = vmatprep.subr.bf16.mxu0 0
        %4509 = vmatpush2.bf16.xpose.msra.mxu0 0
        %4510 = vmatprep.subr.bf16.mxu0 0
        %4511 = vmatpush2.bf16.xpose.msra.mxu0 0
        %4512 = vmatprep.subr.bf16.mxu0 0
        %4513 = vmatpush2.bf16.xpose.msra.mxu0 0
        %4514 = vmatprep.subr.bf16.mxu0 0
        %4515 = vmatpush2.bf16.xpose.msra.mxu0 0
        %4516 = vmatprep.mubr.bf16.mxu0 0
        %4517 = vmatmul.mubr.bf16.gmra.mxu0 %v4479
        %v4518 = vpop.f32.mrf.mxu0
        %v4519 = vadd.f32 %v1998, %v4518
        %v4520 = vpop.f32.mrf.mxu0
        %v4521 = vpop.f32.mrf.mxu0
        %v4522 = vpop.f32.mrf.mxu0
        %4523 = vdwg.mxu0
        %v4524 = vsel %vm2752, %v3739, -inf
        %4525 = vmax.xlane.f32.xlu0 %v4524
        %v4526 = vpop.xlane.xlu0 %4525
        %v4527 = vsel %vm2752, %v3791, -inf
        %4528 = vmax.xlane.f32.xlu0 %v4527
        %v4529 = vpop.xlane.xlu0 %4528
        %v4530 = vsel %vm2752, %v3843, -inf
        %4531 = vmax.xlane.f32.xlu0 %v4530
        %v4532 = vpop.xlane.xlu0 %4531
        %v4533 = vsel %vm2752, %v3895, -inf
        %4534 = vmax.xlane.f32.xlu0 %v4533
        %v4535 = vpop.xlane.xlu0 %4534
        %v4536 = vsel %vm2752, %v3947, -inf
        %4537 = vmax.xlane.f32.xlu0 %v4536
        %v4538 = vpop.xlane.xlu0 %4537
        %v4539 = vsel %vm2752, %v3999, -inf
        %4540 = vmax.xlane.f32.xlu0 %v4539
        %v4541 = vpop.xlane.xlu0 %4540
        %v4542 = vsel %vm2752, %v4051, -inf
        %4543 = vmax.xlane.f32.xlu0 %v4542
        %v4544 = vpop.xlane.xlu0 %4543
        %v4545 = vsel %vm2752, %v4103, -inf
        %4546 = vmax.xlane.f32.xlu0 %v4545
        %v4547 = vpop.xlane.xlu0 %4546
        %v4548 = vsel %vm2752, %v4155, -inf
        %4549 = vmax.xlane.f32.xlu0 %v4548
        %v4550 = vpop.xlane.xlu0 %4549
        %v4551 = vsel %vm2752, %v4207, -inf
        %4552 = vmax.xlane.f32.xlu0 %v4551
        %v4553 = vpop.xlane.xlu0 %4552
        %v4554 = vsel %vm2752, %v4259, -inf
        %4555 = vmax.xlane.f32.xlu0 %v4554
        %v4556 = vpop.xlane.xlu0 %4555
        %v4557 = vsel %vm2752, %v4311, -inf
        %4558 = vmax.xlane.f32.xlu0 %v4557
        %v4559 = vpop.xlane.xlu0 %4558
        %v4560 = vsel %vm2752, %v4363, -inf
        %4561 = vmax.xlane.f32.xlu0 %v4560
        %v4562 = vpop.xlane.xlu0 %4561
        %v4563 = vsel %vm2752, %v4415, -inf
        %4564 = vmax.xlane.f32.xlu0 %v4563
        %v4565 = vpop.xlane.xlu0 %4564
        %v4566 = vsel %vm2752, %v4467, -inf
        %4567 = vmax.xlane.f32.xlu0 %v4566
        %v4568 = vpop.xlane.xlu0 %4567
        %v4569 = vsel %vm2752, %v4519, -inf
        %4570 = vmax.xlane.f32.xlu0 %v4569
        %v4571 = vpop.xlane.xlu0 %4570
        %v4572 = vsub.f32 %v3739, %v4526
        %v4573 = vsub.f32 %v3791, %v4529
        %v4574 = vsub.f32 %v3843, %v4532
        %v4575 = vsub.f32 %v3895, %v4535
        %v4576 = vsub.f32 %v3947, %v4538
        %v4577 = vsub.f32 %v3999, %v4541
        %v4578 = vsub.f32 %v4051, %v4544
        %v4579 = vsub.f32 %v4103, %v4547
        %v4580 = vsub.f32 %v4155, %v4550
        %v4581 = vsub.f32 %v4207, %v4553
        %v4582 = vsub.f32 %v4259, %v4556
        %v4583 = vsub.f32 %v4311, %v4559
        %v4584 = vsub.f32 %v4363, %v4562
        %v4585 = vsub.f32 %v4415, %v4565
        %v4586 = vsub.f32 %v4467, %v4568
        %v4587 = vsub.f32 %v4519, %v4571
        %v4588 = vmul.f32 %v4572, 1.442695
        %v4589 = vpow.pop %v4588
        %v4590 = vmul.f32 %v4573, 1.442695
        %v4591 = vpow.pop %v4590
        %v4592 = vmul.f32 %v4574, 1.442695
        %v4593 = vpow.pop %v4592
        %v4594 = vmul.f32 %v4575, 1.442695
        %v4595 = vpow.pop %v4594
        %v4596 = vmul.f32 %v4576, 1.442695
        %v4597 = vpow.pop %v4596
        %v4598 = vmul.f32 %v4577, 1.442695
        %v4599 = vpow.pop %v4598
        %v4600 = vmul.f32 %v4578, 1.442695
        %v4601 = vpow.pop %v4600
        %v4602 = vmul.f32 %v4579, 1.442695
        %v4603 = vpow.pop %v4602
        %v4604 = vmul.f32 %v4580, 1.442695
        %v4605 = vpow.pop %v4604
        %v4606 = vmul.f32 %v4581, 1.442695
        %v4607 = vpow.pop %v4606
        %v4608 = vmul.f32 %v4582, 1.442695
        %v4609 = vpow.pop %v4608
        %v4610 = vmul.f32 %v4583, 1.442695
        %v4611 = vpow.pop %v4610
        %v4612 = vmul.f32 %v4584, 1.442695
        %v4613 = vpow.pop %v4612
        %v4614 = vmul.f32 %v4585, 1.442695
        %v4615 = vpow.pop %v4614
        %v4616 = vmul.f32 %v4586, 1.442695
        %v4617 = vpow.pop %v4616
        %v4618 = vmul.f32 %v4587, 1.442695
        %v4619 = vpow.pop %v4618
        %v4620 = vsel %vm2752, %v4589, 0.0
        %4621 = vadd.xlane.f32.xlu0 %v4620
        %v4622 = vpop.xlane.xlu0 %4621
        %v4623 = vsel %vm2752, %v4591, 0.0
        %4624 = vadd.xlane.f32.xlu0 %v4623
        %v4625 = vpop.xlane.xlu0 %4624
        %v4626 = vsel %vm2752, %v4593, 0.0
        %4627 = vadd.xlane.f32.xlu0 %v4626
        %v4628 = vpop.xlane.xlu0 %4627
        %v4629 = vsel %vm2752, %v4595, 0.0
        %4630 = vadd.xlane.f32.xlu0 %v4629
        %v4631 = vpop.xlane.xlu0 %4630
        %v4632 = vsel %vm2752, %v4597, 0.0
        %4633 = vadd.xlane.f32.xlu0 %v4632
        %v4634 = vpop.xlane.xlu0 %4633
        %v4635 = vsel %vm2752, %v4599, 0.0
        %4636 = vadd.xlane.f32.xlu0 %v4635
        %v4637 = vpop.xlane.xlu0 %4636
        %v4638 = vsel %vm2752, %v4601, 0.0
        %4639 = vadd.xlane.f32.xlu0 %v4638
        %v4640 = vpop.xlane.xlu0 %4639
        %v4641 = vsel %vm2752, %v4603, 0.0
        %4642 = vadd.xlane.f32.xlu0 %v4641
        %v4643 = vpop.xlane.xlu0 %4642
        %v4644 = vsel %vm2752, %v4605, 0.0
        %4645 = vadd.xlane.f32.xlu0 %v4644
        %v4646 = vpop.xlane.xlu0 %4645
        %v4647 = vsel %vm2752, %v4607, 0.0
        %4648 = vadd.xlane.f32.xlu0 %v4647
        %v4649 = vpop.xlane.xlu0 %4648
        %v4650 = vsel %vm2752, %v4609, 0.0
        %4651 = vadd.xlane.f32.xlu0 %v4650
        %v4652 = vpop.xlane.xlu0 %4651
        %v4653 = vsel %vm2752, %v4611, 0.0
        %4654 = vadd.xlane.f32.xlu0 %v4653
        %v4655 = vpop.xlane.xlu0 %4654
        %v4656 = vsel %vm2752, %v4613, 0.0
        %4657 = vadd.xlane.f32.xlu0 %v4656
        %v4658 = vpop.xlane.xlu0 %4657
        %v4659 = vsel %vm2752, %v4615, 0.0
        %4660 = vadd.xlane.f32.xlu0 %v4659
        %v4661 = vpop.xlane.xlu0 %4660
        %v4662 = vsel %vm2752, %v4617, 0.0
        %4663 = vadd.xlane.f32.xlu0 %v4662
        %v4664 = vpop.xlane.xlu0 %4663
        %v4665 = vsel %vm2752, %v4619, 0.0
        %4666 = vadd.xlane.f32.xlu0 %v4665
        %v4667 = vpop.xlane.xlu0 %4666
        %v4668 = vrcp.pop %v4622
        %v4669 = vrcp.pop %v4625
        %v4670 = vrcp.pop %v4628
        %v4671 = vrcp.pop %v4631
        %v4672 = vrcp.pop %v4634
        %v4673 = vrcp.pop %v4637
        %v4674 = vrcp.pop %v4640
        %v4675 = vrcp.pop %v4643
        %v4676 = vrcp.pop %v4646
        %v4677 = vrcp.pop %v4649
        %v4678 = vrcp.pop %v4652
        %v4679 = vrcp.pop %v4655
        %v4680 = vrcp.pop %v4658
        %v4681 = vrcp.pop %v4661
        %v4682 = vrcp.pop %v4664
        %v4683 = vrcp.pop %v4667
        %v4684 = vmul.f32 %v4589, %v4668
        %v4685 = vmul.f32 %v4591, %v4669
        %v4686 = vmul.f32 %v4593, %v4670
        %v4687 = vmul.f32 %v4595, %v4671
        %v4688 = vmul.f32 %v4597, %v4672
        %v4689 = vmul.f32 %v4599, %v4673
        %v4690 = vmul.f32 %v4601, %v4674
        %v4691 = vmul.f32 %v4603, %v4675
        %v4692 = vmul.f32 %v4605, %v4676
        %v4693 = vmul.f32 %v4607, %v4677
        %v4694 = vmul.f32 %v4609, %v4678
        %v4695 = vmul.f32 %v4611, %v4679
        %v4696 = vmul.f32 %v4613, %v4680
        %v4697 = vmul.f32 %v4615, %v4681
        %v4698 = vmul.f32 %v4617, %v4682
        %v4699 = vmul.f32 %v4619, %v4683
        %v4700 = vpack.c.bf16 %v4684, %v4684
        %v4701 = vpack.c.bf16 %v4685, %v4685
        %v4702 = vpack.c.bf16 %v4686, %v4686
        %v4703 = vpack.c.bf16 %v4687, %v4687
        %v4704 = vpack.c.bf16 %v4688, %v4688
        %v4705 = vpack.c.bf16 %v4689, %v4689
        %v4706 = vpack.c.bf16 %v4690, %v4690
        %v4707 = vpack.c.bf16 %v4691, %v4691
        %v4708 = vpack.c.bf16 %v4692, %v4692
        %v4709 = vpack.c.bf16 %v4693, %v4693
        %v4710 = vpack.c.bf16 %v4694, %v4694
        %v4711 = vpack.c.bf16 %v4695, %v4695
        %v4712 = vpack.c.bf16 %v4696, %v4696
        %v4713 = vpack.c.bf16 %v4697, %v4697
        %v4714 = vpack.c.bf16 %v4698, %v4698
        %v4715 = vpack.c.bf16 %v4699, %v4699
        %4717 = vrot.lane.b32.xlu0 %v1903, 112
        %v4718 = vpop.permute.xlu0 %4717
        %v4720 = vsel %vm2752, %v4700, 0
        %v4723 = vsel %vm2948, %v4718, 0
        %4725 = vmatprep.subr.bf16.mxu0 0
        %4726 = vmatpush1.bf16.msra.mxu0 0
        %4727 = vmatprep.subr.bf16.mxu0 0
        %4728 = vmatpush1.bf16.msra.mxu0 0
        %4729 = vmatprep.subr.bf16.mxu0 0
        %4730 = vmatpush1.bf16.msra.mxu0 0
        %4731 = vmatprep.subr.bf16.mxu0 0
        %4732 = vmatpush1.bf16.msra.mxu0 0
        %4733 = vmatprep.subr.bf16.mxu0 0
        %4734 = vmatpush1.bf16.msra.mxu0 0
        %4735 = vmatprep.subr.bf16.mxu0 0
        %4736 = vmatpush1.bf16.msra.mxu0 0
        %4737 = vmatprep.subr.bf16.mxu0 0
        %4738 = vmatpush1.bf16.msra.mxu0 0
        %4739 = vmatprep.subr.bf16.mxu0 0
        %4740 = vmatpush1.bf16.msra.mxu0 %v4723
        %4741 = vmatprep.subr.bf16.mxu0 0
        %4742 = vmatpush2.bf16.msra.mxu0 0
        %4743 = vmatprep.subr.bf16.mxu0 0
        %4744 = vmatpush2.bf16.msra.mxu0 0
        %4745 = vmatprep.subr.bf16.mxu0 0
        %4746 = vmatpush2.bf16.msra.mxu0 0
        %4747 = vmatprep.subr.bf16.mxu0 0
        %4748 = vmatpush2.bf16.msra.mxu0 0
        %4749 = vmatprep.subr.bf16.mxu0 0
        %4750 = vmatpush2.bf16.msra.mxu0 0
        %4751 = vmatprep.subr.bf16.mxu0 0
        %4752 = vmatpush2.bf16.msra.mxu0 0
        %4753 = vmatprep.subr.bf16.mxu0 0
        %4754 = vmatpush2.bf16.msra.mxu0 0
        %4755 = vmatprep.subr.bf16.mxu0 0
        %4756 = vmatpush2.bf16.msra.mxu0 0
        %4757 = vmatprep.mubr.bf16.mxu0 0
        %4758 = vmatmul.mubr.bf16.gmra.mxu0 %v4720
        %v4759 = vpop.f32.mrf.mxu0
        %v4760 = vadd.f32 0.0, %v4759
        %v4761 = vpop.f32.mrf.mxu0
        %v4762 = vpop.f32.mrf.mxu0
        %v4763 = vpop.f32.mrf.mxu0
        %4764 = vdwg.mxu0
        %4766 = vrot.lane.b32.xlu0 %v1904, 112
        %v4767 = vpop.permute.xlu0 %4766
        %v4769 = vsel %vm2752, %v4701, 0
        %v4772 = vsel %vm2948, %v4767, 0
        %4774 = vmatprep.subr.bf16.mxu0 0
        %4775 = vmatpush1.bf16.msra.mxu0 0
        %4776 = vmatprep.subr.bf16.mxu0 0
        %4777 = vmatpush1.bf16.msra.mxu0 0
        %4778 = vmatprep.subr.bf16.mxu0 0
        %4779 = vmatpush1.bf16.msra.mxu0 0
        %4780 = vmatprep.subr.bf16.mxu0 0
        %4781 = vmatpush1.bf16.msra.mxu0 0
        %4782 = vmatprep.subr.bf16.mxu0 0
        %4783 = vmatpush1.bf16.msra.mxu0 0
        %4784 = vmatprep.subr.bf16.mxu0 0
        %4785 = vmatpush1.bf16.msra.mxu0 0
        %4786 = vmatprep.subr.bf16.mxu0 0
        %4787 = vmatpush1.bf16.msra.mxu0 0
        %4788 = vmatprep.subr.bf16.mxu0 0
        %4789 = vmatpush1.bf16.msra.mxu0 %v4772
        %4790 = vmatprep.subr.bf16.mxu0 0
        %4791 = vmatpush2.bf16.msra.mxu0 0
        %4792 = vmatprep.subr.bf16.mxu0 0
        %4793 = vmatpush2.bf16.msra.mxu0 0
        %4794 = vmatprep.subr.bf16.mxu0 0
        %4795 = vmatpush2.bf16.msra.mxu0 0
        %4796 = vmatprep.subr.bf16.mxu0 0
        %4797 = vmatpush2.bf16.msra.mxu0 0
        %4798 = vmatprep.subr.bf16.mxu0 0
        %4799 = vmatpush2.bf16.msra.mxu0 0
        %4800 = vmatprep.subr.bf16.mxu0 0
        %4801 = vmatpush2.bf16.msra.mxu0 0
        %4802 = vmatprep.subr.bf16.mxu0 0
        %4803 = vmatpush2.bf16.msra.mxu0 0
        %4804 = vmatprep.subr.bf16.mxu0 0
        %4805 = vmatpush2.bf16.msra.mxu0 0
        %4806 = vmatprep.mubr.bf16.mxu0 0
        %4807 = vmatmul.mubr.bf16.gmra.mxu0 %v4769
        %v4808 = vpop.f32.mrf.mxu0
        %v4809 = vadd.f32 0.0, %v4808
        %v4810 = vpop.f32.mrf.mxu0
        %v4811 = vpop.f32.mrf.mxu0
        %v4812 = vpop.f32.mrf.mxu0
        %4813 = vdwg.mxu0
        %4815 = vrot.lane.b32.xlu0 %v1905, 112
        %v4816 = vpop.permute.xlu0 %4815
        %v4818 = vsel %vm2752, %v4702, 0
        %v4821 = vsel %vm2948, %v4816, 0
        %4823 = vmatprep.subr.bf16.mxu0 0
        %4824 = vmatpush1.bf16.msra.mxu0 0
        %4825 = vmatprep.subr.bf16.mxu0 0
        %4826 = vmatpush1.bf16.msra.mxu0 0
        %4827 = vmatprep.subr.bf16.mxu0 0
        %4828 = vmatpush1.bf16.msra.mxu0 0
        %4829 = vmatprep.subr.bf16.mxu0 0
        %4830 = vmatpush1.bf16.msra.mxu0 0
        %4831 = vmatprep.subr.bf16.mxu0 0
        %4832 = vmatpush1.bf16.msra.mxu0 0
        %4833 = vmatprep.subr.bf16.mxu0 0
        %4834 = vmatpush1.bf16.msra.mxu0 0
        %4835 = vmatprep.subr.bf16.mxu0 0
        %4836 = vmatpush1.bf16.msra.mxu0 0
        %4837 = vmatprep.subr.bf16.mxu0 0
        %4838 = vmatpush1.bf16.msra.mxu0 %v4821
        %4839 = vmatprep.subr.bf16.mxu0 0
        %4840 = vmatpush2.bf16.msra.mxu0 0
        %4841 = vmatprep.subr.bf16.mxu0 0
        %4842 = vmatpush2.bf16.msra.mxu0 0
        %4843 = vmatprep.subr.bf16.mxu0 0
        %4844 = vmatpush2.bf16.msra.mxu0 0
        %4845 = vmatprep.subr.bf16.mxu0 0
        %4846 = vmatpush2.bf16.msra.mxu0 0
        %4847 = vmatprep.subr.bf16.mxu0 0
        %4848 = vmatpush2.bf16.msra.mxu0 0
        %4849 = vmatprep.subr.bf16.mxu0 0
        %4850 = vmatpush2.bf16.msra.mxu0 0
        %4851 = vmatprep.subr.bf16.mxu0 0
        %4852 = vmatpush2.bf16.msra.mxu0 0
        %4853 = vmatprep.subr.bf16.mxu0 0
        %4854 = vmatpush2.bf16.msra.mxu0 0
        %4855 = vmatprep.mubr.bf16.mxu0 0
        %4856 = vmatmul.mubr.bf16.gmra.mxu0 %v4818
        %v4857 = vpop.f32.mrf.mxu0
        %v4858 = vadd.f32 0.0, %v4857
        %v4859 = vpop.f32.mrf.mxu0
        %v4860 = vpop.f32.mrf.mxu0
        %v4861 = vpop.f32.mrf.mxu0
        %4862 = vdwg.mxu0
        %4864 = vrot.lane.b32.xlu0 %v1906, 112
        %v4865 = vpop.permute.xlu0 %4864
        %v4867 = vsel %vm2752, %v4703, 0
        %v4870 = vsel %vm2948, %v4865, 0
        %4872 = vmatprep.subr.bf16.mxu0 0
        %4873 = vmatpush1.bf16.msra.mxu0 0
        %4874 = vmatprep.subr.bf16.mxu0 0
        %4875 = vmatpush1.bf16.msra.mxu0 0
        %4876 = vmatprep.subr.bf16.mxu0 0
        %4877 = vmatpush1.bf16.msra.mxu0 0
        %4878 = vmatprep.subr.bf16.mxu0 0
        %4879 = vmatpush1.bf16.msra.mxu0 0
        %4880 = vmatprep.subr.bf16.mxu0 0
        %4881 = vmatpush1.bf16.msra.mxu0 0
        %4882 = vmatprep.subr.bf16.mxu0 0
        %4883 = vmatpush1.bf16.msra.mxu0 0
        %4884 = vmatprep.subr.bf16.mxu0 0
        %4885 = vmatpush1.bf16.msra.mxu0 0
        %4886 = vmatprep.subr.bf16.mxu0 0
        %4887 = vmatpush1.bf16.msra.mxu0 %v4870
        %4888 = vmatprep.subr.bf16.mxu0 0
        %4889 = vmatpush2.bf16.msra.mxu0 0
        %4890 = vmatprep.subr.bf16.mxu0 0
        %4891 = vmatpush2.bf16.msra.mxu0 0
        %4892 = vmatprep.subr.bf16.mxu0 0
        %4893 = vmatpush2.bf16.msra.mxu0 0
        %4894 = vmatprep.subr.bf16.mxu0 0
        %4895 = vmatpush2.bf16.msra.mxu0 0
        %4896 = vmatprep.subr.bf16.mxu0 0
        %4897 = vmatpush2.bf16.msra.mxu0 0
        %4898 = vmatprep.subr.bf16.mxu0 0
        %4899 = vmatpush2.bf16.msra.mxu0 0
        %4900 = vmatprep.subr.bf16.mxu0 0
        %4901 = vmatpush2.bf16.msra.mxu0 0
        %4902 = vmatprep.subr.bf16.mxu0 0
        %4903 = vmatpush2.bf16.msra.mxu0 0
        %4904 = vmatprep.mubr.bf16.mxu0 0
        %4905 = vmatmul.mubr.bf16.gmra.mxu0 %v4867
        %v4906 = vpop.f32.mrf.mxu0
        %v4907 = vadd.f32 0.0, %v4906
        %v4908 = vpop.f32.mrf.mxu0
        %v4909 = vpop.f32.mrf.mxu0
        %v4910 = vpop.f32.mrf.mxu0
        %4911 = vdwg.mxu0
        %4913 = vrot.lane.b32.xlu0 %v1907, 112
        %v4914 = vpop.permute.xlu0 %4913
        %v4916 = vsel %vm2752, %v4704, 0
        %v4919 = vsel %vm2948, %v4914, 0
        %4921 = vmatprep.subr.bf16.mxu0 0
        %4922 = vmatpush1.bf16.msra.mxu0 0
        %4923 = vmatprep.subr.bf16.mxu0 0
        %4924 = vmatpush1.bf16.msra.mxu0 0
        %4925 = vmatprep.subr.bf16.mxu0 0
        %4926 = vmatpush1.bf16.msra.mxu0 0
        %4927 = vmatprep.subr.bf16.mxu0 0
        %4928 = vmatpush1.bf16.msra.mxu0 0
        %4929 = vmatprep.subr.bf16.mxu0 0
        %4930 = vmatpush1.bf16.msra.mxu0 0
        %4931 = vmatprep.subr.bf16.mxu0 0
        %4932 = vmatpush1.bf16.msra.mxu0 0
        %4933 = vmatprep.subr.bf16.mxu0 0
        %4934 = vmatpush1.bf16.msra.mxu0 0
        %4935 = vmatprep.subr.bf16.mxu0 0
        %4936 = vmatpush1.bf16.msra.mxu0 %v4919
        %4937 = vmatprep.subr.bf16.mxu0 0
        %4938 = vmatpush2.bf16.msra.mxu0 0
        %4939 = vmatprep.subr.bf16.mxu0 0
        %4940 = vmatpush2.bf16.msra.mxu0 0
        %4941 = vmatprep.subr.bf16.mxu0 0
        %4942 = vmatpush2.bf16.msra.mxu0 0
        %4943 = vmatprep.subr.bf16.mxu0 0
        %4944 = vmatpush2.bf16.msra.mxu0 0
        %4945 = vmatprep.subr.bf16.mxu0 0
        %4946 = vmatpush2.bf16.msra.mxu0 0
        %4947 = vmatprep.subr.bf16.mxu0 0
        %4948 = vmatpush2.bf16.msra.mxu0 0
        %4949 = vmatprep.subr.bf16.mxu0 0
        %4950 = vmatpush2.bf16.msra.mxu0 0
        %4951 = vmatprep.subr.bf16.mxu0 0
        %4952 = vmatpush2.bf16.msra.mxu0 0
        %4953 = vmatprep.mubr.bf16.mxu0 0
        %4954 = vmatmul.mubr.bf16.gmra.mxu0 %v4916
        %v4955 = vpop.f32.mrf.mxu0
        %v4956 = vadd.f32 0.0, %v4955
        %v4957 = vpop.f32.mrf.mxu0
        %v4958 = vpop.f32.mrf.mxu0
        %v4959 = vpop.f32.mrf.mxu0
        %4960 = vdwg.mxu0
        %4962 = vrot.lane.b32.xlu0 %v1908, 112
        %v4963 = vpop.permute.xlu0 %4962
        %v4965 = vsel %vm2752, %v4705, 0
        %v4968 = vsel %vm2948, %v4963, 0
        %4970 = vmatprep.subr.bf16.mxu0 0
        %4971 = vmatpush1.bf16.msra.mxu0 0
        %4972 = vmatprep.subr.bf16.mxu0 0
        %4973 = vmatpush1.bf16.msra.mxu0 0
        %4974 = vmatprep.subr.bf16.mxu0 0
        %4975 = vmatpush1.bf16.msra.mxu0 0
        %4976 = vmatprep.subr.bf16.mxu0 0
        %4977 = vmatpush1.bf16.msra.mxu0 0
        %4978 = vmatprep.subr.bf16.mxu0 0
        %4979 = vmatpush1.bf16.msra.mxu0 0
        %4980 = vmatprep.subr.bf16.mxu0 0
        %4981 = vmatpush1.bf16.msra.mxu0 0
        %4982 = vmatprep.subr.bf16.mxu0 0
        %4983 = vmatpush1.bf16.msra.mxu0 0
        %4984 = vmatprep.subr.bf16.mxu0 0
        %4985 = vmatpush1.bf16.msra.mxu0 %v4968
        %4986 = vmatprep.subr.bf16.mxu0 0
        %4987 = vmatpush2.bf16.msra.mxu0 0
        %4988 = vmatprep.subr.bf16.mxu0 0
        %4989 = vmatpush2.bf16.msra.mxu0 0
        %4990 = vmatprep.subr.bf16.mxu0 0
        %4991 = vmatpush2.bf16.msra.mxu0 0
        %4992 = vmatprep.subr.bf16.mxu0 0
        %4993 = vmatpush2.bf16.msra.mxu0 0
        %4994 = vmatprep.subr.bf16.mxu0 0
        %4995 = vmatpush2.bf16.msra.mxu0 0
        %4996 = vmatprep.subr.bf16.mxu0 0
        %4997 = vmatpush2.bf16.msra.mxu0 0
        %4998 = vmatprep.subr.bf16.mxu0 0
        %4999 = vmatpush2.bf16.msra.mxu0 0
        %5000 = vmatprep.subr.bf16.mxu0 0
        %5001 = vmatpush2.bf16.msra.mxu0 0
        %5002 = vmatprep.mubr.bf16.mxu0 0
        %5003 = vmatmul.mubr.bf16.gmra.mxu0 %v4965
        %v5004 = vpop.f32.mrf.mxu0
        %v5005 = vadd.f32 0.0, %v5004
        %v5006 = vpop.f32.mrf.mxu0
        %v5007 = vpop.f32.mrf.mxu0
        %v5008 = vpop.f32.mrf.mxu0
        %5009 = vdwg.mxu0
        %5011 = vrot.lane.b32.xlu0 %v1909, 112
        %v5012 = vpop.permute.xlu0 %5011
        %v5014 = vsel %vm2752, %v4706, 0
        %v5017 = vsel %vm2948, %v5012, 0
        %5019 = vmatprep.subr.bf16.mxu0 0
        %5020 = vmatpush1.bf16.msra.mxu0 0
        %5021 = vmatprep.subr.bf16.mxu0 0
        %5022 = vmatpush1.bf16.msra.mxu0 0
        %5023 = vmatprep.subr.bf16.mxu0 0
        %5024 = vmatpush1.bf16.msra.mxu0 0
        %5025 = vmatprep.subr.bf16.mxu0 0
        %5026 = vmatpush1.bf16.msra.mxu0 0
        %5027 = vmatprep.subr.bf16.mxu0 0
        %5028 = vmatpush1.bf16.msra.mxu0 0
        %5029 = vmatprep.subr.bf16.mxu0 0
        %5030 = vmatpush1.bf16.msra.mxu0 0
        %5031 = vmatprep.subr.bf16.mxu0 0
        %5032 = vmatpush1.bf16.msra.mxu0 0
        %5033 = vmatprep.subr.bf16.mxu0 0
        %5034 = vmatpush1.bf16.msra.mxu0 %v5017
        %5035 = vmatprep.subr.bf16.mxu0 0
        %5036 = vmatpush2.bf16.msra.mxu0 0
        %5037 = vmatprep.subr.bf16.mxu0 0
        %5038 = vmatpush2.bf16.msra.mxu0 0
        %5039 = vmatprep.subr.bf16.mxu0 0
        %5040 = vmatpush2.bf16.msra.mxu0 0
        %5041 = vmatprep.subr.bf16.mxu0 0
        %5042 = vmatpush2.bf16.msra.mxu0 0
        %5043 = vmatprep.subr.bf16.mxu0 0
        %5044 = vmatpush2.bf16.msra.mxu0 0
        %5045 = vmatprep.subr.bf16.mxu0 0
        %5046 = vmatpush2.bf16.msra.mxu0 0
        %5047 = vmatprep.subr.bf16.mxu0 0
        %5048 = vmatpush2.bf16.msra.mxu0 0
        %5049 = vmatprep.subr.bf16.mxu0 0
        %5050 = vmatpush2.bf16.msra.mxu0 0
        %5051 = vmatprep.mubr.bf16.mxu0 0
        %5052 = vmatmul.mubr.bf16.gmra.mxu0 %v5014
        %v5053 = vpop.f32.mrf.mxu0
        %v5054 = vadd.f32 0.0, %v5053
        %v5055 = vpop.f32.mrf.mxu0
        %v5056 = vpop.f32.mrf.mxu0
        %v5057 = vpop.f32.mrf.mxu0
        %5058 = vdwg.mxu0
        %5060 = vrot.lane.b32.xlu0 %v1910, 112
        %v5061 = vpop.permute.xlu0 %5060
        %v5063 = vsel %vm2752, %v4707, 0
        %v5066 = vsel %vm2948, %v5061, 0
        %5068 = vmatprep.subr.bf16.mxu0 0
        %5069 = vmatpush1.bf16.msra.mxu0 0
        %5070 = vmatprep.subr.bf16.mxu0 0
        %5071 = vmatpush1.bf16.msra.mxu0 0
        %5072 = vmatprep.subr.bf16.mxu0 0
        %5073 = vmatpush1.bf16.msra.mxu0 0
        %5074 = vmatprep.subr.bf16.mxu0 0
        %5075 = vmatpush1.bf16.msra.mxu0 0
        %5076 = vmatprep.subr.bf16.mxu0 0
        %5077 = vmatpush1.bf16.msra.mxu0 0
        %5078 = vmatprep.subr.bf16.mxu0 0
        %5079 = vmatpush1.bf16.msra.mxu0 0
        %5080 = vmatprep.subr.bf16.mxu0 0
        %5081 = vmatpush1.bf16.msra.mxu0 0
        %5082 = vmatprep.subr.bf16.mxu0 0
        %5083 = vmatpush1.bf16.msra.mxu0 %v5066
        %5084 = vmatprep.subr.bf16.mxu0 0
        %5085 = vmatpush2.bf16.msra.mxu0 0
        %5086 = vmatprep.subr.bf16.mxu0 0
        %5087 = vmatpush2.bf16.msra.mxu0 0
        %5088 = vmatprep.subr.bf16.mxu0 0
        %5089 = vmatpush2.bf16.msra.mxu0 0
        %5090 = vmatprep.subr.bf16.mxu0 0
        %5091 = vmatpush2.bf16.msra.mxu0 0
        %5092 = vmatprep.subr.bf16.mxu0 0
        %5093 = vmatpush2.bf16.msra.mxu0 0
        %5094 = vmatprep.subr.bf16.mxu0 0
        %5095 = vmatpush2.bf16.msra.mxu0 0
        %5096 = vmatprep.subr.bf16.mxu0 0
        %5097 = vmatpush2.bf16.msra.mxu0 0
        %5098 = vmatprep.subr.bf16.mxu0 0
        %5099 = vmatpush2.bf16.msra.mxu0 0
        %5100 = vmatprep.mubr.bf16.mxu0 0
        %5101 = vmatmul.mubr.bf16.gmra.mxu0 %v5063
        %v5102 = vpop.f32.mrf.mxu0
        %v5103 = vadd.f32 0.0, %v5102
        %v5104 = vpop.f32.mrf.mxu0
        %v5105 = vpop.f32.mrf.mxu0
        %v5106 = vpop.f32.mrf.mxu0
        %5107 = vdwg.mxu0
        %5109 = vrot.lane.b32.xlu0 %v1911, 112
        %v5110 = vpop.permute.xlu0 %5109
        %v5112 = vsel %vm2752, %v4708, 0
        %v5115 = vsel %vm2948, %v5110, 0
        %5117 = vmatprep.subr.bf16.mxu0 0
        %5118 = vmatpush1.bf16.msra.mxu0 0
        %5119 = vmatprep.subr.bf16.mxu0 0
        %5120 = vmatpush1.bf16.msra.mxu0 0
        %5121 = vmatprep.subr.bf16.mxu0 0
        %5122 = vmatpush1.bf16.msra.mxu0 0
        %5123 = vmatprep.subr.bf16.mxu0 0
        %5124 = vmatpush1.bf16.msra.mxu0 0
        %5125 = vmatprep.subr.bf16.mxu0 0
        %5126 = vmatpush1.bf16.msra.mxu0 0
        %5127 = vmatprep.subr.bf16.mxu0 0
        %5128 = vmatpush1.bf16.msra.mxu0 0
        %5129 = vmatprep.subr.bf16.mxu0 0
        %5130 = vmatpush1.bf16.msra.mxu0 0
        %5131 = vmatprep.subr.bf16.mxu0 0
        %5132 = vmatpush1.bf16.msra.mxu0 %v5115
        %5133 = vmatprep.subr.bf16.mxu0 0
        %5134 = vmatpush2.bf16.msra.mxu0 0
        %5135 = vmatprep.subr.bf16.mxu0 0
        %5136 = vmatpush2.bf16.msra.mxu0 0
        %5137 = vmatprep.subr.bf16.mxu0 0
        %5138 = vmatpush2.bf16.msra.mxu0 0
        %5139 = vmatprep.subr.bf16.mxu0 0
        %5140 = vmatpush2.bf16.msra.mxu0 0
        %5141 = vmatprep.subr.bf16.mxu0 0
        %5142 = vmatpush2.bf16.msra.mxu0 0
        %5143 = vmatprep.subr.bf16.mxu0 0
        %5144 = vmatpush2.bf16.msra.mxu0 0
        %5145 = vmatprep.subr.bf16.mxu0 0
        %5146 = vmatpush2.bf16.msra.mxu0 0
        %5147 = vmatprep.subr.bf16.mxu0 0
        %5148 = vmatpush2.bf16.msra.mxu0 0
        %5149 = vmatprep.mubr.bf16.mxu0 0
        %5150 = vmatmul.mubr.bf16.gmra.mxu0 %v5112
        %v5151 = vpop.f32.mrf.mxu0
        %v5152 = vadd.f32 0.0, %v5151
        %v5153 = vpop.f32.mrf.mxu0
        %v5154 = vpop.f32.mrf.mxu0
        %v5155 = vpop.f32.mrf.mxu0
        %5156 = vdwg.mxu0
        %5158 = vrot.lane.b32.xlu0 %v1912, 112
        %v5159 = vpop.permute.xlu0 %5158
        %v5161 = vsel %vm2752, %v4709, 0
        %v5164 = vsel %vm2948, %v5159, 0
        %5166 = vmatprep.subr.bf16.mxu0 0
        %5167 = vmatpush1.bf16.msra.mxu0 0
        %5168 = vmatprep.subr.bf16.mxu0 0
        %5169 = vmatpush1.bf16.msra.mxu0 0
        %5170 = vmatprep.subr.bf16.mxu0 0
        %5171 = vmatpush1.bf16.msra.mxu0 0
        %5172 = vmatprep.subr.bf16.mxu0 0
        %5173 = vmatpush1.bf16.msra.mxu0 0
        %5174 = vmatprep.subr.bf16.mxu0 0
        %5175 = vmatpush1.bf16.msra.mxu0 0
        %5176 = vmatprep.subr.bf16.mxu0 0
        %5177 = vmatpush1.bf16.msra.mxu0 0
        %5178 = vmatprep.subr.bf16.mxu0 0
        %5179 = vmatpush1.bf16.msra.mxu0 0
        %5180 = vmatprep.subr.bf16.mxu0 0
        %5181 = vmatpush1.bf16.msra.mxu0 %v5164
        %5182 = vmatprep.subr.bf16.mxu0 0
        %5183 = vmatpush2.bf16.msra.mxu0 0
        %5184 = vmatprep.subr.bf16.mxu0 0
        %5185 = vmatpush2.bf16.msra.mxu0 0
        %5186 = vmatprep.subr.bf16.mxu0 0
        %5187 = vmatpush2.bf16.msra.mxu0 0
        %5188 = vmatprep.subr.bf16.mxu0 0
        %5189 = vmatpush2.bf16.msra.mxu0 0
        %5190 = vmatprep.subr.bf16.mxu0 0
        %5191 = vmatpush2.bf16.msra.mxu0 0
        %5192 = vmatprep.subr.bf16.mxu0 0
        %5193 = vmatpush2.bf16.msra.mxu0 0
        %5194 = vmatprep.subr.bf16.mxu0 0
        %5195 = vmatpush2.bf16.msra.mxu0 0
        %5196 = vmatprep.subr.bf16.mxu0 0
        %5197 = vmatpush2.bf16.msra.mxu0 0
        %5198 = vmatprep.mubr.bf16.mxu0 0
        %5199 = vmatmul.mubr.bf16.gmra.mxu0 %v5161
        %v5200 = vpop.f32.mrf.mxu0
        %v5201 = vadd.f32 0.0, %v5200
        %v5202 = vpop.f32.mrf.mxu0
        %v5203 = vpop.f32.mrf.mxu0
        %v5204 = vpop.f32.mrf.mxu0
        %5205 = vdwg.mxu0
        %5207 = vrot.lane.b32.xlu0 %v1913, 112
        %v5208 = vpop.permute.xlu0 %5207
        %v5210 = vsel %vm2752, %v4710, 0
        %v5213 = vsel %vm2948, %v5208, 0
        %5215 = vmatprep.subr.bf16.mxu0 0
        %5216 = vmatpush1.bf16.msra.mxu0 0
        %5217 = vmatprep.subr.bf16.mxu0 0
        %5218 = vmatpush1.bf16.msra.mxu0 0
        %5219 = vmatprep.subr.bf16.mxu0 0
        %5220 = vmatpush1.bf16.msra.mxu0 0
        %5221 = vmatprep.subr.bf16.mxu0 0
        %5222 = vmatpush1.bf16.msra.mxu0 0
        %5223 = vmatprep.subr.bf16.mxu0 0
        %5224 = vmatpush1.bf16.msra.mxu0 0
        %5225 = vmatprep.subr.bf16.mxu0 0
        %5226 = vmatpush1.bf16.msra.mxu0 0
        %5227 = vmatprep.subr.bf16.mxu0 0
        %5228 = vmatpush1.bf16.msra.mxu0 0
        %5229 = vmatprep.subr.bf16.mxu0 0
        %5230 = vmatpush1.bf16.msra.mxu0 %v5213
        %5231 = vmatprep.subr.bf16.mxu0 0
        %5232 = vmatpush2.bf16.msra.mxu0 0
        %5233 = vmatprep.subr.bf16.mxu0 0
        %5234 = vmatpush2.bf16.msra.mxu0 0
        %5235 = vmatprep.subr.bf16.mxu0 0
        %5236 = vmatpush2.bf16.msra.mxu0 0
        %5237 = vmatprep.subr.bf16.mxu0 0
        %5238 = vmatpush2.bf16.msra.mxu0 0
        %5239 = vmatprep.subr.bf16.mxu0 0
        %5240 = vmatpush2.bf16.msra.mxu0 0
        %5241 = vmatprep.subr.bf16.mxu0 0
        %5242 = vmatpush2.bf16.msra.mxu0 0
        %5243 = vmatprep.subr.bf16.mxu0 0
        %5244 = vmatpush2.bf16.msra.mxu0 0
        %5245 = vmatprep.subr.bf16.mxu0 0
        %5246 = vmatpush2.bf16.msra.mxu0 0
        %5247 = vmatprep.mubr.bf16.mxu0 0
        %5248 = vmatmul.mubr.bf16.gmra.mxu0 %v5210
        %v5249 = vpop.f32.mrf.mxu0
        %v5250 = vadd.f32 0.0, %v5249
        %v5251 = vpop.f32.mrf.mxu0
        %v5252 = vpop.f32.mrf.mxu0
        %v5253 = vpop.f32.mrf.mxu0
        %5254 = vdwg.mxu0
        %5256 = vrot.lane.b32.xlu0 %v1914, 112
        %v5257 = vpop.permute.xlu0 %5256
        %v5259 = vsel %vm2752, %v4711, 0
        %v5262 = vsel %vm2948, %v5257, 0
        %5264 = vmatprep.subr.bf16.mxu0 0
        %5265 = vmatpush1.bf16.msra.mxu0 0
        %5266 = vmatprep.subr.bf16.mxu0 0
        %5267 = vmatpush1.bf16.msra.mxu0 0
        %5268 = vmatprep.subr.bf16.mxu0 0
        %5269 = vmatpush1.bf16.msra.mxu0 0
        %5270 = vmatprep.subr.bf16.mxu0 0
        %5271 = vmatpush1.bf16.msra.mxu0 0
        %5272 = vmatprep.subr.bf16.mxu0 0
        %5273 = vmatpush1.bf16.msra.mxu0 0
        %5274 = vmatprep.subr.bf16.mxu0 0
        %5275 = vmatpush1.bf16.msra.mxu0 0
        %5276 = vmatprep.subr.bf16.mxu0 0
        %5277 = vmatpush1.bf16.msra.mxu0 0
        %5278 = vmatprep.subr.bf16.mxu0 0
        %5279 = vmatpush1.bf16.msra.mxu0 %v5262
        %5280 = vmatprep.subr.bf16.mxu0 0
        %5281 = vmatpush2.bf16.msra.mxu0 0
        %5282 = vmatprep.subr.bf16.mxu0 0
        %5283 = vmatpush2.bf16.msra.mxu0 0
        %5284 = vmatprep.subr.bf16.mxu0 0
        %5285 = vmatpush2.bf16.msra.mxu0 0
        %5286 = vmatprep.subr.bf16.mxu0 0
        %5287 = vmatpush2.bf16.msra.mxu0 0
        %5288 = vmatprep.subr.bf16.mxu0 0
        %5289 = vmatpush2.bf16.msra.mxu0 0
        %5290 = vmatprep.subr.bf16.mxu0 0
        %5291 = vmatpush2.bf16.msra.mxu0 0
        %5292 = vmatprep.subr.bf16.mxu0 0
        %5293 = vmatpush2.bf16.msra.mxu0 0
        %5294 = vmatprep.subr.bf16.mxu0 0
        %5295 = vmatpush2.bf16.msra.mxu0 0
        %5296 = vmatprep.mubr.bf16.mxu0 0
        %5297 = vmatmul.mubr.bf16.gmra.mxu0 %v5259
        %v5298 = vpop.f32.mrf.mxu0
        %v5299 = vadd.f32 0.0, %v5298
        %v5300 = vpop.f32.mrf.mxu0
        %v5301 = vpop.f32.mrf.mxu0
        %v5302 = vpop.f32.mrf.mxu0
        %5303 = vdwg.mxu0
        %5305 = vrot.lane.b32.xlu0 %v1915, 112
        %v5306 = vpop.permute.xlu0 %5305
        %v5308 = vsel %vm2752, %v4712, 0
        %v5311 = vsel %vm2948, %v5306, 0
        %5313 = vmatprep.subr.bf16.mxu0 0
        %5314 = vmatpush1.bf16.msra.mxu0 0
        %5315 = vmatprep.subr.bf16.mxu0 0
        %5316 = vmatpush1.bf16.msra.mxu0 0
        %5317 = vmatprep.subr.bf16.mxu0 0
        %5318 = vmatpush1.bf16.msra.mxu0 0
        %5319 = vmatprep.subr.bf16.mxu0 0
        %5320 = vmatpush1.bf16.msra.mxu0 0
        %5321 = vmatprep.subr.bf16.mxu0 0
        %5322 = vmatpush1.bf16.msra.mxu0 0
        %5323 = vmatprep.subr.bf16.mxu0 0
        %5324 = vmatpush1.bf16.msra.mxu0 0
        %5325 = vmatprep.subr.bf16.mxu0 0
        %5326 = vmatpush1.bf16.msra.mxu0 0
        %5327 = vmatprep.subr.bf16.mxu0 0
        %5328 = vmatpush1.bf16.msra.mxu0 %v5311
        %5329 = vmatprep.subr.bf16.mxu0 0
        %5330 = vmatpush2.bf16.msra.mxu0 0
        %5331 = vmatprep.subr.bf16.mxu0 0
        %5332 = vmatpush2.bf16.msra.mxu0 0
        %5333 = vmatprep.subr.bf16.mxu0 0
        %5334 = vmatpush2.bf16.msra.mxu0 0
        %5335 = vmatprep.subr.bf16.mxu0 0
        %5336 = vmatpush2.bf16.msra.mxu0 0
        %5337 = vmatprep.subr.bf16.mxu0 0
        %5338 = vmatpush2.bf16.msra.mxu0 0
        %5339 = vmatprep.subr.bf16.mxu0 0
        %5340 = vmatpush2.bf16.msra.mxu0 0
        %5341 = vmatprep.subr.bf16.mxu0 0
        %5342 = vmatpush2.bf16.msra.mxu0 0
        %5343 = vmatprep.subr.bf16.mxu0 0
        %5344 = vmatpush2.bf16.msra.mxu0 0
        %5345 = vmatprep.mubr.bf16.mxu0 0
        %5346 = vmatmul.mubr.bf16.gmra.mxu0 %v5308
        %v5347 = vpop.f32.mrf.mxu0
        %v5348 = vadd.f32 0.0, %v5347
        %v5349 = vpop.f32.mrf.mxu0
        %v5350 = vpop.f32.mrf.mxu0
        %v5351 = vpop.f32.mrf.mxu0
        %5352 = vdwg.mxu0
        %5354 = vrot.lane.b32.xlu0 %v1916, 112
        %v5355 = vpop.permute.xlu0 %5354
        %v5357 = vsel %vm2752, %v4713, 0
        %v5360 = vsel %vm2948, %v5355, 0
        %5362 = vmatprep.subr.bf16.mxu0 0
        %5363 = vmatpush1.bf16.msra.mxu0 0
        %5364 = vmatprep.subr.bf16.mxu0 0
        %5365 = vmatpush1.bf16.msra.mxu0 0
        %5366 = vmatprep.subr.bf16.mxu0 0
        %5367 = vmatpush1.bf16.msra.mxu0 0
        %5368 = vmatprep.subr.bf16.mxu0 0
        %5369 = vmatpush1.bf16.msra.mxu0 0
        %5370 = vmatprep.subr.bf16.mxu0 0
        %5371 = vmatpush1.bf16.msra.mxu0 0
        %5372 = vmatprep.subr.bf16.mxu0 0
        %5373 = vmatpush1.bf16.msra.mxu0 0
        %5374 = vmatprep.subr.bf16.mxu0 0
        %5375 = vmatpush1.bf16.msra.mxu0 0
        %5376 = vmatprep.subr.bf16.mxu0 0
        %5377 = vmatpush1.bf16.msra.mxu0 %v5360
        %5378 = vmatprep.subr.bf16.mxu0 0
        %5379 = vmatpush2.bf16.msra.mxu0 0
        %5380 = vmatprep.subr.bf16.mxu0 0
        %5381 = vmatpush2.bf16.msra.mxu0 0
        %5382 = vmatprep.subr.bf16.mxu0 0
        %5383 = vmatpush2.bf16.msra.mxu0 0
        %5384 = vmatprep.subr.bf16.mxu0 0
        %5385 = vmatpush2.bf16.msra.mxu0 0
        %5386 = vmatprep.subr.bf16.mxu0 0
        %5387 = vmatpush2.bf16.msra.mxu0 0
        %5388 = vmatprep.subr.bf16.mxu0 0
        %5389 = vmatpush2.bf16.msra.mxu0 0
        %5390 = vmatprep.subr.bf16.mxu0 0
        %5391 = vmatpush2.bf16.msra.mxu0 0
        %5392 = vmatprep.subr.bf16.mxu0 0
        %5393 = vmatpush2.bf16.msra.mxu0 0
        %5394 = vmatprep.mubr.bf16.mxu0 0
        %5395 = vmatmul.mubr.bf16.gmra.mxu0 %v5357
        %v5396 = vpop.f32.mrf.mxu0
        %v5397 = vadd.f32 0.0, %v5396
        %v5398 = vpop.f32.mrf.mxu0
        %v5399 = vpop.f32.mrf.mxu0
        %v5400 = vpop.f32.mrf.mxu0
        %5401 = vdwg.mxu0
        %5403 = vrot.lane.b32.xlu0 %v1917, 112
        %v5404 = vpop.permute.xlu0 %5403
        %v5406 = vsel %vm2752, %v4714, 0
        %v5409 = vsel %vm2948, %v5404, 0
        %5411 = vmatprep.subr.bf16.mxu0 0
        %5412 = vmatpush1.bf16.msra.mxu0 0
        %5413 = vmatprep.subr.bf16.mxu0 0
        %5414 = vmatpush1.bf16.msra.mxu0 0
        %5415 = vmatprep.subr.bf16.mxu0 0
        %5416 = vmatpush1.bf16.msra.mxu0 0
        %5417 = vmatprep.subr.bf16.mxu0 0
        %5418 = vmatpush1.bf16.msra.mxu0 0
        %5419 = vmatprep.subr.bf16.mxu0 0
        %5420 = vmatpush1.bf16.msra.mxu0 0
        %5421 = vmatprep.subr.bf16.mxu0 0
        %5422 = vmatpush1.bf16.msra.mxu0 0
        %5423 = vmatprep.subr.bf16.mxu0 0
        %5424 = vmatpush1.bf16.msra.mxu0 0
        %5425 = vmatprep.subr.bf16.mxu0 0
        %5426 = vmatpush1.bf16.msra.mxu0 %v5409
        %5427 = vmatprep.subr.bf16.mxu0 0
        %5428 = vmatpush2.bf16.msra.mxu0 0
        %5429 = vmatprep.subr.bf16.mxu0 0
        %5430 = vmatpush2.bf16.msra.mxu0 0
        %5431 = vmatprep.subr.bf16.mxu0 0
        %5432 = vmatpush2.bf16.msra.mxu0 0
        %5433 = vmatprep.subr.bf16.mxu0 0
        %5434 = vmatpush2.bf16.msra.mxu0 0
        %5435 = vmatprep.subr.bf16.mxu0 0
        %5436 = vmatpush2.bf16.msra.mxu0 0
        %5437 = vmatprep.subr.bf16.mxu0 0
        %5438 = vmatpush2.bf16.msra.mxu0 0
        %5439 = vmatprep.subr.bf16.mxu0 0
        %5440 = vmatpush2.bf16.msra.mxu0 0
        %5441 = vmatprep.subr.bf16.mxu0 0
        %5442 = vmatpush2.bf16.msra.mxu0 0
        %5443 = vmatprep.mubr.bf16.mxu0 0
        %5444 = vmatmul.mubr.bf16.gmra.mxu0 %v5406
        %v5445 = vpop.f32.mrf.mxu0
        %v5446 = vadd.f32 0.0, %v5445
        %v5447 = vpop.f32.mrf.mxu0
        %v5448 = vpop.f32.mrf.mxu0
        %v5449 = vpop.f32.mrf.mxu0
        %5450 = vdwg.mxu0
        %5452 = vrot.lane.b32.xlu0 %v1918, 112
        %v5453 = vpop.permute.xlu0 %5452
        %v5455 = vsel %vm2752, %v4715, 0
        %v5458 = vsel %vm2948, %v5453, 0
        %5460 = vmatprep.subr.bf16.mxu0 0
        %5461 = vmatpush1.bf16.msra.mxu0 0
        %5462 = vmatprep.subr.bf16.mxu0 0
        %5463 = vmatpush1.bf16.msra.mxu0 0
        %5464 = vmatprep.subr.bf16.mxu0 0
        %5465 = vmatpush1.bf16.msra.mxu0 0
        %5466 = vmatprep.subr.bf16.mxu0 0
        %5467 = vmatpush1.bf16.msra.mxu0 0
        %5468 = vmatprep.subr.bf16.mxu0 0
        %5469 = vmatpush1.bf16.msra.mxu0 0
        %5470 = vmatprep.subr.bf16.mxu0 0
        %5471 = vmatpush1.bf16.msra.mxu0 0
        %5472 = vmatprep.subr.bf16.mxu0 0
        %5473 = vmatpush1.bf16.msra.mxu0 0
        %5474 = vmatprep.subr.bf16.mxu0 0
        %5475 = vmatpush1.bf16.msra.mxu0 %v5458
        %5476 = vmatprep.subr.bf16.mxu0 0
        %5477 = vmatpush2.bf16.msra.mxu0 0
        %5478 = vmatprep.subr.bf16.mxu0 0
        %5479 = vmatpush2.bf16.msra.mxu0 0
        %5480 = vmatprep.subr.bf16.mxu0 0
        %5481 = vmatpush2.bf16.msra.mxu0 0
        %5482 = vmatprep.subr.bf16.mxu0 0
        %5483 = vmatpush2.bf16.msra.mxu0 0
        %5484 = vmatprep.subr.bf16.mxu0 0
        %5485 = vmatpush2.bf16.msra.mxu0 0
        %5486 = vmatprep.subr.bf16.mxu0 0
        %5487 = vmatpush2.bf16.msra.mxu0 0
        %5488 = vmatprep.subr.bf16.mxu0 0
        %5489 = vmatpush2.bf16.msra.mxu0 0
        %5490 = vmatprep.subr.bf16.mxu0 0
        %5491 = vmatpush2.bf16.msra.mxu0 0
        %5492 = vmatprep.mubr.bf16.mxu0 0
        %5493 = vmatmul.mubr.bf16.gmra.mxu0 %v5455
        %v5494 = vpop.f32.mrf.mxu0
        %v5495 = vadd.f32 0.0, %v5494
        %v5496 = vpop.f32.mrf.mxu0
        %v5497 = vpop.f32.mrf.mxu0
        %v5498 = vpop.f32.mrf.mxu0
        %5499 = vdwg.mxu0
        %v5500 = vpack.c.bf16 %v4809, %v4760
        %v5501 = vpack.c.bf16 %v4907, %v4858
        %v5502 = vpack.c.bf16 %v5005, %v4956
        %v5503 = vpack.c.bf16 %v5103, %v5054
        %v5504 = vpack.c.bf16 %v5201, %v5152
        %v5505 = vpack.c.bf16 %v5299, %v5250
        %v5506 = vpack.c.bf16 %v5397, %v5348
        %v5507 = vpack.c.bf16 %v5495, %v5446
        %s5508 = scalar_lea.vmem %s725, 8 [#allocation8]
        %v5509 = vld [vmem:[%s5508] sm:$0xf]
        %v5510 = vld [vmem:[%s5508 + $0x4] sm:$0xf]
        %v5513 = vunpack.c.l.b16 %v5509
        %v5514 = vunpack.c.l.b16 %v5510
        %v5515 = vpack.c.b16 %v5514, %v5513
        %v5518 = vsel %vm2015, %v5500, 0
        %v5521 = vsel %vm2015, %v5501, 0
        %v5524 = vsel %vm2015, %v5502, 0
        %v5527 = vsel %vm2015, %v5503, 0
        %v5530 = vsel %vm2015, %v5504, 0
        %v5533 = vsel %vm2015, %v5505, 0
        %v5536 = vsel %vm2015, %v5506, 0
        %v5539 = vsel %vm2015, %v5507, 0
        %5541 = vmatprep.subr.bf16.mxu0 0
        %5542 = vmatpush1.bf16.msra.mxu0 0
        %5543 = vmatprep.subr.bf16.mxu0 0
        %5544 = vmatpush1.bf16.msra.mxu0 0
        %5545 = vmatprep.subr.bf16.mxu0 0
        %5546 = vmatpush1.bf16.msra.mxu0 0
        %5547 = vmatprep.subr.bf16.mxu0 0
        %5548 = vmatpush1.bf16.msra.mxu0 0
        %5549 = vmatprep.subr.bf16.mxu0 0
        %5550 = vmatpush1.bf16.msra.mxu0 0
        %5551 = vmatprep.subr.bf16.mxu0 0
        %5552 = vmatpush1.bf16.msra.mxu0 0
        %5553 = vmatprep.subr.bf16.mxu0 0
        %5554 = vmatpush1.bf16.msra.mxu0 0
        %5555 = vmatprep.subr.bf16.mxu0 0
        %5556 = vmatpush1.bf16.msra.mxu0 %v5515
        %5557 = vmatprep.subr.bf16.mxu0 0
        %5558 = vmatpush2.bf16.msra.mxu0 0
        %5559 = vmatprep.subr.bf16.mxu0 0
        %5560 = vmatpush2.bf16.msra.mxu0 0
        %5561 = vmatprep.subr.bf16.mxu0 0
        %5562 = vmatpush2.bf16.msra.mxu0 0
        %5563 = vmatprep.subr.bf16.mxu0 0
        %5564 = vmatpush2.bf16.msra.mxu0 0
        %5565 = vmatprep.subr.bf16.mxu0 0
        %5566 = vmatpush2.bf16.msra.mxu0 0
        %5567 = vmatprep.subr.bf16.mxu0 0
        %5568 = vmatpush2.bf16.msra.mxu0 0
        %5569 = vmatprep.subr.bf16.mxu0 0
        %5570 = vmatpush2.bf16.msra.mxu0 0
        %5571 = vmatprep.subr.bf16.mxu0 0
        %5572 = vmatpush2.bf16.msra.mxu0 0
        %5573 = vmatprep.mubr.bf16.mxu0 0
        %5574 = vmatmul.mubr.bf16.gmra.mxu0 %v5518
        %v5575 = vpop.f32.mrf.mxu0
        %v5576 = vadd.f32 0.0, %v5575
        %v5577 = vpop.f32.mrf.mxu0
        %v5578 = vpop.f32.mrf.mxu0
        %v5579 = vadd.f32 0.0, %v5578
        %v5580 = vpop.f32.mrf.mxu0
        %5581 = vmatprep.mubr.bf16.mxu0 0
        %5582 = vmatmul.mubr.bf16.gmra.mxu0 %v5521
        %v5583 = vpop.f32.mrf.mxu0
        %v5584 = vadd.f32 0.0, %v5583
        %v5585 = vpop.f32.mrf.mxu0
        %v5586 = vpop.f32.mrf.mxu0
        %v5587 = vadd.f32 0.0, %v5586
        %v5588 = vpop.f32.mrf.mxu0
        %5589 = vmatprep.mubr.bf16.mxu0 0
        %5590 = vmatmul.mubr.bf16.gmra.mxu0 %v5524
        %v5591 = vpop.f32.mrf.mxu0
        %v5592 = vadd.f32 0.0, %v5591
        %v5593 = vpop.f32.mrf.mxu0
        %v5594 = vpop.f32.mrf.mxu0
        %v5595 = vadd.f32 0.0, %v5594
        %v5596 = vpop.f32.mrf.mxu0
        %5597 = vmatprep.mubr.bf16.mxu0 0
        %5598 = vmatmul.mubr.bf16.gmra.mxu0 %v5527
        %v5599 = vpop.f32.mrf.mxu0
        %v5600 = vadd.f32 0.0, %v5599
        %v5601 = vpop.f32.mrf.mxu0
        %v5602 = vpop.f32.mrf.mxu0
        %v5603 = vadd.f32 0.0, %v5602
        %v5604 = vpop.f32.mrf.mxu0
        %5605 = vmatprep.mubr.bf16.mxu0 0
        %5606 = vmatmul.mubr.bf16.gmra.mxu0 %v5530
        %v5607 = vpop.f32.mrf.mxu0
        %v5608 = vadd.f32 0.0, %v5607
        %v5609 = vpop.f32.mrf.mxu0
        %v5610 = vpop.f32.mrf.mxu0
        %v5611 = vadd.f32 0.0, %v5610
        %v5612 = vpop.f32.mrf.mxu0
        %5613 = vmatprep.mubr.bf16.mxu0 0
        %5614 = vmatmul.mubr.bf16.gmra.mxu0 %v5533
        %v5615 = vpop.f32.mrf.mxu0
        %v5616 = vadd.f32 0.0, %v5615
        %v5617 = vpop.f32.mrf.mxu0
        %v5618 = vpop.f32.mrf.mxu0
        %v5619 = vadd.f32 0.0, %v5618
        %v5620 = vpop.f32.mrf.mxu0
        %5621 = vmatprep.mubr.bf16.mxu0 0
        %5622 = vmatmul.mubr.bf16.gmra.mxu0 %v5536
        %v5623 = vpop.f32.mrf.mxu0
        %v5624 = vadd.f32 0.0, %v5623
        %v5625 = vpop.f32.mrf.mxu0
        %v5626 = vpop.f32.mrf.mxu0
        %v5627 = vadd.f32 0.0, %v5626
        %v5628 = vpop.f32.mrf.mxu0
        %5629 = vmatprep.mubr.bf16.mxu0 0
        %5630 = vmatmul.mubr.bf16.gmra.mxu0 %v5539
        %v5631 = vpop.f32.mrf.mxu0
        %v5632 = vadd.f32 0.0, %v5631
        %v5633 = vpop.f32.mrf.mxu0
        %v5634 = vpop.f32.mrf.mxu0
        %v5635 = vadd.f32 0.0, %v5634
        %v5636 = vpop.f32.mrf.mxu0
        %5637 = vdwg.mxu0
        %v5640 = vunpack.c.l.b16 %v3690
        %v5641 = vunpack.c.l.b16 %v3691
        %v5642 = vpack.c.b16 %v5641, %v5640
        %v5645 = vsel %vm2015, %v3682, 0
        %v5648 = vsel %vm2015, %v3683, 0
        %v5651 = vsel %vm2015, %v3684, 0
        %v5654 = vsel %vm2015, %v3685, 0
        %v5657 = vsel %vm2015, %v3686, 0
        %v5660 = vsel %vm2015, %v3687, 0
        %v5663 = vsel %vm2015, %v3688, 0
        %v5666 = vsel %vm2015, %v3689, 0
        %5668 = vmatprep.subr.bf16.mxu0 0
        %5669 = vmatpush1.bf16.msra.mxu0 0
        %5670 = vmatprep.subr.bf16.mxu0 0
        %5671 = vmatpush1.bf16.msra.mxu0 0
        %5672 = vmatprep.subr.bf16.mxu0 0
        %5673 = vmatpush1.bf16.msra.mxu0 0
        %5674 = vmatprep.subr.bf16.mxu0 0
        %5675 = vmatpush1.bf16.msra.mxu0 0
        %5676 = vmatprep.subr.bf16.mxu0 0
        %5677 = vmatpush1.bf16.msra.mxu0 0
        %5678 = vmatprep.subr.bf16.mxu0 0
        %5679 = vmatpush1.bf16.msra.mxu0 0
        %5680 = vmatprep.subr.bf16.mxu0 0
        %5681 = vmatpush1.bf16.msra.mxu0 0
        %5682 = vmatprep.subr.bf16.mxu0 0
        %5683 = vmatpush1.bf16.msra.mxu0 %v5642
        %5684 = vmatprep.subr.bf16.mxu0 0
        %5685 = vmatpush2.bf16.msra.mxu0 0
        %5686 = vmatprep.subr.bf16.mxu0 0
        %5687 = vmatpush2.bf16.msra.mxu0 0
        %5688 = vmatprep.subr.bf16.mxu0 0
        %5689 = vmatpush2.bf16.msra.mxu0 0
        %5690 = vmatprep.subr.bf16.mxu0 0
        %5691 = vmatpush2.bf16.msra.mxu0 0
        %5692 = vmatprep.subr.bf16.mxu0 0
        %5693 = vmatpush2.bf16.msra.mxu0 0
        %5694 = vmatprep.subr.bf16.mxu0 0
        %5695 = vmatpush2.bf16.msra.mxu0 0
        %5696 = vmatprep.subr.bf16.mxu0 0
        %5697 = vmatpush2.bf16.msra.mxu0 0
        %5698 = vmatprep.subr.bf16.mxu0 0
        %5699 = vmatpush2.bf16.msra.mxu0 0
        %5700 = vmatprep.mubr.bf16.mxu0 0
        %5701 = vmatmul.mubr.bf16.gmra.mxu0 %v5645
        %v5702 = vpop.f32.mrf.mxu0
        %v5703 = vadd.f32 %v5576, %v5702
        %v5704 = vpop.f32.mrf.mxu0
        %v5705 = vpop.f32.mrf.mxu0
        %v5706 = vadd.f32 %v5579, %v5705
        %v5707 = vpop.f32.mrf.mxu0
        %5708 = vmatprep.mubr.bf16.mxu0 0
        %5709 = vmatmul.mubr.bf16.gmra.mxu0 %v5648
        %v5710 = vpop.f32.mrf.mxu0
        %v5711 = vadd.f32 %v5584, %v5710
        %v5712 = vpop.f32.mrf.mxu0
        %v5713 = vpop.f32.mrf.mxu0
        %v5714 = vadd.f32 %v5587, %v5713
        %v5715 = vpop.f32.mrf.mxu0
        %5716 = vmatprep.mubr.bf16.mxu0 0
        %5717 = vmatmul.mubr.bf16.gmra.mxu0 %v5651
        %v5718 = vpop.f32.mrf.mxu0
        %v5719 = vadd.f32 %v5592, %v5718
        %v5720 = vpop.f32.mrf.mxu0
        %v5721 = vpop.f32.mrf.mxu0
        %v5722 = vadd.f32 %v5595, %v5721
        %v5723 = vpop.f32.mrf.mxu0
        %5724 = vmatprep.mubr.bf16.mxu0 0
        %5725 = vmatmul.mubr.bf16.gmra.mxu0 %v5654
        %v5726 = vpop.f32.mrf.mxu0
        %v5727 = vadd.f32 %v5600, %v5726
        %v5728 = vpop.f32.mrf.mxu0
        %v5729 = vpop.f32.mrf.mxu0
        %v5730 = vadd.f32 %v5603, %v5729
        %v5731 = vpop.f32.mrf.mxu0
        %5732 = vmatprep.mubr.bf16.mxu0 0
        %5733 = vmatmul.mubr.bf16.gmra.mxu0 %v5657
        %v5734 = vpop.f32.mrf.mxu0
        %v5735 = vadd.f32 %v5608, %v5734
        %v5736 = vpop.f32.mrf.mxu0
        %v5737 = vpop.f32.mrf.mxu0
        %v5738 = vadd.f32 %v5611, %v5737
        %v5739 = vpop.f32.mrf.mxu0
        %5740 = vmatprep.mubr.bf16.mxu0 0
        %5741 = vmatmul.mubr.bf16.gmra.mxu0 %v5660
        %v5742 = vpop.f32.mrf.mxu0
        %v5743 = vadd.f32 %v5616, %v5742
        %v5744 = vpop.f32.mrf.mxu0
        %v5745 = vpop.f32.mrf.mxu0
        %v5746 = vadd.f32 %v5619, %v5745
        %v5747 = vpop.f32.mrf.mxu0
        %5748 = vmatprep.mubr.bf16.mxu0 0
        %5749 = vmatmul.mubr.bf16.gmra.mxu0 %v5663
        %v5750 = vpop.f32.mrf.mxu0
        %v5751 = vadd.f32 %v5624, %v5750
        %v5752 = vpop.f32.mrf.mxu0
        %v5753 = vpop.f32.mrf.mxu0
        %v5754 = vadd.f32 %v5627, %v5753
        %v5755 = vpop.f32.mrf.mxu0
        %5756 = vmatprep.mubr.bf16.mxu0 0
        %5757 = vmatmul.mubr.bf16.gmra.mxu0 %v5666
        %v5758 = vpop.f32.mrf.mxu0
        %v5759 = vadd.f32 %v5632, %v5758
        %v5760 = vpop.f32.mrf.mxu0
        %v5761 = vpop.f32.mrf.mxu0
        %v5762 = vadd.f32 %v5635, %v5761
        %v5763 = vpop.f32.mrf.mxu0
        %5764 = vdwg.mxu0
        %v5765 = vadd.f32 %v1084, %v5703
        %v5766 = vadd.f32 %v1085, %v5706
        %v5767 = vadd.f32 %v1086, %v5711
        %v5768 = vadd.f32 %v1087, %v5714
        %v5769 = vadd.f32 %v1088, %v5719
        %v5770 = vadd.f32 %v1089, %v5722
        %v5771 = vadd.f32 %v1090, %v5727
        %v5772 = vadd.f32 %v1091, %v5730
        %v5773 = vadd.f32 %v1092, %v5735
        %v5774 = vadd.f32 %v1093, %v5738
        %v5775 = vadd.f32 %v1094, %v5743
        %v5776 = vadd.f32 %v1095, %v5746
        %v5777 = vadd.f32 %v1096, %v5751
        %v5778 = vadd.f32 %v1097, %v5754
        %v5779 = vadd.f32 %v1098, %v5759
        %v5780 = vadd.f32 %v1099, %v5762
        %v5781 = vlaneseq
        %v5782 = vshrl.u32 %v5781, 7
        %v5783 = vadd.s32 %v5782, 8
        %v5784 = vadd.s32 %v5782, 16
        %v5785 = vadd.s32 %v5782, 24
        %v5786 = vadd.s32 %v5782, 32
        %v5787 = vadd.s32 %v5782, 40
        %v5788 = vadd.s32 %v5782, 48
        %v5789 = vadd.s32 %v5782, 56
        %v5790 = vadd.s32 %v5782, 64
        %v5791 = vadd.s32 %v5782, 72
        %v5792 = vadd.s32 %v5782, 80
        %v5793 = vadd.s32 %v5782, 88
        %v5794 = vadd.s32 %v5782, 96
        %v5795 = vadd.s32 %v5782, 104
        %v5796 = vadd.s32 %v5782, 112
        %v5797 = vadd.s32 %v5782, 120
        %vm5798 = vcmp.lt.s32.totalorder %v5782, 0
        %v5799 = vsub.s32 0, %v5782
        %v5800 = vsel %vm5798, %v5799, %v5782
        %v5801 = vshrl.u32 %v5800, 3
        %v5802 = vand.u32 %v5800, 7
        %v5803 = vsub.s32 0, %v5802
        %v5804 = vsel %vm5798, %v5803, %v5802
        %vm5805 = vcmp.lt.s32.totalorder %v5783, 0
        %v5806 = vsub.s32 0, %v5783
        %v5807 = vsel %vm5805, %v5806, %v5783
        %v5808 = vshrl.u32 %v5807, 3
        %v5809 = vand.u32 %v5807, 7
        %v5810 = vsub.s32 0, %v5809
        %v5811 = vsel %vm5805, %v5810, %v5809
        %vm5812 = vcmp.lt.s32.totalorder %v5784, 0
        %v5813 = vsub.s32 0, %v5784
        %v5814 = vsel %vm5812, %v5813, %v5784
        %v5815 = vshrl.u32 %v5814, 3
        %v5816 = vand.u32 %v5814, 7
        %v5817 = vsub.s32 0, %v5816
        %v5818 = vsel %vm5812, %v5817, %v5816
        %vm5819 = vcmp.lt.s32.totalorder %v5785, 0
        %v5820 = vsub.s32 0, %v5785
        %v5821 = vsel %vm5819, %v5820, %v5785
        %v5822 = vshrl.u32 %v5821, 3
        %v5823 = vand.u32 %v5821, 7
        %v5824 = vsub.s32 0, %v5823
        %v5825 = vsel %vm5819, %v5824, %v5823
        %vm5826 = vcmp.lt.s32.totalorder %v5786, 0
        %v5827 = vsub.s32 0, %v5786
        %v5828 = vsel %vm5826, %v5827, %v5786
        %v5829 = vshrl.u32 %v5828, 3
        %v5830 = vand.u32 %v5828, 7
        %v5831 = vsub.s32 0, %v5830
        %v5832 = vsel %vm5826, %v5831, %v5830
        %vm5833 = vcmp.lt.s32.totalorder %v5787, 0
        %v5834 = vsub.s32 0, %v5787
        %v5835 = vsel %vm5833, %v5834, %v5787
        %v5836 = vshrl.u32 %v5835, 3
        %v5837 = vand.u32 %v5835, 7
        %v5838 = vsub.s32 0, %v5837
        %v5839 = vsel %vm5833, %v5838, %v5837
        %vm5840 = vcmp.lt.s32.totalorder %v5788, 0
        %v5841 = vsub.s32 0, %v5788
        %v5842 = vsel %vm5840, %v5841, %v5788
        %v5843 = vshrl.u32 %v5842, 3
        %v5844 = vand.u32 %v5842, 7
        %v5845 = vsub.s32 0, %v5844
        %v5846 = vsel %vm5840, %v5845, %v5844
        %vm5847 = vcmp.lt.s32.totalorder %v5789, 0
        %v5848 = vsub.s32 0, %v5789
        %v5849 = vsel %vm5847, %v5848, %v5789
        %v5850 = vshrl.u32 %v5849, 3
        %v5851 = vand.u32 %v5849, 7
        %v5852 = vsub.s32 0, %v5851
        %v5853 = vsel %vm5847, %v5852, %v5851
        %vm5854 = vcmp.lt.s32.totalorder %v5790, 0
        %v5855 = vsub.s32 0, %v5790
        %v5856 = vsel %vm5854, %v5855, %v5790
        %v5857 = vshrl.u32 %v5856, 3
        %v5858 = vand.u32 %v5856, 7
        %v5859 = vsub.s32 0, %v5858
        %v5860 = vsel %vm5854, %v5859, %v5858
        %vm5861 = vcmp.lt.s32.totalorder %v5791, 0
        %v5862 = vsub.s32 0, %v5791
        %v5863 = vsel %vm5861, %v5862, %v5791
        %v5864 = vshrl.u32 %v5863, 3
        %v5865 = vand.u32 %v5863, 7
        %v5866 = vsub.s32 0, %v5865
        %v5867 = vsel %vm5861, %v5866, %v5865
        %vm5868 = vcmp.lt.s32.totalorder %v5792, 0
        %v5869 = vsub.s32 0, %v5792
        %v5870 = vsel %vm5868, %v5869, %v5792
        %v5871 = vshrl.u32 %v5870, 3
        %v5872 = vand.u32 %v5870, 7
        %v5873 = vsub.s32 0, %v5872
        %v5874 = vsel %vm5868, %v5873, %v5872
        %vm5875 = vcmp.lt.s32.totalorder %v5793, 0
        %v5876 = vsub.s32 0, %v5793
        %v5877 = vsel %vm5875, %v5876, %v5793
        %v5878 = vshrl.u32 %v5877, 3
        %v5879 = vand.u32 %v5877, 7
        %v5880 = vsub.s32 0, %v5879
        %v5881 = vsel %vm5875, %v5880, %v5879
        %vm5882 = vcmp.lt.s32.totalorder %v5794, 0
        %v5883 = vsub.s32 0, %v5794
        %v5884 = vsel %vm5882, %v5883, %v5794
        %v5885 = vshrl.u32 %v5884, 3
        %v5886 = vand.u32 %v5884, 7
        %v5887 = vsub.s32 0, %v5886
        %v5888 = vsel %vm5882, %v5887, %v5886
        %vm5889 = vcmp.lt.s32.totalorder %v5795, 0
        %v5890 = vsub.s32 0, %v5795
        %v5891 = vsel %vm5889, %v5890, %v5795
        %v5892 = vshrl.u32 %v5891, 3
        %v5893 = vand.u32 %v5891, 7
        %v5894 = vsub.s32 0, %v5893
        %v5895 = vsel %vm5889, %v5894, %v5893
        %vm5896 = vcmp.lt.s32.totalorder %v5796, 0
        %v5897 = vsub.s32 0, %v5796
        %v5898 = vsel %vm5896, %v5897, %v5796
        %v5899 = vshrl.u32 %v5898, 3
        %v5900 = vand.u32 %v5898, 7
        %v5901 = vsub.s32 0, %v5900
        %v5902 = vsel %vm5896, %v5901, %v5900
        %vm5903 = vcmp.lt.s32.totalorder %v5797, 0
        %v5904 = vsub.s32 0, %v5797
        %v5905 = vsel %vm5903, %v5904, %v5797
        %v5906 = vshrl.u32 %v5905, 3
        %v5907 = vand.u32 %v5905, 7
        %v5908 = vsub.s32 0, %v5907
        %v5909 = vsel %vm5903, %v5908, %v5907
        %vm5910 = vcmp.ne.s32.totalorder %v5804, 0
        %vm5911 = vcmp.ne.s32.totalorder %v5811, 0
        %vm5912 = vcmp.ne.s32.totalorder %v5818, 0
        %vm5913 = vcmp.ne.s32.totalorder %v5825, 0
        %vm5914 = vcmp.ne.s32.totalorder %v5832, 0
        %vm5915 = vcmp.ne.s32.totalorder %v5839, 0
        %vm5916 = vcmp.ne.s32.totalorder %v5846, 0
        %vm5917 = vcmp.ne.s32.totalorder %v5853, 0
        %vm5918 = vcmp.ne.s32.totalorder %v5860, 0
        %vm5919 = vcmp.ne.s32.totalorder %v5867, 0
        %vm5920 = vcmp.ne.s32.totalorder %v5874, 0
        %vm5921 = vcmp.ne.s32.totalorder %v5881, 0
        %vm5922 = vcmp.ne.s32.totalorder %v5888, 0
        %vm5923 = vcmp.ne.s32.totalorder %v5895, 0
        %vm5924 = vcmp.ne.s32.totalorder %v5902, 0
        %vm5925 = vcmp.ne.s32.totalorder %v5909, 0
        %vm5926 = vcmp.lt.s32.totalorder %v5804, 0
        %vm5927 = vcmp.lt.s32.totalorder %v5811, 0
        %vm5928 = vcmp.lt.s32.totalorder %v5818, 0
        %vm5929 = vcmp.lt.s32.totalorder %v5825, 0
        %vm5930 = vcmp.lt.s32.totalorder %v5832, 0
        %vm5931 = vcmp.lt.s32.totalorder %v5839, 0
        %vm5932 = vcmp.lt.s32.totalorder %v5846, 0
        %vm5933 = vcmp.lt.s32.totalorder %v5853, 0
        %vm5934 = vcmp.lt.s32.totalorder %v5860, 0
        %vm5935 = vcmp.lt.s32.totalorder %v5867, 0
        %vm5936 = vcmp.lt.s32.totalorder %v5874, 0
        %vm5937 = vcmp.lt.s32.totalorder %v5881, 0
        %vm5938 = vcmp.lt.s32.totalorder %v5888, 0
        %vm5939 = vcmp.lt.s32.totalorder %v5895, 0
        %vm5940 = vcmp.lt.s32.totalorder %v5902, 0
        %vm5941 = vcmp.lt.s32.totalorder %v5909, 0
        %vm5942 = vmand %vm5926, %vm5910
        %vm5943 = vmand %vm5927, %vm5911
        %vm5944 = vmand %vm5928, %vm5912
        %vm5945 = vmand %vm5929, %vm5913
        %vm5946 = vmand %vm5930, %vm5914
        %vm5947 = vmand %vm5931, %vm5915
        %vm5948 = vmand %vm5932, %vm5916
        %vm5949 = vmand %vm5933, %vm5917
        %vm5950 = vmand %vm5934, %vm5918
        %vm5951 = vmand %vm5935, %vm5919
        %vm5952 = vmand %vm5936, %vm5920
        %vm5953 = vmand %vm5937, %vm5921
        %vm5954 = vmand %vm5938, %vm5922
        %vm5955 = vmand %vm5939, %vm5923
        %vm5956 = vmand %vm5940, %vm5924
        %vm5957 = vmand %vm5941, %vm5925
        %v5958 = vadd.s32 %v5804, 8
        %v5959 = vadd.s32 %v5811, 8
        %v5960 = vadd.s32 %v5818, 8
        %v5961 = vadd.s32 %v5825, 8
        %v5962 = vadd.s32 %v5832, 8
        %v5963 = vadd.s32 %v5839, 8
        %v5964 = vadd.s32 %v5846, 8
        %v5965 = vadd.s32 %v5853, 8
        %v5966 = vadd.s32 %v5860, 8
        %v5967 = vadd.s32 %v5867, 8
        %v5968 = vadd.s32 %v5874, 8
        %v5969 = vadd.s32 %v5881, 8
        %v5970 = vadd.s32 %v5888, 8
        %v5971 = vadd.s32 %v5895, 8
        %v5972 = vadd.s32 %v5902, 8
        %v5973 = vadd.s32 %v5909, 8
        %v5974 = vsel %vm5942, %v5958, %v5804
        %v5975 = vsel %vm5943, %v5959, %v5811
        %v5976 = vsel %vm5944, %v5960, %v5818
        %v5977 = vsel %vm5945, %v5961, %v5825
        %v5978 = vsel %vm5946, %v5962, %v5832
        %v5979 = vsel %vm5947, %v5963, %v5839
        %v5980 = vsel %vm5948, %v5964, %v5846
        %v5981 = vsel %vm5949, %v5965, %v5853
        %v5982 = vsel %vm5950, %v5966, %v5860
        %v5983 = vsel %vm5951, %v5967, %v5867
        %v5984 = vsel %vm5952, %v5968, %v5874
        %v5985 = vsel %vm5953, %v5969, %v5881
        %v5986 = vsel %vm5954, %v5970, %v5888
        %v5987 = vsel %vm5955, %v5971, %v5895
        %v5988 = vsel %vm5956, %v5972, %v5902
        %v5989 = vsel %vm5957, %v5973, %v5909
        %vm5990 = vcmp.ne.s32.totalorder %v5974, 0
        %vm5991 = vcmp.ne.s32.totalorder %v5975, 0
        %vm5992 = vcmp.ne.s32.totalorder %v5976, 0
        %vm5993 = vcmp.ne.s32.totalorder %v5977, 0
        %vm5994 = vcmp.ne.s32.totalorder %v5978, 0
        %vm5995 = vcmp.ne.s32.totalorder %v5979, 0
        %vm5996 = vcmp.ne.s32.totalorder %v5980, 0
        %vm5997 = vcmp.ne.s32.totalorder %v5981, 0
        %vm5998 = vcmp.ne.s32.totalorder %v5982, 0
        %vm5999 = vcmp.ne.s32.totalorder %v5983, 0
        %vm6000 = vcmp.ne.s32.totalorder %v5984, 0
        %vm6001 = vcmp.ne.s32.totalorder %v5985, 0
        %vm6002 = vcmp.ne.s32.totalorder %v5986, 0
        %vm6003 = vcmp.ne.s32.totalorder %v5987, 0
        %vm6004 = vcmp.ne.s32.totalorder %v5988, 0
        %vm6005 = vcmp.ne.s32.totalorder %v5989, 0
        %vm6006 = vcmp.ne.s32.totalorder %v5974, 7
        %vm6007 = vcmp.ne.s32.totalorder %v5975, 7
        %vm6008 = vcmp.ne.s32.totalorder %v5976, 7
        %vm6009 = vcmp.ne.s32.totalorder %v5977, 7
        %vm6010 = vcmp.ne.s32.totalorder %v5978, 7
        %vm6011 = vcmp.ne.s32.totalorder %v5979, 7
        %vm6012 = vcmp.ne.s32.totalorder %v5980, 7
        %vm6013 = vcmp.ne.s32.totalorder %v5981, 7
        %vm6014 = vcmp.ne.s32.totalorder %v5982, 7
        %vm6015 = vcmp.ne.s32.totalorder %v5983, 7
        %vm6016 = vcmp.ne.s32.totalorder %v5984, 7
        %vm6017 = vcmp.ne.s32.totalorder %v5985, 7
        %vm6018 = vcmp.ne.s32.totalorder %v5986, 7
        %vm6019 = vcmp.ne.s32.totalorder %v5987, 7
        %vm6020 = vcmp.ne.s32.totalorder %v5988, 7
        %vm6021 = vcmp.ne.s32.totalorder %v5989, 7
        %v6022 = vld [vmem:[%s868] sm:$0x1]
        %v6023 = vld [vmem:[%s871] sm:$0x1]
        %v6024 = vsel %vm1134, %v5765, 0.0
        %6025 = vadd.xlane.f32.xlu0 %v6024
        %v6026 = vpop.xlane.xlu0 %6025
        %v6027 = vsel %vm1134, %v5766, 0.0
        %6028 = vadd.xlane.f32.xlu0 %v6027
        %v6029 = vpop.xlane.xlu0 %6028
        %v6030 = vsel %vm1134, %v5767, 0.0
        %6031 = vadd.xlane.f32.xlu0 %v6030
        %v6032 = vpop.xlane.xlu0 %6031
        %v6033 = vsel %vm1134, %v5768, 0.0
        %6034 = vadd.xlane.f32.xlu0 %v6033
        %v6035 = vpop.xlane.xlu0 %6034
        %v6036 = vsel %vm1134, %v5769, 0.0
        %6037 = vadd.xlane.f32.xlu0 %v6036
        %v6038 = vpop.xlane.xlu0 %6037
        %v6039 = vsel %vm1134, %v5770, 0.0
        %6040 = vadd.xlane.f32.xlu0 %v6039
        %v6041 = vpop.xlane.xlu0 %6040
        %v6042 = vsel %vm1134, %v5771, 0.0
        %6043 = vadd.xlane.f32.xlu0 %v6042
        %v6044 = vpop.xlane.xlu0 %6043
        %v6045 = vsel %vm1134, %v5772, 0.0
        %6046 = vadd.xlane.f32.xlu0 %v6045
        %v6047 = vpop.xlane.xlu0 %6046
        %v6048 = vsel %vm1134, %v5773, 0.0
        %6049 = vadd.xlane.f32.xlu0 %v6048
        %v6050 = vpop.xlane.xlu0 %6049
        %v6051 = vsel %vm1134, %v5774, 0.0
        %6052 = vadd.xlane.f32.xlu0 %v6051
        %v6053 = vpop.xlane.xlu0 %6052
        %v6054 = vsel %vm1134, %v5775, 0.0
        %6055 = vadd.xlane.f32.xlu0 %v6054
        %v6056 = vpop.xlane.xlu0 %6055
        %v6057 = vsel %vm1134, %v5776, 0.0
        %6058 = vadd.xlane.f32.xlu0 %v6057
        %v6059 = vpop.xlane.xlu0 %6058
        %v6060 = vsel %vm1134, %v5777, 0.0
        %6061 = vadd.xlane.f32.xlu0 %v6060
        %v6062 = vpop.xlane.xlu0 %6061
        %v6063 = vsel %vm1134, %v5778, 0.0
        %6064 = vadd.xlane.f32.xlu0 %v6063
        %v6065 = vpop.xlane.xlu0 %6064
        %v6066 = vsel %vm1134, %v5779, 0.0
        %6067 = vadd.xlane.f32.xlu0 %v6066
        %v6068 = vpop.xlane.xlu0 %6067
        %v6069 = vsel %vm1134, %v5780, 0.0
        %6070 = vadd.xlane.f32.xlu0 %v6069
        %v6071 = vpop.xlane.xlu0 %6070
        %v6072 = vmul.f32 %v6026, %v1183
        %v6073 = vmul.f32 %v6029, %v1183
        %v6074 = vmul.f32 %v6032, %v1183
        %v6075 = vmul.f32 %v6035, %v1183
        %v6076 = vmul.f32 %v6038, %v1183
        %v6077 = vmul.f32 %v6041, %v1183
        %v6078 = vmul.f32 %v6044, %v1183
        %v6079 = vmul.f32 %v6047, %v1183
        %v6080 = vmul.f32 %v6050, %v1183
        %v6081 = vmul.f32 %v6053, %v1183
        %v6082 = vmul.f32 %v6056, %v1183
        %v6083 = vmul.f32 %v6059, %v1183
        %v6084 = vmul.f32 %v6062, %v1183
        %v6085 = vmul.f32 %v6065, %v1183
        %v6086 = vmul.f32 %v6068, %v1183
        %v6087 = vmul.f32 %v6071, %v1183
        %v6088 = vsub.f32 %v5765, %v6072
        %v6089 = vsub.f32 %v5766, %v6073
        %v6090 = vsub.f32 %v5767, %v6074
        %v6091 = vsub.f32 %v5768, %v6075
        %v6092 = vsub.f32 %v5769, %v6076
        %v6093 = vsub.f32 %v5770, %v6077
        %v6094 = vsub.f32 %v5771, %v6078
        %v6095 = vsub.f32 %v5772, %v6079
        %v6096 = vsub.f32 %v5773, %v6080
        %v6097 = vsub.f32 %v5774, %v6081
        %v6098 = vsub.f32 %v5775, %v6082
        %v6099 = vsub.f32 %v5776, %v6083
        %v6100 = vsub.f32 %v5777, %v6084
        %v6101 = vsub.f32 %v5778, %v6085
        %v6102 = vsub.f32 %v5779, %v6086
        %v6103 = vsub.f32 %v5780, %v6087
        %v6104 = vmul.f32 %v6088, %v6088
        %v6105 = vmul.f32 %v6089, %v6089
        %v6106 = vmul.f32 %v6090, %v6090
        %v6107 = vmul.f32 %v6091, %v6091
        %v6108 = vmul.f32 %v6092, %v6092
        %v6109 = vmul.f32 %v6093, %v6093
        %v6110 = vmul.f32 %v6094, %v6094
        %v6111 = vmul.f32 %v6095, %v6095
        %v6112 = vmul.f32 %v6096, %v6096
        %v6113 = vmul.f32 %v6097, %v6097
        %v6114 = vmul.f32 %v6098, %v6098
        %v6115 = vmul.f32 %v6099, %v6099
        %v6116 = vmul.f32 %v6100, %v6100
        %v6117 = vmul.f32 %v6101, %v6101
        %v6118 = vmul.f32 %v6102, %v6102
        %v6119 = vmul.f32 %v6103, %v6103
        %v6120 = vsel %vm1134, %v6104, 0.0
        %6121 = vadd.xlane.f32.xlu0 %v6120
        %v6122 = vpop.xlane.xlu0 %6121
        %v6123 = vsel %vm1134, %v6105, 0.0
        %6124 = vadd.xlane.f32.xlu0 %v6123
        %v6125 = vpop.xlane.xlu0 %6124
        %v6126 = vsel %vm1134, %v6106, 0.0
        %6127 = vadd.xlane.f32.xlu0 %v6126
        %v6128 = vpop.xlane.xlu0 %6127
        %v6129 = vsel %vm1134, %v6107, 0.0
        %6130 = vadd.xlane.f32.xlu0 %v6129
        %v6131 = vpop.xlane.xlu0 %6130
        %v6132 = vsel %vm1134, %v6108, 0.0
        %6133 = vadd.xlane.f32.xlu0 %v6132
        %v6134 = vpop.xlane.xlu0 %6133
        %v6135 = vsel %vm1134, %v6109, 0.0
        %6136 = vadd.xlane.f32.xlu0 %v6135
        %v6137 = vpop.xlane.xlu0 %6136
        %v6138 = vsel %vm1134, %v6110, 0.0
        %6139 = vadd.xlane.f32.xlu0 %v6138
        %v6140 = vpop.xlane.xlu0 %6139
        %v6141 = vsel %vm1134, %v6111, 0.0
        %6142 = vadd.xlane.f32.xlu0 %v6141
        %v6143 = vpop.xlane.xlu0 %6142
        %v6144 = vsel %vm1134, %v6112, 0.0
        %6145 = vadd.xlane.f32.xlu0 %v6144
        %v6146 = vpop.xlane.xlu0 %6145
        %v6147 = vsel %vm1134, %v6113, 0.0
        %6148 = vadd.xlane.f32.xlu0 %v6147
        %v6149 = vpop.xlane.xlu0 %6148
        %v6150 = vsel %vm1134, %v6114, 0.0
        %6151 = vadd.xlane.f32.xlu0 %v6150
        %v6152 = vpop.xlane.xlu0 %6151
        %v6153 = vsel %vm1134, %v6115, 0.0
        %6154 = vadd.xlane.f32.xlu0 %v6153
        %v6155 = vpop.xlane.xlu0 %6154
        %v6156 = vsel %vm1134, %v6116, 0.0
        %6157 = vadd.xlane.f32.xlu0 %v6156
        %v6158 = vpop.xlane.xlu0 %6157
        %v6159 = vsel %vm1134, %v6117, 0.0
        %6160 = vadd.xlane.f32.xlu0 %v6159
        %v6161 = vpop.xlane.xlu0 %6160
        %v6162 = vsel %vm1134, %v6118, 0.0
        %6163 = vadd.xlane.f32.xlu0 %v6162
        %v6164 = vpop.xlane.xlu0 %6163
        %v6165 = vsel %vm1134, %v6119, 0.0
        %6166 = vadd.xlane.f32.xlu0 %v6165
        %v6167 = vpop.xlane.xlu0 %6166
        %v6168 = vmul.f32 %v6122, 0.032258064
        %v6169 = vmul.f32 %v6125, 0.032258064
        %v6170 = vmul.f32 %v6128, 0.032258064
        %v6171 = vmul.f32 %v6131, 0.032258064
        %v6172 = vmul.f32 %v6134, 0.032258064
        %v6173 = vmul.f32 %v6137, 0.032258064
        %v6174 = vmul.f32 %v6140, 0.032258064
        %v6175 = vmul.f32 %v6143, 0.032258064
        %v6176 = vmul.f32 %v6146, 0.032258064
        %v6177 = vmul.f32 %v6149, 0.032258064
        %v6178 = vmul.f32 %v6152, 0.032258064
        %v6179 = vmul.f32 %v6155, 0.032258064
        %v6180 = vmul.f32 %v6158, 0.032258064
        %v6181 = vmul.f32 %v6161, 0.032258064
        %v6182 = vmul.f32 %v6164, 0.032258064
        %v6183 = vmul.f32 %v6167, 0.032258064
        %v6184 = vrsqrt.pop %v6168
        %v6185 = vmul.f32 %v6168, %v6184
        %vm6186 = vcmp.eq.f32.partialorder %v6168, inf
        %v6187 = vsel %vm6186, %v6168, %v6185
        %vm6188 = vcmp.eq.f32.partialorder %v6168, 0.0
        %v6189 = vand.u32 %v6168, 2147483648
        %v6190 = vsel %vm6188, %v6189, %v6187
        %v6191 = vrsqrt.pop %v6169
        %v6192 = vmul.f32 %v6169, %v6191
        %vm6193 = vcmp.eq.f32.partialorder %v6169, inf
        %v6194 = vsel %vm6193, %v6169, %v6192
        %vm6195 = vcmp.eq.f32.partialorder %v6169, 0.0
        %v6196 = vand.u32 %v6169, 2147483648
        %v6197 = vsel %vm6195, %v6196, %v6194
        %v6198 = vrsqrt.pop %v6170
        %v6199 = vmul.f32 %v6170, %v6198
        %vm6200 = vcmp.eq.f32.partialorder %v6170, inf
        %v6201 = vsel %vm6200, %v6170, %v6199
        %vm6202 = vcmp.eq.f32.partialorder %v6170, 0.0
        %v6203 = vand.u32 %v6170, 2147483648
        %v6204 = vsel %vm6202, %v6203, %v6201
        %v6205 = vrsqrt.pop %v6171
        %v6206 = vmul.f32 %v6171, %v6205
        %vm6207 = vcmp.eq.f32.partialorder %v6171, inf
        %v6208 = vsel %vm6207, %v6171, %v6206
        %vm6209 = vcmp.eq.f32.partialorder %v6171, 0.0
        %v6210 = vand.u32 %v6171, 2147483648
        %v6211 = vsel %vm6209, %v6210, %v6208
        %v6212 = vrsqrt.pop %v6172
        %v6213 = vmul.f32 %v6172, %v6212
        %vm6214 = vcmp.eq.f32.partialorder %v6172, inf
        %v6215 = vsel %vm6214, %v6172, %v6213
        %vm6216 = vcmp.eq.f32.partialorder %v6172, 0.0
        %v6217 = vand.u32 %v6172, 2147483648
        %v6218 = vsel %vm6216, %v6217, %v6215
        %v6219 = vrsqrt.pop %v6173
        %v6220 = vmul.f32 %v6173, %v6219
        %vm6221 = vcmp.eq.f32.partialorder %v6173, inf
        %v6222 = vsel %vm6221, %v6173, %v6220
        %vm6223 = vcmp.eq.f32.partialorder %v6173, 0.0
        %v6224 = vand.u32 %v6173, 2147483648
        %v6225 = vsel %vm6223, %v6224, %v6222
        %v6226 = vrsqrt.pop %v6174
        %v6227 = vmul.f32 %v6174, %v6226
        %vm6228 = vcmp.eq.f32.partialorder %v6174, inf
        %v6229 = vsel %vm6228, %v6174, %v6227
        %vm6230 = vcmp.eq.f32.partialorder %v6174, 0.0
        %v6231 = vand.u32 %v6174, 2147483648
        %v6232 = vsel %vm6230, %v6231, %v6229
        %v6233 = vrsqrt.pop %v6175
        %v6234 = vmul.f32 %v6175, %v6233
        %vm6235 = vcmp.eq.f32.partialorder %v6175, inf
        %v6236 = vsel %vm6235, %v6175, %v6234
        %vm6237 = vcmp.eq.f32.partialorder %v6175, 0.0
        %v6238 = vand.u32 %v6175, 2147483648
        %v6239 = vsel %vm6237, %v6238, %v6236
        %v6240 = vrsqrt.pop %v6176
        %v6241 = vmul.f32 %v6176, %v6240
        %vm6242 = vcmp.eq.f32.partialorder %v6176, inf
        %v6243 = vsel %vm6242, %v6176, %v6241
        %vm6244 = vcmp.eq.f32.partialorder %v6176, 0.0
        %v6245 = vand.u32 %v6176, 2147483648
        %v6246 = vsel %vm6244, %v6245, %v6243
        %v6247 = vrsqrt.pop %v6177
        %v6248 = vmul.f32 %v6177, %v6247
        %vm6249 = vcmp.eq.f32.partialorder %v6177, inf
        %v6250 = vsel %vm6249, %v6177, %v6248
        %vm6251 = vcmp.eq.f32.partialorder %v6177, 0.0
        %v6252 = vand.u32 %v6177, 2147483648
        %v6253 = vsel %vm6251, %v6252, %v6250
        %v6254 = vrsqrt.pop %v6178
        %v6255 = vmul.f32 %v6178, %v6254
        %vm6256 = vcmp.eq.f32.partialorder %v6178, inf
        %v6257 = vsel %vm6256, %v6178, %v6255
        %vm6258 = vcmp.eq.f32.partialorder %v6178, 0.0
        %v6259 = vand.u32 %v6178, 2147483648
        %v6260 = vsel %vm6258, %v6259, %v6257
        %v6261 = vrsqrt.pop %v6179
        %v6262 = vmul.f32 %v6179, %v6261
        %vm6263 = vcmp.eq.f32.partialorder %v6179, inf
        %v6264 = vsel %vm6263, %v6179, %v6262
        %vm6265 = vcmp.eq.f32.partialorder %v6179, 0.0
        %v6266 = vand.u32 %v6179, 2147483648
        %v6267 = vsel %vm6265, %v6266, %v6264
        %v6268 = vrsqrt.pop %v6180
        %v6269 = vmul.f32 %v6180, %v6268
        %vm6270 = vcmp.eq.f32.partialorder %v6180, inf
        %v6271 = vsel %vm6270, %v6180, %v6269
        %vm6272 = vcmp.eq.f32.partialorder %v6180, 0.0
        %v6273 = vand.u32 %v6180, 2147483648
        %v6274 = vsel %vm6272, %v6273, %v6271
        %v6275 = vrsqrt.pop %v6181
        %v6276 = vmul.f32 %v6181, %v6275
        %vm6277 = vcmp.eq.f32.partialorder %v6181, inf
        %v6278 = vsel %vm6277, %v6181, %v6276
        %vm6279 = vcmp.eq.f32.partialorder %v6181, 0.0
        %v6280 = vand.u32 %v6181, 2147483648
        %v6281 = vsel %vm6279, %v6280, %v6278
        %v6282 = vrsqrt.pop %v6182
        %v6283 = vmul.f32 %v6182, %v6282
        %vm6284 = vcmp.eq.f32.partialorder %v6182, inf
        %v6285 = vsel %vm6284, %v6182, %v6283
        %vm6286 = vcmp.eq.f32.partialorder %v6182, 0.0
        %v6287 = vand.u32 %v6182, 2147483648
        %v6288 = vsel %vm6286, %v6287, %v6285
        %v6289 = vrsqrt.pop %v6183
        %v6290 = vmul.f32 %v6183, %v6289
        %vm6291 = vcmp.eq.f32.partialorder %v6183, inf
        %v6292 = vsel %vm6291, %v6183, %v6290
        %vm6293 = vcmp.eq.f32.partialorder %v6183, 0.0
        %v6294 = vand.u32 %v6183, 2147483648
        %v6295 = vsel %vm6293, %v6294, %v6292
        %v6296 = vadd.f32 %v6190, 1e-06
        %v6297 = vadd.f32 %v6197, 1e-06
        %v6298 = vadd.f32 %v6204, 1e-06
        %v6299 = vadd.f32 %v6211, 1e-06
        %v6300 = vadd.f32 %v6218, 1e-06
        %v6301 = vadd.f32 %v6225, 1e-06
        %v6302 = vadd.f32 %v6232, 1e-06
        %v6303 = vadd.f32 %v6239, 1e-06
        %v6304 = vadd.f32 %v6246, 1e-06
        %v6305 = vadd.f32 %v6253, 1e-06
        %v6306 = vadd.f32 %v6260, 1e-06
        %v6307 = vadd.f32 %v6267, 1e-06
        %v6308 = vadd.f32 %v6274, 1e-06
        %v6309 = vadd.f32 %v6281, 1e-06
        %v6310 = vadd.f32 %v6288, 1e-06
        %v6311 = vadd.f32 %v6295, 1e-06
        %v6312 = vrcp.pop %v6296
        %v6313 = vrcp.pop %v6297
        %v6314 = vrcp.pop %v6298
        %v6315 = vrcp.pop %v6299
        %v6316 = vrcp.pop %v6300
        %v6317 = vrcp.pop %v6301
        %v6318 = vrcp.pop %v6302
        %v6319 = vrcp.pop %v6303
        %v6320 = vrcp.pop %v6304
        %v6321 = vrcp.pop %v6305
        %v6322 = vrcp.pop %v6306
        %v6323 = vrcp.pop %v6307
        %v6324 = vrcp.pop %v6308
        %v6325 = vrcp.pop %v6309
        %v6326 = vrcp.pop %v6310
        %v6327 = vrcp.pop %v6311
        %v6328 = vmul.f32 %v6088, %v6312
        %v6329 = vmul.f32 %v6089, %v6313
        %v6330 = vmul.f32 %v6090, %v6314
        %v6331 = vmul.f32 %v6091, %v6315
        %v6332 = vmul.f32 %v6092, %v6316
        %v6333 = vmul.f32 %v6093, %v6317
        %v6334 = vmul.f32 %v6094, %v6318
        %v6335 = vmul.f32 %v6095, %v6319
        %v6336 = vmul.f32 %v6096, %v6320
        %v6337 = vmul.f32 %v6097, %v6321
        %v6338 = vmul.f32 %v6098, %v6322
        %v6339 = vmul.f32 %v6099, %v6323
        %v6340 = vmul.f32 %v6100, %v6324
        %v6341 = vmul.f32 %v6101, %v6325
        %v6342 = vmul.f32 %v6102, %v6326
        %v6343 = vmul.f32 %v6103, %v6327
        %v6345 = vlaneseq
        %v6346 = vshrl.u32 %v6345, 7
        %v6347 = vsub.s32 0, %v6346
        %v6348 = vrot.slane %v6022, %v6347
        %v6350 = vmul.f32 %v6348, %v6328
        %v6351 = vmul.f32 %v6348, %v6329
        %v6352 = vmul.f32 %v6348, %v6330
        %v6353 = vmul.f32 %v6348, %v6331
        %v6354 = vmul.f32 %v6348, %v6332
        %v6355 = vmul.f32 %v6348, %v6333
        %v6356 = vmul.f32 %v6348, %v6334
        %v6357 = vmul.f32 %v6348, %v6335
        %v6358 = vmul.f32 %v6348, %v6336
        %v6359 = vmul.f32 %v6348, %v6337
        %v6360 = vmul.f32 %v6348, %v6338
        %v6361 = vmul.f32 %v6348, %v6339
        %v6362 = vmul.f32 %v6348, %v6340
        %v6363 = vmul.f32 %v6348, %v6341
        %v6364 = vmul.f32 %v6348, %v6342
        %v6365 = vmul.f32 %v6348, %v6343
        %v6367 = vlaneseq
        %v6368 = vshrl.u32 %v6367, 7
        %v6369 = vsub.s32 0, %v6368
        %v6370 = vrot.slane %v6023, %v6369
        %v6372 = vadd.f32 %v6350, %v6370
        %v6373 = vadd.f32 %v6351, %v6370
        %v6374 = vadd.f32 %v6352, %v6370
        %v6375 = vadd.f32 %v6353, %v6370
        %v6376 = vadd.f32 %v6354, %v6370
        %v6377 = vadd.f32 %v6355, %v6370
        %v6378 = vadd.f32 %v6356, %v6370
        %v6379 = vadd.f32 %v6357, %v6370
        %v6380 = vadd.f32 %v6358, %v6370
        %v6381 = vadd.f32 %v6359, %v6370
        %v6382 = vadd.f32 %v6360, %v6370
        %v6383 = vadd.f32 %v6361, %v6370
        %v6384 = vadd.f32 %v6362, %v6370
        %v6385 = vadd.f32 %v6363, %v6370
        %v6386 = vadd.f32 %v6364, %v6370
        %v6387 = vadd.f32 %v6365, %v6370
        %v6388 = vld [vmem:[%s874] sm:$0x1]
        %v6389 = vrot.slane %v6372, 7
        %v6390 = vrot.slane %v6373, 7
        %v6391 = vrot.slane %v6374, 7
        %v6392 = vrot.slane %v6375, 7
        %v6393 = vrot.slane %v6376, 7
        %v6394 = vrot.slane %v6377, 7
        %v6395 = vrot.slane %v6378, 7
        %v6396 = vrot.slane %v6379, 7
        %v6397 = vrot.slane %v6380, 7
        %v6398 = vrot.slane %v6381, 7
        %v6399 = vrot.slane %v6382, 7
        %v6400 = vrot.slane %v6383, 7
        %v6401 = vrot.slane %v6384, 7
        %v6402 = vrot.slane %v6385, 7
        %v6403 = vrot.slane %v6386, 7
        %v6404 = vrot.slane %v6387, 7
        %vm6405 = vcmp.lt.s32.totalorder %v5782, 1
        %v6406 = vsel %vm6405, %v6403, %v6404
        %v6407 = vsel %vm6405, %v6402, %v6403
        %v6408 = vsel %vm6405, %v6401, %v6402
        %v6409 = vsel %vm6405, %v6400, %v6401
        %v6410 = vsel %vm6405, %v6399, %v6400
        %v6411 = vsel %vm6405, %v6398, %v6399
        %v6412 = vsel %vm6405, %v6397, %v6398
        %v6413 = vsel %vm6405, %v6396, %v6397
        %v6414 = vsel %vm6405, %v6395, %v6396
        %v6415 = vsel %vm6405, %v6394, %v6395
        %v6416 = vsel %vm6405, %v6393, %v6394
        %v6417 = vsel %vm6405, %v6392, %v6393
        %v6418 = vsel %vm6405, %v6391, %v6392
        %v6419 = vsel %vm6405, %v6390, %v6391
        %v6420 = vsel %vm6405, %v6389, %v6390
        %v6421 = vsel %vm6405, %v6404, %v6389
        %v6422 = vsel %vm5990, 1, 0
        %v6423 = vsel %vm5991, 1, 0
        %v6424 = vsel %vm5992, 1, 0
        %v6425 = vsel %vm5993, 1, 0
        %v6426 = vsel %vm5994, 1, 0
        %v6427 = vsel %vm5995, 1, 0
        %v6428 = vsel %vm5996, 1, 0
        %v6429 = vsel %vm5997, 1, 0
        %v6430 = vsel %vm5998, 1, 0
        %v6431 = vsel %vm5999, 1, 0
        %v6432 = vsel %vm6000, 1, 0
        %v6433 = vsel %vm6001, 1, 0
        %v6434 = vsel %vm6002, 1, 0
        %v6435 = vsel %vm6003, 1, 0
        %v6436 = vsel %vm6004, 1, 0
        %v6437 = vsel %vm6005, 1, 0
        %vm6438 = vcmp.eq.s32.totalorder %v6422, 1
        %vm6439 = vcmp.eq.s32.totalorder %v6423, 1
        %vm6440 = vcmp.eq.s32.totalorder %v6424, 1
        %vm6441 = vcmp.eq.s32.totalorder %v6425, 1
        %vm6442 = vcmp.eq.s32.totalorder %v6426, 1
        %vm6443 = vcmp.eq.s32.totalorder %v6427, 1
        %vm6444 = vcmp.eq.s32.totalorder %v6428, 1
        %vm6445 = vcmp.eq.s32.totalorder %v6429, 1
        %vm6446 = vcmp.eq.s32.totalorder %v6430, 1
        %vm6447 = vcmp.eq.s32.totalorder %v6431, 1
        %vm6448 = vcmp.eq.s32.totalorder %v6432, 1
        %vm6449 = vcmp.eq.s32.totalorder %v6433, 1
        %vm6450 = vcmp.eq.s32.totalorder %v6434, 1
        %vm6451 = vcmp.eq.s32.totalorder %v6435, 1
        %vm6452 = vcmp.eq.s32.totalorder %v6436, 1
        %vm6453 = vcmp.eq.s32.totalorder %v6437, 1
        %v6454 = vsel %vm6438, %v6421, 0.0
        %v6455 = vsel %vm6439, %v6420, 0.0
        %v6456 = vsel %vm6440, %v6419, 0.0
        %v6457 = vsel %vm6441, %v6418, 0.0
        %v6458 = vsel %vm6442, %v6417, 0.0
        %v6459 = vsel %vm6443, %v6416, 0.0
        %v6460 = vsel %vm6444, %v6415, 0.0
        %v6461 = vsel %vm6445, %v6414, 0.0
        %v6462 = vsel %vm6446, %v6413, 0.0
        %v6463 = vsel %vm6447, %v6412, 0.0
        %v6464 = vsel %vm6448, %v6411, 0.0
        %v6465 = vsel %vm6449, %v6410, 0.0
        %v6466 = vsel %vm6450, %v6409, 0.0
        %v6467 = vsel %vm6451, %v6408, 0.0
        %v6468 = vsel %vm6452, %v6407, 0.0
        %v6469 = vsel %vm6453, %v6406, 0.0
        %v6470 = vrot.slane %v6372, 1
        %v6471 = vrot.slane %v6373, 1
        %v6472 = vrot.slane %v6374, 1
        %v6473 = vrot.slane %v6375, 1
        %v6474 = vrot.slane %v6376, 1
        %v6475 = vrot.slane %v6377, 1
        %v6476 = vrot.slane %v6378, 1
        %v6477 = vrot.slane %v6379, 1
        %v6478 = vrot.slane %v6380, 1
        %v6479 = vrot.slane %v6381, 1
        %v6480 = vrot.slane %v6382, 1
        %v6481 = vrot.slane %v6383, 1
        %v6482 = vrot.slane %v6384, 1
        %v6483 = vrot.slane %v6385, 1
        %v6484 = vrot.slane %v6386, 1
        %v6485 = vrot.slane %v6387, 1
        %vm6486 = vcmp.lt.s32.totalorder %v5782, 7
        %v6487 = vsel %vm6486, %v6484, %v6485
        %v6488 = vsel %vm6486, %v6483, %v6484
        %v6489 = vsel %vm6486, %v6482, %v6483
        %v6490 = vsel %vm6486, %v6481, %v6482
        %v6491 = vsel %vm6486, %v6480, %v6481
        %v6492 = vsel %vm6486, %v6479, %v6480
        %v6493 = vsel %vm6486, %v6478, %v6479
        %v6494 = vsel %vm6486, %v6477, %v6478
        %v6495 = vsel %vm6486, %v6476, %v6477
        %v6496 = vsel %vm6486, %v6475, %v6476
        %v6497 = vsel %vm6486, %v6474, %v6475
        %v6498 = vsel %vm6486, %v6473, %v6474
        %v6499 = vsel %vm6486, %v6472, %v6473
        %v6500 = vsel %vm6486, %v6471, %v6472
        %v6501 = vsel %vm6486, %v6470, %v6471
        %v6502 = vsel %vm6486, %v6485, %v6470
        %v6503 = vsel %vm6006, 1, 0
        %v6504 = vsel %vm6007, 1, 0
        %v6505 = vsel %vm6008, 1, 0
        %v6506 = vsel %vm6009, 1, 0
        %v6507 = vsel %vm6010, 1, 0
        %v6508 = vsel %vm6011, 1, 0
        %v6509 = vsel %vm6012, 1, 0
        %v6510 = vsel %vm6013, 1, 0
        %v6511 = vsel %vm6014, 1, 0
        %v6512 = vsel %vm6015, 1, 0
        %v6513 = vsel %vm6016, 1, 0
        %v6514 = vsel %vm6017, 1, 0
        %v6515 = vsel %vm6018, 1, 0
        %v6516 = vsel %vm6019, 1, 0
        %v6517 = vsel %vm6020, 1, 0
        %v6518 = vsel %vm6021, 1, 0
        %vm6519 = vcmp.eq.s32.totalorder %v6503, 1
        %vm6520 = vcmp.eq.s32.totalorder %v6504, 1
        %vm6521 = vcmp.eq.s32.totalorder %v6505, 1
        %vm6522 = vcmp.eq.s32.totalorder %v6506, 1
        %vm6523 = vcmp.eq.s32.totalorder %v6507, 1
        %vm6524 = vcmp.eq.s32.totalorder %v6508, 1
        %vm6525 = vcmp.eq.s32.totalorder %v6509, 1
        %vm6526 = vcmp.eq.s32.totalorder %v6510, 1
        %vm6527 = vcmp.eq.s32.totalorder %v6511, 1
        %vm6528 = vcmp.eq.s32.totalorder %v6512, 1
        %vm6529 = vcmp.eq.s32.totalorder %v6513, 1
        %vm6530 = vcmp.eq.s32.totalorder %v6514, 1
        %vm6531 = vcmp.eq.s32.totalorder %v6515, 1
        %vm6532 = vcmp.eq.s32.totalorder %v6516, 1
        %vm6533 = vcmp.eq.s32.totalorder %v6517, 1
        %vm6534 = vcmp.eq.s32.totalorder %v6518, 1
        %v6535 = vsel %vm6519, %v6501, 0.0
        %v6536 = vsel %vm6520, %v6500, 0.0
        %v6537 = vsel %vm6521, %v6499, 0.0
        %v6538 = vsel %vm6522, %v6498, 0.0
        %v6539 = vsel %vm6523, %v6497, 0.0
        %v6540 = vsel %vm6524, %v6496, 0.0
        %v6541 = vsel %vm6525, %v6495, 0.0
        %v6542 = vsel %vm6526, %v6494, 0.0
        %v6543 = vsel %vm6527, %v6493, 0.0
        %v6544 = vsel %vm6528, %v6492, 0.0
        %v6545 = vsel %vm6529, %v6491, 0.0
        %v6546 = vsel %vm6530, %v6490, 0.0
        %v6547 = vsel %vm6531, %v6489, 0.0
        %v6548 = vsel %vm6532, %v6488, 0.0
        %v6549 = vsel %vm6533, %v6487, 0.0
        %v6550 = vsel %vm6534, %v6502, 0.0
        %v6551 = vpack.c.bf16 %v6455, %v6454
        %v6552 = vpack.c.bf16 %v6457, %v6456
        %v6553 = vpack.c.bf16 %v6459, %v6458
        %v6554 = vpack.c.bf16 %v6461, %v6460
        %v6555 = vpack.c.bf16 %v6463, %v6462
        %v6556 = vpack.c.bf16 %v6465, %v6464
        %v6557 = vpack.c.bf16 %v6467, %v6466
        %v6558 = vpack.c.bf16 %v6469, %v6468
        %v6559 = vld [vmem:[%s734] sm:$0xf]
        %v6560 = vld [vmem:[%s734 + $0x4] sm:$0xf]
        %v6561 = vld [vmem:[%s734 + $0x8] sm:$0xf]
        %v6562 = vld [vmem:[%s734 + $0xc] sm:$0xf]
        %v6563 = vpack.c.bf16 %v6373, %v6372
        %v6564 = vpack.c.bf16 %v6375, %v6374
        %v6565 = vpack.c.bf16 %v6377, %v6376
        %v6566 = vpack.c.bf16 %v6379, %v6378
        %v6567 = vpack.c.bf16 %v6381, %v6380
        %v6568 = vpack.c.bf16 %v6383, %v6382
        %v6569 = vpack.c.bf16 %v6385, %v6384
        %v6570 = vpack.c.bf16 %v6387, %v6386
        %s6571 = scalar_lea.vmem %s734, 16 [#allocation9]
        %v6572 = vld [vmem:[%s6571] sm:$0xf]
        %v6573 = vld [vmem:[%s6571 + $0x4] sm:$0xf]
        %v6574 = vld [vmem:[%s6571 + $0x8] sm:$0xf]
        %v6575 = vld [vmem:[%s6571 + $0xc] sm:$0xf]
        %v6580 = vunpack.c.l.b16 %v6572
        %v6581 = vunpack.c.l.b16 %v6573
        %v6582 = vunpack.c.l.b16 %v6574
        %v6583 = vunpack.c.l.b16 %v6575
        %v6584 = vpack.c.b16 %v6581, %v6580
        %v6585 = vpack.c.b16 %v6583, %v6582
        %v6589 = vsel %vm1134, %v6563, 0
        %v6592 = vsel %vm1134, %v6564, 0
        %v6595 = vsel %vm1134, %v6565, 0
        %v6598 = vsel %vm1134, %v6566, 0
        %v6601 = vsel %vm1134, %v6567, 0
        %v6604 = vsel %vm1134, %v6568, 0
        %v6607 = vsel %vm1134, %v6569, 0
        %v6610 = vsel %vm1134, %v6570, 0
        %6612 = vmatprep.subr.bf16.mxu0 0
        %6613 = vmatpush1.bf16.msra.mxu0 0
        %6614 = vmatprep.subr.bf16.mxu0 0
        %6615 = vmatpush1.bf16.msra.mxu0 0
        %6616 = vmatprep.subr.bf16.mxu0 0
        %6617 = vmatpush1.bf16.msra.mxu0 0
        %6618 = vmatprep.subr.bf16.mxu0 0
        %6619 = vmatpush1.bf16.msra.mxu0 0
        %6620 = vmatprep.subr.bf16.mxu0 0
        %6621 = vmatpush1.bf16.msra.mxu0 0
        %6622 = vmatprep.subr.bf16.mxu0 0
        %6623 = vmatpush1.bf16.msra.mxu0 0
        %6624 = vmatprep.subr.bf16.mxu0 0
        %6625 = vmatpush1.bf16.msra.mxu0 %v6585
        %6626 = vmatprep.subr.bf16.mxu0 0
        %6627 = vmatpush1.bf16.msra.mxu0 %v6584
        %6628 = vmatprep.subr.bf16.mxu0 0
        %6629 = vmatpush2.bf16.msra.mxu0 0
        %6630 = vmatprep.subr.bf16.mxu0 0
        %6631 = vmatpush2.bf16.msra.mxu0 0
        %6632 = vmatprep.subr.bf16.mxu0 0
        %6633 = vmatpush2.bf16.msra.mxu0 0
        %6634 = vmatprep.subr.bf16.mxu0 0
        %6635 = vmatpush2.bf16.msra.mxu0 0
        %6636 = vmatprep.subr.bf16.mxu0 0
        %6637 = vmatpush2.bf16.msra.mxu0 0
        %6638 = vmatprep.subr.bf16.mxu0 0
        %6639 = vmatpush2.bf16.msra.mxu0 0
        %6640 = vmatprep.subr.bf16.mxu0 0
        %6641 = vmatpush2.bf16.msra.mxu0 0
        %6642 = vmatprep.subr.bf16.mxu0 0
        %6643 = vmatpush2.bf16.msra.mxu0 0
        %6644 = vmatprep.mubr.bf16.mxu0 0
        %6645 = vmatmul.mubr.bf16.gmra.mxu0 %v6589
        %v6646 = vpop.f32.mrf.mxu0
        %v6647 = vadd.f32 0.0, %v6646
        %v6648 = vpop.f32.mrf.mxu0
        %v6649 = vpop.f32.mrf.mxu0
        %v6650 = vadd.f32 0.0, %v6649
        %v6651 = vpop.f32.mrf.mxu0
        %6652 = vmatprep.mubr.bf16.mxu0 0
        %6653 = vmatmul.mubr.bf16.gmra.mxu0 %v6592
        %v6654 = vpop.f32.mrf.mxu0
        %v6655 = vadd.f32 0.0, %v6654
        %v6656 = vpop.f32.mrf.mxu0
        %v6657 = vpop.f32.mrf.mxu0
        %v6658 = vadd.f32 0.0, %v6657
        %v6659 = vpop.f32.mrf.mxu0
        %6660 = vmatprep.mubr.bf16.mxu0 0
        %6661 = vmatmul.mubr.bf16.gmra.mxu0 %v6595
        %v6662 = vpop.f32.mrf.mxu0
        %v6663 = vadd.f32 0.0, %v6662
        %v6664 = vpop.f32.mrf.mxu0
        %v6665 = vpop.f32.mrf.mxu0
        %v6666 = vadd.f32 0.0, %v6665
        %v6667 = vpop.f32.mrf.mxu0
        %6668 = vmatprep.mubr.bf16.mxu0 0
        %6669 = vmatmul.mubr.bf16.gmra.mxu0 %v6598
        %v6670 = vpop.f32.mrf.mxu0
        %v6671 = vadd.f32 0.0, %v6670
        %v6672 = vpop.f32.mrf.mxu0
        %v6673 = vpop.f32.mrf.mxu0
        %v6674 = vadd.f32 0.0, %v6673
        %v6675 = vpop.f32.mrf.mxu0
        %6676 = vmatprep.mubr.bf16.mxu0 0
        %6677 = vmatmul.mubr.bf16.gmra.mxu0 %v6601
        %v6678 = vpop.f32.mrf.mxu0
        %v6679 = vadd.f32 0.0, %v6678
        %v6680 = vpop.f32.mrf.mxu0
        %v6681 = vpop.f32.mrf.mxu0
        %v6682 = vadd.f32 0.0, %v6681
        %v6683 = vpop.f32.mrf.mxu0
        %6684 = vmatprep.mubr.bf16.mxu0 0
        %6685 = vmatmul.mubr.bf16.gmra.mxu0 %v6604
        %v6686 = vpop.f32.mrf.mxu0
        %v6687 = vadd.f32 0.0, %v6686
        %v6688 = vpop.f32.mrf.mxu0
        %v6689 = vpop.f32.mrf.mxu0
        %v6690 = vadd.f32 0.0, %v6689
        %v6691 = vpop.f32.mrf.mxu0
        %6692 = vmatprep.mubr.bf16.mxu0 0
        %6693 = vmatmul.mubr.bf16.gmra.mxu0 %v6607
        %v6694 = vpop.f32.mrf.mxu0
        %v6695 = vadd.f32 0.0, %v6694
        %v6696 = vpop.f32.mrf.mxu0
        %v6697 = vpop.f32.mrf.mxu0
        %v6698 = vadd.f32 0.0, %v6697
        %v6699 = vpop.f32.mrf.mxu0
        %6700 = vmatprep.mubr.bf16.mxu0 0
        %6701 = vmatmul.mubr.bf16.gmra.mxu0 %v6610
        %v6702 = vpop.f32.mrf.mxu0
        %v6703 = vadd.f32 0.0, %v6702
        %v6704 = vpop.f32.mrf.mxu0
        %v6705 = vpop.f32.mrf.mxu0
        %v6706 = vadd.f32 0.0, %v6705
        %v6707 = vpop.f32.mrf.mxu0
        %6708 = vdwg.mxu0
        %v6713 = vunpack.c.l.b16 %v6559
        %v6714 = vunpack.c.l.b16 %v6560
        %v6715 = vunpack.c.l.b16 %v6561
        %v6716 = vunpack.c.l.b16 %v6562
        %v6717 = vpack.c.b16 %v6714, %v6713
        %v6718 = vpack.c.b16 %v6716, %v6715
        %v6722 = vsel %vm1134, %v6551, 0
        %v6725 = vsel %vm1134, %v6552, 0
        %v6728 = vsel %vm1134, %v6553, 0
        %v6731 = vsel %vm1134, %v6554, 0
        %v6734 = vsel %vm1134, %v6555, 0
        %v6737 = vsel %vm1134, %v6556, 0
        %v6740 = vsel %vm1134, %v6557, 0
        %v6743 = vsel %vm1134, %v6558, 0
        %6745 = vmatprep.subr.bf16.mxu0 0
        %6746 = vmatpush1.bf16.msra.mxu0 0
        %6747 = vmatprep.subr.bf16.mxu0 0
        %6748 = vmatpush1.bf16.msra.mxu0 0
        %6749 = vmatprep.subr.bf16.mxu0 0
        %6750 = vmatpush1.bf16.msra.mxu0 0
        %6751 = vmatprep.subr.bf16.mxu0 0
        %6752 = vmatpush1.bf16.msra.mxu0 0
        %6753 = vmatprep.subr.bf16.mxu0 0
        %6754 = vmatpush1.bf16.msra.mxu0 0
        %6755 = vmatprep.subr.bf16.mxu0 0
        %6756 = vmatpush1.bf16.msra.mxu0 0
        %6757 = vmatprep.subr.bf16.mxu0 0
        %6758 = vmatpush1.bf16.msra.mxu0 %v6718
        %6759 = vmatprep.subr.bf16.mxu0 0
        %6760 = vmatpush1.bf16.msra.mxu0 %v6717
        %6761 = vmatprep.subr.bf16.mxu0 0
        %6762 = vmatpush2.bf16.msra.mxu0 0
        %6763 = vmatprep.subr.bf16.mxu0 0
        %6764 = vmatpush2.bf16.msra.mxu0 0
        %6765 = vmatprep.subr.bf16.mxu0 0
        %6766 = vmatpush2.bf16.msra.mxu0 0
        %6767 = vmatprep.subr.bf16.mxu0 0
        %6768 = vmatpush2.bf16.msra.mxu0 0
        %6769 = vmatprep.subr.bf16.mxu0 0
        %6770 = vmatpush2.bf16.msra.mxu0 0
        %6771 = vmatprep.subr.bf16.mxu0 0
        %6772 = vmatpush2.bf16.msra.mxu0 0
        %6773 = vmatprep.subr.bf16.mxu0 0
        %6774 = vmatpush2.bf16.msra.mxu0 0
        %6775 = vmatprep.subr.bf16.mxu0 0
        %6776 = vmatpush2.bf16.msra.mxu0 0
        %6777 = vmatprep.mubr.bf16.mxu0 0
        %6778 = vmatmul.mubr.bf16.gmra.mxu0 %v6722
        %v6779 = vpop.f32.mrf.mxu0
        %v6780 = vadd.f32 %v6647, %v6779
        %v6781 = vpop.f32.mrf.mxu0
        %v6782 = vpop.f32.mrf.mxu0
        %v6783 = vadd.f32 %v6650, %v6782
        %v6784 = vpop.f32.mrf.mxu0
        %6785 = vmatprep.mubr.bf16.mxu0 0
        %6786 = vmatmul.mubr.bf16.gmra.mxu0 %v6725
        %v6787 = vpop.f32.mrf.mxu0
        %v6788 = vadd.f32 %v6655, %v6787
        %v6789 = vpop.f32.mrf.mxu0
        %v6790 = vpop.f32.mrf.mxu0
        %v6791 = vadd.f32 %v6658, %v6790
        %v6792 = vpop.f32.mrf.mxu0
        %6793 = vmatprep.mubr.bf16.mxu0 0
        %6794 = vmatmul.mubr.bf16.gmra.mxu0 %v6728
        %v6795 = vpop.f32.mrf.mxu0
        %v6796 = vadd.f32 %v6663, %v6795
        %v6797 = vpop.f32.mrf.mxu0
        %v6798 = vpop.f32.mrf.mxu0
        %v6799 = vadd.f32 %v6666, %v6798
        %v6800 = vpop.f32.mrf.mxu0
        %6801 = vmatprep.mubr.bf16.mxu0 0
        %6802 = vmatmul.mubr.bf16.gmra.mxu0 %v6731
        %v6803 = vpop.f32.mrf.mxu0
        %v6804 = vadd.f32 %v6671, %v6803
        %v6805 = vpop.f32.mrf.mxu0
        %v6806 = vpop.f32.mrf.mxu0
        %v6807 = vadd.f32 %v6674, %v6806
        %v6808 = vpop.f32.mrf.mxu0
        %6809 = vmatprep.mubr.bf16.mxu0 0
        %6810 = vmatmul.mubr.bf16.gmra.mxu0 %v6734
        %v6811 = vpop.f32.mrf.mxu0
        %v6812 = vadd.f32 %v6679, %v6811
        %v6813 = vpop.f32.mrf.mxu0
        %v6814 = vpop.f32.mrf.mxu0
        %v6815 = vadd.f32 %v6682, %v6814
        %v6816 = vpop.f32.mrf.mxu0
        %6817 = vmatprep.mubr.bf16.mxu0 0
        %6818 = vmatmul.mubr.bf16.gmra.mxu0 %v6737
        %v6819 = vpop.f32.mrf.mxu0
        %v6820 = vadd.f32 %v6687, %v6819
        %v6821 = vpop.f32.mrf.mxu0
        %v6822 = vpop.f32.mrf.mxu0
        %v6823 = vadd.f32 %v6690, %v6822
        %v6824 = vpop.f32.mrf.mxu0
        %6825 = vmatprep.mubr.bf16.mxu0 0
        %6826 = vmatmul.mubr.bf16.gmra.mxu0 %v6740
        %v6827 = vpop.f32.mrf.mxu0
        %v6828 = vadd.f32 %v6695, %v6827
        %v6829 = vpop.f32.mrf.mxu0
        %v6830 = vpop.f32.mrf.mxu0
        %v6831 = vadd.f32 %v6698, %v6830
        %v6832 = vpop.f32.mrf.mxu0
        %6833 = vmatprep.mubr.bf16.mxu0 0
        %6834 = vmatmul.mubr.bf16.gmra.mxu0 %v6743
        %v6835 = vpop.f32.mrf.mxu0
        %v6836 = vadd.f32 %v6703, %v6835
        %v6837 = vpop.f32.mrf.mxu0
        %v6838 = vpop.f32.mrf.mxu0
        %v6839 = vadd.f32 %v6706, %v6838
        %v6840 = vpop.f32.mrf.mxu0
        %6841 = vdwg.mxu0
        %v6842 = vpack.c.bf16 %v6536, %v6535
        %v6843 = vpack.c.bf16 %v6538, %v6537
        %v6844 = vpack.c.bf16 %v6540, %v6539
        %v6845 = vpack.c.bf16 %v6542, %v6541
        %v6846 = vpack.c.bf16 %v6544, %v6543
        %v6847 = vpack.c.bf16 %v6546, %v6545
        %v6848 = vpack.c.bf16 %v6548, %v6547
        %v6849 = vpack.c.bf16 %v6550, %v6549
        %s6850 = scalar_lea.vmem %s734, 32 [#allocation9]
        %v6851 = vld [vmem:[%s6850] sm:$0xf]
        %v6852 = vld [vmem:[%s6850 + $0x4] sm:$0xf]
        %v6853 = vld [vmem:[%s6850 + $0x8] sm:$0xf]
        %v6854 = vld [vmem:[%s6850 + $0xc] sm:$0xf]
        %v6859 = vunpack.c.l.b16 %v6851
        %v6860 = vunpack.c.l.b16 %v6852
        %v6861 = vunpack.c.l.b16 %v6853
        %v6862 = vunpack.c.l.b16 %v6854
        %v6863 = vpack.c.b16 %v6860, %v6859
        %v6864 = vpack.c.b16 %v6862, %v6861
        %v6868 = vsel %vm1134, %v6842, 0
        %v6871 = vsel %vm1134, %v6843, 0
        %v6874 = vsel %vm1134, %v6844, 0
        %v6877 = vsel %vm1134, %v6845, 0
        %v6880 = vsel %vm1134, %v6846, 0
        %v6883 = vsel %vm1134, %v6847, 0
        %v6886 = vsel %vm1134, %v6848, 0
        %v6889 = vsel %vm1134, %v6849, 0
        %6891 = vmatprep.subr.bf16.mxu0 0
        %6892 = vmatpush1.bf16.msra.mxu0 0
        %6893 = vmatprep.subr.bf16.mxu0 0
        %6894 = vmatpush1.bf16.msra.mxu0 0
        %6895 = vmatprep.subr.bf16.mxu0 0
        %6896 = vmatpush1.bf16.msra.mxu0 0
        %6897 = vmatprep.subr.bf16.mxu0 0
        %6898 = vmatpush1.bf16.msra.mxu0 0
        %6899 = vmatprep.subr.bf16.mxu0 0
        %6900 = vmatpush1.bf16.msra.mxu0 0
        %6901 = vmatprep.subr.bf16.mxu0 0
        %6902 = vmatpush1.bf16.msra.mxu0 0
        %6903 = vmatprep.subr.bf16.mxu0 0
        %6904 = vmatpush1.bf16.msra.mxu0 %v6864
        %6905 = vmatprep.subr.bf16.mxu0 0
        %6906 = vmatpush1.bf16.msra.mxu0 %v6863
        %6907 = vmatprep.subr.bf16.mxu0 0
        %6908 = vmatpush2.bf16.msra.mxu0 0
        %6909 = vmatprep.subr.bf16.mxu0 0
        %6910 = vmatpush2.bf16.msra.mxu0 0
        %6911 = vmatprep.subr.bf16.mxu0 0
        %6912 = vmatpush2.bf16.msra.mxu0 0
        %6913 = vmatprep.subr.bf16.mxu0 0
        %6914 = vmatpush2.bf16.msra.mxu0 0
        %6915 = vmatprep.subr.bf16.mxu0 0
        %6916 = vmatpush2.bf16.msra.mxu0 0
        %6917 = vmatprep.subr.bf16.mxu0 0
        %6918 = vmatpush2.bf16.msra.mxu0 0
        %6919 = vmatprep.subr.bf16.mxu0 0
        %6920 = vmatpush2.bf16.msra.mxu0 0
        %6921 = vmatprep.subr.bf16.mxu0 0
        %6922 = vmatpush2.bf16.msra.mxu0 0
        %6923 = vmatprep.mubr.bf16.mxu0 0
        %6924 = vmatmul.mubr.bf16.gmra.mxu0 %v6868
        %v6925 = vpop.f32.mrf.mxu0
        %v6926 = vadd.f32 0.0, %v6925
        %v6927 = vpop.f32.mrf.mxu0
        %v6928 = vpop.f32.mrf.mxu0
        %v6929 = vadd.f32 0.0, %v6928
        %v6930 = vpop.f32.mrf.mxu0
        %6931 = vmatprep.mubr.bf16.mxu0 0
        %6932 = vmatmul.mubr.bf16.gmra.mxu0 %v6871
        %v6933 = vpop.f32.mrf.mxu0
        %v6934 = vadd.f32 0.0, %v6933
        %v6935 = vpop.f32.mrf.mxu0
        %v6936 = vpop.f32.mrf.mxu0
        %v6937 = vadd.f32 0.0, %v6936
        %v6938 = vpop.f32.mrf.mxu0
        %6939 = vmatprep.mubr.bf16.mxu0 0
        %6940 = vmatmul.mubr.bf16.gmra.mxu0 %v6874
        %v6941 = vpop.f32.mrf.mxu0
        %v6942 = vadd.f32 0.0, %v6941
        %v6943 = vpop.f32.mrf.mxu0
        %v6944 = vpop.f32.mrf.mxu0
        %v6945 = vadd.f32 0.0, %v6944
        %v6946 = vpop.f32.mrf.mxu0
        %6947 = vmatprep.mubr.bf16.mxu0 0
        %6948 = vmatmul.mubr.bf16.gmra.mxu0 %v6877
        %v6949 = vpop.f32.mrf.mxu0
        %v6950 = vadd.f32 0.0, %v6949
        %v6951 = vpop.f32.mrf.mxu0
        %v6952 = vpop.f32.mrf.mxu0
        %v6953 = vadd.f32 0.0, %v6952
        %v6954 = vpop.f32.mrf.mxu0
        %6955 = vmatprep.mubr.bf16.mxu0 0
        %6956 = vmatmul.mubr.bf16.gmra.mxu0 %v6880
        %v6957 = vpop.f32.mrf.mxu0
        %v6958 = vadd.f32 0.0, %v6957
        %v6959 = vpop.f32.mrf.mxu0
        %v6960 = vpop.f32.mrf.mxu0
        %v6961 = vadd.f32 0.0, %v6960
        %v6962 = vpop.f32.mrf.mxu0
        %6963 = vmatprep.mubr.bf16.mxu0 0
        %6964 = vmatmul.mubr.bf16.gmra.mxu0 %v6883
        %v6965 = vpop.f32.mrf.mxu0
        %v6966 = vadd.f32 0.0, %v6965
        %v6967 = vpop.f32.mrf.mxu0
        %v6968 = vpop.f32.mrf.mxu0
        %v6969 = vadd.f32 0.0, %v6968
        %v6970 = vpop.f32.mrf.mxu0
        %6971 = vmatprep.mubr.bf16.mxu0 0
        %6972 = vmatmul.mubr.bf16.gmra.mxu0 %v6886
        %v6973 = vpop.f32.mrf.mxu0
        %v6974 = vadd.f32 0.0, %v6973
        %v6975 = vpop.f32.mrf.mxu0
        %v6976 = vpop.f32.mrf.mxu0
        %v6977 = vadd.f32 0.0, %v6976
        %v6978 = vpop.f32.mrf.mxu0
        %6979 = vmatprep.mubr.bf16.mxu0 0
        %6980 = vmatmul.mubr.bf16.gmra.mxu0 %v6889
        %v6981 = vpop.f32.mrf.mxu0
        %v6982 = vadd.f32 0.0, %v6981
        %v6983 = vpop.f32.mrf.mxu0
        %v6984 = vpop.f32.mrf.mxu0
        %v6985 = vadd.f32 0.0, %v6984
        %v6986 = vpop.f32.mrf.mxu0
        %6987 = vdwg.mxu0
        %v6988 = vadd.f32 %v6780, %v6926
        %v6989 = vadd.f32 %v6783, %v6929
        %v6990 = vadd.f32 %v6788, %v6934
        %v6991 = vadd.f32 %v6791, %v6937
        %v6992 = vadd.f32 %v6796, %v6942
        %v6993 = vadd.f32 %v6799, %v6945
        %v6994 = vadd.f32 %v6804, %v6950
        %v6995 = vadd.f32 %v6807, %v6953
        %v6996 = vadd.f32 %v6812, %v6958
        %v6997 = vadd.f32 %v6815, %v6961
        %v6998 = vadd.f32 %v6820, %v6966
        %v6999 = vadd.f32 %v6823, %v6969
        %v7000 = vadd.f32 %v6828, %v6974
        %v7001 = vadd.f32 %v6831, %v6977
        %v7002 = vadd.f32 %v6836, %v6982
        %v7003 = vadd.f32 %v6839, %v6985
        %v7005 = vlaneseq
        %v7006 = vshrl.u32 %v7005, 7
        %v7007 = vsub.s32 0, %v7006
        %v7008 = vrot.slane %v6388, %v7007
        %v7010 = vadd.f32 %v6988, %v7008
        %v7011 = vadd.f32 %v6989, %v7008
        %v7012 = vadd.f32 %v6990, %v7008
        %v7013 = vadd.f32 %v6991, %v7008
        %v7014 = vadd.f32 %v6992, %v7008
        %v7015 = vadd.f32 %v6993, %v7008
        %v7016 = vadd.f32 %v6994, %v7008
        %v7017 = vadd.f32 %v6995, %v7008
        %v7018 = vadd.f32 %v6996, %v7008
        %v7019 = vadd.f32 %v6997, %v7008
        %v7020 = vadd.f32 %v6998, %v7008
        %v7021 = vadd.f32 %v6999, %v7008
        %v7022 = vadd.f32 %v7000, %v7008
        %v7023 = vadd.f32 %v7001, %v7008
        %v7024 = vadd.f32 %v7002, %v7008
        %v7025 = vadd.f32 %v7003, %v7008
        %v7026 = vmax.f32 %v7010, 0.0
        %v7027 = vmax.f32 %v7011, 0.0
        %v7028 = vmax.f32 %v7012, 0.0
        %v7029 = vmax.f32 %v7013, 0.0
        %v7030 = vmax.f32 %v7014, 0.0
        %v7031 = vmax.f32 %v7015, 0.0
        %v7032 = vmax.f32 %v7016, 0.0
        %v7033 = vmax.f32 %v7017, 0.0
        %v7034 = vmax.f32 %v7018, 0.0
        %v7035 = vmax.f32 %v7019, 0.0
        %v7036 = vmax.f32 %v7020, 0.0
        %v7037 = vmax.f32 %v7021, 0.0
        %v7038 = vmax.f32 %v7022, 0.0
        %v7039 = vmax.f32 %v7023, 0.0
        %v7040 = vmax.f32 %v7024, 0.0
        %v7041 = vmax.f32 %v7025, 0.0
        %v7042 = vld [vmem:[%s882] sm:$0x1]
        %v7043 = vrot.slane %v7026, 7
        %v7044 = vrot.slane %v7027, 7
        %v7045 = vrot.slane %v7028, 7
        %v7046 = vrot.slane %v7029, 7
        %v7047 = vrot.slane %v7030, 7
        %v7048 = vrot.slane %v7031, 7
        %v7049 = vrot.slane %v7032, 7
        %v7050 = vrot.slane %v7033, 7
        %v7051 = vrot.slane %v7034, 7
        %v7052 = vrot.slane %v7035, 7
        %v7053 = vrot.slane %v7036, 7
        %v7054 = vrot.slane %v7037, 7
        %v7055 = vrot.slane %v7038, 7
        %v7056 = vrot.slane %v7039, 7
        %v7057 = vrot.slane %v7040, 7
        %v7058 = vrot.slane %v7041, 7
        %v7059 = vsel %vm6405, %v7057, %v7058
        %v7060 = vsel %vm6405, %v7056, %v7057
        %v7061 = vsel %vm6405, %v7055, %v7056
        %v7062 = vsel %vm6405, %v7054, %v7055
        %v7063 = vsel %vm6405, %v7053, %v7054
        %v7064 = vsel %vm6405, %v7052, %v7053
        %v7065 = vsel %vm6405, %v7051, %v7052
        %v7066 = vsel %vm6405, %v7050, %v7051
        %v7067 = vsel %vm6405, %v7049, %v7050
        %v7068 = vsel %vm6405, %v7048, %v7049
        %v7069 = vsel %vm6405, %v7047, %v7048
        %v7070 = vsel %vm6405, %v7046, %v7047
        %v7071 = vsel %vm6405, %v7045, %v7046
        %v7072 = vsel %vm6405, %v7044, %v7045
        %v7073 = vsel %vm6405, %v7043, %v7044
        %v7074 = vsel %vm6405, %v7058, %v7043
        %v7075 = vsel %vm6438, %v7074, 0.0
        %v7076 = vsel %vm6439, %v7073, 0.0
        %v7077 = vsel %vm6440, %v7072, 0.0
        %v7078 = vsel %vm6441, %v7071, 0.0
        %v7079 = vsel %vm6442, %v7070, 0.0
        %v7080 = vsel %vm6443, %v7069, 0.0
        %v7081 = vsel %vm6444, %v7068, 0.0
        %v7082 = vsel %vm6445, %v7067, 0.0
        %v7083 = vsel %vm6446, %v7066, 0.0
        %v7084 = vsel %vm6447, %v7065, 0.0
        %v7085 = vsel %vm6448, %v7064, 0.0
        %v7086 = vsel %vm6449, %v7063, 0.0
        %v7087 = vsel %vm6450, %v7062, 0.0
        %v7088 = vsel %vm6451, %v7061, 0.0
        %v7089 = vsel %vm6452, %v7060, 0.0
        %v7090 = vsel %vm6453, %v7059, 0.0
        %v7091 = vrot.slane %v7026, 1
        %v7092 = vrot.slane %v7027, 1
        %v7093 = vrot.slane %v7028, 1
        %v7094 = vrot.slane %v7029, 1
        %v7095 = vrot.slane %v7030, 1
        %v7096 = vrot.slane %v7031, 1
        %v7097 = vrot.slane %v7032, 1
        %v7098 = vrot.slane %v7033, 1
        %v7099 = vrot.slane %v7034, 1
        %v7100 = vrot.slane %v7035, 1
        %v7101 = vrot.slane %v7036, 1
        %v7102 = vrot.slane %v7037, 1
        %v7103 = vrot.slane %v7038, 1
        %v7104 = vrot.slane %v7039, 1
        %v7105 = vrot.slane %v7040, 1
        %v7106 = vrot.slane %v7041, 1
        %v7107 = vsel %vm6486, %v7105, %v7106
        %v7108 = vsel %vm6486, %v7104, %v7105
        %v7109 = vsel %vm6486, %v7103, %v7104
        %v7110 = vsel %vm6486, %v7102, %v7103
        %v7111 = vsel %vm6486, %v7101, %v7102
        %v7112 = vsel %vm6486, %v7100, %v7101
        %v7113 = vsel %vm6486, %v7099, %v7100
        %v7114 = vsel %vm6486, %v7098, %v7099
        %v7115 = vsel %vm6486, %v7097, %v7098
        %v7116 = vsel %vm6486, %v7096, %v7097
        %v7117 = vsel %vm6486, %v7095, %v7096
        %v7118 = vsel %vm6486, %v7094, %v7095
        %v7119 = vsel %vm6486, %v7093, %v7094
        %v7120 = vsel %vm6486, %v7092, %v7093
        %v7121 = vsel %vm6486, %v7091, %v7092
        %v7122 = vsel %vm6486, %v7106, %v7091
        %v7123 = vsel %vm6519, %v7121, 0.0
        %v7124 = vsel %vm6520, %v7120, 0.0
        %v7125 = vsel %vm6521, %v7119, 0.0
        %v7126 = vsel %vm6522, %v7118, 0.0
        %v7127 = vsel %vm6523, %v7117, 0.0
        %v7128 = vsel %vm6524, %v7116, 0.0
        %v7129 = vsel %vm6525, %v7115, 0.0
        %v7130 = vsel %vm6526, %v7114, 0.0
        %v7131 = vsel %vm6527, %v7113, 0.0
        %v7132 = vsel %vm6528, %v7112, 0.0
        %v7133 = vsel %vm6529, %v7111, 0.0
        %v7134 = vsel %vm6530, %v7110, 0.0
        %v7135 = vsel %vm6531, %v7109, 0.0
        %v7136 = vsel %vm6532, %v7108, 0.0
        %v7137 = vsel %vm6533, %v7107, 0.0
        %v7138 = vsel %vm6534, %v7122, 0.0
        %v7139 = vpack.c.bf16 %v7076, %v7075
        %v7140 = vpack.c.bf16 %v7078, %v7077
        %v7141 = vpack.c.bf16 %v7080, %v7079
        %v7142 = vpack.c.bf16 %v7082, %v7081
        %v7143 = vpack.c.bf16 %v7084, %v7083
        %v7144 = vpack.c.bf16 %v7086, %v7085
        %v7145 = vpack.c.bf16 %v7088, %v7087
        %v7146 = vpack.c.bf16 %v7090, %v7089
        %v7147 = vld [vmem:[%s879] sm:$0xf]
        %v7148 = vld [vmem:[%s879 + $0x4] sm:$0xf]
        %v7149 = vld [vmem:[%s879 + $0x8] sm:$0xf]
        %v7150 = vld [vmem:[%s879 + $0xc] sm:$0xf]
        %v7151 = vld [vmem:[%s879 + $0x10] sm:$0xf]
        %v7152 = vld [vmem:[%s879 + $0x14] sm:$0xf]
        %v7153 = vld [vmem:[%s879 + $0x18] sm:$0xf]
        %v7154 = vld [vmem:[%s879 + $0x1c] sm:$0xf]
        %v7155 = vpack.c.bf16 %v7027, %v7026
        %v7156 = vpack.c.bf16 %v7029, %v7028
        %v7157 = vpack.c.bf16 %v7031, %v7030
        %v7158 = vpack.c.bf16 %v7033, %v7032
        %v7159 = vpack.c.bf16 %v7035, %v7034
        %v7160 = vpack.c.bf16 %v7037, %v7036
        %v7161 = vpack.c.bf16 %v7039, %v7038
        %v7162 = vpack.c.bf16 %v7041, %v7040
        %s7163 = scalar_lea.vmem %s879, 32
        %v7164 = vld [vmem:[%s7163] sm:$0xf]
        %v7165 = vld [vmem:[%s7163 + $0x4] sm:$0xf]
        %v7166 = vld [vmem:[%s7163 + $0x8] sm:$0xf]
        %v7167 = vld [vmem:[%s7163 + $0xc] sm:$0xf]
        %v7168 = vld [vmem:[%s7163 + $0x10] sm:$0xf]
        %v7169 = vld [vmem:[%s7163 + $0x14] sm:$0xf]
        %v7170 = vld [vmem:[%s7163 + $0x18] sm:$0xf]
        %v7171 = vld [vmem:[%s7163 + $0x1c] sm:$0xf]
        %v7180 = vunpack.c.l.b16 %v7164
        %v7181 = vunpack.c.l.b16 %v7165
        %v7182 = vunpack.c.l.b16 %v7166
        %v7183 = vunpack.c.l.b16 %v7167
        %v7184 = vunpack.c.l.b16 %v7168
        %v7185 = vunpack.c.l.b16 %v7169
        %v7186 = vunpack.c.l.b16 %v7170
        %v7187 = vunpack.c.l.b16 %v7171
        %v7188 = vpack.c.b16 %v7181, %v7180
        %v7189 = vpack.c.b16 %v7183, %v7182
        %v7190 = vpack.c.b16 %v7185, %v7184
        %v7191 = vpack.c.b16 %v7187, %v7186
        %vm7196 = vcmask 523264
        %v7198 = vsel %vm7196, %v7155, 0
        %v7201 = vsel %vm7196, %v7156, 0
        %v7204 = vsel %vm7196, %v7157, 0
        %v7207 = vsel %vm7196, %v7158, 0
        %v7210 = vsel %vm7196, %v7159, 0
        %v7213 = vsel %vm7196, %v7160, 0
        %v7216 = vsel %vm7196, %v7161, 0
        %v7219 = vsel %vm7196, %v7162, 0
        %7221 = vmatprep.subr.bf16.mxu0 0
        %7222 = vmatpush1.bf16.msra.mxu0 0
        %7223 = vmatprep.subr.bf16.mxu0 0
        %7224 = vmatpush1.bf16.msra.mxu0 0
        %7225 = vmatprep.subr.bf16.mxu0 0
        %7226 = vmatpush1.bf16.msra.mxu0 0
        %7227 = vmatprep.subr.bf16.mxu0 0
        %7228 = vmatpush1.bf16.msra.mxu0 0
        %7229 = vmatprep.subr.bf16.mxu0 0
        %7230 = vmatpush1.bf16.msra.mxu0 %v7191
        %7231 = vmatprep.subr.bf16.mxu0 0
        %7232 = vmatpush1.bf16.msra.mxu0 %v7190
        %7233 = vmatprep.subr.bf16.mxu0 0
        %7234 = vmatpush1.bf16.msra.mxu0 %v7189
        %7235 = vmatprep.subr.bf16.mxu0 0
        %7236 = vmatpush1.bf16.msra.mxu0 %v7188
        %7237 = vmatprep.subr.bf16.mxu0 0
        %7238 = vmatpush2.bf16.msra.mxu0 0
        %7239 = vmatprep.subr.bf16.mxu0 0
        %7240 = vmatpush2.bf16.msra.mxu0 0
        %7241 = vmatprep.subr.bf16.mxu0 0
        %7242 = vmatpush2.bf16.msra.mxu0 0
        %7243 = vmatprep.subr.bf16.mxu0 0
        %7244 = vmatpush2.bf16.msra.mxu0 0
        %7245 = vmatprep.subr.bf16.mxu0 0
        %7246 = vmatpush2.bf16.msra.mxu0 0
        %7247 = vmatprep.subr.bf16.mxu0 0
        %7248 = vmatpush2.bf16.msra.mxu0 0
        %7249 = vmatprep.subr.bf16.mxu0 0
        %7250 = vmatpush2.bf16.msra.mxu0 0
        %7251 = vmatprep.subr.bf16.mxu0 0
        %7252 = vmatpush2.bf16.msra.mxu0 0
        %7253 = vmatprep.mubr.bf16.mxu0 0
        %7254 = vmatmul.mubr.bf16.gmra.mxu0 %v7198
        %v7255 = vpop.f32.mrf.mxu0
        %v7256 = vadd.f32 0.0, %v7255
        %v7257 = vpop.f32.mrf.mxu0
        %v7258 = vpop.f32.mrf.mxu0
        %v7259 = vadd.f32 0.0, %v7258
        %v7260 = vpop.f32.mrf.mxu0
        %7261 = vmatprep.mubr.bf16.mxu0 0
        %7262 = vmatmul.mubr.bf16.gmra.mxu0 %v7201
        %v7263 = vpop.f32.mrf.mxu0
        %v7264 = vadd.f32 0.0, %v7263
        %v7265 = vpop.f32.mrf.mxu0
        %v7266 = vpop.f32.mrf.mxu0
        %v7267 = vadd.f32 0.0, %v7266
        %v7268 = vpop.f32.mrf.mxu0
        %7269 = vmatprep.mubr.bf16.mxu0 0
        %7270 = vmatmul.mubr.bf16.gmra.mxu0 %v7204
        %v7271 = vpop.f32.mrf.mxu0
        %v7272 = vadd.f32 0.0, %v7271
        %v7273 = vpop.f32.mrf.mxu0
        %v7274 = vpop.f32.mrf.mxu0
        %v7275 = vadd.f32 0.0, %v7274
        %v7276 = vpop.f32.mrf.mxu0
        %7277 = vmatprep.mubr.bf16.mxu0 0
        %7278 = vmatmul.mubr.bf16.gmra.mxu0 %v7207
        %v7279 = vpop.f32.mrf.mxu0
        %v7280 = vadd.f32 0.0, %v7279
        %v7281 = vpop.f32.mrf.mxu0
        %v7282 = vpop.f32.mrf.mxu0
        %v7283 = vadd.f32 0.0, %v7282
        %v7284 = vpop.f32.mrf.mxu0
        %7285 = vmatprep.mubr.bf16.mxu0 0
        %7286 = vmatmul.mubr.bf16.gmra.mxu0 %v7210
        %v7287 = vpop.f32.mrf.mxu0
        %v7288 = vadd.f32 0.0, %v7287
        %v7289 = vpop.f32.mrf.mxu0
        %v7290 = vpop.f32.mrf.mxu0
        %v7291 = vadd.f32 0.0, %v7290
        %v7292 = vpop.f32.mrf.mxu0
        %7293 = vmatprep.mubr.bf16.mxu0 0
        %7294 = vmatmul.mubr.bf16.gmra.mxu0 %v7213
        %v7295 = vpop.f32.mrf.mxu0
        %v7296 = vadd.f32 0.0, %v7295
        %v7297 = vpop.f32.mrf.mxu0
        %v7298 = vpop.f32.mrf.mxu0
        %v7299 = vadd.f32 0.0, %v7298
        %v7300 = vpop.f32.mrf.mxu0
        %7301 = vmatprep.mubr.bf16.mxu0 0
        %7302 = vmatmul.mubr.bf16.gmra.mxu0 %v7216
        %v7303 = vpop.f32.mrf.mxu0
        %v7304 = vadd.f32 0.0, %v7303
        %v7305 = vpop.f32.mrf.mxu0
        %v7306 = vpop.f32.mrf.mxu0
        %v7307 = vadd.f32 0.0, %v7306
        %v7308 = vpop.f32.mrf.mxu0
        %7309 = vmatprep.mubr.bf16.mxu0 0
        %7310 = vmatmul.mubr.bf16.gmra.mxu0 %v7219
        %v7311 = vpop.f32.mrf.mxu0
        %v7312 = vadd.f32 0.0, %v7311
        %v7313 = vpop.f32.mrf.mxu0
        %v7314 = vpop.f32.mrf.mxu0
        %v7315 = vadd.f32 0.0, %v7314
        %v7316 = vpop.f32.mrf.mxu0
        %7317 = vdwg.mxu0
        %v7326 = vunpack.c.l.b16 %v7147
        %v7327 = vunpack.c.l.b16 %v7148
        %v7328 = vunpack.c.l.b16 %v7149
        %v7329 = vunpack.c.l.b16 %v7150
        %v7330 = vunpack.c.l.b16 %v7151
        %v7331 = vunpack.c.l.b16 %v7152
        %v7332 = vunpack.c.l.b16 %v7153
        %v7333 = vunpack.c.l.b16 %v7154
        %v7334 = vpack.c.b16 %v7327, %v7326
        %v7335 = vpack.c.b16 %v7329, %v7328
        %v7336 = vpack.c.b16 %v7331, %v7330
        %v7337 = vpack.c.b16 %v7333, %v7332
        %v7343 = vsel %vm7196, %v7139, 0
        %v7346 = vsel %vm7196, %v7140, 0
        %v7349 = vsel %vm7196, %v7141, 0
        %v7352 = vsel %vm7196, %v7142, 0
        %v7355 = vsel %vm7196, %v7143, 0
        %v7358 = vsel %vm7196, %v7144, 0
        %v7361 = vsel %vm7196, %v7145, 0
        %v7364 = vsel %vm7196, %v7146, 0
        %7366 = vmatprep.subr.bf16.mxu0 0
        %7367 = vmatpush1.bf16.msra.mxu0 0
        %7368 = vmatprep.subr.bf16.mxu0 0
        %7369 = vmatpush1.bf16.msra.mxu0 0
        %7370 = vmatprep.subr.bf16.mxu0 0
        %7371 = vmatpush1.bf16.msra.mxu0 0
        %7372 = vmatprep.subr.bf16.mxu0 0
        %7373 = vmatpush1.bf16.msra.mxu0 0
        %7374 = vmatprep.subr.bf16.mxu0 0
        %7375 = vmatpush1.bf16.msra.mxu0 %v7337
        %7376 = vmatprep.subr.bf16.mxu0 0
        %7377 = vmatpush1.bf16.msra.mxu0 %v7336
        %7378 = vmatprep.subr.bf16.mxu0 0
        %7379 = vmatpush1.bf16.msra.mxu0 %v7335
        %7380 = vmatprep.subr.bf16.mxu0 0
        %7381 = vmatpush1.bf16.msra.mxu0 %v7334
        %7382 = vmatprep.subr.bf16.mxu0 0
        %7383 = vmatpush2.bf16.msra.mxu0 0
        %7384 = vmatprep.subr.bf16.mxu0 0
        %7385 = vmatpush2.bf16.msra.mxu0 0
        %7386 = vmatprep.subr.bf16.mxu0 0
        %7387 = vmatpush2.bf16.msra.mxu0 0
        %7388 = vmatprep.subr.bf16.mxu0 0
        %7389 = vmatpush2.bf16.msra.mxu0 0
        %7390 = vmatprep.subr.bf16.mxu0 0
        %7391 = vmatpush2.bf16.msra.mxu0 0
        %7392 = vmatprep.subr.bf16.mxu0 0
        %7393 = vmatpush2.bf16.msra.mxu0 0
        %7394 = vmatprep.subr.bf16.mxu0 0
        %7395 = vmatpush2.bf16.msra.mxu0 0
        %7396 = vmatprep.subr.bf16.mxu0 0
        %7397 = vmatpush2.bf16.msra.mxu0 0
        %7398 = vmatprep.mubr.bf16.mxu0 0
        %7399 = vmatmul.mubr.bf16.gmra.mxu0 %v7343
        %v7400 = vpop.f32.mrf.mxu0
        %v7401 = vadd.f32 %v7256, %v7400
        %v7402 = vpop.f32.mrf.mxu0
        %v7403 = vpop.f32.mrf.mxu0
        %v7404 = vadd.f32 %v7259, %v7403
        %v7405 = vpop.f32.mrf.mxu0
        %7406 = vmatprep.mubr.bf16.mxu0 0
        %7407 = vmatmul.mubr.bf16.gmra.mxu0 %v7346
        %v7408 = vpop.f32.mrf.mxu0
        %v7409 = vadd.f32 %v7264, %v7408
        %v7410 = vpop.f32.mrf.mxu0
        %v7411 = vpop.f32.mrf.mxu0
        %v7412 = vadd.f32 %v7267, %v7411
        %v7413 = vpop.f32.mrf.mxu0
        %7414 = vmatprep.mubr.bf16.mxu0 0
        %7415 = vmatmul.mubr.bf16.gmra.mxu0 %v7349
        %v7416 = vpop.f32.mrf.mxu0
        %v7417 = vadd.f32 %v7272, %v7416
        %v7418 = vpop.f32.mrf.mxu0
        %v7419 = vpop.f32.mrf.mxu0
        %v7420 = vadd.f32 %v7275, %v7419
        %v7421 = vpop.f32.mrf.mxu0
        %7422 = vmatprep.mubr.bf16.mxu0 0
        %7423 = vmatmul.mubr.bf16.gmra.mxu0 %v7352
        %v7424 = vpop.f32.mrf.mxu0
        %v7425 = vadd.f32 %v7280, %v7424
        %v7426 = vpop.f32.mrf.mxu0
        %v7427 = vpop.f32.mrf.mxu0
        %v7428 = vadd.f32 %v7283, %v7427
        %v7429 = vpop.f32.mrf.mxu0
        %7430 = vmatprep.mubr.bf16.mxu0 0
        %7431 = vmatmul.mubr.bf16.gmra.mxu0 %v7355
        %v7432 = vpop.f32.mrf.mxu0
        %v7433 = vadd.f32 %v7288, %v7432
        %v7434 = vpop.f32.mrf.mxu0
        %v7435 = vpop.f32.mrf.mxu0
        %v7436 = vadd.f32 %v7291, %v7435
        %v7437 = vpop.f32.mrf.mxu0
        %7438 = vmatprep.mubr.bf16.mxu0 0
        %7439 = vmatmul.mubr.bf16.gmra.mxu0 %v7358
        %v7440 = vpop.f32.mrf.mxu0
        %v7441 = vadd.f32 %v7296, %v7440
        %v7442 = vpop.f32.mrf.mxu0
        %v7443 = vpop.f32.mrf.mxu0
        %v7444 = vadd.f32 %v7299, %v7443
        %v7445 = vpop.f32.mrf.mxu0
        %7446 = vmatprep.mubr.bf16.mxu0 0
        %7447 = vmatmul.mubr.bf16.gmra.mxu0 %v7361
        %v7448 = vpop.f32.mrf.mxu0
        %v7449 = vadd.f32 %v7304, %v7448
        %v7450 = vpop.f32.mrf.mxu0
        %v7451 = vpop.f32.mrf.mxu0
        %v7452 = vadd.f32 %v7307, %v7451
        %v7453 = vpop.f32.mrf.mxu0
        %7454 = vmatprep.mubr.bf16.mxu0 0
        %7455 = vmatmul.mubr.bf16.gmra.mxu0 %v7364
        %v7456 = vpop.f32.mrf.mxu0
        %v7457 = vadd.f32 %v7312, %v7456
        %v7458 = vpop.f32.mrf.mxu0
        %v7459 = vpop.f32.mrf.mxu0
        %v7460 = vadd.f32 %v7315, %v7459
        %v7461 = vpop.f32.mrf.mxu0
        %7462 = vdwg.mxu0
        %v7463 = vpack.c.bf16 %v7124, %v7123
        %v7464 = vpack.c.bf16 %v7126, %v7125
        %v7465 = vpack.c.bf16 %v7128, %v7127
        %v7466 = vpack.c.bf16 %v7130, %v7129
        %v7467 = vpack.c.bf16 %v7132, %v7131
        %v7468 = vpack.c.bf16 %v7134, %v7133
        %v7469 = vpack.c.bf16 %v7136, %v7135
        %v7470 = vpack.c.bf16 %v7138, %v7137
        %s7471 = scalar_lea.vmem %s879, 64
        %v7472 = vld [vmem:[%s7471] sm:$0xf]
        %v7473 = vld [vmem:[%s7471 + $0x4] sm:$0xf]
        %v7474 = vld [vmem:[%s7471 + $0x8] sm:$0xf]
        %v7475 = vld [vmem:[%s7471 + $0xc] sm:$0xf]
        %v7476 = vld [vmem:[%s7471 + $0x10] sm:$0xf]
        %v7477 = vld [vmem:[%s7471 + $0x14] sm:$0xf]
        %v7478 = vld [vmem:[%s7471 + $0x18] sm:$0xf]
        %v7479 = vld [vmem:[%s7471 + $0x1c] sm:$0xf]
        %v7488 = vunpack.c.l.b16 %v7472
        %v7489 = vunpack.c.l.b16 %v7473
        %v7490 = vunpack.c.l.b16 %v7474
        %v7491 = vunpack.c.l.b16 %v7475
        %v7492 = vunpack.c.l.b16 %v7476
        %v7493 = vunpack.c.l.b16 %v7477
        %v7494 = vunpack.c.l.b16 %v7478
        %v7495 = vunpack.c.l.b16 %v7479
        %v7496 = vpack.c.b16 %v7489, %v7488
        %v7497 = vpack.c.b16 %v7491, %v7490
        %v7498 = vpack.c.b16 %v7493, %v7492
        %v7499 = vpack.c.b16 %v7495, %v7494
        %v7505 = vsel %vm7196, %v7463, 0
        %v7508 = vsel %vm7196, %v7464, 0
        %v7511 = vsel %vm7196, %v7465, 0
        %v7514 = vsel %vm7196, %v7466, 0
        %v7517 = vsel %vm7196, %v7467, 0
        %v7520 = vsel %vm7196, %v7468, 0
        %v7523 = vsel %vm7196, %v7469, 0
        %v7526 = vsel %vm7196, %v7470, 0
        %7528 = vmatprep.subr.bf16.mxu0 0
        %7529 = vmatpush1.bf16.msra.mxu0 0
        %7530 = vmatprep.subr.bf16.mxu0 0
        %7531 = vmatpush1.bf16.msra.mxu0 0
        %7532 = vmatprep.subr.bf16.mxu0 0
        %7533 = vmatpush1.bf16.msra.mxu0 0
        %7534 = vmatprep.subr.bf16.mxu0 0
        %7535 = vmatpush1.bf16.msra.mxu0 0
        %7536 = vmatprep.subr.bf16.mxu0 0
        %7537 = vmatpush1.bf16.msra.mxu0 %v7499
        %7538 = vmatprep.subr.bf16.mxu0 0
        %7539 = vmatpush1.bf16.msra.mxu0 %v7498
        %7540 = vmatprep.subr.bf16.mxu0 0
        %7541 = vmatpush1.bf16.msra.mxu0 %v7497
        %7542 = vmatprep.subr.bf16.mxu0 0
        %7543 = vmatpush1.bf16.msra.mxu0 %v7496
        %7544 = vmatprep.subr.bf16.mxu0 0
        %7545 = vmatpush2.bf16.msra.mxu0 0
        %7546 = vmatprep.subr.bf16.mxu0 0
        %7547 = vmatpush2.bf16.msra.mxu0 0
        %7548 = vmatprep.subr.bf16.mxu0 0
        %7549 = vmatpush2.bf16.msra.mxu0 0
        %7550 = vmatprep.subr.bf16.mxu0 0
        %7551 = vmatpush2.bf16.msra.mxu0 0
        %7552 = vmatprep.subr.bf16.mxu0 0
        %7553 = vmatpush2.bf16.msra.mxu0 0
        %7554 = vmatprep.subr.bf16.mxu0 0
        %7555 = vmatpush2.bf16.msra.mxu0 0
        %7556 = vmatprep.subr.bf16.mxu0 0
        %7557 = vmatpush2.bf16.msra.mxu0 0
        %7558 = vmatprep.subr.bf16.mxu0 0
        %7559 = vmatpush2.bf16.msra.mxu0 0
        %7560 = vmatprep.mubr.bf16.mxu0 0
        %7561 = vmatmul.mubr.bf16.gmra.mxu0 %v7505
        %v7562 = vpop.f32.mrf.mxu0
        %v7563 = vadd.f32 0.0, %v7562
        %v7564 = vpop.f32.mrf.mxu0
        %v7565 = vpop.f32.mrf.mxu0
        %v7566 = vadd.f32 0.0, %v7565
        %v7567 = vpop.f32.mrf.mxu0
        %7568 = vmatprep.mubr.bf16.mxu0 0
        %7569 = vmatmul.mubr.bf16.gmra.mxu0 %v7508
        %v7570 = vpop.f32.mrf.mxu0
        %v7571 = vadd.f32 0.0, %v7570
        %v7572 = vpop.f32.mrf.mxu0
        %v7573 = vpop.f32.mrf.mxu0
        %v7574 = vadd.f32 0.0, %v7573
        %v7575 = vpop.f32.mrf.mxu0
        %7576 = vmatprep.mubr.bf16.mxu0 0
        %7577 = vmatmul.mubr.bf16.gmra.mxu0 %v7511
        %v7578 = vpop.f32.mrf.mxu0
        %v7579 = vadd.f32 0.0, %v7578
        %v7580 = vpop.f32.mrf.mxu0
        %v7581 = vpop.f32.mrf.mxu0
        %v7582 = vadd.f32 0.0, %v7581
        %v7583 = vpop.f32.mrf.mxu0
        %7584 = vmatprep.mubr.bf16.mxu0 0
        %7585 = vmatmul.mubr.bf16.gmra.mxu0 %v7514
        %v7586 = vpop.f32.mrf.mxu0
        %v7587 = vadd.f32 0.0, %v7586
        %v7588 = vpop.f32.mrf.mxu0
        %v7589 = vpop.f32.mrf.mxu0
        %v7590 = vadd.f32 0.0, %v7589
        %v7591 = vpop.f32.mrf.mxu0
        %7592 = vmatprep.mubr.bf16.mxu0 0
        %7593 = vmatmul.mubr.bf16.gmra.mxu0 %v7517
        %v7594 = vpop.f32.mrf.mxu0
        %v7595 = vadd.f32 0.0, %v7594
        %v7596 = vpop.f32.mrf.mxu0
        %v7597 = vpop.f32.mrf.mxu0
        %v7598 = vadd.f32 0.0, %v7597
        %v7599 = vpop.f32.mrf.mxu0
        %7600 = vmatprep.mubr.bf16.mxu0 0
        %7601 = vmatmul.mubr.bf16.gmra.mxu0 %v7520
        %v7602 = vpop.f32.mrf.mxu0
        %v7603 = vadd.f32 0.0, %v7602
        %v7604 = vpop.f32.mrf.mxu0
        %v7605 = vpop.f32.mrf.mxu0
        %v7606 = vadd.f32 0.0, %v7605
        %v7607 = vpop.f32.mrf.mxu0
        %7608 = vmatprep.mubr.bf16.mxu0 0
        %7609 = vmatmul.mubr.bf16.gmra.mxu0 %v7523
        %v7610 = vpop.f32.mrf.mxu0
        %v7611 = vadd.f32 0.0, %v7610
        %v7612 = vpop.f32.mrf.mxu0
        %v7613 = vpop.f32.mrf.mxu0
        %v7614 = vadd.f32 0.0, %v7613
        %v7615 = vpop.f32.mrf.mxu0
        %7616 = vmatprep.mubr.bf16.mxu0 0
        %7617 = vmatmul.mubr.bf16.gmra.mxu0 %v7526
        %v7618 = vpop.f32.mrf.mxu0
        %v7619 = vadd.f32 0.0, %v7618
        %v7620 = vpop.f32.mrf.mxu0
        %v7621 = vpop.f32.mrf.mxu0
        %v7622 = vadd.f32 0.0, %v7621
        %v7623 = vpop.f32.mrf.mxu0
        %7624 = vdwg.mxu0
        %v7625 = vadd.f32 %v7401, %v7563
        %v7626 = vadd.f32 %v7404, %v7566
        %v7627 = vadd.f32 %v7409, %v7571
        %v7628 = vadd.f32 %v7412, %v7574
        %v7629 = vadd.f32 %v7417, %v7579
        %v7630 = vadd.f32 %v7420, %v7582
        %v7631 = vadd.f32 %v7425, %v7587
        %v7632 = vadd.f32 %v7428, %v7590
        %v7633 = vadd.f32 %v7433, %v7595
        %v7634 = vadd.f32 %v7436, %v7598
        %v7635 = vadd.f32 %v7441, %v7603
        %v7636 = vadd.f32 %v7444, %v7606
        %v7637 = vadd.f32 %v7449, %v7611
        %v7638 = vadd.f32 %v7452, %v7614
        %v7639 = vadd.f32 %v7457, %v7619
        %v7640 = vadd.f32 %v7460, %v7622
        %v7642 = vlaneseq
        %v7643 = vshrl.u32 %v7642, 7
        %v7644 = vsub.s32 0, %v7643
        %v7645 = vrot.slane %v7042, %v7644
        %v7647 = vadd.f32 %v7625, %v7645
        %v7648 = vadd.f32 %v7626, %v7645
        %v7649 = vadd.f32 %v7627, %v7645
        %v7650 = vadd.f32 %v7628, %v7645
        %v7651 = vadd.f32 %v7629, %v7645
        %v7652 = vadd.f32 %v7630, %v7645
        %v7653 = vadd.f32 %v7631, %v7645
        %v7654 = vadd.f32 %v7632, %v7645
        %v7655 = vadd.f32 %v7633, %v7645
        %v7656 = vadd.f32 %v7634, %v7645
        %v7657 = vadd.f32 %v7635, %v7645
        %v7658 = vadd.f32 %v7636, %v7645
        %v7659 = vadd.f32 %v7637, %v7645
        %v7660 = vadd.f32 %v7638, %v7645
        %v7661 = vadd.f32 %v7639, %v7645
        %v7662 = vadd.f32 %v7640, %v7645
        %v7663 = vadd.f32 %v5765, %v7647
        %v7664 = vadd.f32 %v5766, %v7648
        %v7665 = vadd.f32 %v5767, %v7649
        %v7666 = vadd.f32 %v5768, %v7650
        %v7667 = vadd.f32 %v5769, %v7651
        %v7668 = vadd.f32 %v5770, %v7652
        %v7669 = vadd.f32 %v5771, %v7653
        %v7670 = vadd.f32 %v5772, %v7654
        %v7671 = vadd.f32 %v5773, %v7655
        %v7672 = vadd.f32 %v5774, %v7656
        %v7673 = vadd.f32 %v5775, %v7657
        %v7674 = vadd.f32 %v5776, %v7658
        %v7675 = vadd.f32 %v5777, %v7659
        %v7676 = vadd.f32 %v5778, %v7660
        %v7677 = vadd.f32 %v5779, %v7661
        %v7678 = vadd.f32 %v5780, %v7662
        %7679 = vst.msk [vmem:[#allocation2] sm:$0xff] %vm1134, %v7663
        %7680 = vst.msk [vmem:[#allocation2 + $0x8] sm:$0xff] %vm1134, %v7664
        %7681 = vst.msk [vmem:[#allocation2 + $0x10] sm:$0xff] %vm1134, %v7665
        %7682 = vst.msk [vmem:[#allocation2 + $0x18] sm:$0xff] %vm1134, %v7666
        %7683 = vst.msk [vmem:[#allocation2 + $0x20] sm:$0xff] %vm1134, %v7667
        %7684 = vst.msk [vmem:[#allocation2 + $0x28] sm:$0xff] %vm1134, %v7668
        %7685 = vst.msk [vmem:[#allocation2 + $0x30] sm:$0xff] %vm1134, %v7669
        %7686 = vst.msk [vmem:[#allocation2 + $0x38] sm:$0xff] %vm1134, %v7670
        %7687 = vst.msk [vmem:[#allocation2 + $0x40] sm:$0xff] %vm1134, %v7671
        %7688 = vst.msk [vmem:[#allocation2 + $0x48] sm:$0xff] %vm1134, %v7672
        %7689 = vst.msk [vmem:[#allocation2 + $0x50] sm:$0xff] %vm1134, %v7673
        %7690 = vst.msk [vmem:[#allocation2 + $0x58] sm:$0xff] %vm1134, %v7674
        %7691 = vst.msk [vmem:[#allocation2 + $0x60] sm:$0xff] %vm1134, %v7675
        %7692 = vst.msk [vmem:[#allocation2 + $0x68] sm:$0xff] %vm1134, %v7676
        %7693 = vst.msk [vmem:[#allocation2 + $0x70] sm:$0xff] %vm1134, %v7677
        %7694 = vst.msk [vmem:[#allocation2 + $0x78] sm:$0xff] %vm1134, %v7678
        %p7695 = scmp.eq.s32.totalorder %s44, 1
        // Predicated region
        $region113: #{tpu_custom_call.1} parent=91 // pred_check
          %p7696 = pneg %p7695
        $region114: #{tpu_custom_call.1} parent=91 // pred_check_branch
          %7698 = sbr.rel (%p7696) target = $region116
        $region115: #{tpu_custom_call.1} parent=91 // pred_region
          %v7699 = vld [vmem:[%s16] sm:$0x1]
          %v7700 = vld [vmem:[%s17] sm:$0x1]
          %v7701 = vsel %vm1134, %v7663, 0.0
          %7702 = vadd.xlane.f32.xlu0 %v7701
          %v7703 = vpop.xlane.xlu0 %7702
          %v7704 = vsel %vm1134, %v7664, 0.0
          %7705 = vadd.xlane.f32.xlu0 %v7704
          %v7706 = vpop.xlane.xlu0 %7705
          %v7707 = vsel %vm1134, %v7665, 0.0
          %7708 = vadd.xlane.f32.xlu0 %v7707
          %v7709 = vpop.xlane.xlu0 %7708
          %v7710 = vsel %vm1134, %v7666, 0.0
          %7711 = vadd.xlane.f32.xlu0 %v7710
          %v7712 = vpop.xlane.xlu0 %7711
          %v7713 = vsel %vm1134, %v7667, 0.0
          %7714 = vadd.xlane.f32.xlu0 %v7713
          %v7715 = vpop.xlane.xlu0 %7714
          %v7716 = vsel %vm1134, %v7668, 0.0
          %7717 = vadd.xlane.f32.xlu0 %v7716
          %v7718 = vpop.xlane.xlu0 %7717
          %v7719 = vsel %vm1134, %v7669, 0.0
          %7720 = vadd.xlane.f32.xlu0 %v7719
          %v7721 = vpop.xlane.xlu0 %7720
          %v7722 = vsel %vm1134, %v7670, 0.0
          %7723 = vadd.xlane.f32.xlu0 %v7722
          %v7724 = vpop.xlane.xlu0 %7723
          %v7725 = vsel %vm1134, %v7671, 0.0
          %7726 = vadd.xlane.f32.xlu0 %v7725
          %v7727 = vpop.xlane.xlu0 %7726
          %v7728 = vsel %vm1134, %v7672, 0.0
          %7729 = vadd.xlane.f32.xlu0 %v7728
          %v7730 = vpop.xlane.xlu0 %7729
          %v7731 = vsel %vm1134, %v7673, 0.0
          %7732 = vadd.xlane.f32.xlu0 %v7731
          %v7733 = vpop.xlane.xlu0 %7732
          %v7734 = vsel %vm1134, %v7674, 0.0
          %7735 = vadd.xlane.f32.xlu0 %v7734
          %v7736 = vpop.xlane.xlu0 %7735
          %v7737 = vsel %vm1134, %v7675, 0.0
          %7738 = vadd.xlane.f32.xlu0 %v7737
          %v7739 = vpop.xlane.xlu0 %7738
          %v7740 = vsel %vm1134, %v7676, 0.0
          %7741 = vadd.xlane.f32.xlu0 %v7740
          %v7742 = vpop.xlane.xlu0 %7741
          %v7743 = vsel %vm1134, %v7677, 0.0
          %7744 = vadd.xlane.f32.xlu0 %v7743
          %v7745 = vpop.xlane.xlu0 %7744
          %v7746 = vsel %vm1134, %v7678, 0.0
          %7747 = vadd.xlane.f32.xlu0 %v7746
          %v7748 = vpop.xlane.xlu0 %7747
          %v7749 = vmul.f32 %v7703, %v1183
          %v7750 = vmul.f32 %v7706, %v1183
          %v7751 = vmul.f32 %v7709, %v1183
          %v7752 = vmul.f32 %v7712, %v1183
          %v7753 = vmul.f32 %v7715, %v1183
          %v7754 = vmul.f32 %v7718, %v1183
          %v7755 = vmul.f32 %v7721, %v1183
          %v7756 = vmul.f32 %v7724, %v1183
          %v7757 = vmul.f32 %v7727, %v1183
          %v7758 = vmul.f32 %v7730, %v1183
          %v7759 = vmul.f32 %v7733, %v1183
          %v7760 = vmul.f32 %v7736, %v1183
          %v7761 = vmul.f32 %v7739, %v1183
          %v7762 = vmul.f32 %v7742, %v1183
          %v7763 = vmul.f32 %v7745, %v1183
          %v7764 = vmul.f32 %v7748, %v1183
          %v7765 = vsub.f32 %v7663, %v7749
          %v7766 = vsub.f32 %v7664, %v7750
          %v7767 = vsub.f32 %v7665, %v7751
          %v7768 = vsub.f32 %v7666, %v7752
          %v7769 = vsub.f32 %v7667, %v7753
          %v7770 = vsub.f32 %v7668, %v7754
          %v7771 = vsub.f32 %v7669, %v7755
          %v7772 = vsub.f32 %v7670, %v7756
          %v7773 = vsub.f32 %v7671, %v7757
          %v7774 = vsub.f32 %v7672, %v7758
          %v7775 = vsub.f32 %v7673, %v7759
          %v7776 = vsub.f32 %v7674, %v7760
          %v7777 = vsub.f32 %v7675, %v7761
          %v7778 = vsub.f32 %v7676, %v7762
          %v7779 = vsub.f32 %v7677, %v7763
          %v7780 = vsub.f32 %v7678, %v7764
          %v7781 = vmul.f32 %v7765, %v7765
          %v7782 = vmul.f32 %v7766, %v7766
          %v7783 = vmul.f32 %v7767, %v7767
          %v7784 = vmul.f32 %v7768, %v7768
          %v7785 = vmul.f32 %v7769, %v7769
          %v7786 = vmul.f32 %v7770, %v7770
          %v7787 = vmul.f32 %v7771, %v7771
          %v7788 = vmul.f32 %v7772, %v7772
          %v7789 = vmul.f32 %v7773, %v7773
          %v7790 = vmul.f32 %v7774, %v7774
          %v7791 = vmul.f32 %v7775, %v7775
          %v7792 = vmul.f32 %v7776, %v7776
          %v7793 = vmul.f32 %v7777, %v7777
          %v7794 = vmul.f32 %v7778, %v7778
          %v7795 = vmul.f32 %v7779, %v7779
          %v7796 = vmul.f32 %v7780, %v7780
          %v7797 = vsel %vm1134, %v7781, 0.0
          %7798 = vadd.xlane.f32.xlu0 %v7797
          %v7799 = vpop.xlane.xlu0 %7798
          %v7800 = vsel %vm1134, %v7782, 0.0
          %7801 = vadd.xlane.f32.xlu0 %v7800
          %v7802 = vpop.xlane.xlu0 %7801
          %v7803 = vsel %vm1134, %v7783, 0.0
          %7804 = vadd.xlane.f32.xlu0 %v7803
          %v7805 = vpop.xlane.xlu0 %7804
          %v7806 = vsel %vm1134, %v7784, 0.0
          %7807 = vadd.xlane.f32.xlu0 %v7806
          %v7808 = vpop.xlane.xlu0 %7807
          %v7809 = vsel %vm1134, %v7785, 0.0
          %7810 = vadd.xlane.f32.xlu0 %v7809
          %v7811 = vpop.xlane.xlu0 %7810
          %v7812 = vsel %vm1134, %v7786, 0.0
          %7813 = vadd.xlane.f32.xlu0 %v7812
          %v7814 = vpop.xlane.xlu0 %7813
          %v7815 = vsel %vm1134, %v7787, 0.0
          %7816 = vadd.xlane.f32.xlu0 %v7815
          %v7817 = vpop.xlane.xlu0 %7816
          %v7818 = vsel %vm1134, %v7788, 0.0
          %7819 = vadd.xlane.f32.xlu0 %v7818
          %v7820 = vpop.xlane.xlu0 %7819
          %v7821 = vsel %vm1134, %v7789, 0.0
          %7822 = vadd.xlane.f32.xlu0 %v7821
          %v7823 = vpop.xlane.xlu0 %7822
          %v7824 = vsel %vm1134, %v7790, 0.0
          %7825 = vadd.xlane.f32.xlu0 %v7824
          %v7826 = vpop.xlane.xlu0 %7825
          %v7827 = vsel %vm1134, %v7791, 0.0
          %7828 = vadd.xlane.f32.xlu0 %v7827
          %v7829 = vpop.xlane.xlu0 %7828
          %v7830 = vsel %vm1134, %v7792, 0.0
          %7831 = vadd.xlane.f32.xlu0 %v7830
          %v7832 = vpop.xlane.xlu0 %7831
          %v7833 = vsel %vm1134, %v7793, 0.0
          %7834 = vadd.xlane.f32.xlu0 %v7833
          %v7835 = vpop.xlane.xlu0 %7834
          %v7836 = vsel %vm1134, %v7794, 0.0
          %7837 = vadd.xlane.f32.xlu0 %v7836
          %v7838 = vpop.xlane.xlu0 %7837
          %v7839 = vsel %vm1134, %v7795, 0.0
          %7840 = vadd.xlane.f32.xlu0 %v7839
          %v7841 = vpop.xlane.xlu0 %7840
          %v7842 = vsel %vm1134, %v7796, 0.0
          %7843 = vadd.xlane.f32.xlu0 %v7842
          %v7844 = vpop.xlane.xlu0 %7843
          %v7845 = vmul.f32 %v7799, 0.032258064
          %v7846 = vmul.f32 %v7802, 0.032258064
          %v7847 = vmul.f32 %v7805, 0.032258064
          %v7848 = vmul.f32 %v7808, 0.032258064
          %v7849 = vmul.f32 %v7811, 0.032258064
          %v7850 = vmul.f32 %v7814, 0.032258064
          %v7851 = vmul.f32 %v7817, 0.032258064
          %v7852 = vmul.f32 %v7820, 0.032258064
          %v7853 = vmul.f32 %v7823, 0.032258064
          %v7854 = vmul.f32 %v7826, 0.032258064
          %v7855 = vmul.f32 %v7829, 0.032258064
          %v7856 = vmul.f32 %v7832, 0.032258064
          %v7857 = vmul.f32 %v7835, 0.032258064
          %v7858 = vmul.f32 %v7838, 0.032258064
          %v7859 = vmul.f32 %v7841, 0.032258064
          %v7860 = vmul.f32 %v7844, 0.032258064
          %v7861 = vrsqrt.pop %v7845
          %v7862 = vmul.f32 %v7845, %v7861
          %vm7863 = vcmp.eq.f32.partialorder %v7845, inf
          %v7864 = vsel %vm7863, %v7845, %v7862
          %vm7865 = vcmp.eq.f32.partialorder %v7845, 0.0
          %v7866 = vand.u32 %v7845, 2147483648
          %v7867 = vsel %vm7865, %v7866, %v7864
          %v7868 = vrsqrt.pop %v7846
          %v7869 = vmul.f32 %v7846, %v7868
          %vm7870 = vcmp.eq.f32.partialorder %v7846, inf
          %v7871 = vsel %vm7870, %v7846, %v7869
          %vm7872 = vcmp.eq.f32.partialorder %v7846, 0.0
          %v7873 = vand.u32 %v7846, 2147483648
          %v7874 = vsel %vm7872, %v7873, %v7871
          %v7875 = vrsqrt.pop %v7847
          %v7876 = vmul.f32 %v7847, %v7875
          %vm7877 = vcmp.eq.f32.partialorder %v7847, inf
          %v7878 = vsel %vm7877, %v7847, %v7876
          %vm7879 = vcmp.eq.f32.partialorder %v7847, 0.0
          %v7880 = vand.u32 %v7847, 2147483648
          %v7881 = vsel %vm7879, %v7880, %v7878
          %v7882 = vrsqrt.pop %v7848
          %v7883 = vmul.f32 %v7848, %v7882
          %vm7884 = vcmp.eq.f32.partialorder %v7848, inf
          %v7885 = vsel %vm7884, %v7848, %v7883
          %vm7886 = vcmp.eq.f32.partialorder %v7848, 0.0
          %v7887 = vand.u32 %v7848, 2147483648
          %v7888 = vsel %vm7886, %v7887, %v7885
          %v7889 = vrsqrt.pop %v7849
          %v7890 = vmul.f32 %v7849, %v7889
          %vm7891 = vcmp.eq.f32.partialorder %v7849, inf
          %v7892 = vsel %vm7891, %v7849, %v7890
          %vm7893 = vcmp.eq.f32.partialorder %v7849, 0.0
          %v7894 = vand.u32 %v7849, 2147483648
          %v7895 = vsel %vm7893, %v7894, %v7892
          %v7896 = vrsqrt.pop %v7850
          %v7897 = vmul.f32 %v7850, %v7896
          %vm7898 = vcmp.eq.f32.partialorder %v7850, inf
          %v7899 = vsel %vm7898, %v7850, %v7897
          %vm7900 = vcmp.eq.f32.partialorder %v7850, 0.0
          %v7901 = vand.u32 %v7850, 2147483648
          %v7902 = vsel %vm7900, %v7901, %v7899
          %v7903 = vrsqrt.pop %v7851
          %v7904 = vmul.f32 %v7851, %v7903
          %vm7905 = vcmp.eq.f32.partialorder %v7851, inf
          %v7906 = vsel %vm7905, %v7851, %v7904
          %vm7907 = vcmp.eq.f32.partialorder %v7851, 0.0
          %v7908 = vand.u32 %v7851, 2147483648
          %v7909 = vsel %vm7907, %v7908, %v7906
          %v7910 = vrsqrt.pop %v7852
          %v7911 = vmul.f32 %v7852, %v7910
          %vm7912 = vcmp.eq.f32.partialorder %v7852, inf
          %v7913 = vsel %vm7912, %v7852, %v7911
          %vm7914 = vcmp.eq.f32.partialorder %v7852, 0.0
          %v7915 = vand.u32 %v7852, 2147483648
          %v7916 = vsel %vm7914, %v7915, %v7913
          %v7917 = vrsqrt.pop %v7853
          %v7918 = vmul.f32 %v7853, %v7917
          %vm7919 = vcmp.eq.f32.partialorder %v7853, inf
          %v7920 = vsel %vm7919, %v7853, %v7918
          %vm7921 = vcmp.eq.f32.partialorder %v7853, 0.0
          %v7922 = vand.u32 %v7853, 2147483648
          %v7923 = vsel %vm7921, %v7922, %v7920
          %v7924 = vrsqrt.pop %v7854
          %v7925 = vmul.f32 %v7854, %v7924
          %vm7926 = vcmp.eq.f32.partialorder %v7854, inf
          %v7927 = vsel %vm7926, %v7854, %v7925
          %vm7928 = vcmp.eq.f32.partialorder %v7854, 0.0
          %v7929 = vand.u32 %v7854, 2147483648
          %v7930 = vsel %vm7928, %v7929, %v7927
          %v7931 = vrsqrt.pop %v7855
          %v7932 = vmul.f32 %v7855, %v7931
          %vm7933 = vcmp.eq.f32.partialorder %v7855, inf
          %v7934 = vsel %vm7933, %v7855, %v7932
          %vm7935 = vcmp.eq.f32.partialorder %v7855, 0.0
          %v7936 = vand.u32 %v7855, 2147483648
          %v7937 = vsel %vm7935, %v7936, %v7934
          %v7938 = vrsqrt.pop %v7856
          %v7939 = vmul.f32 %v7856, %v7938
          %vm7940 = vcmp.eq.f32.partialorder %v7856, inf
          %v7941 = vsel %vm7940, %v7856, %v7939
          %vm7942 = vcmp.eq.f32.partialorder %v7856, 0.0
          %v7943 = vand.u32 %v7856, 2147483648
          %v7944 = vsel %vm7942, %v7943, %v7941
          %v7945 = vrsqrt.pop %v7857
          %v7946 = vmul.f32 %v7857, %v7945
          %vm7947 = vcmp.eq.f32.partialorder %v7857, inf
          %v7948 = vsel %vm7947, %v7857, %v7946
          %vm7949 = vcmp.eq.f32.partialorder %v7857, 0.0
          %v7950 = vand.u32 %v7857, 2147483648
          %v7951 = vsel %vm7949, %v7950, %v7948
          %v7952 = vrsqrt.pop %v7858
          %v7953 = vmul.f32 %v7858, %v7952
          %vm7954 = vcmp.eq.f32.partialorder %v7858, inf
          %v7955 = vsel %vm7954, %v7858, %v7953
          %vm7956 = vcmp.eq.f32.partialorder %v7858, 0.0
          %v7957 = vand.u32 %v7858, 2147483648
          %v7958 = vsel %vm7956, %v7957, %v7955
          %v7959 = vrsqrt.pop %v7859
          %v7960 = vmul.f32 %v7859, %v7959
          %vm7961 = vcmp.eq.f32.partialorder %v7859, inf
          %v7962 = vsel %vm7961, %v7859, %v7960
          %vm7963 = vcmp.eq.f32.partialorder %v7859, 0.0
          %v7964 = vand.u32 %v7859, 2147483648
          %v7965 = vsel %vm7963, %v7964, %v7962
          %v7966 = vrsqrt.pop %v7860
          %v7967 = vmul.f32 %v7860, %v7966
          %vm7968 = vcmp.eq.f32.partialorder %v7860, inf
          %v7969 = vsel %vm7968, %v7860, %v7967
          %vm7970 = vcmp.eq.f32.partialorder %v7860, 0.0
          %v7971 = vand.u32 %v7860, 2147483648
          %v7972 = vsel %vm7970, %v7971, %v7969
          %v7973 = vadd.f32 %v7867, 1e-06
          %v7974 = vadd.f32 %v7874, 1e-06
          %v7975 = vadd.f32 %v7881, 1e-06
          %v7976 = vadd.f32 %v7888, 1e-06
          %v7977 = vadd.f32 %v7895, 1e-06
          %v7978 = vadd.f32 %v7902, 1e-06
          %v7979 = vadd.f32 %v7909, 1e-06
          %v7980 = vadd.f32 %v7916, 1e-06
          %v7981 = vadd.f32 %v7923, 1e-06
          %v7982 = vadd.f32 %v7930, 1e-06
          %v7983 = vadd.f32 %v7937, 1e-06
          %v7984 = vadd.f32 %v7944, 1e-06
          %v7985 = vadd.f32 %v7951, 1e-06
          %v7986 = vadd.f32 %v7958, 1e-06
          %v7987 = vadd.f32 %v7965, 1e-06
          %v7988 = vadd.f32 %v7972, 1e-06
          %v7989 = vrcp.pop %v7973
          %v7990 = vrcp.pop %v7974
          %v7991 = vrcp.pop %v7975
          %v7992 = vrcp.pop %v7976
          %v7993 = vrcp.pop %v7977
          %v7994 = vrcp.pop %v7978
          %v7995 = vrcp.pop %v7979
          %v7996 = vrcp.pop %v7980
          %v7997 = vrcp.pop %v7981
          %v7998 = vrcp.pop %v7982
          %v7999 = vrcp.pop %v7983
          %v8000 = vrcp.pop %v7984
          %v8001 = vrcp.pop %v7985
          %v8002 = vrcp.pop %v7986
          %v8003 = vrcp.pop %v7987
          %v8004 = vrcp.pop %v7988
          %v8005 = vmul.f32 %v7765, %v7989
          %v8006 = vmul.f32 %v7766, %v7990
          %v8007 = vmul.f32 %v7767, %v7991
          %v8008 = vmul.f32 %v7768, %v7992
          %v8009 = vmul.f32 %v7769, %v7993
          %v8010 = vmul.f32 %v7770, %v7994
          %v8011 = vmul.f32 %v7771, %v7995
          %v8012 = vmul.f32 %v7772, %v7996
          %v8013 = vmul.f32 %v7773, %v7997
          %v8014 = vmul.f32 %v7774, %v7998
          %v8015 = vmul.f32 %v7775, %v7999
          %v8016 = vmul.f32 %v7776, %v8000
          %v8017 = vmul.f32 %v7777, %v8001
          %v8018 = vmul.f32 %v7778, %v8002
          %v8019 = vmul.f32 %v7779, %v8003
          %v8020 = vmul.f32 %v7780, %v8004
          %v8022 = vlaneseq
          %v8023 = vshrl.u32 %v8022, 7
          %v8024 = vsub.s32 0, %v8023
          %v8025 = vrot.slane %v7699, %v8024
          %v8027 = vmul.f32 %v8025, %v8005
          %v8028 = vmul.f32 %v8025, %v8006
          %v8029 = vmul.f32 %v8025, %v8007
          %v8030 = vmul.f32 %v8025, %v8008
          %v8031 = vmul.f32 %v8025, %v8009
          %v8032 = vmul.f32 %v8025, %v8010
          %v8033 = vmul.f32 %v8025, %v8011
          %v8034 = vmul.f32 %v8025, %v8012
          %v8035 = vmul.f32 %v8025, %v8013
          %v8036 = vmul.f32 %v8025, %v8014
          %v8037 = vmul.f32 %v8025, %v8015
          %v8038 = vmul.f32 %v8025, %v8016
          %v8039 = vmul.f32 %v8025, %v8017
          %v8040 = vmul.f32 %v8025, %v8018
          %v8041 = vmul.f32 %v8025, %v8019
          %v8042 = vmul.f32 %v8025, %v8020
          %v8044 = vlaneseq
          %v8045 = vshrl.u32 %v8044, 7
          %v8046 = vsub.s32 0, %v8045
          %v8047 = vrot.slane %v7700, %v8046
          %v8049 = vadd.f32 %v8027, %v8047
          %v8050 = vadd.f32 %v8028, %v8047
          %v8051 = vadd.f32 %v8029, %v8047
          %v8052 = vadd.f32 %v8030, %v8047
          %v8053 = vadd.f32 %v8031, %v8047
          %v8054 = vadd.f32 %v8032, %v8047
          %v8055 = vadd.f32 %v8033, %v8047
          %v8056 = vadd.f32 %v8034, %v8047
          %v8057 = vadd.f32 %v8035, %v8047
          %v8058 = vadd.f32 %v8036, %v8047
          %v8059 = vadd.f32 %v8037, %v8047
          %v8060 = vadd.f32 %v8038, %v8047
          %v8061 = vadd.f32 %v8039, %v8047
          %v8062 = vadd.f32 %v8040, %v8047
          %v8063 = vadd.f32 %v8041, %v8047
          %v8064 = vadd.f32 %v8042, %v8047
          %8065 = vst.msk [vmem:[%s838] sm:$0xff] %vm1134, %v8049
          %8066 = vst.msk [vmem:[%s838 + $0x8] sm:$0xff] %vm1134, %v8050
          %8067 = vst.msk [vmem:[%s838 + $0x10] sm:$0xff] %vm1134, %v8051
          %8068 = vst.msk [vmem:[%s838 + $0x18] sm:$0xff] %vm1134, %v8052
          %8069 = vst.msk [vmem:[%s838 + $0x20] sm:$0xff] %vm1134, %v8053
          %8070 = vst.msk [vmem:[%s838 + $0x28] sm:$0xff] %vm1134, %v8054
          %8071 = vst.msk [vmem:[%s838 + $0x30] sm:$0xff] %vm1134, %v8055
          %8072 = vst.msk [vmem:[%s838 + $0x38] sm:$0xff] %vm1134, %v8056
          %8073 = vst.msk [vmem:[%s838 + $0x40] sm:$0xff] %vm1134, %v8057
          %8074 = vst.msk [vmem:[%s838 + $0x48] sm:$0xff] %vm1134, %v8058
          %8075 = vst.msk [vmem:[%s838 + $0x50] sm:$0xff] %vm1134, %v8059
          %8076 = vst.msk [vmem:[%s838 + $0x58] sm:$0xff] %vm1134, %v8060
          %8077 = vst.msk [vmem:[%s838 + $0x60] sm:$0xff] %vm1134, %v8061
          %8078 = vst.msk [vmem:[%s838 + $0x68] sm:$0xff] %vm1134, %v8062
          %8079 = vst.msk [vmem:[%s838 + $0x70] sm:$0xff] %vm1134, %v8063
          %8080 = vst.msk [vmem:[%s838 + $0x78] sm:$0xff] %vm1134, %v8064
        $region116: #{tpu_custom_call.1} parent=91 // pred_fallthru
          _
        %s8081 = sand.u32 %s507, 1
        %s8082 = scalar_lea.sflag [#allocation5], %s8081
        %s8083 = sand.u32 %s507, 1
        %s8084 = smul.addr %s8083, 128
        %s8085 = scalar_lea.vmem [#allocation11], %s8084
        // Predicated region
        $region117: #{tpu_custom_call.1} parent=91 // pred_check
          %p8086 = pneg %p517
        $region118: #{tpu_custom_call.1} parent=91 // pred_check_branch
          %8088 = sbr.rel (%p8086) target = $region120
        $region119: #{tpu_custom_call.1} parent=91 // pred_region
          %s8089 = smul.u32 16, %s43
          %s8091 = ssub.s32 2048, 2048
          %8092 = vsyncadd %s8082, %s8091
          %s8093 = smul.addr %s8089, 128
          %s8094 = scalar_lea.hbm %s18, %s8093
          %s8095 = sshll.u32 %s8085, 4
          %s8096 = int_to_ptr.vmem [resolvable:$true] %s8095
          %8101 = dma.vmem_to_hbm [thread:$0]  %s8096, 2048, %s8094, %s8082, 128, 128, 8
        $region120: #{tpu_custom_call.1} parent=91 // pred_fallthru
          _
      $region92: #{tpu_custom_call.1} parent=5 // pred_fallthru
        _
      %p8102 = scmp.le.s32.totalorder 2, %s34
      // Predicated region
      $region121: #{tpu_custom_call.1} parent=5 // pred_check
        %p8103 = pneg %p8102
      $region122: #{tpu_custom_call.1} parent=5 // pred_check_branch
        %8105 = sbr.rel (%p8103) target = $region124
      $region123: #{tpu_custom_call.1} parent=5 // pred_region
        %s8106 = ssub.s32 %s34, 2
        // Predicated region
        $region125: #{tpu_custom_call.1} parent=123 // pred_check
          %p8107 = pneg %p523
        $region126: #{tpu_custom_call.1} parent=123 // pred_check_branch
          %8109 = sbr.rel (%p8107) target = $region128
        $region127: #{tpu_custom_call.1} parent=123 // pred_region
          %s8110 = sand.u32 %s508, 1
          %s8111 = scalar_lea.sflag [#allocation5], %s8110
          %s8112 = sand.u32 %s508, 1
          %s8113 = smul.addr %s8112, 128
          %s8114 = scalar_lea.vmem [#allocation11], %s8113
          %8115 = dma.done %s8111, 2048
        $region128: #{tpu_custom_call.1} parent=123 // pred_fallthru
          _
      $region124: #{tpu_custom_call.1} parent=5 // pred_fallthru
        _
    $region6: #{tpu_custom_call.1} parent=1 // loop_footer
      %s38 = sadd.s32 1, %s34
    $region7: #{tpu_custom_call.1} parent=1 // loop_footer_branch
      %33 = sbr.rel target = $region3
    $region8: #{tpu_custom_call.1} parent=1 // loop_exit
      _
    %8116 = vsyncpa [#allocation4], 1
    %s8117 = scalar_lea.sflag [#allocation4], 1
    %8118 = vsyncpa %s8117, 1
    %8119 = vsyncpa [#allocation7], 1
    %s8120 = scalar_lea.sflag [#allocation7], 1
    %8121 = vsyncpa %s8120, 1
    %8122 = vsyncpa [#allocation10], 1
    %s8123 = scalar_lea.sflag [#allocation10], 1
    %8124 = vsyncpa %s8123, 1
    %8125 = vsyncpa [#allocation5], 1
    %s8126 = scalar_lea.sflag [#allocation5], 1
    %8127 = vsyncpa %s8126, 1

</llo_original>
